<compile_context>
chip_gen: v5e
topology: v5e:2x2
jax: 0.10.0
libtpu: 0.0.40
codegen_flags: <defaults>
</compile_context>

<pallas_src>
import functools

import jax
import jax.numpy as jnp
import numpy as np
from jax import lax
from jax.experimental import pallas as pl
from jax.experimental.pallas import tpu as pltpu

BN_EPS = 1e-5


def _round_up(v, m):
    return (v + m - 1) // m * m


def _mod(idx, d):
    # Power-of-two fast path keeps the lowering to simple bit ops.
    if d & (d - 1) == 0:
        return jnp.bitwise_and(idx, d - 1)
    return idx % d


# ------------------------------ Pallas kernel -------------------------------

def _im2col_3x3_into(op_ref, pad_ref, v, Ho, Wo):
    """Stage the fused-K (M, 9*C) bf16 im2col operand of a stride-1 / pad-1
    3x3 conv into `op_ref`.

    v        : (M, C) f32 activation, rows flattened as (batch, y, x).
    pad_ref  : (M + 2*P, C) f32 scratch; the interior [P, P+M) is overwritten
               here (sublane-aligned store).  The P guard rows at each end are
               never zeroed: every read that lands in them is killed by the
               boundary masks (select, so garbage/NaN is safe).
    """
    M, C = v.shape
    P = (pad_ref.shape[0] - M) // 2
    pad_ref[P:P + M, :] = v

    idx = lax.broadcasted_iota(jnp.int32, (M, C), 0)
    r = _mod(idx, Ho * Wo)          # flat (y, x) index inside one image
    c = _mod(idx, Wo)               # x index inside one row
    row_ok = {-1: r >= Wo, 0: None, 1: r < (Ho - 1) * Wo}
    col_ok = {-1: c >= 1, 0: None, 1: c < Wo - 1}

    t = 0
    for dy in (-1, 0, 1):
        for dx in (-1, 0, 1):
            s = dy * Wo + dx
            tap = pad_ref[P + s:P + s + M, :]
            mask = None
            for ok in (row_ok[dy], col_ok[dx]):
                if ok is not None:
                    mask = ok if mask is None else jnp.logical_and(mask, ok)
            if mask is not None:
                tap = jnp.where(mask, tap, 0.0)
            op_ref[:, t * C:(t + 1) * C] = tap.astype(op_ref.dtype)
            t += 1


def _basic_block_kernel(*refs, stride, has_sc, Ho, Wo, Cin, Cout):
    """Fused BasicBlock: relu(bn2(conv2(relu(bn1(conv1(x))))) + shortcut(x))."""
    n_in = 10 if has_sc else 7
    o_ref = refs[n_in]
    scratch = refs[n_in + 1:]
    if has_sc:
        (x_ref, w1_ref, s1_ref, b1_ref, w2_ref, s2_ref, b2_ref,
         wsc_ref, ssc_ref, bsc_ref) = refs[:n_in]
    else:
        (x_ref, w1_ref, s1_ref, b1_ref, w2_ref, s2_ref, b2_ref) = refs[:n_in]
    if stride == 1:
        pad1_ref, op1_ref, pad2_ref, op2_ref = scratch
    else:
        pad2_ref, op2_ref = scratch

    # ---- conv1 (one fused-K bf16 matmul, K = 9*Cin) + bn1 + relu ----
    if stride == 1:
        # x_ref: (M, Cin) bf16, pad=1 is virtual (masked taps in VMEM).
        _im2col_3x3_into(op1_ref, pad1_ref, x_ref[...].astype(jnp.float32),
                         Ho, Wo)
        op1 = op1_ref[...]
    else:
        # x_ref: (M, 9*Cin) bf16 lane-dense tap stack built in the wrapper.
        op1 = x_ref[...]
    acc1 = jnp.dot(op1, w1_ref[...], preferred_element_type=jnp.float32)
    h = jnp.maximum(acc1 * s1_ref[...] + b1_ref[...], 0.0)     # (M, Cout) f32

    # ---- conv2 (stride 1, pad 1: fused-K matmul, K = 9*Cout) + bn2 ----
    _im2col_3x3_into(op2_ref, pad2_ref, h, Ho, Wo)
    acc2 = jnp.dot(op2_ref[...], w2_ref[...],
                   preferred_element_type=jnp.float32)
    out = acc2 * s2_ref[...] + b2_ref[...]

    # ---- shortcut path ----
    if has_sc:
        if stride == 1:
            xs = x_ref[...]
        else:
            xs = x_ref[:, 4 * Cin:5 * Cin]     # center tap == x[:, ::s, ::s, :]
        sc = jnp.dot(xs, wsc_ref[...], preferred_element_type=jnp.float32)
        sc = sc * ssc_ref[...] + bsc_ref[...]
    else:
        sc = x_ref[...].astype(jnp.float32)    # identity (Cin == Cout)

    o_ref[...] = jnp.maximum(out + sc, 0.0).astype(o_ref.dtype)


# ------------------------------ wrappers -------------------------------------

def basic_block_forward_nhwc(params, x_nhwc):
    """Fused BasicBlock forward.  NHWC in (any float dtype), NHWC bf16 out."""
    stride = int(params["stride"])
    has_sc = "sc_w" in params
    n, h, w, cin = x_nhwc.shape
    cout = params["conv1_w"].shape[0]
    ho = (h + 2 - 3) // stride + 1
    wo = (w + 2 - 3) // stride + 1

    def fused_w(w_oihw):          # OIHW -> (kh*kw*Cin, Cout) tap-major bf16
        co, ci, kh, kw = w_oihw.shape
        return (jnp.transpose(w_oihw, (2, 3, 1, 0))
                .reshape(kh * kw * ci, co).astype(jnp.bfloat16))

    w1 = fused_w(params["conv1_w"])
    w2 = fused_w(params["conv2_w"])
    s1, b1 = [v.reshape(1, cout).astype(jnp.float32) for v in params["bn1"]]
    s2, b2 = [v.reshape(1, cout).astype(jnp.float32) for v in params["bn2"]]

    if stride == 1:
        # Flat bf16 NHWC; the kernel builds the fused-K taps in VMEM, so the
        # activation crosses HBM exactly once and is never padded in HBM.
        x_in = x_nhwc.reshape(n * h * w, cin).astype(jnp.bfloat16)
        in_rows, kin = h * w, cin
    else:
        # Strided conv: gather the 9 taps once, already fused along K
        # (~9/stride^2 = 2.25x the input, lane-dense 9*Cin = 576 wide).
        xp = jnp.pad(x_nhwc.astype(jnp.bfloat16),
                     ((0, 0), (1, 1), (1, 1), (0, 0)))
        taps = [xp[:, kh:kh + stride * (ho - 1) + 1:stride,
                   kw:kw + stride * (wo - 1) + 1:stride, :]
                for kh in range(3) for kw in range(3)]
        x_in = jnp.concatenate(taps, axis=-1).reshape(n * ho * wo, 9 * cin)
        in_rows, kin = ho * wo, 9 * cin

    # Fold B_tile images into the matmul M dim; keep >= 2 grid steps so both
    # v7x TensorCores get work, and bound the per-step VMEM footprint.
    per_img = (2 * in_rows * kin * 2                       # x block (dbl-buffered)
               + ho * wo * (9 * cin * 2 + 9 * cout * 2)    # fused-K staging
               + (in_rows + ho * wo + 32) * max(cin, cout) * 4   # pad scratches
               + ho * wo * cout * (4 + 2 * 2))             # h / out block
    bt = max(1, min(n, (8 * 1024 * 1024) // max(per_img, 1)))
    if n >= 2:
        bt = min(bt, n // 2)
    while n % bt:
        bt -= 1
    steps = n // bt
    m_blk = bt * ho * wo
    pad_rows = _round_up(wo + 1, 8)

    def full_spec(a):
        nd = a.ndim
        return pl.BlockSpec(a.shape, lambda i, _nd=nd: (0,) * _nd)

    args = [x_in, w1, s1, b1, w2, s2, b2]
    in_specs = [pl.BlockSpec((bt * in_rows, kin), lambda i: (i, 0)),
                full_spec(w1), full_spec(s1), full_spec(b1),
                full_spec(w2), full_spec(s2), full_spec(b2)]
    if has_sc:
        wsc = params["sc_w"].reshape(cout, cin).T.astype(jnp.bfloat16)
        ssc, bsc = [v.reshape(1, cout).astype(jnp.float32)
                    for v in params["sc_bn"]]
        args += [wsc, ssc, bsc]
        in_specs += [full_spec(wsc), full_spec(ssc), full_spec(bsc)]

    scratch_shapes = []
    if stride == 1:
        scratch_shapes += [pltpu.VMEM((m_blk + 2 * pad_rows, cin), jnp.float32),
                           pltpu.VMEM((m_blk, 9 * cin), jnp.bfloat16)]
    scratch_shapes += [pltpu.VMEM((m_blk + 2 * pad_rows, cout), jnp.float32),
                       pltpu.VMEM((m_blk, 9 * cout), jnp.bfloat16)]

    kernel = functools.partial(_basic_block_kernel, stride=stride,
                               has_sc=has_sc, Ho=ho, Wo=wo, Cin=cin, Cout=cout)

    out = pl.pallas_call(
        kernel,
        out_shape=jax.ShapeDtypeStruct((n * ho * wo, cout), jnp.bfloat16),
        grid_spec=pltpu.PrefetchScalarGridSpec(
            num_scalar_prefetch=0,
            grid=(steps,),
            in_specs=in_specs,
            out_specs=pl.BlockSpec((m_blk, cout), lambda i: (i, 0)),
            scratch_shapes=scratch_shapes,
        ),
        compiler_params=pltpu.CompilerParams(
            dimension_semantics=("parallel",),
            vmem_limit_bytes=32 * 1024 * 1024),
    )(*args)
    return out.reshape(n, ho, wo, cout)


def basic_block_forward(params, x_nchw):
    """PyTorch-interface wrapper: NCHW f32 in -> NCHW f32 out.  The transposes
    exist only to match nn.Module semantics; a real network should call
    basic_block_forward_nhwc and stay NHWC/bf16 end-to-end."""
    x_nhwc = jnp.transpose(x_nchw, (0, 2, 3, 1))
    out = basic_block_forward_nhwc(params, x_nhwc)
    return jnp.transpose(out, (0, 3, 1, 2)).astype(jnp.float32)


# ------------------------------ parameters -----------------------------------

def _fold_bn(gamma, beta, mean, var):
    scale = gamma / jnp.sqrt(var + BN_EPS)
    return scale, beta - mean * scale


def _init_conv(key, cout, cin, k):
    fan_in = float(cin * k * k)
    return jax.random.normal(key, (cout, cin, k, k), jnp.float32) / jnp.sqrt(fan_in)


def _init_bn(key, c):
    k1, k2 = jax.random.split(key)
    gamma = 1.0 + 0.1 * jax.random.normal(k1, (c,), jnp.float32)
    beta = 0.1 * jax.random.normal(k2, (c,), jnp.float32)
    return _fold_bn(gamma, beta, jnp.zeros((c,), jnp.float32),
                    jnp.ones((c,), jnp.float32))


def init_basic_block(key, in_planes, planes, stride):
    ks = jax.random.split(key, 6)
    p = {"stride": stride,
         "conv1_w": _init_conv(ks[0], planes, in_planes, 3),
         "bn1": _init_bn(ks[1], planes),
         "conv2_w": _init_conv(ks[2], planes, planes, 3),
         "bn2": _init_bn(ks[3], planes)}
    if stride != 1 or in_planes != planes:        # expansion == 1
        p["sc_w"] = _init_conv(ks[4], planes, in_planes, 1)
        p["sc_bn"] = _init_bn(ks[5], planes)
    return p


# ------------------------------ pure-JAX reference ---------------------------

def ref_basic_block(params, x_nchw):
    x = jnp.transpose(x_nchw, (0, 2, 3, 1)).astype(jnp.float32)

    def conv(v, w_oihw, stride, pad):
        return jax.lax.conv_general_dilated(
            v, jnp.transpose(w_oihw, (2, 3, 1, 0)),
            window_strides=(stride, stride), padding=[(pad, pad)] * 2,
            dimension_numbers=("NHWC", "HWIO", "NHWC"),
            precision=jax.lax.Precision.HIGHEST)

    s = int(params["stride"])
    s1, b1 = params["bn1"]
    s2, b2 = params["bn2"]
    h = jnp.maximum(conv(x, params["conv1_w"], s, 1) * s1 + b1, 0.0)
    h = conv(h, params["conv2_w"], 1, 1) * s2 + b2
    if "sc_w" in params:
        ssc, bsc = params["sc_bn"]
        sc = conv(x, params["sc_w"], s, 0) * ssc + bsc
    else:
        sc = x
    return jnp.transpose(jnp.maximum(h + sc, 0.0), (0, 3, 1, 2))


# --------------------------------- main ---------------------------------------

if __name__ == "__main__":
    key = jax.random.PRNGKey(0)
    kx, ka, kb = jax.random.split(key, 3)
    x = jax.random.normal(kx, (2, 64, 16, 16), jnp.float32)      # NCHW

    # Identity-shortcut block (stride=1, in_planes == planes).
    blk_a = init_basic_block(ka, 64, 64, stride=1)
    # Downsampling block with 1x1-conv shortcut (stride=2, 64 -> 128 planes).
    blk_b = init_basic_block(kb, 64, 128, stride=2)

    out_a = jax.block_until_ready(
        jax.jit(functools.partial(basic_block_forward, blk_a))(x))
    out_b = jax.block_until_ready(
        jax.jit(functools.partial(basic_block_forward, blk_b))(x))

    assert out_a.shape == (2, 64, 16, 16) and out_a.dtype == jnp.float32
    assert out_b.shape == (2, 128, 8, 8) and out_b.dtype == jnp.float32
    assert bool(jnp.all(jnp.isfinite(out_a))) and bool(jnp.all(jnp.isfinite(out_b)))

    # Correctness vs. a pure-JAX f32 reference (bf16-operand/output tolerance).
    np.testing.assert_allclose(np.asarray(out_a),
                               np.asarray(ref_basic_block(blk_a, x)),
                               rtol=5e-2, atol=5e-2)
    np.testing.assert_allclose(np.asarray(out_b),
                               np.asarray(ref_basic_block(blk_b, x)),
                               rtol=5e-2, atol=5e-2)

    print("KERNEL_OK")
</pallas_src>

<mosaic_0001>
module attributes {stable_mosaic.version = 11 : i64} {
  func.func @_basic_block_kernel(%arg0: i32, %arg1: memref<256x64xbf16, #tpu.memory_space<vmem>>, %arg2: memref<576x64xbf16, #tpu.memory_space<vmem>>, %arg3: memref<1x64xf32, #tpu.memory_space<vmem>>, %arg4: memref<1x64xf32, #tpu.memory_space<vmem>>, %arg5: memref<576x64xbf16, #tpu.memory_space<vmem>>, %arg6: memref<1x64xf32, #tpu.memory_space<vmem>>, %arg7: memref<1x64xf32, #tpu.memory_space<vmem>>, %arg8: memref<256x64xbf16, #tpu.memory_space<vmem>>, %arg9: memref<304x64xf32, #tpu.memory_space<vmem>>, %arg10: memref<256x576xbf16, #tpu.memory_space<vmem>>, %arg11: memref<304x64xf32, #tpu.memory_space<vmem>>, %arg12: memref<256x576xbf16, #tpu.memory_space<vmem>>) attributes {dimension_semantics = [#tpu.dimension_semantics<parallel>], iteration_bounds = array<i64: 2>, scalar_prefetch = 0 : i64, scratch_operands = 4 : i64, tpu.core_type = #tpu.core_type<tc>, window_params = [{transform_indices = @transform_0, window_bounds = array<i64: 256, 64>}, {pipeline_mode = #tpu.pipeline_mode<synchronous>, transform_indices = @transform_1, window_bounds = array<i64: 576, 64>}, {pipeline_mode = #tpu.pipeline_mode<synchronous>, transform_indices = @transform_2, window_bounds = array<i64: 1, 64>}, {pipeline_mode = #tpu.pipeline_mode<synchronous>, transform_indices = @transform_3, window_bounds = array<i64: 1, 64>}, {pipeline_mode = #tpu.pipeline_mode<synchronous>, transform_indices = @transform_4, window_bounds = array<i64: 576, 64>}, {pipeline_mode = #tpu.pipeline_mode<synchronous>, transform_indices = @transform_5, window_bounds = array<i64: 1, 64>}, {pipeline_mode = #tpu.pipeline_mode<synchronous>, transform_indices = @transform_6, window_bounds = array<i64: 1, 64>}, {transform_indices = @transform_7, window_bounds = array<i64: 256, 64>}]} {
    %c0 = arith.constant 0 : index
    %c0_0 = arith.constant 0 : index
    %0 = vector.load %arg1[%c0, %c0_0] : memref<256x64xbf16, #tpu.memory_space<vmem>>, vector<256x64xbf16>
    %1 = arith.extf %0 : vector<256x64xbf16> to vector<256x64xf32>
    %c24 = arith.constant 24 : index
    %c0_1 = arith.constant 0 : index
    %2 = vector.load %arg9[%c24, %c0_1] : memref<304x64xf32, #tpu.memory_space<vmem>>, vector<256x64xf32>
    tpu.vector_store %arg9[%c24, %c0_1], %1 {strides = array<i32>} : memref<304x64xf32, #tpu.memory_space<vmem>>, vector<256x64xf32>,
    %3 = tpu.iota {dimensions = array<i32: 0>} : vector<256x64xi32>
    %c255_i32 = arith.constant 255 : i32
    %4 = vector.broadcast %c255_i32 : i32 to vector<256x64xi32>
    %5 = arith.andi %3, %4 : vector<256x64xi32>
    %c15_i32 = arith.constant 15 : i32
    %6 = vector.broadcast %c15_i32 : i32 to vector<256x64xi32>
    %7 = arith.andi %3, %6 : vector<256x64xi32>
    %c16_i32 = arith.constant 16 : i32
    %8 = vector.broadcast %c16_i32 : i32 to vector<256x64xi32>
    %9 = arith.cmpi sge, %5, %8 : vector<256x64xi32>
    %c240_i32 = arith.constant 240 : i32
    %10 = vector.broadcast %c240_i32 : i32 to vector<256x64xi32>
    %11 = arith.cmpi slt, %5, %10 : vector<256x64xi32>
    %c1_i32 = arith.constant 1 : i32
    %12 = vector.broadcast %c1_i32 : i32 to vector<256x64xi32>
    %13 = arith.cmpi sge, %7, %12 : vector<256x64xi32>
    %c15_i32_2 = arith.constant 15 : i32
    %14 = vector.broadcast %c15_i32_2 : i32 to vector<256x64xi32>
    %15 = arith.cmpi slt, %7, %14 : vector<256x64xi32>
    %c7 = arith.constant 7 : index
    %c0_3 = arith.constant 0 : index
    %16 = vector.load %arg9[%c7, %c0_3] : memref<304x64xf32, #tpu.memory_space<vmem>>, vector<256x64xf32>
    %17 = arith.andi %9, %13 : vector<256x64xi1>
    %cst = arith.constant 0.000000e+00 : f32
    %18 = vector.broadcast %cst : f32 to vector<256x64xf32>
    %19 = arith.select %17, %16, %18 : vector<256x64xi1>, vector<256x64xf32>
    %20 = arith.truncf %19 : vector<256x64xf32> to vector<256x64xbf16>
    %c0_4 = arith.constant 0 : index
    %c0_5 = arith.constant 0 : index
    %21 = vector.load %arg10[%c0_4, %c0_5] : memref<256x576xbf16, #tpu.memory_space<vmem>>, vector<256x64xbf16>
    tpu.vector_store %arg10[%c0_4, %c0_5], %20 {strides = array<i32>} : memref<256x576xbf16, #tpu.memory_space<vmem>>, vector<256x64xbf16>,
    %c8 = arith.constant 8 : index
    %c0_6 = arith.constant 0 : index
    %22 = vector.load %arg9[%c8, %c0_6] : memref<304x64xf32, #tpu.memory_space<vmem>>, vector<256x64xf32>
    %cst_7 = arith.constant 0.000000e+00 : f32
    %23 = vector.broadcast %cst_7 : f32 to vector<256x64xf32>
    %24 = arith.select %9, %22, %23 : vector<256x64xi1>, vector<256x64xf32>
    %25 = arith.truncf %24 : vector<256x64xf32> to vector<256x64xbf16>
    %c0_8 = arith.constant 0 : index
    %c64 = arith.constant 64 : index
    %26 = vector.load %arg10[%c0_8, %c64] : memref<256x576xbf16, #tpu.memory_space<vmem>>, vector<256x64xbf16>
    tpu.vector_store %arg10[%c0_8, %c64], %25 {strides = array<i32>} : memref<256x576xbf16, #tpu.memory_space<vmem>>, vector<256x64xbf16>,
    %c9 = arith.constant 9 : index
    %c0_9 = arith.constant 0 : index
    %27 = vector.load %arg9[%c9, %c0_9] : memref<304x64xf32, #tpu.memory_space<vmem>>, vector<256x64xf32>
    %28 = arith.andi %9, %15 : vector<256x64xi1>
    %cst_10 = arith.constant 0.000000e+00 : f32
    %29 = vector.broadcast %cst_10 : f32 to vector<256x64xf32>
    %30 = arith.select %28, %27, %29 : vector<256x64xi1>, vector<256x64xf32>
    %31 = arith.truncf %30 : vector<256x64xf32> to vector<256x64xbf16>
    %c0_11 = arith.constant 0 : index
    %c128 = arith.constant 128 : index
    %32 = vector.load %arg10[%c0_11, %c128] : memref<256x576xbf16, #tpu.memory_space<vmem>>, vector<256x64xbf16>
    tpu.vector_store %arg10[%c0_11, %c128], %31 {strides = array<i32>} : memref<256x576xbf16, #tpu.memory_space<vmem>>, vector<256x64xbf16>,
    %c23 = arith.constant 23 : index
    %c0_12 = arith.constant 0 : index
    %33 = vector.load %arg9[%c23, %c0_12] : memref<304x64xf32, #tpu.memory_space<vmem>>, vector<256x64xf32>
    %cst_13 = arith.constant 0.000000e+00 : f32
    %34 = vector.broadcast %cst_13 : f32 to vector<256x64xf32>
    %35 = arith.select %13, %33, %34 : vector<256x64xi1>, vector<256x64xf32>
    %36 = arith.truncf %35 : vector<256x64xf32> to vector<256x64xbf16>
    %c0_14 = arith.constant 0 : index
    %c192 = arith.constant 192 : index
    %37 = vector.load %arg10[%c0_14, %c192] : memref<256x576xbf16, #tpu.memory_space<vmem>>, vector<256x64xbf16>
    tpu.vector_store %arg10[%c0_14, %c192], %36 {strides = array<i32>} : memref<256x576xbf16, #tpu.memory_space<vmem>>, vector<256x64xbf16>,
    %c24_15 = arith.constant 24 : index
    %c0_16 = arith.constant 0 : index
    %38 = vector.load %arg9[%c24_15, %c0_16] : memref<304x64xf32, #tpu.memory_space<vmem>>, vector<256x64xf32>
    %39 = arith.truncf %38 : vector<256x64xf32> to vector<256x64xbf16>
    %c0_17 = arith.constant 0 : index
    %c256 = arith.constant 256 : index
    %40 = vector.load %arg10[%c0_17, %c256] : memref<256x576xbf16, #tpu.memory_space<vmem>>, vector<256x64xbf16>
    tpu.vector_store %arg10[%c0_17, %c256], %39 {strides = array<i32>} : memref<256x576xbf16, #tpu.memory_space<vmem>>, vector<256x64xbf16>,
    %c25 = arith.constant 25 : index
    %c0_18 = arith.constant 0 : index
    %41 = vector.load %arg9[%c25, %c0_18] : memref<304x64xf32, #tpu.memory_space<vmem>>, vector<256x64xf32>
    %cst_19 = arith.constant 0.000000e+00 : f32
    %42 = vector.broadcast %cst_19 : f32 to vector<256x64xf32>
    %43 = arith.select %15, %41, %42 : vector<256x64xi1>, vector<256x64xf32>
    %44 = arith.truncf %43 : vector<256x64xf32> to vector<256x64xbf16>
    %c0_20 = arith.constant 0 : index
    %c320 = arith.constant 320 : index
    %45 = vector.load %arg10[%c0_20, %c320] : memref<256x576xbf16, #tpu.memory_space<vmem>>, vector<256x64xbf16>
    tpu.vector_store %arg10[%c0_20, %c320], %44 {strides = array<i32>} : memref<256x576xbf16, #tpu.memory_space<vmem>>, vector<256x64xbf16>,
    %c39 = arith.constant 39 : index
    %c0_21 = arith.constant 0 : index
    %46 = vector.load %arg9[%c39, %c0_21] : memref<304x64xf32, #tpu.memory_space<vmem>>, vector<256x64xf32>
    %47 = arith.andi %11, %13 : vector<256x64xi1>
    %cst_22 = arith.constant 0.000000e+00 : f32
    %48 = vector.broadcast %cst_22 : f32 to vector<256x64xf32>
    %49 = arith.select %47, %46, %48 : vector<256x64xi1>, vector<256x64xf32>
    %50 = arith.truncf %49 : vector<256x64xf32> to vector<256x64xbf16>
    %c0_23 = arith.constant 0 : index
    %c384 = arith.constant 384 : index
    %51 = vector.load %arg10[%c0_23, %c384] : memref<256x576xbf16, #tpu.memory_space<vmem>>, vector<256x64xbf16>
    tpu.vector_store %arg10[%c0_23, %c384], %50 {strides = array<i32>} : memref<256x576xbf16, #tpu.memory_space<vmem>>, vector<256x64xbf16>,
    %c40 = arith.constant 40 : index
    %c0_24 = arith.constant 0 : index
    %52 = vector.load %arg9[%c40, %c0_24] : memref<304x64xf32, #tpu.memory_space<vmem>>, vector<256x64xf32>
    %cst_25 = arith.constant 0.000000e+00 : f32
    %53 = vector.broadcast %cst_25 : f32 to vector<256x64xf32>
    %54 = arith.select %11, %52, %53 : vector<256x64xi1>, vector<256x64xf32>
    %55 = arith.truncf %54 : vector<256x64xf32> to vector<256x64xbf16>
    %c0_26 = arith.constant 0 : index
    %c448 = arith.constant 448 : index
    %56 = vector.load %arg10[%c0_26, %c448] : memref<256x576xbf16, #tpu.memory_space<vmem>>, vector<256x64xbf16>
    tpu.vector_store %arg10[%c0_26, %c448], %55 {strides = array<i32>} : memref<256x576xbf16, #tpu.memory_space<vmem>>, vector<256x64xbf16>,
    %c41 = arith.constant 41 : index
    %c0_27 = arith.constant 0 : index
    %57 = vector.load %arg9[%c41, %c0_27] : memref<304x64xf32, #tpu.memory_space<vmem>>, vector<256x64xf32>
    %58 = arith.andi %11, %15 : vector<256x64xi1>
    %cst_28 = arith.constant 0.000000e+00 : f32
    %59 = vector.broadcast %cst_28 : f32 to vector<256x64xf32>
    %60 = arith.select %58, %57, %59 : vector<256x64xi1>, vector<256x64xf32>
    %61 = arith.truncf %60 : vector<256x64xf32> to vector<256x64xbf16>
    %c0_29 = arith.constant 0 : index
    %c512 = arith.constant 512 : index
    %62 = vector.load %arg10[%c0_29, %c512] : memref<256x576xbf16, #tpu.memory_space<vmem>>, vector<256x64xbf16>
    tpu.vector_store %arg10[%c0_29, %c512], %61 {strides = array<i32>} : memref<256x576xbf16, #tpu.memory_space<vmem>>, vector<256x64xbf16>,
    %c0_30 = arith.constant 0 : index
    %c0_31 = arith.constant 0 : index
    %63 = vector.load %arg10[%c0_30, %c0_31] : memref<256x576xbf16, #tpu.memory_space<vmem>>, vector<256x576xbf16>
    %c0_32 = arith.constant 0 : index
    %c0_33 = arith.constant 0 : index
    %64 = vector.load %arg2[%c0_32, %c0_33] : memref<576x64xbf16, #tpu.memory_space<vmem>>, vector<576x64xbf16>
    %cst_34 = arith.constant dense<0.000000e+00> : vector<256x64xf32>
    %65 = tpu.matmul %63, %64, %cst_34 {dimension_numbers = #tpu.dot_dimension_numbers<[1], [0], [0], [1], [0, 0, 1, 1], [], []>} : vector<256x576xbf16>, vector<576x64xbf16>, vector<256x64xf32> -> vector<256x64xf32>
    %c0_35 = arith.constant 0 : index
    %c0_36 = arith.constant 0 : index
    %66 = vector.load %arg3[%c0_35, %c0_36] : memref<1x64xf32, #tpu.memory_space<vmem>>, vector<1x64xf32>
    %67 = vector.broadcast %66 : vector<1x64xf32> to vector<256x64xf32>
    %68 = arith.mulf %65, %67 : vector<256x64xf32>
    %c0_37 = arith.constant 0 : index
    %c0_38 = arith.constant 0 : index
    %69 = vector.load %arg4[%c0_37, %c0_38] : memref<1x64xf32, #tpu.memory_space<vmem>>, vector<1x64xf32>
    %70 = vector.broadcast %69 : vector<1x64xf32> to vector<256x64xf32>
    %71 = arith.addf %68, %70 : vector<256x64xf32>
    %cst_39 = arith.constant 0.000000e+00 : f32
    %72 = vector.broadcast %cst_39 : f32 to vector<256x64xf32>
    %73 = arith.maximumf %71, %72 : vector<256x64xf32>
    %c24_40 = arith.constant 24 : index
    %c0_41 = arith.constant 0 : index
    %74 = vector.load %arg11[%c24_40, %c0_41] : memref<304x64xf32, #tpu.memory_space<vmem>>, vector<256x64xf32>
    tpu.vector_store %arg11[%c24_40, %c0_41], %73 {strides = array<i32>} : memref<304x64xf32, #tpu.memory_space<vmem>>, vector<256x64xf32>,
    %75 = tpu.iota {dimensions = array<i32: 0>} : vector<256x64xi32>
    %c255_i32_42 = arith.constant 255 : i32
    %76 = vector.broadcast %c255_i32_42 : i32 to vector<256x64xi32>
    %77 = arith.andi %75, %76 : vector<256x64xi32>
    %c15_i32_43 = arith.constant 15 : i32
    %78 = vector.broadcast %c15_i32_43 : i32 to vector<256x64xi32>
    %79 = arith.andi %75, %78 : vector<256x64xi32>
    %c16_i32_44 = arith.constant 16 : i32
    %80 = vector.broadcast %c16_i32_44 : i32 to vector<256x64xi32>
    %81 = arith.cmpi sge, %77, %80 : vector<256x64xi32>
    %c240_i32_45 = arith.constant 240 : i32
    %82 = vector.broadcast %c240_i32_45 : i32 to vector<256x64xi32>
    %83 = arith.cmpi slt, %77, %82 : vector<256x64xi32>
    %c1_i32_46 = arith.constant 1 : i32
    %84 = vector.broadcast %c1_i32_46 : i32 to vector<256x64xi32>
    %85 = arith.cmpi sge, %79, %84 : vector<256x64xi32>
    %c15_i32_47 = arith.constant 15 : i32
    %86 = vector.broadcast %c15_i32_47 : i32 to vector<256x64xi32>
    %87 = arith.cmpi slt, %79, %86 : vector<256x64xi32>
    %c7_48 = arith.constant 7 : index
    %c0_49 = arith.constant 0 : index
    %88 = vector.load %arg11[%c7_48, %c0_49] : memref<304x64xf32, #tpu.memory_space<vmem>>, vector<256x64xf32>
    %89 = arith.andi %81, %85 : vector<256x64xi1>
    %cst_50 = arith.constant 0.000000e+00 : f32
    %90 = vector.broadcast %cst_50 : f32 to vector<256x64xf32>
    %91 = arith.select %89, %88, %90 : vector<256x64xi1>, vector<256x64xf32>
    %92 = arith.truncf %91 : vector<256x64xf32> to vector<256x64xbf16>
    %c0_51 = arith.constant 0 : index
    %c0_52 = arith.constant 0 : index
    %93 = vector.load %arg12[%c0_51, %c0_52] : memref<256x576xbf16, #tpu.memory_space<vmem>>, vector<256x64xbf16>
    tpu.vector_store %arg12[%c0_51, %c0_52], %92 {strides = array<i32>} : memref<256x576xbf16, #tpu.memory_space<vmem>>, vector<256x64xbf16>,
    %c8_53 = arith.constant 8 : index
    %c0_54 = arith.constant 0 : index
    %94 = vector.load %arg11[%c8_53, %c0_54] : memref<304x64xf32, #tpu.memory_space<vmem>>, vector<256x64xf32>
    %cst_55 = arith.constant 0.000000e+00 : f32
    %95 = vector.broadcast %cst_55 : f32 to vector<256x64xf32>
    %96 = arith.select %81, %94, %95 : vector<256x64xi1>, vector<256x64xf32>
    %97 = arith.truncf %96 : vector<256x64xf32> to vector<256x64xbf16>
    %c0_56 = arith.constant 0 : index
    %c64_57 = arith.constant 64 : index
    %98 = vector.load %arg12[%c0_56, %c64_57] : memref<256x576xbf16, #tpu.memory_space<vmem>>, vector<256x64xbf16>
    tpu.vector_store %arg12[%c0_56, %c64_57], %97 {strides = array<i32>} : memref<256x576xbf16, #tpu.memory_space<vmem>>, vector<256x64xbf16>,
    %c9_58 = arith.constant 9 : index
    %c0_59 = arith.constant 0 : index
    %99 = vector.load %arg11[%c9_58, %c0_59] : memref<304x64xf32, #tpu.memory_space<vmem>>, vector<256x64xf32>
    %100 = arith.andi %81, %87 : vector<256x64xi1>
    %cst_60 = arith.constant 0.000000e+00 : f32
    %101 = vector.broadcast %cst_60 : f32 to vector<256x64xf32>
    %102 = arith.select %100, %99, %101 : vector<256x64xi1>, vector<256x64xf32>
    %103 = arith.truncf %102 : vector<256x64xf32> to vector<256x64xbf16>
    %c0_61 = arith.constant 0 : index
    %c128_62 = arith.constant 128 : index
    %104 = vector.load %arg12[%c0_61, %c128_62] : memref<256x576xbf16, #tpu.memory_space<vmem>>, vector<256x64xbf16>
    tpu.vector_store %arg12[%c0_61, %c128_62], %103 {strides = array<i32>} : memref<256x576xbf16, #tpu.memory_space<vmem>>, vector<256x64xbf16>,
    %c23_63 = arith.constant 23 : index
    %c0_64 = arith.constant 0 : index
    %105 = vector.load %arg11[%c23_63, %c0_64] : memref<304x64xf32, #tpu.memory_space<vmem>>, vector<256x64xf32>
    %cst_65 = arith.constant 0.000000e+00 : f32
    %106 = vector.broadcast %cst_65 : f32 to vector<256x64xf32>
    %107 = arith.select %85, %105, %106 : vector<256x64xi1>, vector<256x64xf32>
    %108 = arith.truncf %107 : vector<256x64xf32> to vector<256x64xbf16>
    %c0_66 = arith.constant 0 : index
    %c192_67 = arith.constant 192 : index
    %109 = vector.load %arg12[%c0_66, %c192_67] : memref<256x576xbf16, #tpu.memory_space<vmem>>, vector<256x64xbf16>
    tpu.vector_store %arg12[%c0_66, %c192_67], %108 {strides = array<i32>} : memref<256x576xbf16, #tpu.memory_space<vmem>>, vector<256x64xbf16>,
    %c24_68 = arith.constant 24 : index
    %c0_69 = arith.constant 0 : index
    %110 = vector.load %arg11[%c24_68, %c0_69] : memref<304x64xf32, #tpu.memory_space<vmem>>, vector<256x64xf32>
    %111 = arith.truncf %110 : vector<256x64xf32> to vector<256x64xbf16>
    %c0_70 = arith.constant 0 : index
    %c256_71 = arith.constant 256 : index
    %112 = vector.load %arg12[%c0_70, %c256_71] : memref<256x576xbf16, #tpu.memory_space<vmem>>, vector<256x64xbf16>
    tpu.vector_store %arg12[%c0_70, %c256_71], %111 {strides = array<i32>} : memref<256x576xbf16, #tpu.memory_space<vmem>>, vector<256x64xbf16>,
    %c25_72 = arith.constant 25 : index
    %c0_73 = arith.constant 0 : index
    %113 = vector.load %arg11[%c25_72, %c0_73] : memref<304x64xf32, #tpu.memory_space<vmem>>, vector<256x64xf32>
    %cst_74 = arith.constant 0.000000e+00 : f32
    %114 = vector.broadcast %cst_74 : f32 to vector<256x64xf32>
    %115 = arith.select %87, %113, %114 : vector<256x64xi1>, vector<256x64xf32>
    %116 = arith.truncf %115 : vector<256x64xf32> to vector<256x64xbf16>
    %c0_75 = arith.constant 0 : index
    %c320_76 = arith.constant 320 : index
    %117 = vector.load %arg12[%c0_75, %c320_76] : memref<256x576xbf16, #tpu.memory_space<vmem>>, vector<256x64xbf16>
    tpu.vector_store %arg12[%c0_75, %c320_76], %116 {strides = array<i32>} : memref<256x576xbf16, #tpu.memory_space<vmem>>, vector<256x64xbf16>,
    %c39_77 = arith.constant 39 : index
    %c0_78 = arith.constant 0 : index
    %118 = vector.load %arg11[%c39_77, %c0_78] : memref<304x64xf32, #tpu.memory_space<vmem>>, vector<256x64xf32>
    %119 = arith.andi %83, %85 : vector<256x64xi1>
    %cst_79 = arith.constant 0.000000e+00 : f32
    %120 = vector.broadcast %cst_79 : f32 to vector<256x64xf32>
    %121 = arith.select %119, %118, %120 : vector<256x64xi1>, vector<256x64xf32>
    %122 = arith.truncf %121 : vector<256x64xf32> to vector<256x64xbf16>
    %c0_80 = arith.constant 0 : index
    %c384_81 = arith.constant 384 : index
    %123 = vector.load %arg12[%c0_80, %c384_81] : memref<256x576xbf16, #tpu.memory_space<vmem>>, vector<256x64xbf16>
    tpu.vector_store %arg12[%c0_80, %c384_81], %122 {strides = array<i32>} : memref<256x576xbf16, #tpu.memory_space<vmem>>, vector<256x64xbf16>,
    %c40_82 = arith.constant 40 : index
    %c0_83 = arith.constant 0 : index
    %124 = vector.load %arg11[%c40_82, %c0_83] : memref<304x64xf32, #tpu.memory_space<vmem>>, vector<256x64xf32>
    %cst_84 = arith.constant 0.000000e+00 : f32
    %125 = vector.broadcast %cst_84 : f32 to vector<256x64xf32>
    %126 = arith.select %83, %124, %125 : vector<256x64xi1>, vector<256x64xf32>
    %127 = arith.truncf %126 : vector<256x64xf32> to vector<256x64xbf16>
    %c0_85 = arith.constant 0 : index
    %c448_86 = arith.constant 448 : index
    %128 = vector.load %arg12[%c0_85, %c448_86] : memref<256x576xbf16, #tpu.memory_space<vmem>>, vector<256x64xbf16>
    tpu.vector_store %arg12[%c0_85, %c448_86], %127 {strides = array<i32>} : memref<256x576xbf16, #tpu.memory_space<vmem>>, vector<256x64xbf16>,
    %c41_87 = arith.constant 41 : index
    %c0_88 = arith.constant 0 : index
    %129 = vector.load %arg11[%c41_87, %c0_88] : memref<304x64xf32, #tpu.memory_space<vmem>>, vector<256x64xf32>
    %130 = arith.andi %83, %87 : vector<256x64xi1>
    %cst_89 = arith.constant 0.000000e+00 : f32
    %131 = vector.broadcast %cst_89 : f32 to vector<256x64xf32>
    %132 = arith.select %130, %129, %131 : vector<256x64xi1>, vector<256x64xf32>
    %133 = arith.truncf %132 : vector<256x64xf32> to vector<256x64xbf16>
    %c0_90 = arith.constant 0 : index
    %c512_91 = arith.constant 512 : index
    %134 = vector.load %arg12[%c0_90, %c512_91] : memref<256x576xbf16, #tpu.memory_space<vmem>>, vector<256x64xbf16>
    tpu.vector_store %arg12[%c0_90, %c512_91], %133 {strides = array<i32>} : memref<256x576xbf16, #tpu.memory_space<vmem>>, vector<256x64xbf16>,
    %c0_92 = arith.constant 0 : index
    %c0_93 = arith.constant 0 : index
    %135 = vector.load %arg12[%c0_92, %c0_93] : memref<256x576xbf16, #tpu.memory_space<vmem>>, vector<256x576xbf16>
    %c0_94 = arith.constant 0 : index
    %c0_95 = arith.constant 0 : index
    %136 = vector.load %arg5[%c0_94, %c0_95] : memref<576x64xbf16, #tpu.memory_space<vmem>>, vector<576x64xbf16>
    %cst_96 = arith.constant dense<0.000000e+00> : vector<256x64xf32>
    %137 = tpu.matmul %135, %136, %cst_96 {dimension_numbers = #tpu.dot_dimension_numbers<[1], [0], [0], [1], [0, 0, 1, 1], [], []>} : vector<256x576xbf16>, vector<576x64xbf16>, vector<256x64xf32> -> vector<256x64xf32>
    %c0_97 = arith.constant 0 : index
    %c0_98 = arith.constant 0 : index
    %138 = vector.load %arg6[%c0_97, %c0_98] : memref<1x64xf32, #tpu.memory_space<vmem>>, vector<1x64xf32>
    %139 = vector.broadcast %138 : vector<1x64xf32> to vector<256x64xf32>
    %140 = arith.mulf %137, %139 : vector<256x64xf32>
    %c0_99 = arith.constant 0 : index
    %c0_100 = arith.constant 0 : index
    %141 = vector.load %arg7[%c0_99, %c0_100] : memref<1x64xf32, #tpu.memory_space<vmem>>, vector<1x64xf32>
    %142 = vector.broadcast %141 : vector<1x64xf32> to vector<256x64xf32>
    %143 = arith.addf %140, %142 : vector<256x64xf32>
    %c0_101 = arith.constant 0 : index
    %c0_102 = arith.constant 0 : index
    %144 = vector.load %arg1[%c0_101, %c0_102] : memref<256x64xbf16, #tpu.memory_space<vmem>>, vector<256x64xbf16>
    %145 = arith.extf %144 : vector<256x64xbf16> to vector<256x64xf32>
    %146 = arith.addf %143, %145 : vector<256x64xf32>
    %cst_103 = arith.constant 0.000000e+00 : f32
    %147 = vector.broadcast %cst_103 : f32 to vector<256x64xf32>
    %148 = arith.maximumf %146, %147 : vector<256x64xf32>
    %149 = arith.truncf %148 : vector<256x64xf32> to vector<256x64xbf16>
    %c0_104 = arith.constant 0 : index
    %c0_105 = arith.constant 0 : index
    %150 = vector.load %arg8[%c0_104, %c0_105] : memref<256x64xbf16, #tpu.memory_space<vmem>>, vector<256x64xbf16>
    tpu.vector_store %arg8[%c0_104, %c0_105], %149 {strides = array<i32>} : memref<256x64xbf16, #tpu.memory_space<vmem>>, vector<256x64xbf16>,
    return
  }
  func.func @transform_0(%arg0: i32) -> (i32, i32) {
    %c0_i32 = arith.constant 0 : i32
    %c0_i32_0 = arith.constant 0 : i32
    return %arg0, %c0_i32 : i32, i32
  }
  func.func @transform_1(%arg0: i32) -> (i32, i32) {
    %c0_i32 = arith.constant 0 : i32
    %c0_i32_0 = arith.constant 0 : i32
    %c0_i32_1 = arith.constant 0 : i32
    return %c0_i32, %c0_i32_0 : i32, i32
  }
  func.func @transform_2(%arg0: i32) -> (i32, i32) {
    %c0_i32 = arith.constant 0 : i32
    %c0_i32_0 = arith.constant 0 : i32
    %c0_i32_1 = arith.constant 0 : i32
    return %c0_i32, %c0_i32_0 : i32, i32
  }
  func.func @transform_3(%arg0: i32) -> (i32, i32) {
    %c0_i32 = arith.constant 0 : i32
    %c0_i32_0 = arith.constant 0 : i32
    %c0_i32_1 = arith.constant 0 : i32
    return %c0_i32, %c0_i32_0 : i32, i32
  }
  func.func @transform_4(%arg0: i32) -> (i32, i32) {
    %c0_i32 = arith.constant 0 : i32
    %c0_i32_0 = arith.constant 0 : i32
    %c0_i32_1 = arith.constant 0 : i32
    return %c0_i32, %c0_i32_0 : i32, i32
  }
  func.func @transform_5(%arg0: i32) -> (i32, i32) {
    %c0_i32 = arith.constant 0 : i32
    %c0_i32_0 = arith.constant 0 : i32
    %c0_i32_1 = arith.constant 0 : i32
    return %c0_i32, %c0_i32_0 : i32, i32
  }
  func.func @transform_6(%arg0: i32) -> (i32, i32) {
    %c0_i32 = arith.constant 0 : i32
    %c0_i32_0 = arith.constant 0 : i32
    %c0_i32_1 = arith.constant 0 : i32
    return %c0_i32, %c0_i32_0 : i32, i32
  }
  func.func @transform_7(%arg0: i32) -> (i32, i32) {
    %c0_i32 = arith.constant 0 : i32
    %c0_i32_0 = arith.constant 0 : i32
    return %arg0, %c0_i32 : i32, i32
  }
}

</mosaic_0001>

<llo_original>
// kernel: basic_block_forward.1
$region0: #{basic_block_forward.1}
  #allocation0 [shape = 'u32[]', space=smem, size = 0x4, offset = 0x4, fixed_abs, tag = 'smem constant byte address 0x4 - core index']
  #allocation1 [shape = 'u32[72,128]{1,0:T(1,128)}', space=vmem, size = 0x9000, scoped, tag = 'internal scratch']
  #allocation2 [shape = 'f32[304,64]{1,0:T(8,128)}', space=vmem, size = 0x26000, scoped, tag = 'scratch operand']
  #allocation3 [shape = 'bf16[256,576]{1,0:T(8,128)(2,1)}', space=vmem, size = 0x50000, scoped, tag = 'scratch operand']
  #allocation4 [shape = 'f32[304,64]{1,0:T(8,128)}', space=vmem, size = 0x26000, scoped, tag = 'scratch operand']
  #allocation5 [shape = 'bf16[256,576]{1,0:T(8,128)(2,1)}', space=vmem, size = 0x50000, scoped, tag = 'scratch operand']
  %s0 = inlined_call_operand.vmem [shape: bf16[512,64], index: 0, kind: input, shape index: {}]
  %s1 = inlined_call_operand.vmem [shape: bf16[576,64], index: 1, kind: input, shape index: {}]
  %s2 = inlined_call_operand.vmem [shape: f32[1,64], index: 2, kind: input, shape index: {}]
  %s3 = inlined_call_operand.vmem [shape: f32[1,64], index: 3, kind: input, shape index: {}]
  %s4 = inlined_call_operand.vmem [shape: bf16[576,64], index: 4, kind: input, shape index: {}]
  %s5 = inlined_call_operand.vmem [shape: f32[1,64], index: 5, kind: input, shape index: {}]
  %s6 = inlined_call_operand.vmem [shape: f32[1,64], index: 6, kind: input, shape index: {}]
  %s7 = inlined_call_operand.vmem [shape: bf16[512,64], index: 7, kind: output, shape index: {}]
  %s8 = sld [smem:[#allocation0]]
  $region61: #{basic_block_forward.1} parent=0
    _
  %s10 = ssub.s32 1, %s8
  %s11 = scalar_select 0, %s10, %s8
  loop: start=0, step=1, limit=4
  $region2: #{basic_block_forward.1} parent=0 // loop_pre_header
    _
  $region3: #{basic_block_forward.1} parent=0 // loop_header
    %s13 = sphi 0, %s17
    %p14 = scmp.ge.s32.totalorder %s13, 4
    %s23 = sphi 0, %s25
    %s26 = sphi 0, %s23
    %s27 = sphi 0, %s26
    %s43 = sphi 0, %s27
    %s47 = sphi 0, %s47
    %s49 = sphi 0, %s47
    %s50 = sphi 0, %s49
    %s64 = sphi 0, %s50
    %s68 = sphi 0, %s68
    %s70 = sphi 0, %s68
    %s71 = sphi 0, %s70
    %s85 = sphi 0, %s71
    %s89 = sphi 0, %s89
    %s91 = sphi 0, %s89
    %s92 = sphi 0, %s91
    %s106 = sphi 0, %s92
    %s110 = sphi 0, %s110
    %s112 = sphi 0, %s110
    %s113 = sphi 0, %s112
    %s127 = sphi 0, %s113
    %s131 = sphi 0, %s131
    %s133 = sphi 0, %s131
    %s134 = sphi 0, %s133
    %s148 = sphi 0, %s134
    %s152 = sphi 0, %s152
    %s154 = sphi 0, %s152
    %s155 = sphi 0, %s154
    %s169 = sphi 0, %s155
    %s175 = sphi 0, %s177
    %s178 = sphi 0, %s175
    %s179 = sphi 0, %s178
    %s195 = sphi 0, %s179
  $region4: #{basic_block_forward.1} parent=0 // loop_header_branch
    %16 = sbr.rel (%p14) target = $region8
  $region5: #{basic_block_forward.1} parent=0 // loop_body
    %s18 = ssub.s32 %s13, 1
    %s19 = ssub.s32 %s13, 2
    %s20 = sadd.s32 %s13, 1
    %s21 = ssub.s32 %s13, %s20
    %p22 = scmp.eq.s32.totalorder %s21, 0
    %s24 = sadd.s32 %s23, 1
    %s25 = scalar_select %p22, %s23, %s24
    %p28 = pneg %p22
    %p29 = scmp.eq.s32.totalorder %s13, 1
    %p30 = por %p28, %p29
    %p31 = scmp.ne.s32.totalorder %s23, %s26
    %p32 = scmp.eq.s32.totalorder %s13, 0
    %p33 = por %p31, %p32
    %p34 = scmp.ne.s32.totalorder %s23, %s26
    %p35 = scmp.eq.s32.totalorder %s18, 1
    %p36 = por %p34, %p35
    %p37 = scmp.ne.s32.totalorder %s26, %s27
    %p38 = scmp.eq.s32.totalorder %s18, 0
    %p39 = por %p37, %p38
    %p40 = scmp.ne.s32.totalorder %s26, %s27
    %p41 = scmp.eq.s32.totalorder %s19, 1
    %p42 = por %p40, %p41
    %p44 = scmp.ne.s32.totalorder %s27, %s43
    %p45 = scmp.eq.s32.totalorder %s19, 0
    %p46 = por %p44, %p45
    %s48 = sadd.s32 %s47, 1
    %p51 = scmp.eq.s32.totalorder %s13, 1
    %p52 = scmp.ne.s32.totalorder %s47, %s49
    %p53 = scmp.eq.s32.totalorder %s13, 0
    %p54 = por %p52, %p53
    %p55 = scmp.ne.s32.totalorder %s47, %s49
    %p56 = scmp.eq.s32.totalorder %s18, 1
    %p57 = por %p55, %p56
    %p58 = scmp.ne.s32.totalorder %s49, %s50
    %p59 = scmp.eq.s32.totalorder %s18, 0
    %p60 = por %p58, %p59
    %p61 = scmp.ne.s32.totalorder %s49, %s50
    %p62 = scmp.eq.s32.totalorder %s19, 1
    %p63 = por %p61, %p62
    %p65 = scmp.ne.s32.totalorder %s50, %s64
    %p66 = scmp.eq.s32.totalorder %s19, 0
    %p67 = por %p65, %p66
    %s69 = sadd.s32 %s68, 1
    %p72 = scmp.eq.s32.totalorder %s13, 1
    %p73 = scmp.ne.s32.totalorder %s68, %s70
    %p74 = scmp.eq.s32.totalorder %s13, 0
    %p75 = por %p73, %p74
    %p76 = scmp.ne.s32.totalorder %s68, %s70
    %p77 = scmp.eq.s32.totalorder %s18, 1
    %p78 = por %p76, %p77
    %p79 = scmp.ne.s32.totalorder %s70, %s71
    %p80 = scmp.eq.s32.totalorder %s18, 0
    %p81 = por %p79, %p80
    %p82 = scmp.ne.s32.totalorder %s70, %s71
    %p83 = scmp.eq.s32.totalorder %s19, 1
    %p84 = por %p82, %p83
    %p86 = scmp.ne.s32.totalorder %s71, %s85
    %p87 = scmp.eq.s32.totalorder %s19, 0
    %p88 = por %p86, %p87
    %s90 = sadd.s32 %s89, 1
    %p93 = scmp.eq.s32.totalorder %s13, 1
    %p94 = scmp.ne.s32.totalorder %s89, %s91
    %p95 = scmp.eq.s32.totalorder %s13, 0
    %p96 = por %p94, %p95
    %p97 = scmp.ne.s32.totalorder %s89, %s91
    %p98 = scmp.eq.s32.totalorder %s18, 1
    %p99 = por %p97, %p98
    %p100 = scmp.ne.s32.totalorder %s91, %s92
    %p101 = scmp.eq.s32.totalorder %s18, 0
    %p102 = por %p100, %p101
    %p103 = scmp.ne.s32.totalorder %s91, %s92
    %p104 = scmp.eq.s32.totalorder %s19, 1
    %p105 = por %p103, %p104
    %p107 = scmp.ne.s32.totalorder %s92, %s106
    %p108 = scmp.eq.s32.totalorder %s19, 0
    %p109 = por %p107, %p108
    %s111 = sadd.s32 %s110, 1
    %p114 = scmp.eq.s32.totalorder %s13, 1
    %p115 = scmp.ne.s32.totalorder %s110, %s112
    %p116 = scmp.eq.s32.totalorder %s13, 0
    %p117 = por %p115, %p116
    %p118 = scmp.ne.s32.totalorder %s110, %s112
    %p119 = scmp.eq.s32.totalorder %s18, 1
    %p120 = por %p118, %p119
    %p121 = scmp.ne.s32.totalorder %s112, %s113
    %p122 = scmp.eq.s32.totalorder %s18, 0
    %p123 = por %p121, %p122
    %p124 = scmp.ne.s32.totalorder %s112, %s113
    %p125 = scmp.eq.s32.totalorder %s19, 1
    %p126 = por %p124, %p125
    %p128 = scmp.ne.s32.totalorder %s113, %s127
    %p129 = scmp.eq.s32.totalorder %s19, 0
    %p130 = por %p128, %p129
    %s132 = sadd.s32 %s131, 1
    %p135 = scmp.eq.s32.totalorder %s13, 1
    %p136 = scmp.ne.s32.totalorder %s131, %s133
    %p137 = scmp.eq.s32.totalorder %s13, 0
    %p138 = por %p136, %p137
    %p139 = scmp.ne.s32.totalorder %s131, %s133
    %p140 = scmp.eq.s32.totalorder %s18, 1
    %p141 = por %p139, %p140
    %p142 = scmp.ne.s32.totalorder %s133, %s134
    %p143 = scmp.eq.s32.totalorder %s18, 0
    %p144 = por %p142, %p143
    %p145 = scmp.ne.s32.totalorder %s133, %s134
    %p146 = scmp.eq.s32.totalorder %s19, 1
    %p147 = por %p145, %p146
    %p149 = scmp.ne.s32.totalorder %s134, %s148
    %p150 = scmp.eq.s32.totalorder %s19, 0
    %p151 = por %p149, %p150
    %s153 = sadd.s32 %s152, 1
    %p156 = scmp.eq.s32.totalorder %s13, 1
    %p157 = scmp.ne.s32.totalorder %s152, %s154
    %p158 = scmp.eq.s32.totalorder %s13, 0
    %p159 = por %p157, %p158
    %p160 = scmp.ne.s32.totalorder %s152, %s154
    %p161 = scmp.eq.s32.totalorder %s18, 1
    %p162 = por %p160, %p161
    %p163 = scmp.ne.s32.totalorder %s154, %s155
    %p164 = scmp.eq.s32.totalorder %s18, 0
    %p165 = por %p163, %p164
    %p166 = scmp.ne.s32.totalorder %s154, %s155
    %p167 = scmp.eq.s32.totalorder %s19, 1
    %p168 = por %p166, %p167
    %p170 = scmp.ne.s32.totalorder %s155, %s169
    %p171 = scmp.eq.s32.totalorder %s19, 0
    %p172 = por %p170, %p171
    %s173 = ssub.s32 %s13, %s20
    %p174 = scmp.eq.s32.totalorder %s173, 0
    %s176 = sadd.s32 %s175, 1
    %s177 = scalar_select %p174, %s175, %s176
    %p180 = pneg %p174
    %p181 = scmp.eq.s32.totalorder %s13, 1
    %p182 = por %p180, %p181
    %p183 = scmp.ne.s32.totalorder %s175, %s178
    %p184 = scmp.eq.s32.totalorder %s13, 0
    %p185 = por %p183, %p184
    %p186 = scmp.ne.s32.totalorder %s175, %s178
    %p187 = scmp.eq.s32.totalorder %s18, 1
    %p188 = por %p186, %p187
    %p189 = scmp.ne.s32.totalorder %s178, %s179
    %p190 = scmp.eq.s32.totalorder %s18, 0
    %p191 = por %p189, %p190
    %p192 = scmp.ne.s32.totalorder %s178, %s179
    %p193 = scmp.eq.s32.totalorder %s19, 1
    %p194 = por %p192, %p193
    %p196 = scmp.ne.s32.totalorder %s179, %s195
    %p197 = scmp.eq.s32.totalorder %s19, 0
    %p198 = por %p196, %p197
    %p199 = scmp.le.s32.totalorder 1, %s13
    %p200 = scmp.lt.s32.totalorder %s13, 3
    %p201 = pnand %p199, %p200
    %p202 = pneg %p201
    // Predicated region
    $region9: #{basic_block_forward.1} parent=5 // pred_check
      _
    $region10: #{basic_block_forward.1} parent=5 // pred_check_branch
      %204 = sbr.rel (%p201) target = $region12
    $region11: #{basic_block_forward.1} parent=5 // pred_region
      %s205 = ssub.s32 %s13, 1
      // Predicated region
      $region13: #{basic_block_forward.1} parent=11 // pred_check
        %p206 = pneg %p60
      $region14: #{basic_block_forward.1} parent=11 // pred_check_branch
        %208 = sbr.rel (%p206) target = $region16
      $region15: #{basic_block_forward.1} parent=11 // pred_region
        _
      $region16: #{basic_block_forward.1} parent=11 // pred_fallthru
        _
      // Predicated region
      $region17: #{basic_block_forward.1} parent=11 // pred_check
        %p209 = pneg %p81
      $region18: #{basic_block_forward.1} parent=11 // pred_check_branch
        %211 = sbr.rel (%p209) target = $region20
      $region19: #{basic_block_forward.1} parent=11 // pred_region
        _
      $region20: #{basic_block_forward.1} parent=11 // pred_fallthru
        _
      // Predicated region
      $region21: #{basic_block_forward.1} parent=11 // pred_check
        %p212 = pneg %p102
      $region22: #{basic_block_forward.1} parent=11 // pred_check_branch
        %214 = sbr.rel (%p212) target = $region24
      $region23: #{basic_block_forward.1} parent=11 // pred_region
        _
      $region24: #{basic_block_forward.1} parent=11 // pred_fallthru
        _
      // Predicated region
      $region25: #{basic_block_forward.1} parent=11 // pred_check
        %p215 = pneg %p123
      $region26: #{basic_block_forward.1} parent=11 // pred_check_branch
        %217 = sbr.rel (%p215) target = $region28
      $region27: #{basic_block_forward.1} parent=11 // pred_region
        _
      $region28: #{basic_block_forward.1} parent=11 // pred_fallthru
        _
      // Predicated region
      $region29: #{basic_block_forward.1} parent=11 // pred_check
        %p218 = pneg %p144
      $region30: #{basic_block_forward.1} parent=11 // pred_check_branch
        %220 = sbr.rel (%p218) target = $region32
      $region31: #{basic_block_forward.1} parent=11 // pred_region
        _
      $region32: #{basic_block_forward.1} parent=11 // pred_fallthru
        _
      // Predicated region
      $region33: #{basic_block_forward.1} parent=11 // pred_check
        %p221 = pneg %p165
      $region34: #{basic_block_forward.1} parent=11 // pred_check_branch
        %223 = sbr.rel (%p221) target = $region36
      $region35: #{basic_block_forward.1} parent=11 // pred_region
        _
      $region36: #{basic_block_forward.1} parent=11 // pred_fallthru
        _
    $region12: #{basic_block_forward.1} parent=5 // pred_fallthru
      _
    %p224 = scmp.lt.s32.totalorder %s13, 2
    // Predicated region
    $region37: #{basic_block_forward.1} parent=5 // pred_check
      %p225 = pneg %p224
    $region38: #{basic_block_forward.1} parent=5 // pred_check_branch
      %227 = sbr.rel (%p225) target = $region40
    $region39: #{basic_block_forward.1} parent=5 // pred_region
      // Predicated region
      $region41: #{basic_block_forward.1} parent=39 // pred_check
        %p228 = pneg %p33
      $region42: #{basic_block_forward.1} parent=39 // pred_check_branch
        %230 = sbr.rel (%p228) target = $region44
      $region43: #{basic_block_forward.1} parent=39 // pred_region
        %s231 = smul.u32 32, %s13
        %p232 = scmp.lt.s32.totalorder %s231, 63
        %s233 = scalar_select %p232, %s231, 63
        %s234 = smul.addr %s233, 4
        %s235 = scalar_lea.vmem %s0, %s234
        %s236 = smul.u32 32, %s13
      $region44: #{basic_block_forward.1} parent=39 // pred_fallthru
        _
    $region40: #{basic_block_forward.1} parent=5 // pred_fallthru
      _
    %p237 = scmp.le.s32.totalorder 1, %s13
    %p238 = scmp.lt.s32.totalorder %s13, 3
    %p239 = pnand %p237, %p238
    %p240 = pneg %p239
    // Predicated region
    $region45: #{basic_block_forward.1} parent=5 // pred_check
      _
    $region46: #{basic_block_forward.1} parent=5 // pred_check_branch
      %242 = sbr.rel (%p239) target = $region48
    $region47: #{basic_block_forward.1} parent=5 // pred_region
      %s243 = ssub.s32 %s13, 1
      %s244 = smul.u32 32, %s18
      %p245 = scmp.lt.s32.totalorder %s244, 63
      %s246 = scalar_select %p245, %s244, 63
      %s247 = smul.addr %s246, 4
      %s248 = scalar_lea.vmem %s0, %s247
      %p249 = pneg %p39
      %p250 = pneg %p36
      %p251 = pneg %p60
      %p252 = pneg %p57
      %p253 = pneg %p81
      %p254 = pneg %p78
      %p255 = pneg %p102
      %p256 = pneg %p99
      %p257 = pneg %p123
      %p258 = pneg %p120
      %p259 = pneg %p144
      %p260 = pneg %p141
      %p261 = pneg %p165
      %p262 = pneg %p162
      %p263 = pneg %p191
      %p264 = pneg %p188
      %s265 = smul.u32 32, %s18
      %p266 = scmp.lt.s32.totalorder %s265, 63
      %s267 = scalar_select %p266, %s265, 63
      %s268 = smul.addr %s267, 4
      %s269 = scalar_lea.vmem %s7, %s268
      %s270 = smul.u32 32, %s18
      %p271 = scmp.lt.s32.totalorder %s270, 63
      %s272 = scalar_select %p271, %s270, 63
      %s273 = smul.addr %s272, 4
      %s274 = scalar_lea.vmem %s0, %s273
      %s275 = smul.u32 32, %s18
      %s276 = smul.u32 32, %s18
      %p277 = scmp.lt.s32.totalorder %s276, 63
      %s278 = scalar_select %p277, %s276, 63
      %s279 = smul.addr %s278, 4
      %s280 = scalar_lea.vmem %s7, %s279
      %s281 = smul.u32 32, %s18
      %v283 = vld [vmem:[%s274] sm:$0xf]
      %v284 = vld [vmem:[%s274 + $0x4] sm:$0xf]
      %v285 = vld [vmem:[%s274 + $0x8] sm:$0xf]
      %v286 = vld [vmem:[%s274 + $0xc] sm:$0xf]
      %v287 = vld [vmem:[%s274 + $0x10] sm:$0xf]
      %v288 = vld [vmem:[%s274 + $0x14] sm:$0xf]
      %v289 = vld [vmem:[%s274 + $0x18] sm:$0xf]
      %v290 = vld [vmem:[%s274 + $0x1c] sm:$0xf]
      %v291 = vld [vmem:[%s274 + $0x20] sm:$0xf]
      %v292 = vld [vmem:[%s274 + $0x24] sm:$0xf]
      %v293 = vld [vmem:[%s274 + $0x28] sm:$0xf]
      %v294 = vld [vmem:[%s274 + $0x2c] sm:$0xf]
      %v295 = vld [vmem:[%s274 + $0x30] sm:$0xf]
      %v296 = vld [vmem:[%s274 + $0x34] sm:$0xf]
      %v297 = vld [vmem:[%s274 + $0x38] sm:$0xf]
      %v298 = vld [vmem:[%s274 + $0x3c] sm:$0xf]
      %v299 = vld [vmem:[%s274 + $0x40] sm:$0xf]
      %v300 = vld [vmem:[%s274 + $0x44] sm:$0xf]
      %v301 = vld [vmem:[%s274 + $0x48] sm:$0xf]
      %v302 = vld [vmem:[%s274 + $0x4c] sm:$0xf]
      %v303 = vld [vmem:[%s274 + $0x50] sm:$0xf]
      %v304 = vld [vmem:[%s274 + $0x54] sm:$0xf]
      %v305 = vld [vmem:[%s274 + $0x58] sm:$0xf]
      %v306 = vld [vmem:[%s274 + $0x5c] sm:$0xf]
      %v307 = vld [vmem:[%s274 + $0x60] sm:$0xf]
      %v308 = vld [vmem:[%s274 + $0x64] sm:$0xf]
      %v309 = vld [vmem:[%s274 + $0x68] sm:$0xf]
      %v310 = vld [vmem:[%s274 + $0x6c] sm:$0xf]
      %v311 = vld [vmem:[%s274 + $0x70] sm:$0xf]
      %v312 = vld [vmem:[%s274 + $0x74] sm:$0xf]
      %v313 = vld [vmem:[%s274 + $0x78] sm:$0xf]
      %v314 = vld [vmem:[%s274 + $0x7c] sm:$0xf]
      %v315 = vunpack.c.l.bf16 %v283
      %v316 = vunpack.c.l.bf16 %v284
      %v317 = vunpack.c.l.bf16 %v285
      %v318 = vunpack.c.l.bf16 %v286
      %v319 = vunpack.c.l.bf16 %v287
      %v320 = vunpack.c.l.bf16 %v288
      %v321 = vunpack.c.l.bf16 %v289
      %v322 = vunpack.c.l.bf16 %v290
      %v323 = vunpack.c.l.bf16 %v291
      %v324 = vunpack.c.l.bf16 %v292
      %v325 = vunpack.c.l.bf16 %v293
      %v326 = vunpack.c.l.bf16 %v294
      %v327 = vunpack.c.l.bf16 %v295
      %v328 = vunpack.c.l.bf16 %v296
      %v329 = vunpack.c.l.bf16 %v297
      %v330 = vunpack.c.l.bf16 %v298
      %v331 = vunpack.c.l.bf16 %v299
      %v332 = vunpack.c.l.bf16 %v300
      %v333 = vunpack.c.l.bf16 %v301
      %v334 = vunpack.c.l.bf16 %v302
      %v335 = vunpack.c.l.bf16 %v303
      %v336 = vunpack.c.l.bf16 %v304
      %v337 = vunpack.c.l.bf16 %v305
      %v338 = vunpack.c.l.bf16 %v306
      %v339 = vunpack.c.l.bf16 %v307
      %v340 = vunpack.c.l.bf16 %v308
      %v341 = vunpack.c.l.bf16 %v309
      %v342 = vunpack.c.l.bf16 %v310
      %v343 = vunpack.c.l.bf16 %v311
      %v344 = vunpack.c.l.bf16 %v312
      %v345 = vunpack.c.l.bf16 %v313
      %v346 = vunpack.c.l.bf16 %v314
      %vm347 = vcmask 523264
      %348 = vst.msk [vmem:[#allocation2 + $0x18] sm:$0xff] %vm347, %v315
      %349 = vst.msk [vmem:[#allocation2 + $0x20] sm:$0xff] %vm347, %v316
      %350 = vst.msk [vmem:[#allocation2 + $0x28] sm:$0xff] %vm347, %v317
      %351 = vst.msk [vmem:[#allocation2 + $0x30] sm:$0xff] %vm347, %v318
      %352 = vst.msk [vmem:[#allocation2 + $0x38] sm:$0xff] %vm347, %v319
      %353 = vst.msk [vmem:[#allocation2 + $0x40] sm:$0xff] %vm347, %v320
      %354 = vst.msk [vmem:[#allocation2 + $0x48] sm:$0xff] %vm347, %v321
      %355 = vst.msk [vmem:[#allocation2 + $0x50] sm:$0xff] %vm347, %v322
      %356 = vst.msk [vmem:[#allocation2 + $0x58] sm:$0xff] %vm347, %v323
      %357 = vst.msk [vmem:[#allocation2 + $0x60] sm:$0xff] %vm347, %v324
      %358 = vst.msk [vmem:[#allocation2 + $0x68] sm:$0xff] %vm347, %v325
      %359 = vst.msk [vmem:[#allocation2 + $0x70] sm:$0xff] %vm347, %v326
      %360 = vst.msk [vmem:[#allocation2 + $0x78] sm:$0xff] %vm347, %v327
      %361 = vst.msk [vmem:[#allocation2 + $0x80] sm:$0xff] %vm347, %v328
      %362 = vst.msk [vmem:[#allocation2 + $0x88] sm:$0xff] %vm347, %v329
      %363 = vst.msk [vmem:[#allocation2 + $0x90] sm:$0xff] %vm347, %v330
      %364 = vst.msk [vmem:[#allocation2 + $0x98] sm:$0xff] %vm347, %v331
      %365 = vst.msk [vmem:[#allocation2 + $0xa0] sm:$0xff] %vm347, %v332
      %366 = vst.msk [vmem:[#allocation2 + $0xa8] sm:$0xff] %vm347, %v333
      %367 = vst.msk [vmem:[#allocation2 + $0xb0] sm:$0xff] %vm347, %v334
      %368 = vst.msk [vmem:[#allocation2 + $0xb8] sm:$0xff] %vm347, %v335
      %369 = vst.msk [vmem:[#allocation2 + $0xc0] sm:$0xff] %vm347, %v336
      %370 = vst.msk [vmem:[#allocation2 + $0xc8] sm:$0xff] %vm347, %v337
      %371 = vst.msk [vmem:[#allocation2 + $0xd0] sm:$0xff] %vm347, %v338
      %372 = vst.msk [vmem:[#allocation2 + $0xd8] sm:$0xff] %vm347, %v339
      %373 = vst.msk [vmem:[#allocation2 + $0xe0] sm:$0xff] %vm347, %v340
      %374 = vst.msk [vmem:[#allocation2 + $0xe8] sm:$0xff] %vm347, %v341
      %375 = vst.msk [vmem:[#allocation2 + $0xf0] sm:$0xff] %vm347, %v342
      %376 = vst.msk [vmem:[#allocation2 + $0xf8] sm:$0xff] %vm347, %v343
      %377 = vst.msk [vmem:[#allocation2 + $0x100] sm:$0xff] %vm347, %v344
      %378 = vst.msk [vmem:[#allocation2 + $0x108] sm:$0xff] %vm347, %v345
      %379 = vst.msk [vmem:[#allocation2 + $0x110] sm:$0xff] %vm347, %v346
      %v380 = vlaneseq
      %v381 = vshrl.u32 %v380, 7
      %v382 = vadd.s32 %v381, 8
      %v383 = vadd.s32 %v381, 16
      %v384 = vadd.s32 %v381, 24
      %v385 = vadd.s32 %v381, 32
      %v386 = vadd.s32 %v381, 40
      %v387 = vadd.s32 %v381, 48
      %v388 = vadd.s32 %v381, 56
      %v389 = vadd.s32 %v381, 64
      %v390 = vadd.s32 %v381, 72
      %v391 = vadd.s32 %v381, 80
      %v392 = vadd.s32 %v381, 88
      %v393 = vadd.s32 %v381, 96
      %v394 = vadd.s32 %v381, 104
      %v395 = vadd.s32 %v381, 112
      %v396 = vadd.s32 %v381, 120
      %v397 = vadd.s32 %v381, 128
      %v398 = vadd.s32 %v381, 136
      %v399 = vadd.s32 %v381, 144
      %v400 = vadd.s32 %v381, 152
      %v401 = vadd.s32 %v381, 160
      %v402 = vadd.s32 %v381, 168
      %v403 = vadd.s32 %v381, 176
      %v404 = vadd.s32 %v381, 184
      %v405 = vadd.s32 %v381, 192
      %v406 = vadd.s32 %v381, 200
      %v407 = vadd.s32 %v381, 208
      %v408 = vadd.s32 %v381, 216
      %v409 = vadd.s32 %v381, 224
      %v410 = vadd.s32 %v381, 232
      %v411 = vadd.s32 %v381, 240
      %v412 = vadd.s32 %v381, 248
      %v413 = vand.u32 %v381, 255
      %v414 = vand.u32 %v382, 255
      %v415 = vand.u32 %v383, 255
      %v416 = vand.u32 %v384, 255
      %v417 = vand.u32 %v385, 255
      %v418 = vand.u32 %v386, 255
      %v419 = vand.u32 %v387, 255
      %v420 = vand.u32 %v388, 255
      %v421 = vand.u32 %v389, 255
      %v422 = vand.u32 %v390, 255
      %v423 = vand.u32 %v391, 255
      %v424 = vand.u32 %v392, 255
      %v425 = vand.u32 %v393, 255
      %v426 = vand.u32 %v394, 255
      %v427 = vand.u32 %v395, 255
      %v428 = vand.u32 %v396, 255
      %v429 = vand.u32 %v397, 255
      %v430 = vand.u32 %v398, 255
      %v431 = vand.u32 %v399, 255
      %v432 = vand.u32 %v400, 255
      %v433 = vand.u32 %v401, 255
      %v434 = vand.u32 %v402, 255
      %v435 = vand.u32 %v403, 255
      %v436 = vand.u32 %v404, 255
      %v437 = vand.u32 %v405, 255
      %v438 = vand.u32 %v406, 255
      %v439 = vand.u32 %v407, 255
      %v440 = vand.u32 %v408, 255
      %v441 = vand.u32 %v409, 255
      %v442 = vand.u32 %v410, 255
      %v443 = vand.u32 %v411, 255
      %v444 = vand.u32 %v412, 255
      %v445 = vand.u32 %v381, 15
      %v446 = vand.u32 %v382, 15
      %v447 = vand.u32 %v383, 15
      %v448 = vand.u32 %v384, 15
      %v449 = vand.u32 %v385, 15
      %v450 = vand.u32 %v386, 15
      %v451 = vand.u32 %v387, 15
      %v452 = vand.u32 %v388, 15
      %v453 = vand.u32 %v389, 15
      %v454 = vand.u32 %v390, 15
      %v455 = vand.u32 %v391, 15
      %v456 = vand.u32 %v392, 15
      %v457 = vand.u32 %v393, 15
      %v458 = vand.u32 %v394, 15
      %v459 = vand.u32 %v395, 15
      %v460 = vand.u32 %v396, 15
      %v461 = vand.u32 %v397, 15
      %v462 = vand.u32 %v398, 15
      %v463 = vand.u32 %v399, 15
      %v464 = vand.u32 %v400, 15
      %v465 = vand.u32 %v401, 15
      %v466 = vand.u32 %v402, 15
      %v467 = vand.u32 %v403, 15
      %v468 = vand.u32 %v404, 15
      %v469 = vand.u32 %v405, 15
      %v470 = vand.u32 %v406, 15
      %v471 = vand.u32 %v407, 15
      %v472 = vand.u32 %v408, 15
      %v473 = vand.u32 %v409, 15
      %v474 = vand.u32 %v410, 15
      %v475 = vand.u32 %v411, 15
      %v476 = vand.u32 %v412, 15
      %vm477 = vcmp.ge.s32.totalorder %v413, 16
      %vm478 = vcmp.ge.s32.totalorder %v414, 16
      %vm479 = vcmp.ge.s32.totalorder %v415, 16
      %vm480 = vcmp.ge.s32.totalorder %v416, 16
      %vm481 = vcmp.ge.s32.totalorder %v417, 16
      %vm482 = vcmp.ge.s32.totalorder %v418, 16
      %vm483 = vcmp.ge.s32.totalorder %v419, 16
      %vm484 = vcmp.ge.s32.totalorder %v420, 16
      %vm485 = vcmp.ge.s32.totalorder %v421, 16
      %vm486 = vcmp.ge.s32.totalorder %v422, 16
      %vm487 = vcmp.ge.s32.totalorder %v423, 16
      %vm488 = vcmp.ge.s32.totalorder %v424, 16
      %vm489 = vcmp.ge.s32.totalorder %v425, 16
      %vm490 = vcmp.ge.s32.totalorder %v426, 16
      %vm491 = vcmp.ge.s32.totalorder %v427, 16
      %vm492 = vcmp.ge.s32.totalorder %v428, 16
      %vm493 = vcmp.ge.s32.totalorder %v429, 16
      %vm494 = vcmp.ge.s32.totalorder %v430, 16
      %vm495 = vcmp.ge.s32.totalorder %v431, 16
      %vm496 = vcmp.ge.s32.totalorder %v432, 16
      %vm497 = vcmp.ge.s32.totalorder %v433, 16
      %vm498 = vcmp.ge.s32.totalorder %v434, 16
      %vm499 = vcmp.ge.s32.totalorder %v435, 16
      %vm500 = vcmp.ge.s32.totalorder %v436, 16
      %vm501 = vcmp.ge.s32.totalorder %v437, 16
      %vm502 = vcmp.ge.s32.totalorder %v438, 16
      %vm503 = vcmp.ge.s32.totalorder %v439, 16
      %vm504 = vcmp.ge.s32.totalorder %v440, 16
      %vm505 = vcmp.ge.s32.totalorder %v441, 16
      %vm506 = vcmp.ge.s32.totalorder %v442, 16
      %vm507 = vcmp.ge.s32.totalorder %v443, 16
      %vm508 = vcmp.ge.s32.totalorder %v444, 16
      %vm509 = vcmp.lt.s32.totalorder %v413, 240
      %vm510 = vcmp.lt.s32.totalorder %v414, 240
      %vm511 = vcmp.lt.s32.totalorder %v415, 240
      %vm512 = vcmp.lt.s32.totalorder %v416, 240
      %vm513 = vcmp.lt.s32.totalorder %v417, 240
      %vm514 = vcmp.lt.s32.totalorder %v418, 240
      %vm515 = vcmp.lt.s32.totalorder %v419, 240
      %vm516 = vcmp.lt.s32.totalorder %v420, 240
      %vm517 = vcmp.lt.s32.totalorder %v421, 240
      %vm518 = vcmp.lt.s32.totalorder %v422, 240
      %vm519 = vcmp.lt.s32.totalorder %v423, 240
      %vm520 = vcmp.lt.s32.totalorder %v424, 240
      %vm521 = vcmp.lt.s32.totalorder %v425, 240
      %vm522 = vcmp.lt.s32.totalorder %v426, 240
      %vm523 = vcmp.lt.s32.totalorder %v427, 240
      %vm524 = vcmp.lt.s32.totalorder %v428, 240
      %vm525 = vcmp.lt.s32.totalorder %v429, 240
      %vm526 = vcmp.lt.s32.totalorder %v430, 240
      %vm527 = vcmp.lt.s32.totalorder %v431, 240
      %vm528 = vcmp.lt.s32.totalorder %v432, 240
      %vm529 = vcmp.lt.s32.totalorder %v433, 240
      %vm530 = vcmp.lt.s32.totalorder %v434, 240
      %vm531 = vcmp.lt.s32.totalorder %v435, 240
      %vm532 = vcmp.lt.s32.totalorder %v436, 240
      %vm533 = vcmp.lt.s32.totalorder %v437, 240
      %vm534 = vcmp.lt.s32.totalorder %v438, 240
      %vm535 = vcmp.lt.s32.totalorder %v439, 240
      %vm536 = vcmp.lt.s32.totalorder %v440, 240
      %vm537 = vcmp.lt.s32.totalorder %v441, 240
      %vm538 = vcmp.lt.s32.totalorder %v442, 240
      %vm539 = vcmp.lt.s32.totalorder %v443, 240
      %vm540 = vcmp.lt.s32.totalorder %v444, 240
      %vm541 = vcmp.ge.s32.totalorder %v445, 1
      %vm542 = vcmp.ge.s32.totalorder %v446, 1
      %vm543 = vcmp.ge.s32.totalorder %v447, 1
      %vm544 = vcmp.ge.s32.totalorder %v448, 1
      %vm545 = vcmp.ge.s32.totalorder %v449, 1
      %vm546 = vcmp.ge.s32.totalorder %v450, 1
      %vm547 = vcmp.ge.s32.totalorder %v451, 1
      %vm548 = vcmp.ge.s32.totalorder %v452, 1
      %vm549 = vcmp.ge.s32.totalorder %v453, 1
      %vm550 = vcmp.ge.s32.totalorder %v454, 1
      %vm551 = vcmp.ge.s32.totalorder %v455, 1
      %vm552 = vcmp.ge.s32.totalorder %v456, 1
      %vm553 = vcmp.ge.s32.totalorder %v457, 1
      %vm554 = vcmp.ge.s32.totalorder %v458, 1
      %vm555 = vcmp.ge.s32.totalorder %v459, 1
      %vm556 = vcmp.ge.s32.totalorder %v460, 1
      %vm557 = vcmp.ge.s32.totalorder %v461, 1
      %vm558 = vcmp.ge.s32.totalorder %v462, 1
      %vm559 = vcmp.ge.s32.totalorder %v463, 1
      %vm560 = vcmp.ge.s32.totalorder %v464, 1
      %vm561 = vcmp.ge.s32.totalorder %v465, 1
      %vm562 = vcmp.ge.s32.totalorder %v466, 1
      %vm563 = vcmp.ge.s32.totalorder %v467, 1
      %vm564 = vcmp.ge.s32.totalorder %v468, 1
      %vm565 = vcmp.ge.s32.totalorder %v469, 1
      %vm566 = vcmp.ge.s32.totalorder %v470, 1
      %vm567 = vcmp.ge.s32.totalorder %v471, 1
      %vm568 = vcmp.ge.s32.totalorder %v472, 1
      %vm569 = vcmp.ge.s32.totalorder %v473, 1
      %vm570 = vcmp.ge.s32.totalorder %v474, 1
      %vm571 = vcmp.ge.s32.totalorder %v475, 1
      %vm572 = vcmp.ge.s32.totalorder %v476, 1
      %vm573 = vcmp.lt.s32.totalorder %v445, 15
      %vm574 = vcmp.lt.s32.totalorder %v446, 15
      %vm575 = vcmp.lt.s32.totalorder %v447, 15
      %vm576 = vcmp.lt.s32.totalorder %v448, 15
      %vm577 = vcmp.lt.s32.totalorder %v449, 15
      %vm578 = vcmp.lt.s32.totalorder %v450, 15
      %vm579 = vcmp.lt.s32.totalorder %v451, 15
      %vm580 = vcmp.lt.s32.totalorder %v452, 15
      %vm581 = vcmp.lt.s32.totalorder %v453, 15
      %vm582 = vcmp.lt.s32.totalorder %v454, 15
      %vm583 = vcmp.lt.s32.totalorder %v455, 15
      %vm584 = vcmp.lt.s32.totalorder %v456, 15
      %vm585 = vcmp.lt.s32.totalorder %v457, 15
      %vm586 = vcmp.lt.s32.totalorder %v458, 15
      %vm587 = vcmp.lt.s32.totalorder %v459, 15
      %vm588 = vcmp.lt.s32.totalorder %v460, 15
      %vm589 = vcmp.lt.s32.totalorder %v461, 15
      %vm590 = vcmp.lt.s32.totalorder %v462, 15
      %vm591 = vcmp.lt.s32.totalorder %v463, 15
      %vm592 = vcmp.lt.s32.totalorder %v464, 15
      %vm593 = vcmp.lt.s32.totalorder %v465, 15
      %vm594 = vcmp.lt.s32.totalorder %v466, 15
      %vm595 = vcmp.lt.s32.totalorder %v467, 15
      %vm596 = vcmp.lt.s32.totalorder %v468, 15
      %vm597 = vcmp.lt.s32.totalorder %v469, 15
      %vm598 = vcmp.lt.s32.totalorder %v470, 15
      %vm599 = vcmp.lt.s32.totalorder %v471, 15
      %vm600 = vcmp.lt.s32.totalorder %v472, 15
      %vm601 = vcmp.lt.s32.totalorder %v473, 15
      %vm602 = vcmp.lt.s32.totalorder %v474, 15
      %vm603 = vcmp.lt.s32.totalorder %v475, 15
      %vm604 = vcmp.lt.s32.totalorder %v476, 15
      %v605 = vld [vmem:[#allocation2 + $0x7] sm:$0xff]
      %v606 = vld [vmem:[#allocation2 + $0xf] sm:$0xff]
      %v607 = vld [vmem:[#allocation2 + $0x17] sm:$0xff]
      %v608 = vld [vmem:[#allocation2 + $0x1f] sm:$0xff]
      %v609 = vld [vmem:[#allocation2 + $0x27] sm:$0xff]
      %v610 = vld [vmem:[#allocation2 + $0x2f] sm:$0xff]
      %v611 = vld [vmem:[#allocation2 + $0x37] sm:$0xff]
      %v612 = vld [vmem:[#allocation2 + $0x3f] sm:$0xff]
      %v613 = vld [vmem:[#allocation2 + $0x47] sm:$0xff]
      %v614 = vld [vmem:[#allocation2 + $0x4f] sm:$0xff]
      %v615 = vld [vmem:[#allocation2 + $0x57] sm:$0xff]
      %v616 = vld [vmem:[#allocation2 + $0x5f] sm:$0xff]
      %v617 = vld [vmem:[#allocation2 + $0x67] sm:$0xff]
      %v618 = vld [vmem:[#allocation2 + $0x6f] sm:$0xff]
      %v619 = vld [vmem:[#allocation2 + $0x77] sm:$0xff]
      %v620 = vld [vmem:[#allocation2 + $0x7f] sm:$0xff]
      %v621 = vld [vmem:[#allocation2 + $0x87] sm:$0xff]
      %v622 = vld [vmem:[#allocation2 + $0x8f] sm:$0xff]
      %v623 = vld [vmem:[#allocation2 + $0x97] sm:$0xff]
      %v624 = vld [vmem:[#allocation2 + $0x9f] sm:$0xff]
      %v625 = vld [vmem:[#allocation2 + $0xa7] sm:$0xff]
      %v626 = vld [vmem:[#allocation2 + $0xaf] sm:$0xff]
      %v627 = vld [vmem:[#allocation2 + $0xb7] sm:$0xff]
      %v628 = vld [vmem:[#allocation2 + $0xbf] sm:$0xff]
      %v629 = vld [vmem:[#allocation2 + $0xc7] sm:$0xff]
      %v630 = vld [vmem:[#allocation2 + $0xcf] sm:$0xff]
      %v631 = vld [vmem:[#allocation2 + $0xd7] sm:$0xff]
      %v632 = vld [vmem:[#allocation2 + $0xdf] sm:$0xff]
      %v633 = vld [vmem:[#allocation2 + $0xe7] sm:$0xff]
      %v634 = vld [vmem:[#allocation2 + $0xef] sm:$0xff]
      %v635 = vld [vmem:[#allocation2 + $0xf7] sm:$0xff]
      %v636 = vld [vmem:[#allocation2 + $0xff] sm:$0xff]
      %vm637 = vmand %vm477, %vm541
      %vm638 = vmand %vm478, %vm542
      %vm639 = vmand %vm479, %vm543
      %vm640 = vmand %vm480, %vm544
      %vm641 = vmand %vm481, %vm545
      %vm642 = vmand %vm482, %vm546
      %vm643 = vmand %vm483, %vm547
      %vm644 = vmand %vm484, %vm548
      %vm645 = vmand %vm485, %vm549
      %vm646 = vmand %vm486, %vm550
      %vm647 = vmand %vm487, %vm551
      %vm648 = vmand %vm488, %vm552
      %vm649 = vmand %vm489, %vm553
      %vm650 = vmand %vm490, %vm554
      %vm651 = vmand %vm491, %vm555
      %vm652 = vmand %vm492, %vm556
      %vm653 = vmand %vm493, %vm557
      %vm654 = vmand %vm494, %vm558
      %vm655 = vmand %vm495, %vm559
      %vm656 = vmand %vm496, %vm560
      %vm657 = vmand %vm497, %vm561
      %vm658 = vmand %vm498, %vm562
      %vm659 = vmand %vm499, %vm563
      %vm660 = vmand %vm500, %vm564
      %vm661 = vmand %vm501, %vm565
      %vm662 = vmand %vm502, %vm566
      %vm663 = vmand %vm503, %vm567
      %vm664 = vmand %vm504, %vm568
      %vm665 = vmand %vm505, %vm569
      %vm666 = vmand %vm506, %vm570
      %vm667 = vmand %vm507, %vm571
      %vm668 = vmand %vm508, %vm572
      %v669 = vsel %vm637, %v605, 0.0
      %v670 = vsel %vm638, %v606, 0.0
      %v671 = vsel %vm639, %v607, 0.0
      %v672 = vsel %vm640, %v608, 0.0
      %v673 = vsel %vm641, %v609, 0.0
      %v674 = vsel %vm642, %v610, 0.0
      %v675 = vsel %vm643, %v611, 0.0
      %v676 = vsel %vm644, %v612, 0.0
      %v677 = vsel %vm645, %v613, 0.0
      %v678 = vsel %vm646, %v614, 0.0
      %v679 = vsel %vm647, %v615, 0.0
      %v680 = vsel %vm648, %v616, 0.0
      %v681 = vsel %vm649, %v617, 0.0
      %v682 = vsel %vm650, %v618, 0.0
      %v683 = vsel %vm651, %v619, 0.0
      %v684 = vsel %vm652, %v620, 0.0
      %v685 = vsel %vm653, %v621, 0.0
      %v686 = vsel %vm654, %v622, 0.0
      %v687 = vsel %vm655, %v623, 0.0
      %v688 = vsel %vm656, %v624, 0.0
      %v689 = vsel %vm657, %v625, 0.0
      %v690 = vsel %vm658, %v626, 0.0
      %v691 = vsel %vm659, %v627, 0.0
      %v692 = vsel %vm660, %v628, 0.0
      %v693 = vsel %vm661, %v629, 0.0
      %v694 = vsel %vm662, %v630, 0.0
      %v695 = vsel %vm663, %v631, 0.0
      %v696 = vsel %vm664, %v632, 0.0
      %v697 = vsel %vm665, %v633, 0.0
      %v698 = vsel %vm666, %v634, 0.0
      %v699 = vsel %vm667, %v635, 0.0
      %v700 = vsel %vm668, %v636, 0.0
      %v701 = vpack.c.bf16 %v669, %v669
      %v702 = vpack.c.bf16 %v670, %v670
      %v703 = vpack.c.bf16 %v671, %v671
      %v704 = vpack.c.bf16 %v672, %v672
      %v705 = vpack.c.bf16 %v673, %v673
      %v706 = vpack.c.bf16 %v674, %v674
      %v707 = vpack.c.bf16 %v675, %v675
      %v708 = vpack.c.bf16 %v676, %v676
      %v709 = vpack.c.bf16 %v677, %v677
      %v710 = vpack.c.bf16 %v678, %v678
      %v711 = vpack.c.bf16 %v679, %v679
      %v712 = vpack.c.bf16 %v680, %v680
      %v713 = vpack.c.bf16 %v681, %v681
      %v714 = vpack.c.bf16 %v682, %v682
      %v715 = vpack.c.bf16 %v683, %v683
      %v716 = vpack.c.bf16 %v684, %v684
      %v717 = vpack.c.bf16 %v685, %v685
      %v718 = vpack.c.bf16 %v686, %v686
      %v719 = vpack.c.bf16 %v687, %v687
      %v720 = vpack.c.bf16 %v688, %v688
      %v721 = vpack.c.bf16 %v689, %v689
      %v722 = vpack.c.bf16 %v690, %v690
      %v723 = vpack.c.bf16 %v691, %v691
      %v724 = vpack.c.bf16 %v692, %v692
      %v725 = vpack.c.bf16 %v693, %v693
      %v726 = vpack.c.bf16 %v694, %v694
      %v727 = vpack.c.bf16 %v695, %v695
      %v728 = vpack.c.bf16 %v696, %v696
      %v729 = vpack.c.bf16 %v697, %v697
      %v730 = vpack.c.bf16 %v698, %v698
      %v731 = vpack.c.bf16 %v699, %v699
      %v732 = vpack.c.bf16 %v700, %v700
      %vm733 = vcmask 519168
      %734 = vst.msk [vmem:[#allocation3] sm:$0xf] %vm733, %v701
      %735 = vst.msk [vmem:[#allocation3 + $0x14] sm:$0xf] %vm733, %v702
      %736 = vst.msk [vmem:[#allocation3 + $0x28] sm:$0xf] %vm733, %v703
      %737 = vst.msk [vmem:[#allocation3 + $0x3c] sm:$0xf] %vm733, %v704
      %738 = vst.msk [vmem:[#allocation3 + $0x50] sm:$0xf] %vm733, %v705
      %739 = vst.msk [vmem:[#allocation3 + $0x64] sm:$0xf] %vm733, %v706
      %740 = vst.msk [vmem:[#allocation3 + $0x78] sm:$0xf] %vm733, %v707
      %741 = vst.msk [vmem:[#allocation3 + $0x8c] sm:$0xf] %vm733, %v708
      %742 = vst.msk [vmem:[#allocation3 + $0xa0] sm:$0xf] %vm733, %v709
      %743 = vst.msk [vmem:[#allocation3 + $0xb4] sm:$0xf] %vm733, %v710
      %744 = vst.msk [vmem:[#allocation3 + $0xc8] sm:$0xf] %vm733, %v711
      %745 = vst.msk [vmem:[#allocation3 + $0xdc] sm:$0xf] %vm733, %v712
      %746 = vst.msk [vmem:[#allocation3 + $0xf0] sm:$0xf] %vm733, %v713
      %747 = vst.msk [vmem:[#allocation3 + $0x104] sm:$0xf] %vm733, %v714
      %748 = vst.msk [vmem:[#allocation3 + $0x118] sm:$0xf] %vm733, %v715
      %749 = vst.msk [vmem:[#allocation3 + $0x12c] sm:$0xf] %vm733, %v716
      %750 = vst.msk [vmem:[#allocation3 + $0x140] sm:$0xf] %vm733, %v717
      %751 = vst.msk [vmem:[#allocation3 + $0x154] sm:$0xf] %vm733, %v718
      %752 = vst.msk [vmem:[#allocation3 + $0x168] sm:$0xf] %vm733, %v719
      %753 = vst.msk [vmem:[#allocation3 + $0x17c] sm:$0xf] %vm733, %v720
      %754 = vst.msk [vmem:[#allocation3 + $0x190] sm:$0xf] %vm733, %v721
      %755 = vst.msk [vmem:[#allocation3 + $0x1a4] sm:$0xf] %vm733, %v722
      %756 = vst.msk [vmem:[#allocation3 + $0x1b8] sm:$0xf] %vm733, %v723
      %757 = vst.msk [vmem:[#allocation3 + $0x1cc] sm:$0xf] %vm733, %v724
      %758 = vst.msk [vmem:[#allocation3 + $0x1e0] sm:$0xf] %vm733, %v725
      %759 = vst.msk [vmem:[#allocation3 + $0x1f4] sm:$0xf] %vm733, %v726
      %760 = vst.msk [vmem:[#allocation3 + $0x208] sm:$0xf] %vm733, %v727
      %761 = vst.msk [vmem:[#allocation3 + $0x21c] sm:$0xf] %vm733, %v728
      %762 = vst.msk [vmem:[#allocation3 + $0x230] sm:$0xf] %vm733, %v729
      %763 = vst.msk [vmem:[#allocation3 + $0x244] sm:$0xf] %vm733, %v730
      %764 = vst.msk [vmem:[#allocation3 + $0x258] sm:$0xf] %vm733, %v731
      %765 = vst.msk [vmem:[#allocation3 + $0x26c] sm:$0xf] %vm733, %v732
      %v766 = vld [vmem:[#allocation2 + $0x8] sm:$0xff]
      %v767 = vld [vmem:[#allocation2 + $0x10] sm:$0xff]
      %v768 = vld [vmem:[#allocation2 + $0x18] sm:$0xff]
      %v769 = vld [vmem:[#allocation2 + $0x20] sm:$0xff]
      %v770 = vld [vmem:[#allocation2 + $0x28] sm:$0xff]
      %v771 = vld [vmem:[#allocation2 + $0x30] sm:$0xff]
      %v772 = vld [vmem:[#allocation2 + $0x38] sm:$0xff]
      %v773 = vld [vmem:[#allocation2 + $0x40] sm:$0xff]
      %v774 = vld [vmem:[#allocation2 + $0x48] sm:$0xff]
      %v775 = vld [vmem:[#allocation2 + $0x50] sm:$0xff]
      %v776 = vld [vmem:[#allocation2 + $0x58] sm:$0xff]
      %v777 = vld [vmem:[#allocation2 + $0x60] sm:$0xff]
      %v778 = vld [vmem:[#allocation2 + $0x68] sm:$0xff]
      %v779 = vld [vmem:[#allocation2 + $0x70] sm:$0xff]
      %v780 = vld [vmem:[#allocation2 + $0x78] sm:$0xff]
      %v781 = vld [vmem:[#allocation2 + $0x80] sm:$0xff]
      %v782 = vld [vmem:[#allocation2 + $0x88] sm:$0xff]
      %v783 = vld [vmem:[#allocation2 + $0x90] sm:$0xff]
      %v784 = vld [vmem:[#allocation2 + $0x98] sm:$0xff]
      %v785 = vld [vmem:[#allocation2 + $0xa0] sm:$0xff]
      %v786 = vld [vmem:[#allocation2 + $0xa8] sm:$0xff]
      %v787 = vld [vmem:[#allocation2 + $0xb0] sm:$0xff]
      %v788 = vld [vmem:[#allocation2 + $0xb8] sm:$0xff]
      %v789 = vld [vmem:[#allocation2 + $0xc0] sm:$0xff]
      %v790 = vld [vmem:[#allocation2 + $0xc8] sm:$0xff]
      %v791 = vld [vmem:[#allocation2 + $0xd0] sm:$0xff]
      %v792 = vld [vmem:[#allocation2 + $0xd8] sm:$0xff]
      %v793 = vld [vmem:[#allocation2 + $0xe0] sm:$0xff]
      %v794 = vld [vmem:[#allocation2 + $0xe8] sm:$0xff]
      %v795 = vld [vmem:[#allocation2 + $0xf0] sm:$0xff]
      %v796 = vld [vmem:[#allocation2 + $0xf8] sm:$0xff]
      %v797 = vld [vmem:[#allocation2 + $0x100] sm:$0xff]
      %v798 = vsel %vm477, %v766, 0.0
      %v799 = vsel %vm478, %v767, 0.0
      %v800 = vsel %vm479, %v768, 0.0
      %v801 = vsel %vm480, %v769, 0.0
      %v802 = vsel %vm481, %v770, 0.0
      %v803 = vsel %vm482, %v771, 0.0
      %v804 = vsel %vm483, %v772, 0.0
      %v805 = vsel %vm484, %v773, 0.0
      %v806 = vsel %vm485, %v774, 0.0
      %v807 = vsel %vm486, %v775, 0.0
      %v808 = vsel %vm487, %v776, 0.0
      %v809 = vsel %vm488, %v777, 0.0
      %v810 = vsel %vm489, %v778, 0.0
      %v811 = vsel %vm490, %v779, 0.0
      %v812 = vsel %vm491, %v780, 0.0
      %v813 = vsel %vm492, %v781, 0.0
      %v814 = vsel %vm493, %v782, 0.0
      %v815 = vsel %vm494, %v783, 0.0
      %v816 = vsel %vm495, %v784, 0.0
      %v817 = vsel %vm496, %v785, 0.0
      %v818 = vsel %vm497, %v786, 0.0
      %v819 = vsel %vm498, %v787, 0.0
      %v820 = vsel %vm499, %v788, 0.0
      %v821 = vsel %vm500, %v789, 0.0
      %v822 = vsel %vm501, %v790, 0.0
      %v823 = vsel %vm502, %v791, 0.0
      %v824 = vsel %vm503, %v792, 0.0
      %v825 = vsel %vm504, %v793, 0.0
      %v826 = vsel %vm505, %v794, 0.0
      %v827 = vsel %vm506, %v795, 0.0
      %v828 = vsel %vm507, %v796, 0.0
      %v829 = vsel %vm508, %v797, 0.0
      %v830 = vpack.c.bf16 %v798, %v798
      %v831 = vpack.c.bf16 %v799, %v799
      %v832 = vpack.c.bf16 %v800, %v800
      %v833 = vpack.c.bf16 %v801, %v801
      %v834 = vpack.c.bf16 %v802, %v802
      %v835 = vpack.c.bf16 %v803, %v803
      %v836 = vpack.c.bf16 %v804, %v804
      %v837 = vpack.c.bf16 %v805, %v805
      %v838 = vpack.c.bf16 %v806, %v806
      %v839 = vpack.c.bf16 %v807, %v807
      %v840 = vpack.c.bf16 %v808, %v808
      %v841 = vpack.c.bf16 %v809, %v809
      %v842 = vpack.c.bf16 %v810, %v810
      %v843 = vpack.c.bf16 %v811, %v811
      %v844 = vpack.c.bf16 %v812, %v812
      %v845 = vpack.c.bf16 %v813, %v813
      %v846 = vpack.c.bf16 %v814, %v814
      %v847 = vpack.c.bf16 %v815, %v815
      %v848 = vpack.c.bf16 %v816, %v816
      %v849 = vpack.c.bf16 %v817, %v817
      %v850 = vpack.c.bf16 %v818, %v818
      %v851 = vpack.c.bf16 %v819, %v819
      %v852 = vpack.c.bf16 %v820, %v820
      %v853 = vpack.c.bf16 %v821, %v821
      %v854 = vpack.c.bf16 %v822, %v822
      %v855 = vpack.c.bf16 %v823, %v823
      %v856 = vpack.c.bf16 %v824, %v824
      %v857 = vpack.c.bf16 %v825, %v825
      %v858 = vpack.c.bf16 %v826, %v826
      %v859 = vpack.c.bf16 %v827, %v827
      %v860 = vpack.c.bf16 %v828, %v828
      %v861 = vpack.c.bf16 %v829, %v829
      %894 = vrot.lane.b32.xlu0 %v830, 64
      %v895 = vpop.permute.xlu0 %894
      %896 = vrot.lane.b32.xlu0 %v831, 64
      %v897 = vpop.permute.xlu0 %896
      %898 = vrot.lane.b32.xlu0 %v832, 64
      %v899 = vpop.permute.xlu0 %898
      %900 = vrot.lane.b32.xlu0 %v833, 64
      %v901 = vpop.permute.xlu0 %900
      %902 = vrot.lane.b32.xlu0 %v834, 64
      %v903 = vpop.permute.xlu0 %902
      %904 = vrot.lane.b32.xlu0 %v835, 64
      %v905 = vpop.permute.xlu0 %904
      %906 = vrot.lane.b32.xlu0 %v836, 64
      %v907 = vpop.permute.xlu0 %906
      %908 = vrot.lane.b32.xlu0 %v837, 64
      %v909 = vpop.permute.xlu0 %908
      %910 = vrot.lane.b32.xlu0 %v838, 64
      %v911 = vpop.permute.xlu0 %910
      %912 = vrot.lane.b32.xlu0 %v839, 64
      %v913 = vpop.permute.xlu0 %912
      %914 = vrot.lane.b32.xlu0 %v840, 64
      %v915 = vpop.permute.xlu0 %914
      %916 = vrot.lane.b32.xlu0 %v841, 64
      %v917 = vpop.permute.xlu0 %916
      %918 = vrot.lane.b32.xlu0 %v842, 64
      %v919 = vpop.permute.xlu0 %918
      %920 = vrot.lane.b32.xlu0 %v843, 64
      %v921 = vpop.permute.xlu0 %920
      %922 = vrot.lane.b32.xlu0 %v844, 64
      %v923 = vpop.permute.xlu0 %922
      %924 = vrot.lane.b32.xlu0 %v845, 64
      %v925 = vpop.permute.xlu0 %924
      %926 = vrot.lane.b32.xlu0 %v846, 64
      %v927 = vpop.permute.xlu0 %926
      %928 = vrot.lane.b32.xlu0 %v847, 64
      %v929 = vpop.permute.xlu0 %928
      %930 = vrot.lane.b32.xlu0 %v848, 64
      %v931 = vpop.permute.xlu0 %930
      %932 = vrot.lane.b32.xlu0 %v849, 64
      %v933 = vpop.permute.xlu0 %932
      %934 = vrot.lane.b32.xlu0 %v850, 64
      %v935 = vpop.permute.xlu0 %934
      %936 = vrot.lane.b32.xlu0 %v851, 64
      %v937 = vpop.permute.xlu0 %936
      %938 = vrot.lane.b32.xlu0 %v852, 64
      %v939 = vpop.permute.xlu0 %938
      %940 = vrot.lane.b32.xlu0 %v853, 64
      %v941 = vpop.permute.xlu0 %940
      %942 = vrot.lane.b32.xlu0 %v854, 64
      %v943 = vpop.permute.xlu0 %942
      %944 = vrot.lane.b32.xlu0 %v855, 64
      %v945 = vpop.permute.xlu0 %944
      %946 = vrot.lane.b32.xlu0 %v856, 64
      %v947 = vpop.permute.xlu0 %946
      %948 = vrot.lane.b32.xlu0 %v857, 64
      %v949 = vpop.permute.xlu0 %948
      %950 = vrot.lane.b32.xlu0 %v858, 64
      %v951 = vpop.permute.xlu0 %950
      %952 = vrot.lane.b32.xlu0 %v859, 64
      %v953 = vpop.permute.xlu0 %952
      %954 = vrot.lane.b32.xlu0 %v860, 64
      %v955 = vpop.permute.xlu0 %954
      %956 = vrot.lane.b32.xlu0 %v861, 64
      %v957 = vpop.permute.xlu0 %956
      %vm990 = vcmask 1043968
      %991 = vst.msk [vmem:[#allocation3] sm:$0xf] %vm990, %v895
      %992 = vst.msk [vmem:[#allocation3 + $0x14] sm:$0xf] %vm990, %v897
      %993 = vst.msk [vmem:[#allocation3 + $0x28] sm:$0xf] %vm990, %v899
      %994 = vst.msk [vmem:[#allocation3 + $0x3c] sm:$0xf] %vm990, %v901
      %995 = vst.msk [vmem:[#allocation3 + $0x50] sm:$0xf] %vm990, %v903
      %996 = vst.msk [vmem:[#allocation3 + $0x64] sm:$0xf] %vm990, %v905
      %997 = vst.msk [vmem:[#allocation3 + $0x78] sm:$0xf] %vm990, %v907
      %998 = vst.msk [vmem:[#allocation3 + $0x8c] sm:$0xf] %vm990, %v909
      %999 = vst.msk [vmem:[#allocation3 + $0xa0] sm:$0xf] %vm990, %v911
      %1000 = vst.msk [vmem:[#allocation3 + $0xb4] sm:$0xf] %vm990, %v913
      %1001 = vst.msk [vmem:[#allocation3 + $0xc8] sm:$0xf] %vm990, %v915
      %1002 = vst.msk [vmem:[#allocation3 + $0xdc] sm:$0xf] %vm990, %v917
      %1003 = vst.msk [vmem:[#allocation3 + $0xf0] sm:$0xf] %vm990, %v919
      %1004 = vst.msk [vmem:[#allocation3 + $0x104] sm:$0xf] %vm990, %v921
      %1005 = vst.msk [vmem:[#allocation3 + $0x118] sm:$0xf] %vm990, %v923
      %1006 = vst.msk [vmem:[#allocation3 + $0x12c] sm:$0xf] %vm990, %v925
      %1007 = vst.msk [vmem:[#allocation3 + $0x140] sm:$0xf] %vm990, %v927
      %1008 = vst.msk [vmem:[#allocation3 + $0x154] sm:$0xf] %vm990, %v929
      %1009 = vst.msk [vmem:[#allocation3 + $0x168] sm:$0xf] %vm990, %v931
      %1010 = vst.msk [vmem:[#allocation3 + $0x17c] sm:$0xf] %vm990, %v933
      %1011 = vst.msk [vmem:[#allocation3 + $0x190] sm:$0xf] %vm990, %v935
      %1012 = vst.msk [vmem:[#allocation3 + $0x1a4] sm:$0xf] %vm990, %v937
      %1013 = vst.msk [vmem:[#allocation3 + $0x1b8] sm:$0xf] %vm990, %v939
      %1014 = vst.msk [vmem:[#allocation3 + $0x1cc] sm:$0xf] %vm990, %v941
      %1015 = vst.msk [vmem:[#allocation3 + $0x1e0] sm:$0xf] %vm990, %v943
      %1016 = vst.msk [vmem:[#allocation3 + $0x1f4] sm:$0xf] %vm990, %v945
      %1017 = vst.msk [vmem:[#allocation3 + $0x208] sm:$0xf] %vm990, %v947
      %1018 = vst.msk [vmem:[#allocation3 + $0x21c] sm:$0xf] %vm990, %v949
      %1019 = vst.msk [vmem:[#allocation3 + $0x230] sm:$0xf] %vm990, %v951
      %1020 = vst.msk [vmem:[#allocation3 + $0x244] sm:$0xf] %vm990, %v953
      %1021 = vst.msk [vmem:[#allocation3 + $0x258] sm:$0xf] %vm990, %v955
      %1022 = vst.msk [vmem:[#allocation3 + $0x26c] sm:$0xf] %vm990, %v957
      %v1023 = vld [vmem:[#allocation2 + $0x9] sm:$0xff]
      %v1024 = vld [vmem:[#allocation2 + $0x11] sm:$0xff]
      %v1025 = vld [vmem:[#allocation2 + $0x19] sm:$0xff]
      %v1026 = vld [vmem:[#allocation2 + $0x21] sm:$0xff]
      %v1027 = vld [vmem:[#allocation2 + $0x29] sm:$0xff]
      %v1028 = vld [vmem:[#allocation2 + $0x31] sm:$0xff]
      %v1029 = vld [vmem:[#allocation2 + $0x39] sm:$0xff]
      %v1030 = vld [vmem:[#allocation2 + $0x41] sm:$0xff]
      %v1031 = vld [vmem:[#allocation2 + $0x49] sm:$0xff]
      %v1032 = vld [vmem:[#allocation2 + $0x51] sm:$0xff]
      %v1033 = vld [vmem:[#allocation2 + $0x59] sm:$0xff]
      %v1034 = vld [vmem:[#allocation2 + $0x61] sm:$0xff]
      %v1035 = vld [vmem:[#allocation2 + $0x69] sm:$0xff]
      %v1036 = vld [vmem:[#allocation2 + $0x71] sm:$0xff]
      %v1037 = vld [vmem:[#allocation2 + $0x79] sm:$0xff]
      %v1038 = vld [vmem:[#allocation2 + $0x81] sm:$0xff]
      %v1039 = vld [vmem:[#allocation2 + $0x89] sm:$0xff]
      %v1040 = vld [vmem:[#allocation2 + $0x91] sm:$0xff]
      %v1041 = vld [vmem:[#allocation2 + $0x99] sm:$0xff]
      %v1042 = vld [vmem:[#allocation2 + $0xa1] sm:$0xff]
      %v1043 = vld [vmem:[#allocation2 + $0xa9] sm:$0xff]
      %v1044 = vld [vmem:[#allocation2 + $0xb1] sm:$0xff]
      %v1045 = vld [vmem:[#allocation2 + $0xb9] sm:$0xff]
      %v1046 = vld [vmem:[#allocation2 + $0xc1] sm:$0xff]
      %v1047 = vld [vmem:[#allocation2 + $0xc9] sm:$0xff]
      %v1048 = vld [vmem:[#allocation2 + $0xd1] sm:$0xff]
      %v1049 = vld [vmem:[#allocation2 + $0xd9] sm:$0xff]
      %v1050 = vld [vmem:[#allocation2 + $0xe1] sm:$0xff]
      %v1051 = vld [vmem:[#allocation2 + $0xe9] sm:$0xff]
      %v1052 = vld [vmem:[#allocation2 + $0xf1] sm:$0xff]
      %v1053 = vld [vmem:[#allocation2 + $0xf9] sm:$0xff]
      %v1054 = vld [vmem:[#allocation2 + $0x101] sm:$0xff]
      %vm1055 = vmand %vm477, %vm573
      %vm1056 = vmand %vm478, %vm574
      %vm1057 = vmand %vm479, %vm575
      %vm1058 = vmand %vm480, %vm576
      %vm1059 = vmand %vm481, %vm577
      %vm1060 = vmand %vm482, %vm578
      %vm1061 = vmand %vm483, %vm579
      %vm1062 = vmand %vm484, %vm580
      %vm1063 = vmand %vm485, %vm581
      %vm1064 = vmand %vm486, %vm582
      %vm1065 = vmand %vm487, %vm583
      %vm1066 = vmand %vm488, %vm584
      %vm1067 = vmand %vm489, %vm585
      %vm1068 = vmand %vm490, %vm586
      %vm1069 = vmand %vm491, %vm587
      %vm1070 = vmand %vm492, %vm588
      %vm1071 = vmand %vm493, %vm589
      %vm1072 = vmand %vm494, %vm590
      %vm1073 = vmand %vm495, %vm591
      %vm1074 = vmand %vm496, %vm592
      %vm1075 = vmand %vm497, %vm593
      %vm1076 = vmand %vm498, %vm594
      %vm1077 = vmand %vm499, %vm595
      %vm1078 = vmand %vm500, %vm596
      %vm1079 = vmand %vm501, %vm597
      %vm1080 = vmand %vm502, %vm598
      %vm1081 = vmand %vm503, %vm599
      %vm1082 = vmand %vm504, %vm600
      %vm1083 = vmand %vm505, %vm601
      %vm1084 = vmand %vm506, %vm602
      %vm1085 = vmand %vm507, %vm603
      %vm1086 = vmand %vm508, %vm604
      %v1087 = vsel %vm1055, %v1023, 0.0
      %v1088 = vsel %vm1056, %v1024, 0.0
      %v1089 = vsel %vm1057, %v1025, 0.0
      %v1090 = vsel %vm1058, %v1026, 0.0
      %v1091 = vsel %vm1059, %v1027, 0.0
      %v1092 = vsel %vm1060, %v1028, 0.0
      %v1093 = vsel %vm1061, %v1029, 0.0
      %v1094 = vsel %vm1062, %v1030, 0.0
      %v1095 = vsel %vm1063, %v1031, 0.0
      %v1096 = vsel %vm1064, %v1032, 0.0
      %v1097 = vsel %vm1065, %v1033, 0.0
      %v1098 = vsel %vm1066, %v1034, 0.0
      %v1099 = vsel %vm1067, %v1035, 0.0
      %v1100 = vsel %vm1068, %v1036, 0.0
      %v1101 = vsel %vm1069, %v1037, 0.0
      %v1102 = vsel %vm1070, %v1038, 0.0
      %v1103 = vsel %vm1071, %v1039, 0.0
      %v1104 = vsel %vm1072, %v1040, 0.0
      %v1105 = vsel %vm1073, %v1041, 0.0
      %v1106 = vsel %vm1074, %v1042, 0.0
      %v1107 = vsel %vm1075, %v1043, 0.0
      %v1108 = vsel %vm1076, %v1044, 0.0
      %v1109 = vsel %vm1077, %v1045, 0.0
      %v1110 = vsel %vm1078, %v1046, 0.0
      %v1111 = vsel %vm1079, %v1047, 0.0
      %v1112 = vsel %vm1080, %v1048, 0.0
      %v1113 = vsel %vm1081, %v1049, 0.0
      %v1114 = vsel %vm1082, %v1050, 0.0
      %v1115 = vsel %vm1083, %v1051, 0.0
      %v1116 = vsel %vm1084, %v1052, 0.0
      %v1117 = vsel %vm1085, %v1053, 0.0
      %v1118 = vsel %vm1086, %v1054, 0.0
      %v1119 = vpack.c.bf16 %v1087, %v1087
      %v1120 = vpack.c.bf16 %v1088, %v1088
      %v1121 = vpack.c.bf16 %v1089, %v1089
      %v1122 = vpack.c.bf16 %v1090, %v1090
      %v1123 = vpack.c.bf16 %v1091, %v1091
      %v1124 = vpack.c.bf16 %v1092, %v1092
      %v1125 = vpack.c.bf16 %v1093, %v1093
      %v1126 = vpack.c.bf16 %v1094, %v1094
      %v1127 = vpack.c.bf16 %v1095, %v1095
      %v1128 = vpack.c.bf16 %v1096, %v1096
      %v1129 = vpack.c.bf16 %v1097, %v1097
      %v1130 = vpack.c.bf16 %v1098, %v1098
      %v1131 = vpack.c.bf16 %v1099, %v1099
      %v1132 = vpack.c.bf16 %v1100, %v1100
      %v1133 = vpack.c.bf16 %v1101, %v1101
      %v1134 = vpack.c.bf16 %v1102, %v1102
      %v1135 = vpack.c.bf16 %v1103, %v1103
      %v1136 = vpack.c.bf16 %v1104, %v1104
      %v1137 = vpack.c.bf16 %v1105, %v1105
      %v1138 = vpack.c.bf16 %v1106, %v1106
      %v1139 = vpack.c.bf16 %v1107, %v1107
      %v1140 = vpack.c.bf16 %v1108, %v1108
      %v1141 = vpack.c.bf16 %v1109, %v1109
      %v1142 = vpack.c.bf16 %v1110, %v1110
      %v1143 = vpack.c.bf16 %v1111, %v1111
      %v1144 = vpack.c.bf16 %v1112, %v1112
      %v1145 = vpack.c.bf16 %v1113, %v1113
      %v1146 = vpack.c.bf16 %v1114, %v1114
      %v1147 = vpack.c.bf16 %v1115, %v1115
      %v1148 = vpack.c.bf16 %v1116, %v1116
      %v1149 = vpack.c.bf16 %v1117, %v1117
      %v1150 = vpack.c.bf16 %v1118, %v1118
      %1151 = vst.msk [vmem:[#allocation3 + $0x4] sm:$0xf] %vm733, %v1119
      %1152 = vst.msk [vmem:[#allocation3 + $0x18] sm:$0xf] %vm733, %v1120
      %1153 = vst.msk [vmem:[#allocation3 + $0x2c] sm:$0xf] %vm733, %v1121
      %1154 = vst.msk [vmem:[#allocation3 + $0x40] sm:$0xf] %vm733, %v1122
      %1155 = vst.msk [vmem:[#allocation3 + $0x54] sm:$0xf] %vm733, %v1123
      %1156 = vst.msk [vmem:[#allocation3 + $0x68] sm:$0xf] %vm733, %v1124
      %1157 = vst.msk [vmem:[#allocation3 + $0x7c] sm:$0xf] %vm733, %v1125
      %1158 = vst.msk [vmem:[#allocation3 + $0x90] sm:$0xf] %vm733, %v1126
      %1159 = vst.msk [vmem:[#allocation3 + $0xa4] sm:$0xf] %vm733, %v1127
      %1160 = vst.msk [vmem:[#allocation3 + $0xb8] sm:$0xf] %vm733, %v1128
      %1161 = vst.msk [vmem:[#allocation3 + $0xcc] sm:$0xf] %vm733, %v1129
      %1162 = vst.msk [vmem:[#allocation3 + $0xe0] sm:$0xf] %vm733, %v1130
      %1163 = vst.msk [vmem:[#allocation3 + $0xf4] sm:$0xf] %vm733, %v1131
      %1164 = vst.msk [vmem:[#allocation3 + $0x108] sm:$0xf] %vm733, %v1132
      %1165 = vst.msk [vmem:[#allocation3 + $0x11c] sm:$0xf] %vm733, %v1133
      %1166 = vst.msk [vmem:[#allocation3 + $0x130] sm:$0xf] %vm733, %v1134
      %1167 = vst.msk [vmem:[#allocation3 + $0x144] sm:$0xf] %vm733, %v1135
      %1168 = vst.msk [vmem:[#allocation3 + $0x158] sm:$0xf] %vm733, %v1136
      %1169 = vst.msk [vmem:[#allocation3 + $0x16c] sm:$0xf] %vm733, %v1137
      %1170 = vst.msk [vmem:[#allocation3 + $0x180] sm:$0xf] %vm733, %v1138
      %1171 = vst.msk [vmem:[#allocation3 + $0x194] sm:$0xf] %vm733, %v1139
      %1172 = vst.msk [vmem:[#allocation3 + $0x1a8] sm:$0xf] %vm733, %v1140
      %1173 = vst.msk [vmem:[#allocation3 + $0x1bc] sm:$0xf] %vm733, %v1141
      %1174 = vst.msk [vmem:[#allocation3 + $0x1d0] sm:$0xf] %vm733, %v1142
      %1175 = vst.msk [vmem:[#allocation3 + $0x1e4] sm:$0xf] %vm733, %v1143
      %1176 = vst.msk [vmem:[#allocation3 + $0x1f8] sm:$0xf] %vm733, %v1144
      %1177 = vst.msk [vmem:[#allocation3 + $0x20c] sm:$0xf] %vm733, %v1145
      %1178 = vst.msk [vmem:[#allocation3 + $0x220] sm:$0xf] %vm733, %v1146
      %1179 = vst.msk [vmem:[#allocation3 + $0x234] sm:$0xf] %vm733, %v1147
      %1180 = vst.msk [vmem:[#allocation3 + $0x248] sm:$0xf] %vm733, %v1148
      %1181 = vst.msk [vmem:[#allocation3 + $0x25c] sm:$0xf] %vm733, %v1149
      %1182 = vst.msk [vmem:[#allocation3 + $0x270] sm:$0xf] %vm733, %v1150
      %v1183 = vld [vmem:[#allocation2 + $0x17] sm:$0xff]
      %v1184 = vld [vmem:[#allocation2 + $0x1f] sm:$0xff]
      %v1185 = vld [vmem:[#allocation2 + $0x27] sm:$0xff]
      %v1186 = vld [vmem:[#allocation2 + $0x2f] sm:$0xff]
      %v1187 = vld [vmem:[#allocation2 + $0x37] sm:$0xff]
      %v1188 = vld [vmem:[#allocation2 + $0x3f] sm:$0xff]
      %v1189 = vld [vmem:[#allocation2 + $0x47] sm:$0xff]
      %v1190 = vld [vmem:[#allocation2 + $0x4f] sm:$0xff]
      %v1191 = vld [vmem:[#allocation2 + $0x57] sm:$0xff]
      %v1192 = vld [vmem:[#allocation2 + $0x5f] sm:$0xff]
      %v1193 = vld [vmem:[#allocation2 + $0x67] sm:$0xff]
      %v1194 = vld [vmem:[#allocation2 + $0x6f] sm:$0xff]
      %v1195 = vld [vmem:[#allocation2 + $0x77] sm:$0xff]
      %v1196 = vld [vmem:[#allocation2 + $0x7f] sm:$0xff]
      %v1197 = vld [vmem:[#allocation2 + $0x87] sm:$0xff]
      %v1198 = vld [vmem:[#allocation2 + $0x8f] sm:$0xff]
      %v1199 = vld [vmem:[#allocation2 + $0x97] sm:$0xff]
      %v1200 = vld [vmem:[#allocation2 + $0x9f] sm:$0xff]
      %v1201 = vld [vmem:[#allocation2 + $0xa7] sm:$0xff]
      %v1202 = vld [vmem:[#allocation2 + $0xaf] sm:$0xff]
      %v1203 = vld [vmem:[#allocation2 + $0xb7] sm:$0xff]
      %v1204 = vld [vmem:[#allocation2 + $0xbf] sm:$0xff]
      %v1205 = vld [vmem:[#allocation2 + $0xc7] sm:$0xff]
      %v1206 = vld [vmem:[#allocation2 + $0xcf] sm:$0xff]
      %v1207 = vld [vmem:[#allocation2 + $0xd7] sm:$0xff]
      %v1208 = vld [vmem:[#allocation2 + $0xdf] sm:$0xff]
      %v1209 = vld [vmem:[#allocation2 + $0xe7] sm:$0xff]
      %v1210 = vld [vmem:[#allocation2 + $0xef] sm:$0xff]
      %v1211 = vld [vmem:[#allocation2 + $0xf7] sm:$0xff]
      %v1212 = vld [vmem:[#allocation2 + $0xff] sm:$0xff]
      %v1213 = vld [vmem:[#allocation2 + $0x107] sm:$0xff]
      %v1214 = vld [vmem:[#allocation2 + $0x10f] sm:$0xff]
      %v1215 = vsel %vm541, %v1183, 0.0
      %v1216 = vsel %vm542, %v1184, 0.0
      %v1217 = vsel %vm543, %v1185, 0.0
      %v1218 = vsel %vm544, %v1186, 0.0
      %v1219 = vsel %vm545, %v1187, 0.0
      %v1220 = vsel %vm546, %v1188, 0.0
      %v1221 = vsel %vm547, %v1189, 0.0
      %v1222 = vsel %vm548, %v1190, 0.0
      %v1223 = vsel %vm549, %v1191, 0.0
      %v1224 = vsel %vm550, %v1192, 0.0
      %v1225 = vsel %vm551, %v1193, 0.0
      %v1226 = vsel %vm552, %v1194, 0.0
      %v1227 = vsel %vm553, %v1195, 0.0
      %v1228 = vsel %vm554, %v1196, 0.0
      %v1229 = vsel %vm555, %v1197, 0.0
      %v1230 = vsel %vm556, %v1198, 0.0
      %v1231 = vsel %vm557, %v1199, 0.0
      %v1232 = vsel %vm558, %v1200, 0.0
      %v1233 = vsel %vm559, %v1201, 0.0
      %v1234 = vsel %vm560, %v1202, 0.0
      %v1235 = vsel %vm561, %v1203, 0.0
      %v1236 = vsel %vm562, %v1204, 0.0
      %v1237 = vsel %vm563, %v1205, 0.0
      %v1238 = vsel %vm564, %v1206, 0.0
      %v1239 = vsel %vm565, %v1207, 0.0
      %v1240 = vsel %vm566, %v1208, 0.0
      %v1241 = vsel %vm567, %v1209, 0.0
      %v1242 = vsel %vm568, %v1210, 0.0
      %v1243 = vsel %vm569, %v1211, 0.0
      %v1244 = vsel %vm570, %v1212, 0.0
      %v1245 = vsel %vm571, %v1213, 0.0
      %v1246 = vsel %vm572, %v1214, 0.0
      %v1247 = vpack.c.bf16 %v1215, %v1215
      %v1248 = vpack.c.bf16 %v1216, %v1216
      %v1249 = vpack.c.bf16 %v1217, %v1217
      %v1250 = vpack.c.bf16 %v1218, %v1218
      %v1251 = vpack.c.bf16 %v1219, %v1219
      %v1252 = vpack.c.bf16 %v1220, %v1220
      %v1253 = vpack.c.bf16 %v1221, %v1221
      %v1254 = vpack.c.bf16 %v1222, %v1222
      %v1255 = vpack.c.bf16 %v1223, %v1223
      %v1256 = vpack.c.bf16 %v1224, %v1224
      %v1257 = vpack.c.bf16 %v1225, %v1225
      %v1258 = vpack.c.bf16 %v1226, %v1226
      %v1259 = vpack.c.bf16 %v1227, %v1227
      %v1260 = vpack.c.bf16 %v1228, %v1228
      %v1261 = vpack.c.bf16 %v1229, %v1229
      %v1262 = vpack.c.bf16 %v1230, %v1230
      %v1263 = vpack.c.bf16 %v1231, %v1231
      %v1264 = vpack.c.bf16 %v1232, %v1232
      %v1265 = vpack.c.bf16 %v1233, %v1233
      %v1266 = vpack.c.bf16 %v1234, %v1234
      %v1267 = vpack.c.bf16 %v1235, %v1235
      %v1268 = vpack.c.bf16 %v1236, %v1236
      %v1269 = vpack.c.bf16 %v1237, %v1237
      %v1270 = vpack.c.bf16 %v1238, %v1238
      %v1271 = vpack.c.bf16 %v1239, %v1239
      %v1272 = vpack.c.bf16 %v1240, %v1240
      %v1273 = vpack.c.bf16 %v1241, %v1241
      %v1274 = vpack.c.bf16 %v1242, %v1242
      %v1275 = vpack.c.bf16 %v1243, %v1243
      %v1276 = vpack.c.bf16 %v1244, %v1244
      %v1277 = vpack.c.bf16 %v1245, %v1245
      %v1278 = vpack.c.bf16 %v1246, %v1246
      %1311 = vrot.lane.b32.xlu0 %v1247, 64
      %v1312 = vpop.permute.xlu0 %1311
      %1313 = vrot.lane.b32.xlu0 %v1248, 64
      %v1314 = vpop.permute.xlu0 %1313
      %1315 = vrot.lane.b32.xlu0 %v1249, 64
      %v1316 = vpop.permute.xlu0 %1315
      %1317 = vrot.lane.b32.xlu0 %v1250, 64
      %v1318 = vpop.permute.xlu0 %1317
      %1319 = vrot.lane.b32.xlu0 %v1251, 64
      %v1320 = vpop.permute.xlu0 %1319
      %1321 = vrot.lane.b32.xlu0 %v1252, 64
      %v1322 = vpop.permute.xlu0 %1321
      %1323 = vrot.lane.b32.xlu0 %v1253, 64
      %v1324 = vpop.permute.xlu0 %1323
      %1325 = vrot.lane.b32.xlu0 %v1254, 64
      %v1326 = vpop.permute.xlu0 %1325
      %1327 = vrot.lane.b32.xlu0 %v1255, 64
      %v1328 = vpop.permute.xlu0 %1327
      %1329 = vrot.lane.b32.xlu0 %v1256, 64
      %v1330 = vpop.permute.xlu0 %1329
      %1331 = vrot.lane.b32.xlu0 %v1257, 64
      %v1332 = vpop.permute.xlu0 %1331
      %1333 = vrot.lane.b32.xlu0 %v1258, 64
      %v1334 = vpop.permute.xlu0 %1333
      %1335 = vrot.lane.b32.xlu0 %v1259, 64
      %v1336 = vpop.permute.xlu0 %1335
      %1337 = vrot.lane.b32.xlu0 %v1260, 64
      %v1338 = vpop.permute.xlu0 %1337
      %1339 = vrot.lane.b32.xlu0 %v1261, 64
      %v1340 = vpop.permute.xlu0 %1339
      %1341 = vrot.lane.b32.xlu0 %v1262, 64
      %v1342 = vpop.permute.xlu0 %1341
      %1343 = vrot.lane.b32.xlu0 %v1263, 64
      %v1344 = vpop.permute.xlu0 %1343
      %1345 = vrot.lane.b32.xlu0 %v1264, 64
      %v1346 = vpop.permute.xlu0 %1345
      %1347 = vrot.lane.b32.xlu0 %v1265, 64
      %v1348 = vpop.permute.xlu0 %1347
      %1349 = vrot.lane.b32.xlu0 %v1266, 64
      %v1350 = vpop.permute.xlu0 %1349
      %1351 = vrot.lane.b32.xlu0 %v1267, 64
      %v1352 = vpop.permute.xlu0 %1351
      %1353 = vrot.lane.b32.xlu0 %v1268, 64
      %v1354 = vpop.permute.xlu0 %1353
      %1355 = vrot.lane.b32.xlu0 %v1269, 64
      %v1356 = vpop.permute.xlu0 %1355
      %1357 = vrot.lane.b32.xlu0 %v1270, 64
      %v1358 = vpop.permute.xlu0 %1357
      %1359 = vrot.lane.b32.xlu0 %v1271, 64
      %v1360 = vpop.permute.xlu0 %1359
      %1361 = vrot.lane.b32.xlu0 %v1272, 64
      %v1362 = vpop.permute.xlu0 %1361
      %1363 = vrot.lane.b32.xlu0 %v1273, 64
      %v1364 = vpop.permute.xlu0 %1363
      %1365 = vrot.lane.b32.xlu0 %v1274, 64
      %v1366 = vpop.permute.xlu0 %1365
      %1367 = vrot.lane.b32.xlu0 %v1275, 64
      %v1368 = vpop.permute.xlu0 %1367
      %1369 = vrot.lane.b32.xlu0 %v1276, 64
      %v1370 = vpop.permute.xlu0 %1369
      %1371 = vrot.lane.b32.xlu0 %v1277, 64
      %v1372 = vpop.permute.xlu0 %1371
      %1373 = vrot.lane.b32.xlu0 %v1278, 64
      %v1374 = vpop.permute.xlu0 %1373
      %1407 = vst.msk [vmem:[#allocation3 + $0x4] sm:$0xf] %vm990, %v1312
      %1408 = vst.msk [vmem:[#allocation3 + $0x18] sm:$0xf] %vm990, %v1314
      %1409 = vst.msk [vmem:[#allocation3 + $0x2c] sm:$0xf] %vm990, %v1316
      %1410 = vst.msk [vmem:[#allocation3 + $0x40] sm:$0xf] %vm990, %v1318
      %1411 = vst.msk [vmem:[#allocation3 + $0x54] sm:$0xf] %vm990, %v1320
      %1412 = vst.msk [vmem:[#allocation3 + $0x68] sm:$0xf] %vm990, %v1322
      %1413 = vst.msk [vmem:[#allocation3 + $0x7c] sm:$0xf] %vm990, %v1324
      %1414 = vst.msk [vmem:[#allocation3 + $0x90] sm:$0xf] %vm990, %v1326
      %1415 = vst.msk [vmem:[#allocation3 + $0xa4] sm:$0xf] %vm990, %v1328
      %1416 = vst.msk [vmem:[#allocation3 + $0xb8] sm:$0xf] %vm990, %v1330
      %1417 = vst.msk [vmem:[#allocation3 + $0xcc] sm:$0xf] %vm990, %v1332
      %1418 = vst.msk [vmem:[#allocation3 + $0xe0] sm:$0xf] %vm990, %v1334
      %1419 = vst.msk [vmem:[#allocation3 + $0xf4] sm:$0xf] %vm990, %v1336
      %1420 = vst.msk [vmem:[#allocation3 + $0x108] sm:$0xf] %vm990, %v1338
      %1421 = vst.msk [vmem:[#allocation3 + $0x11c] sm:$0xf] %vm990, %v1340
      %1422 = vst.msk [vmem:[#allocation3 + $0x130] sm:$0xf] %vm990, %v1342
      %1423 = vst.msk [vmem:[#allocation3 + $0x144] sm:$0xf] %vm990, %v1344
      %1424 = vst.msk [vmem:[#allocation3 + $0x158] sm:$0xf] %vm990, %v1346
      %1425 = vst.msk [vmem:[#allocation3 + $0x16c] sm:$0xf] %vm990, %v1348
      %1426 = vst.msk [vmem:[#allocation3 + $0x180] sm:$0xf] %vm990, %v1350
      %1427 = vst.msk [vmem:[#allocation3 + $0x194] sm:$0xf] %vm990, %v1352
      %1428 = vst.msk [vmem:[#allocation3 + $0x1a8] sm:$0xf] %vm990, %v1354
      %1429 = vst.msk [vmem:[#allocation3 + $0x1bc] sm:$0xf] %vm990, %v1356
      %1430 = vst.msk [vmem:[#allocation3 + $0x1d0] sm:$0xf] %vm990, %v1358
      %1431 = vst.msk [vmem:[#allocation3 + $0x1e4] sm:$0xf] %vm990, %v1360
      %1432 = vst.msk [vmem:[#allocation3 + $0x1f8] sm:$0xf] %vm990, %v1362
      %1433 = vst.msk [vmem:[#allocation3 + $0x20c] sm:$0xf] %vm990, %v1364
      %1434 = vst.msk [vmem:[#allocation3 + $0x220] sm:$0xf] %vm990, %v1366
      %1435 = vst.msk [vmem:[#allocation3 + $0x234] sm:$0xf] %vm990, %v1368
      %1436 = vst.msk [vmem:[#allocation3 + $0x248] sm:$0xf] %vm990, %v1370
      %1437 = vst.msk [vmem:[#allocation3 + $0x25c] sm:$0xf] %vm990, %v1372
      %1438 = vst.msk [vmem:[#allocation3 + $0x270] sm:$0xf] %vm990, %v1374
      %v1439 = vld [vmem:[#allocation2 + $0x18] sm:$0xff]
      %v1440 = vld [vmem:[#allocation2 + $0x20] sm:$0xff]
      %v1441 = vld [vmem:[#allocation2 + $0x28] sm:$0xff]
      %v1442 = vld [vmem:[#allocation2 + $0x30] sm:$0xff]
      %v1443 = vld [vmem:[#allocation2 + $0x38] sm:$0xff]
      %v1444 = vld [vmem:[#allocation2 + $0x40] sm:$0xff]
      %v1445 = vld [vmem:[#allocation2 + $0x48] sm:$0xff]
      %v1446 = vld [vmem:[#allocation2 + $0x50] sm:$0xff]
      %v1447 = vld [vmem:[#allocation2 + $0x58] sm:$0xff]
      %v1448 = vld [vmem:[#allocation2 + $0x60] sm:$0xff]
      %v1449 = vld [vmem:[#allocation2 + $0x68] sm:$0xff]
      %v1450 = vld [vmem:[#allocation2 + $0x70] sm:$0xff]
      %v1451 = vld [vmem:[#allocation2 + $0x78] sm:$0xff]
      %v1452 = vld [vmem:[#allocation2 + $0x80] sm:$0xff]
      %v1453 = vld [vmem:[#allocation2 + $0x88] sm:$0xff]
      %v1454 = vld [vmem:[#allocation2 + $0x90] sm:$0xff]
      %v1455 = vld [vmem:[#allocation2 + $0x98] sm:$0xff]
      %v1456 = vld [vmem:[#allocation2 + $0xa0] sm:$0xff]
      %v1457 = vld [vmem:[#allocation2 + $0xa8] sm:$0xff]
      %v1458 = vld [vmem:[#allocation2 + $0xb0] sm:$0xff]
      %v1459 = vld [vmem:[#allocation2 + $0xb8] sm:$0xff]
      %v1460 = vld [vmem:[#allocation2 + $0xc0] sm:$0xff]
      %v1461 = vld [vmem:[#allocation2 + $0xc8] sm:$0xff]
      %v1462 = vld [vmem:[#allocation2 + $0xd0] sm:$0xff]
      %v1463 = vld [vmem:[#allocation2 + $0xd8] sm:$0xff]
      %v1464 = vld [vmem:[#allocation2 + $0xe0] sm:$0xff]
      %v1465 = vld [vmem:[#allocation2 + $0xe8] sm:$0xff]
      %v1466 = vld [vmem:[#allocation2 + $0xf0] sm:$0xff]
      %v1467 = vld [vmem:[#allocation2 + $0xf8] sm:$0xff]
      %v1468 = vld [vmem:[#allocation2 + $0x100] sm:$0xff]
      %v1469 = vld [vmem:[#allocation2 + $0x108] sm:$0xff]
      %v1470 = vld [vmem:[#allocation2 + $0x110] sm:$0xff]
      %v1471 = vpack.c.bf16 %v1439, %v1439
      %v1472 = vpack.c.bf16 %v1440, %v1440
      %v1473 = vpack.c.bf16 %v1441, %v1441
      %v1474 = vpack.c.bf16 %v1442, %v1442
      %v1475 = vpack.c.bf16 %v1443, %v1443
      %v1476 = vpack.c.bf16 %v1444, %v1444
      %v1477 = vpack.c.bf16 %v1445, %v1445
      %v1478 = vpack.c.bf16 %v1446, %v1446
      %v1479 = vpack.c.bf16 %v1447, %v1447
      %v1480 = vpack.c.bf16 %v1448, %v1448
      %v1481 = vpack.c.bf16 %v1449, %v1449
      %v1482 = vpack.c.bf16 %v1450, %v1450
      %v1483 = vpack.c.bf16 %v1451, %v1451
      %v1484 = vpack.c.bf16 %v1452, %v1452
      %v1485 = vpack.c.bf16 %v1453, %v1453
      %v1486 = vpack.c.bf16 %v1454, %v1454
      %v1487 = vpack.c.bf16 %v1455, %v1455
      %v1488 = vpack.c.bf16 %v1456, %v1456
      %v1489 = vpack.c.bf16 %v1457, %v1457
      %v1490 = vpack.c.bf16 %v1458, %v1458
      %v1491 = vpack.c.bf16 %v1459, %v1459
      %v1492 = vpack.c.bf16 %v1460, %v1460
      %v1493 = vpack.c.bf16 %v1461, %v1461
      %v1494 = vpack.c.bf16 %v1462, %v1462
      %v1495 = vpack.c.bf16 %v1463, %v1463
      %v1496 = vpack.c.bf16 %v1464, %v1464
      %v1497 = vpack.c.bf16 %v1465, %v1465
      %v1498 = vpack.c.bf16 %v1466, %v1466
      %v1499 = vpack.c.bf16 %v1467, %v1467
      %v1500 = vpack.c.bf16 %v1468, %v1468
      %v1501 = vpack.c.bf16 %v1469, %v1469
      %v1502 = vpack.c.bf16 %v1470, %v1470
      %1503 = vst.msk [vmem:[#allocation3 + $0x8] sm:$0xf] %vm733, %v1471
      %1504 = vst.msk [vmem:[#allocation3 + $0x1c] sm:$0xf] %vm733, %v1472
      %1505 = vst.msk [vmem:[#allocation3 + $0x30] sm:$0xf] %vm733, %v1473
      %1506 = vst.msk [vmem:[#allocation3 + $0x44] sm:$0xf] %vm733, %v1474
      %1507 = vst.msk [vmem:[#allocation3 + $0x58] sm:$0xf] %vm733, %v1475
      %1508 = vst.msk [vmem:[#allocation3 + $0x6c] sm:$0xf] %vm733, %v1476
      %1509 = vst.msk [vmem:[#allocation3 + $0x80] sm:$0xf] %vm733, %v1477
      %1510 = vst.msk [vmem:[#allocation3 + $0x94] sm:$0xf] %vm733, %v1478
      %1511 = vst.msk [vmem:[#allocation3 + $0xa8] sm:$0xf] %vm733, %v1479
      %1512 = vst.msk [vmem:[#allocation3 + $0xbc] sm:$0xf] %vm733, %v1480
      %1513 = vst.msk [vmem:[#allocation3 + $0xd0] sm:$0xf] %vm733, %v1481
      %1514 = vst.msk [vmem:[#allocation3 + $0xe4] sm:$0xf] %vm733, %v1482
      %1515 = vst.msk [vmem:[#allocation3 + $0xf8] sm:$0xf] %vm733, %v1483
      %1516 = vst.msk [vmem:[#allocation3 + $0x10c] sm:$0xf] %vm733, %v1484
      %1517 = vst.msk [vmem:[#allocation3 + $0x120] sm:$0xf] %vm733, %v1485
      %1518 = vst.msk [vmem:[#allocation3 + $0x134] sm:$0xf] %vm733, %v1486
      %1519 = vst.msk [vmem:[#allocation3 + $0x148] sm:$0xf] %vm733, %v1487
      %1520 = vst.msk [vmem:[#allocation3 + $0x15c] sm:$0xf] %vm733, %v1488
      %1521 = vst.msk [vmem:[#allocation3 + $0x170] sm:$0xf] %vm733, %v1489
      %1522 = vst.msk [vmem:[#allocation3 + $0x184] sm:$0xf] %vm733, %v1490
      %1523 = vst.msk [vmem:[#allocation3 + $0x198] sm:$0xf] %vm733, %v1491
      %1524 = vst.msk [vmem:[#allocation3 + $0x1ac] sm:$0xf] %vm733, %v1492
      %1525 = vst.msk [vmem:[#allocation3 + $0x1c0] sm:$0xf] %vm733, %v1493
      %1526 = vst.msk [vmem:[#allocation3 + $0x1d4] sm:$0xf] %vm733, %v1494
      %1527 = vst.msk [vmem:[#allocation3 + $0x1e8] sm:$0xf] %vm733, %v1495
      %1528 = vst.msk [vmem:[#allocation3 + $0x1fc] sm:$0xf] %vm733, %v1496
      %1529 = vst.msk [vmem:[#allocation3 + $0x210] sm:$0xf] %vm733, %v1497
      %1530 = vst.msk [vmem:[#allocation3 + $0x224] sm:$0xf] %vm733, %v1498
      %1531 = vst.msk [vmem:[#allocation3 + $0x238] sm:$0xf] %vm733, %v1499
      %1532 = vst.msk [vmem:[#allocation3 + $0x24c] sm:$0xf] %vm733, %v1500
      %1533 = vst.msk [vmem:[#allocation3 + $0x260] sm:$0xf] %vm733, %v1501
      %1534 = vst.msk [vmem:[#allocation3 + $0x274] sm:$0xf] %vm733, %v1502
      %v1535 = vld [vmem:[#allocation2 + $0x19] sm:$0xff]
      %v1536 = vld [vmem:[#allocation2 + $0x21] sm:$0xff]
      %v1537 = vld [vmem:[#allocation2 + $0x29] sm:$0xff]
      %v1538 = vld [vmem:[#allocation2 + $0x31] sm:$0xff]
      %v1539 = vld [vmem:[#allocation2 + $0x39] sm:$0xff]
      %v1540 = vld [vmem:[#allocation2 + $0x41] sm:$0xff]
      %v1541 = vld [vmem:[#allocation2 + $0x49] sm:$0xff]
      %v1542 = vld [vmem:[#allocation2 + $0x51] sm:$0xff]
      %v1543 = vld [vmem:[#allocation2 + $0x59] sm:$0xff]
      %v1544 = vld [vmem:[#allocation2 + $0x61] sm:$0xff]
      %v1545 = vld [vmem:[#allocation2 + $0x69] sm:$0xff]
      %v1546 = vld [vmem:[#allocation2 + $0x71] sm:$0xff]
      %v1547 = vld [vmem:[#allocation2 + $0x79] sm:$0xff]
      %v1548 = vld [vmem:[#allocation2 + $0x81] sm:$0xff]
      %v1549 = vld [vmem:[#allocation2 + $0x89] sm:$0xff]
      %v1550 = vld [vmem:[#allocation2 + $0x91] sm:$0xff]
      %v1551 = vld [vmem:[#allocation2 + $0x99] sm:$0xff]
      %v1552 = vld [vmem:[#allocation2 + $0xa1] sm:$0xff]
      %v1553 = vld [vmem:[#allocation2 + $0xa9] sm:$0xff]
      %v1554 = vld [vmem:[#allocation2 + $0xb1] sm:$0xff]
      %v1555 = vld [vmem:[#allocation2 + $0xb9] sm:$0xff]
      %v1556 = vld [vmem:[#allocation2 + $0xc1] sm:$0xff]
      %v1557 = vld [vmem:[#allocation2 + $0xc9] sm:$0xff]
      %v1558 = vld [vmem:[#allocation2 + $0xd1] sm:$0xff]
      %v1559 = vld [vmem:[#allocation2 + $0xd9] sm:$0xff]
      %v1560 = vld [vmem:[#allocation2 + $0xe1] sm:$0xff]
      %v1561 = vld [vmem:[#allocation2 + $0xe9] sm:$0xff]
      %v1562 = vld [vmem:[#allocation2 + $0xf1] sm:$0xff]
      %v1563 = vld [vmem:[#allocation2 + $0xf9] sm:$0xff]
      %v1564 = vld [vmem:[#allocation2 + $0x101] sm:$0xff]
      %v1565 = vld [vmem:[#allocation2 + $0x109] sm:$0xff]
      %v1566 = vld [vmem:[#allocation2 + $0x111] sm:$0xff]
      %v1567 = vsel %vm573, %v1535, 0.0
      %v1568 = vsel %vm574, %v1536, 0.0
      %v1569 = vsel %vm575, %v1537, 0.0
      %v1570 = vsel %vm576, %v1538, 0.0
      %v1571 = vsel %vm577, %v1539, 0.0
      %v1572 = vsel %vm578, %v1540, 0.0
      %v1573 = vsel %vm579, %v1541, 0.0
      %v1574 = vsel %vm580, %v1542, 0.0
      %v1575 = vsel %vm581, %v1543, 0.0
      %v1576 = vsel %vm582, %v1544, 0.0
      %v1577 = vsel %vm583, %v1545, 0.0
      %v1578 = vsel %vm584, %v1546, 0.0
      %v1579 = vsel %vm585, %v1547, 0.0
      %v1580 = vsel %vm586, %v1548, 0.0
      %v1581 = vsel %vm587, %v1549, 0.0
      %v1582 = vsel %vm588, %v1550, 0.0
      %v1583 = vsel %vm589, %v1551, 0.0
      %v1584 = vsel %vm590, %v1552, 0.0
      %v1585 = vsel %vm591, %v1553, 0.0
      %v1586 = vsel %vm592, %v1554, 0.0
      %v1587 = vsel %vm593, %v1555, 0.0
      %v1588 = vsel %vm594, %v1556, 0.0
      %v1589 = vsel %vm595, %v1557, 0.0
      %v1590 = vsel %vm596, %v1558, 0.0
      %v1591 = vsel %vm597, %v1559, 0.0
      %v1592 = vsel %vm598, %v1560, 0.0
      %v1593 = vsel %vm599, %v1561, 0.0
      %v1594 = vsel %vm600, %v1562, 0.0
      %v1595 = vsel %vm601, %v1563, 0.0
      %v1596 = vsel %vm602, %v1564, 0.0
      %v1597 = vsel %vm603, %v1565, 0.0
      %v1598 = vsel %vm604, %v1566, 0.0
      %v1599 = vpack.c.bf16 %v1567, %v1567
      %v1600 = vpack.c.bf16 %v1568, %v1568
      %v1601 = vpack.c.bf16 %v1569, %v1569
      %v1602 = vpack.c.bf16 %v1570, %v1570
      %v1603 = vpack.c.bf16 %v1571, %v1571
      %v1604 = vpack.c.bf16 %v1572, %v1572
      %v1605 = vpack.c.bf16 %v1573, %v1573
      %v1606 = vpack.c.bf16 %v1574, %v1574
      %v1607 = vpack.c.bf16 %v1575, %v1575
      %v1608 = vpack.c.bf16 %v1576, %v1576
      %v1609 = vpack.c.bf16 %v1577, %v1577
      %v1610 = vpack.c.bf16 %v1578, %v1578
      %v1611 = vpack.c.bf16 %v1579, %v1579
      %v1612 = vpack.c.bf16 %v1580, %v1580
      %v1613 = vpack.c.bf16 %v1581, %v1581
      %v1614 = vpack.c.bf16 %v1582, %v1582
      %v1615 = vpack.c.bf16 %v1583, %v1583
      %v1616 = vpack.c.bf16 %v1584, %v1584
      %v1617 = vpack.c.bf16 %v1585, %v1585
      %v1618 = vpack.c.bf16 %v1586, %v1586
      %v1619 = vpack.c.bf16 %v1587, %v1587
      %v1620 = vpack.c.bf16 %v1588, %v1588
      %v1621 = vpack.c.bf16 %v1589, %v1589
      %v1622 = vpack.c.bf16 %v1590, %v1590
      %v1623 = vpack.c.bf16 %v1591, %v1591
      %v1624 = vpack.c.bf16 %v1592, %v1592
      %v1625 = vpack.c.bf16 %v1593, %v1593
      %v1626 = vpack.c.bf16 %v1594, %v1594
      %v1627 = vpack.c.bf16 %v1595, %v1595
      %v1628 = vpack.c.bf16 %v1596, %v1596
      %v1629 = vpack.c.bf16 %v1597, %v1597
      %v1630 = vpack.c.bf16 %v1598, %v1598
      %1663 = vrot.lane.b32.xlu0 %v1599, 64
      %v1664 = vpop.permute.xlu0 %1663
      %1665 = vrot.lane.b32.xlu0 %v1600, 64
      %v1666 = vpop.permute.xlu0 %1665
      %1667 = vrot.lane.b32.xlu0 %v1601, 64
      %v1668 = vpop.permute.xlu0 %1667
      %1669 = vrot.lane.b32.xlu0 %v1602, 64
      %v1670 = vpop.permute.xlu0 %1669
      %1671 = vrot.lane.b32.xlu0 %v1603, 64
      %v1672 = vpop.permute.xlu0 %1671
      %1673 = vrot.lane.b32.xlu0 %v1604, 64
      %v1674 = vpop.permute.xlu0 %1673
      %1675 = vrot.lane.b32.xlu0 %v1605, 64
      %v1676 = vpop.permute.xlu0 %1675
      %1677 = vrot.lane.b32.xlu0 %v1606, 64
      %v1678 = vpop.permute.xlu0 %1677
      %1679 = vrot.lane.b32.xlu0 %v1607, 64
      %v1680 = vpop.permute.xlu0 %1679
      %1681 = vrot.lane.b32.xlu0 %v1608, 64
      %v1682 = vpop.permute.xlu0 %1681
      %1683 = vrot.lane.b32.xlu0 %v1609, 64
      %v1684 = vpop.permute.xlu0 %1683
      %1685 = vrot.lane.b32.xlu0 %v1610, 64
      %v1686 = vpop.permute.xlu0 %1685
      %1687 = vrot.lane.b32.xlu0 %v1611, 64
      %v1688 = vpop.permute.xlu0 %1687
      %1689 = vrot.lane.b32.xlu0 %v1612, 64
      %v1690 = vpop.permute.xlu0 %1689
      %1691 = vrot.lane.b32.xlu0 %v1613, 64
      %v1692 = vpop.permute.xlu0 %1691
      %1693 = vrot.lane.b32.xlu0 %v1614, 64
      %v1694 = vpop.permute.xlu0 %1693
      %1695 = vrot.lane.b32.xlu0 %v1615, 64
      %v1696 = vpop.permute.xlu0 %1695
      %1697 = vrot.lane.b32.xlu0 %v1616, 64
      %v1698 = vpop.permute.xlu0 %1697
      %1699 = vrot.lane.b32.xlu0 %v1617, 64
      %v1700 = vpop.permute.xlu0 %1699
      %1701 = vrot.lane.b32.xlu0 %v1618, 64
      %v1702 = vpop.permute.xlu0 %1701
      %1703 = vrot.lane.b32.xlu0 %v1619, 64
      %v1704 = vpop.permute.xlu0 %1703
      %1705 = vrot.lane.b32.xlu0 %v1620, 64
      %v1706 = vpop.permute.xlu0 %1705
      %1707 = vrot.lane.b32.xlu0 %v1621, 64
      %v1708 = vpop.permute.xlu0 %1707
      %1709 = vrot.lane.b32.xlu0 %v1622, 64
      %v1710 = vpop.permute.xlu0 %1709
      %1711 = vrot.lane.b32.xlu0 %v1623, 64
      %v1712 = vpop.permute.xlu0 %1711
      %1713 = vrot.lane.b32.xlu0 %v1624, 64
      %v1714 = vpop.permute.xlu0 %1713
      %1715 = vrot.lane.b32.xlu0 %v1625, 64
      %v1716 = vpop.permute.xlu0 %1715
      %1717 = vrot.lane.b32.xlu0 %v1626, 64
      %v1718 = vpop.permute.xlu0 %1717
      %1719 = vrot.lane.b32.xlu0 %v1627, 64
      %v1720 = vpop.permute.xlu0 %1719
      %1721 = vrot.lane.b32.xlu0 %v1628, 64
      %v1722 = vpop.permute.xlu0 %1721
      %1723 = vrot.lane.b32.xlu0 %v1629, 64
      %v1724 = vpop.permute.xlu0 %1723
      %1725 = vrot.lane.b32.xlu0 %v1630, 64
      %v1726 = vpop.permute.xlu0 %1725
      %1759 = vst.msk [vmem:[#allocation3 + $0x8] sm:$0xf] %vm990, %v1664
      %1760 = vst.msk [vmem:[#allocation3 + $0x1c] sm:$0xf] %vm990, %v1666
      %1761 = vst.msk [vmem:[#allocation3 + $0x30] sm:$0xf] %vm990, %v1668
      %1762 = vst.msk [vmem:[#allocation3 + $0x44] sm:$0xf] %vm990, %v1670
      %1763 = vst.msk [vmem:[#allocation3 + $0x58] sm:$0xf] %vm990, %v1672
      %1764 = vst.msk [vmem:[#allocation3 + $0x6c] sm:$0xf] %vm990, %v1674
      %1765 = vst.msk [vmem:[#allocation3 + $0x80] sm:$0xf] %vm990, %v1676
      %1766 = vst.msk [vmem:[#allocation3 + $0x94] sm:$0xf] %vm990, %v1678
      %1767 = vst.msk [vmem:[#allocation3 + $0xa8] sm:$0xf] %vm990, %v1680
      %1768 = vst.msk [vmem:[#allocation3 + $0xbc] sm:$0xf] %vm990, %v1682
      %1769 = vst.msk [vmem:[#allocation3 + $0xd0] sm:$0xf] %vm990, %v1684
      %1770 = vst.msk [vmem:[#allocation3 + $0xe4] sm:$0xf] %vm990, %v1686
      %1771 = vst.msk [vmem:[#allocation3 + $0xf8] sm:$0xf] %vm990, %v1688
      %1772 = vst.msk [vmem:[#allocation3 + $0x10c] sm:$0xf] %vm990, %v1690
      %1773 = vst.msk [vmem:[#allocation3 + $0x120] sm:$0xf] %vm990, %v1692
      %1774 = vst.msk [vmem:[#allocation3 + $0x134] sm:$0xf] %vm990, %v1694
      %1775 = vst.msk [vmem:[#allocation3 + $0x148] sm:$0xf] %vm990, %v1696
      %1776 = vst.msk [vmem:[#allocation3 + $0x15c] sm:$0xf] %vm990, %v1698
      %1777 = vst.msk [vmem:[#allocation3 + $0x170] sm:$0xf] %vm990, %v1700
      %1778 = vst.msk [vmem:[#allocation3 + $0x184] sm:$0xf] %vm990, %v1702
      %1779 = vst.msk [vmem:[#allocation3 + $0x198] sm:$0xf] %vm990, %v1704
      %1780 = vst.msk [vmem:[#allocation3 + $0x1ac] sm:$0xf] %vm990, %v1706
      %1781 = vst.msk [vmem:[#allocation3 + $0x1c0] sm:$0xf] %vm990, %v1708
      %1782 = vst.msk [vmem:[#allocation3 + $0x1d4] sm:$0xf] %vm990, %v1710
      %1783 = vst.msk [vmem:[#allocation3 + $0x1e8] sm:$0xf] %vm990, %v1712
      %1784 = vst.msk [vmem:[#allocation3 + $0x1fc] sm:$0xf] %vm990, %v1714
      %1785 = vst.msk [vmem:[#allocation3 + $0x210] sm:$0xf] %vm990, %v1716
      %1786 = vst.msk [vmem:[#allocation3 + $0x224] sm:$0xf] %vm990, %v1718
      %1787 = vst.msk [vmem:[#allocation3 + $0x238] sm:$0xf] %vm990, %v1720
      %1788 = vst.msk [vmem:[#allocation3 + $0x24c] sm:$0xf] %vm990, %v1722
      %1789 = vst.msk [vmem:[#allocation3 + $0x260] sm:$0xf] %vm990, %v1724
      %1790 = vst.msk [vmem:[#allocation3 + $0x274] sm:$0xf] %vm990, %v1726
      %v1791 = vld [vmem:[#allocation2 + $0x27] sm:$0xff]
      %v1792 = vld [vmem:[#allocation2 + $0x2f] sm:$0xff]
      %v1793 = vld [vmem:[#allocation2 + $0x37] sm:$0xff]
      %v1794 = vld [vmem:[#allocation2 + $0x3f] sm:$0xff]
      %v1795 = vld [vmem:[#allocation2 + $0x47] sm:$0xff]
      %v1796 = vld [vmem:[#allocation2 + $0x4f] sm:$0xff]
      %v1797 = vld [vmem:[#allocation2 + $0x57] sm:$0xff]
      %v1798 = vld [vmem:[#allocation2 + $0x5f] sm:$0xff]
      %v1799 = vld [vmem:[#allocation2 + $0x67] sm:$0xff]
      %v1800 = vld [vmem:[#allocation2 + $0x6f] sm:$0xff]
      %v1801 = vld [vmem:[#allocation2 + $0x77] sm:$0xff]
      %v1802 = vld [vmem:[#allocation2 + $0x7f] sm:$0xff]
      %v1803 = vld [vmem:[#allocation2 + $0x87] sm:$0xff]
      %v1804 = vld [vmem:[#allocation2 + $0x8f] sm:$0xff]
      %v1805 = vld [vmem:[#allocation2 + $0x97] sm:$0xff]
      %v1806 = vld [vmem:[#allocation2 + $0x9f] sm:$0xff]
      %v1807 = vld [vmem:[#allocation2 + $0xa7] sm:$0xff]
      %v1808 = vld [vmem:[#allocation2 + $0xaf] sm:$0xff]
      %v1809 = vld [vmem:[#allocation2 + $0xb7] sm:$0xff]
      %v1810 = vld [vmem:[#allocation2 + $0xbf] sm:$0xff]
      %v1811 = vld [vmem:[#allocation2 + $0xc7] sm:$0xff]
      %v1812 = vld [vmem:[#allocation2 + $0xcf] sm:$0xff]
      %v1813 = vld [vmem:[#allocation2 + $0xd7] sm:$0xff]
      %v1814 = vld [vmem:[#allocation2 + $0xdf] sm:$0xff]
      %v1815 = vld [vmem:[#allocation2 + $0xe7] sm:$0xff]
      %v1816 = vld [vmem:[#allocation2 + $0xef] sm:$0xff]
      %v1817 = vld [vmem:[#allocation2 + $0xf7] sm:$0xff]
      %v1818 = vld [vmem:[#allocation2 + $0xff] sm:$0xff]
      %v1819 = vld [vmem:[#allocation2 + $0x107] sm:$0xff]
      %v1820 = vld [vmem:[#allocation2 + $0x10f] sm:$0xff]
      %v1821 = vld [vmem:[#allocation2 + $0x117] sm:$0xff]
      %v1822 = vld [vmem:[#allocation2 + $0x11f] sm:$0xff]
      %vm1823 = vmand %vm509, %vm541
      %vm1824 = vmand %vm510, %vm542
      %vm1825 = vmand %vm511, %vm543
      %vm1826 = vmand %vm512, %vm544
      %vm1827 = vmand %vm513, %vm545
      %vm1828 = vmand %vm514, %vm546
      %vm1829 = vmand %vm515, %vm547
      %vm1830 = vmand %vm516, %vm548
      %vm1831 = vmand %vm517, %vm549
      %vm1832 = vmand %vm518, %vm550
      %vm1833 = vmand %vm519, %vm551
      %vm1834 = vmand %vm520, %vm552
      %vm1835 = vmand %vm521, %vm553
      %vm1836 = vmand %vm522, %vm554
      %vm1837 = vmand %vm523, %vm555
      %vm1838 = vmand %vm524, %vm556
      %vm1839 = vmand %vm525, %vm557
      %vm1840 = vmand %vm526, %vm558
      %vm1841 = vmand %vm527, %vm559
      %vm1842 = vmand %vm528, %vm560
      %vm1843 = vmand %vm529, %vm561
      %vm1844 = vmand %vm530, %vm562
      %vm1845 = vmand %vm531, %vm563
      %vm1846 = vmand %vm532, %vm564
      %vm1847 = vmand %vm533, %vm565
      %vm1848 = vmand %vm534, %vm566
      %vm1849 = vmand %vm535, %vm567
      %vm1850 = vmand %vm536, %vm568
      %vm1851 = vmand %vm537, %vm569
      %vm1852 = vmand %vm538, %vm570
      %vm1853 = vmand %vm539, %vm571
      %vm1854 = vmand %vm540, %vm572
      %v1855 = vsel %vm1823, %v1791, 0.0
      %v1856 = vsel %vm1824, %v1792, 0.0
      %v1857 = vsel %vm1825, %v1793, 0.0
      %v1858 = vsel %vm1826, %v1794, 0.0
      %v1859 = vsel %vm1827, %v1795, 0.0
      %v1860 = vsel %vm1828, %v1796, 0.0
      %v1861 = vsel %vm1829, %v1797, 0.0
      %v1862 = vsel %vm1830, %v1798, 0.0
      %v1863 = vsel %vm1831, %v1799, 0.0
      %v1864 = vsel %vm1832, %v1800, 0.0
      %v1865 = vsel %vm1833, %v1801, 0.0
      %v1866 = vsel %vm1834, %v1802, 0.0
      %v1867 = vsel %vm1835, %v1803, 0.0
      %v1868 = vsel %vm1836, %v1804, 0.0
      %v1869 = vsel %vm1837, %v1805, 0.0
      %v1870 = vsel %vm1838, %v1806, 0.0
      %v1871 = vsel %vm1839, %v1807, 0.0
      %v1872 = vsel %vm1840, %v1808, 0.0
      %v1873 = vsel %vm1841, %v1809, 0.0
      %v1874 = vsel %vm1842, %v1810, 0.0
      %v1875 = vsel %vm1843, %v1811, 0.0
      %v1876 = vsel %vm1844, %v1812, 0.0
      %v1877 = vsel %vm1845, %v1813, 0.0
      %v1878 = vsel %vm1846, %v1814, 0.0
      %v1879 = vsel %vm1847, %v1815, 0.0
      %v1880 = vsel %vm1848, %v1816, 0.0
      %v1881 = vsel %vm1849, %v1817, 0.0
      %v1882 = vsel %vm1850, %v1818, 0.0
      %v1883 = vsel %vm1851, %v1819, 0.0
      %v1884 = vsel %vm1852, %v1820, 0.0
      %v1885 = vsel %vm1853, %v1821, 0.0
      %v1886 = vsel %vm1854, %v1822, 0.0
      %v1887 = vpack.c.bf16 %v1855, %v1855
      %v1888 = vpack.c.bf16 %v1856, %v1856
      %v1889 = vpack.c.bf16 %v1857, %v1857
      %v1890 = vpack.c.bf16 %v1858, %v1858
      %v1891 = vpack.c.bf16 %v1859, %v1859
      %v1892 = vpack.c.bf16 %v1860, %v1860
      %v1893 = vpack.c.bf16 %v1861, %v1861
      %v1894 = vpack.c.bf16 %v1862, %v1862
      %v1895 = vpack.c.bf16 %v1863, %v1863
      %v1896 = vpack.c.bf16 %v1864, %v1864
      %v1897 = vpack.c.bf16 %v1865, %v1865
      %v1898 = vpack.c.bf16 %v1866, %v1866
      %v1899 = vpack.c.bf16 %v1867, %v1867
      %v1900 = vpack.c.bf16 %v1868, %v1868
      %v1901 = vpack.c.bf16 %v1869, %v1869
      %v1902 = vpack.c.bf16 %v1870, %v1870
      %v1903 = vpack.c.bf16 %v1871, %v1871
      %v1904 = vpack.c.bf16 %v1872, %v1872
      %v1905 = vpack.c.bf16 %v1873, %v1873
      %v1906 = vpack.c.bf16 %v1874, %v1874
      %v1907 = vpack.c.bf16 %v1875, %v1875
      %v1908 = vpack.c.bf16 %v1876, %v1876
      %v1909 = vpack.c.bf16 %v1877, %v1877
      %v1910 = vpack.c.bf16 %v1878, %v1878
      %v1911 = vpack.c.bf16 %v1879, %v1879
      %v1912 = vpack.c.bf16 %v1880, %v1880
      %v1913 = vpack.c.bf16 %v1881, %v1881
      %v1914 = vpack.c.bf16 %v1882, %v1882
      %v1915 = vpack.c.bf16 %v1883, %v1883
      %v1916 = vpack.c.bf16 %v1884, %v1884
      %v1917 = vpack.c.bf16 %v1885, %v1885
      %v1918 = vpack.c.bf16 %v1886, %v1886
      %1919 = vst.msk [vmem:[#allocation3 + $0xc] sm:$0xf] %vm733, %v1887
      %1920 = vst.msk [vmem:[#allocation3 + $0x20] sm:$0xf] %vm733, %v1888
      %1921 = vst.msk [vmem:[#allocation3 + $0x34] sm:$0xf] %vm733, %v1889
      %1922 = vst.msk [vmem:[#allocation3 + $0x48] sm:$0xf] %vm733, %v1890
      %1923 = vst.msk [vmem:[#allocation3 + $0x5c] sm:$0xf] %vm733, %v1891
      %1924 = vst.msk [vmem:[#allocation3 + $0x70] sm:$0xf] %vm733, %v1892
      %1925 = vst.msk [vmem:[#allocation3 + $0x84] sm:$0xf] %vm733, %v1893
      %1926 = vst.msk [vmem:[#allocation3 + $0x98] sm:$0xf] %vm733, %v1894
      %1927 = vst.msk [vmem:[#allocation3 + $0xac] sm:$0xf] %vm733, %v1895
      %1928 = vst.msk [vmem:[#allocation3 + $0xc0] sm:$0xf] %vm733, %v1896
      %1929 = vst.msk [vmem:[#allocation3 + $0xd4] sm:$0xf] %vm733, %v1897
      %1930 = vst.msk [vmem:[#allocation3 + $0xe8] sm:$0xf] %vm733, %v1898
      %1931 = vst.msk [vmem:[#allocation3 + $0xfc] sm:$0xf] %vm733, %v1899
      %1932 = vst.msk [vmem:[#allocation3 + $0x110] sm:$0xf] %vm733, %v1900
      %1933 = vst.msk [vmem:[#allocation3 + $0x124] sm:$0xf] %vm733, %v1901
      %1934 = vst.msk [vmem:[#allocation3 + $0x138] sm:$0xf] %vm733, %v1902
      %1935 = vst.msk [vmem:[#allocation3 + $0x14c] sm:$0xf] %vm733, %v1903
      %1936 = vst.msk [vmem:[#allocation3 + $0x160] sm:$0xf] %vm733, %v1904
      %1937 = vst.msk [vmem:[#allocation3 + $0x174] sm:$0xf] %vm733, %v1905
      %1938 = vst.msk [vmem:[#allocation3 + $0x188] sm:$0xf] %vm733, %v1906
      %1939 = vst.msk [vmem:[#allocation3 + $0x19c] sm:$0xf] %vm733, %v1907
      %1940 = vst.msk [vmem:[#allocation3 + $0x1b0] sm:$0xf] %vm733, %v1908
      %1941 = vst.msk [vmem:[#allocation3 + $0x1c4] sm:$0xf] %vm733, %v1909
      %1942 = vst.msk [vmem:[#allocation3 + $0x1d8] sm:$0xf] %vm733, %v1910
      %1943 = vst.msk [vmem:[#allocation3 + $0x1ec] sm:$0xf] %vm733, %v1911
      %1944 = vst.msk [vmem:[#allocation3 + $0x200] sm:$0xf] %vm733, %v1912
      %1945 = vst.msk [vmem:[#allocation3 + $0x214] sm:$0xf] %vm733, %v1913
      %1946 = vst.msk [vmem:[#allocation3 + $0x228] sm:$0xf] %vm733, %v1914
      %1947 = vst.msk [vmem:[#allocation3 + $0x23c] sm:$0xf] %vm733, %v1915
      %1948 = vst.msk [vmem:[#allocation3 + $0x250] sm:$0xf] %vm733, %v1916
      %1949 = vst.msk [vmem:[#allocation3 + $0x264] sm:$0xf] %vm733, %v1917
      %1950 = vst.msk [vmem:[#allocation3 + $0x278] sm:$0xf] %vm733, %v1918
      %v1951 = vld [vmem:[#allocation2 + $0x28] sm:$0xff]
      %v1952 = vld [vmem:[#allocation2 + $0x30] sm:$0xff]
      %v1953 = vld [vmem:[#allocation2 + $0x38] sm:$0xff]
      %v1954 = vld [vmem:[#allocation2 + $0x40] sm:$0xff]
      %v1955 = vld [vmem:[#allocation2 + $0x48] sm:$0xff]
      %v1956 = vld [vmem:[#allocation2 + $0x50] sm:$0xff]
      %v1957 = vld [vmem:[#allocation2 + $0x58] sm:$0xff]
      %v1958 = vld [vmem:[#allocation2 + $0x60] sm:$0xff]
      %v1959 = vld [vmem:[#allocation2 + $0x68] sm:$0xff]
      %v1960 = vld [vmem:[#allocation2 + $0x70] sm:$0xff]
      %v1961 = vld [vmem:[#allocation2 + $0x78] sm:$0xff]
      %v1962 = vld [vmem:[#allocation2 + $0x80] sm:$0xff]
      %v1963 = vld [vmem:[#allocation2 + $0x88] sm:$0xff]
      %v1964 = vld [vmem:[#allocation2 + $0x90] sm:$0xff]
      %v1965 = vld [vmem:[#allocation2 + $0x98] sm:$0xff]
      %v1966 = vld [vmem:[#allocation2 + $0xa0] sm:$0xff]
      %v1967 = vld [vmem:[#allocation2 + $0xa8] sm:$0xff]
      %v1968 = vld [vmem:[#allocation2 + $0xb0] sm:$0xff]
      %v1969 = vld [vmem:[#allocation2 + $0xb8] sm:$0xff]
      %v1970 = vld [vmem:[#allocation2 + $0xc0] sm:$0xff]
      %v1971 = vld [vmem:[#allocation2 + $0xc8] sm:$0xff]
      %v1972 = vld [vmem:[#allocation2 + $0xd0] sm:$0xff]
      %v1973 = vld [vmem:[#allocation2 + $0xd8] sm:$0xff]
      %v1974 = vld [vmem:[#allocation2 + $0xe0] sm:$0xff]
      %v1975 = vld [vmem:[#allocation2 + $0xe8] sm:$0xff]
      %v1976 = vld [vmem:[#allocation2 + $0xf0] sm:$0xff]
      %v1977 = vld [vmem:[#allocation2 + $0xf8] sm:$0xff]
      %v1978 = vld [vmem:[#allocation2 + $0x100] sm:$0xff]
      %v1979 = vld [vmem:[#allocation2 + $0x108] sm:$0xff]
      %v1980 = vld [vmem:[#allocation2 + $0x110] sm:$0xff]
      %v1981 = vld [vmem:[#allocation2 + $0x118] sm:$0xff]
      %v1982 = vld [vmem:[#allocation2 + $0x120] sm:$0xff]
      %v1983 = vsel %vm509, %v1951, 0.0
      %v1984 = vsel %vm510, %v1952, 0.0
      %v1985 = vsel %vm511, %v1953, 0.0
      %v1986 = vsel %vm512, %v1954, 0.0
      %v1987 = vsel %vm513, %v1955, 0.0
      %v1988 = vsel %vm514, %v1956, 0.0
      %v1989 = vsel %vm515, %v1957, 0.0
      %v1990 = vsel %vm516, %v1958, 0.0
      %v1991 = vsel %vm517, %v1959, 0.0
      %v1992 = vsel %vm518, %v1960, 0.0
      %v1993 = vsel %vm519, %v1961, 0.0
      %v1994 = vsel %vm520, %v1962, 0.0
      %v1995 = vsel %vm521, %v1963, 0.0
      %v1996 = vsel %vm522, %v1964, 0.0
      %v1997 = vsel %vm523, %v1965, 0.0
      %v1998 = vsel %vm524, %v1966, 0.0
      %v1999 = vsel %vm525, %v1967, 0.0
      %v2000 = vsel %vm526, %v1968, 0.0
      %v2001 = vsel %vm527, %v1969, 0.0
      %v2002 = vsel %vm528, %v1970, 0.0
      %v2003 = vsel %vm529, %v1971, 0.0
      %v2004 = vsel %vm530, %v1972, 0.0
      %v2005 = vsel %vm531, %v1973, 0.0
      %v2006 = vsel %vm532, %v1974, 0.0
      %v2007 = vsel %vm533, %v1975, 0.0
      %v2008 = vsel %vm534, %v1976, 0.0
      %v2009 = vsel %vm535, %v1977, 0.0
      %v2010 = vsel %vm536, %v1978, 0.0
      %v2011 = vsel %vm537, %v1979, 0.0
      %v2012 = vsel %vm538, %v1980, 0.0
      %v2013 = vsel %vm539, %v1981, 0.0
      %v2014 = vsel %vm540, %v1982, 0.0
      %v2015 = vpack.c.bf16 %v1983, %v1983
      %v2016 = vpack.c.bf16 %v1984, %v1984
      %v2017 = vpack.c.bf16 %v1985, %v1985
      %v2018 = vpack.c.bf16 %v1986, %v1986
      %v2019 = vpack.c.bf16 %v1987, %v1987
      %v2020 = vpack.c.bf16 %v1988, %v1988
      %v2021 = vpack.c.bf16 %v1989, %v1989
      %v2022 = vpack.c.bf16 %v1990, %v1990
      %v2023 = vpack.c.bf16 %v1991, %v1991
      %v2024 = vpack.c.bf16 %v1992, %v1992
      %v2025 = vpack.c.bf16 %v1993, %v1993
      %v2026 = vpack.c.bf16 %v1994, %v1994
      %v2027 = vpack.c.bf16 %v1995, %v1995
      %v2028 = vpack.c.bf16 %v1996, %v1996
      %v2029 = vpack.c.bf16 %v1997, %v1997
      %v2030 = vpack.c.bf16 %v1998, %v1998
      %v2031 = vpack.c.bf16 %v1999, %v1999
      %v2032 = vpack.c.bf16 %v2000, %v2000
      %v2033 = vpack.c.bf16 %v2001, %v2001
      %v2034 = vpack.c.bf16 %v2002, %v2002
      %v2035 = vpack.c.bf16 %v2003, %v2003
      %v2036 = vpack.c.bf16 %v2004, %v2004
      %v2037 = vpack.c.bf16 %v2005, %v2005
      %v2038 = vpack.c.bf16 %v2006, %v2006
      %v2039 = vpack.c.bf16 %v2007, %v2007
      %v2040 = vpack.c.bf16 %v2008, %v2008
      %v2041 = vpack.c.bf16 %v2009, %v2009
      %v2042 = vpack.c.bf16 %v2010, %v2010
      %v2043 = vpack.c.bf16 %v2011, %v2011
      %v2044 = vpack.c.bf16 %v2012, %v2012
      %v2045 = vpack.c.bf16 %v2013, %v2013
      %v2046 = vpack.c.bf16 %v2014, %v2014
      %2079 = vrot.lane.b32.xlu0 %v2015, 64
      %v2080 = vpop.permute.xlu0 %2079
      %2081 = vrot.lane.b32.xlu0 %v2016, 64
      %v2082 = vpop.permute.xlu0 %2081
      %2083 = vrot.lane.b32.xlu0 %v2017, 64
      %v2084 = vpop.permute.xlu0 %2083
      %2085 = vrot.lane.b32.xlu0 %v2018, 64
      %v2086 = vpop.permute.xlu0 %2085
      %2087 = vrot.lane.b32.xlu0 %v2019, 64
      %v2088 = vpop.permute.xlu0 %2087
      %2089 = vrot.lane.b32.xlu0 %v2020, 64
      %v2090 = vpop.permute.xlu0 %2089
      %2091 = vrot.lane.b32.xlu0 %v2021, 64
      %v2092 = vpop.permute.xlu0 %2091
      %2093 = vrot.lane.b32.xlu0 %v2022, 64
      %v2094 = vpop.permute.xlu0 %2093
      %2095 = vrot.lane.b32.xlu0 %v2023, 64
      %v2096 = vpop.permute.xlu0 %2095
      %2097 = vrot.lane.b32.xlu0 %v2024, 64
      %v2098 = vpop.permute.xlu0 %2097
      %2099 = vrot.lane.b32.xlu0 %v2025, 64
      %v2100 = vpop.permute.xlu0 %2099
      %2101 = vrot.lane.b32.xlu0 %v2026, 64
      %v2102 = vpop.permute.xlu0 %2101
      %2103 = vrot.lane.b32.xlu0 %v2027, 64
      %v2104 = vpop.permute.xlu0 %2103
      %2105 = vrot.lane.b32.xlu0 %v2028, 64
      %v2106 = vpop.permute.xlu0 %2105
      %2107 = vrot.lane.b32.xlu0 %v2029, 64
      %v2108 = vpop.permute.xlu0 %2107
      %2109 = vrot.lane.b32.xlu0 %v2030, 64
      %v2110 = vpop.permute.xlu0 %2109
      %2111 = vrot.lane.b32.xlu0 %v2031, 64
      %v2112 = vpop.permute.xlu0 %2111
      %2113 = vrot.lane.b32.xlu0 %v2032, 64
      %v2114 = vpop.permute.xlu0 %2113
      %2115 = vrot.lane.b32.xlu0 %v2033, 64
      %v2116 = vpop.permute.xlu0 %2115
      %2117 = vrot.lane.b32.xlu0 %v2034, 64
      %v2118 = vpop.permute.xlu0 %2117
      %2119 = vrot.lane.b32.xlu0 %v2035, 64
      %v2120 = vpop.permute.xlu0 %2119
      %2121 = vrot.lane.b32.xlu0 %v2036, 64
      %v2122 = vpop.permute.xlu0 %2121
      %2123 = vrot.lane.b32.xlu0 %v2037, 64
      %v2124 = vpop.permute.xlu0 %2123
      %2125 = vrot.lane.b32.xlu0 %v2038, 64
      %v2126 = vpop.permute.xlu0 %2125
      %2127 = vrot.lane.b32.xlu0 %v2039, 64
      %v2128 = vpop.permute.xlu0 %2127
      %2129 = vrot.lane.b32.xlu0 %v2040, 64
      %v2130 = vpop.permute.xlu0 %2129
      %2131 = vrot.lane.b32.xlu0 %v2041, 64
      %v2132 = vpop.permute.xlu0 %2131
      %2133 = vrot.lane.b32.xlu0 %v2042, 64
      %v2134 = vpop.permute.xlu0 %2133
      %2135 = vrot.lane.b32.xlu0 %v2043, 64
      %v2136 = vpop.permute.xlu0 %2135
      %2137 = vrot.lane.b32.xlu0 %v2044, 64
      %v2138 = vpop.permute.xlu0 %2137
      %2139 = vrot.lane.b32.xlu0 %v2045, 64
      %v2140 = vpop.permute.xlu0 %2139
      %2141 = vrot.lane.b32.xlu0 %v2046, 64
      %v2142 = vpop.permute.xlu0 %2141
      %2175 = vst.msk [vmem:[#allocation3 + $0xc] sm:$0xf] %vm990, %v2080
      %2176 = vst.msk [vmem:[#allocation3 + $0x20] sm:$0xf] %vm990, %v2082
      %2177 = vst.msk [vmem:[#allocation3 + $0x34] sm:$0xf] %vm990, %v2084
      %2178 = vst.msk [vmem:[#allocation3 + $0x48] sm:$0xf] %vm990, %v2086
      %2179 = vst.msk [vmem:[#allocation3 + $0x5c] sm:$0xf] %vm990, %v2088
      %2180 = vst.msk [vmem:[#allocation3 + $0x70] sm:$0xf] %vm990, %v2090
      %2181 = vst.msk [vmem:[#allocation3 + $0x84] sm:$0xf] %vm990, %v2092
      %2182 = vst.msk [vmem:[#allocation3 + $0x98] sm:$0xf] %vm990, %v2094
      %2183 = vst.msk [vmem:[#allocation3 + $0xac] sm:$0xf] %vm990, %v2096
      %2184 = vst.msk [vmem:[#allocation3 + $0xc0] sm:$0xf] %vm990, %v2098
      %2185 = vst.msk [vmem:[#allocation3 + $0xd4] sm:$0xf] %vm990, %v2100
      %2186 = vst.msk [vmem:[#allocation3 + $0xe8] sm:$0xf] %vm990, %v2102
      %2187 = vst.msk [vmem:[#allocation3 + $0xfc] sm:$0xf] %vm990, %v2104
      %2188 = vst.msk [vmem:[#allocation3 + $0x110] sm:$0xf] %vm990, %v2106
      %2189 = vst.msk [vmem:[#allocation3 + $0x124] sm:$0xf] %vm990, %v2108
      %2190 = vst.msk [vmem:[#allocation3 + $0x138] sm:$0xf] %vm990, %v2110
      %2191 = vst.msk [vmem:[#allocation3 + $0x14c] sm:$0xf] %vm990, %v2112
      %2192 = vst.msk [vmem:[#allocation3 + $0x160] sm:$0xf] %vm990, %v2114
      %2193 = vst.msk [vmem:[#allocation3 + $0x174] sm:$0xf] %vm990, %v2116
      %2194 = vst.msk [vmem:[#allocation3 + $0x188] sm:$0xf] %vm990, %v2118
      %2195 = vst.msk [vmem:[#allocation3 + $0x19c] sm:$0xf] %vm990, %v2120
      %2196 = vst.msk [vmem:[#allocation3 + $0x1b0] sm:$0xf] %vm990, %v2122
      %2197 = vst.msk [vmem:[#allocation3 + $0x1c4] sm:$0xf] %vm990, %v2124
      %2198 = vst.msk [vmem:[#allocation3 + $0x1d8] sm:$0xf] %vm990, %v2126
      %2199 = vst.msk [vmem:[#allocation3 + $0x1ec] sm:$0xf] %vm990, %v2128
      %2200 = vst.msk [vmem:[#allocation3 + $0x200] sm:$0xf] %vm990, %v2130
      %2201 = vst.msk [vmem:[#allocation3 + $0x214] sm:$0xf] %vm990, %v2132
      %2202 = vst.msk [vmem:[#allocation3 + $0x228] sm:$0xf] %vm990, %v2134
      %2203 = vst.msk [vmem:[#allocation3 + $0x23c] sm:$0xf] %vm990, %v2136
      %2204 = vst.msk [vmem:[#allocation3 + $0x250] sm:$0xf] %vm990, %v2138
      %2205 = vst.msk [vmem:[#allocation3 + $0x264] sm:$0xf] %vm990, %v2140
      %2206 = vst.msk [vmem:[#allocation3 + $0x278] sm:$0xf] %vm990, %v2142
      %v2207 = vld [vmem:[#allocation2 + $0x29] sm:$0xff]
      %v2208 = vld [vmem:[#allocation2 + $0x31] sm:$0xff]
      %v2209 = vld [vmem:[#allocation2 + $0x39] sm:$0xff]
      %v2210 = vld [vmem:[#allocation2 + $0x41] sm:$0xff]
      %v2211 = vld [vmem:[#allocation2 + $0x49] sm:$0xff]
      %v2212 = vld [vmem:[#allocation2 + $0x51] sm:$0xff]
      %v2213 = vld [vmem:[#allocation2 + $0x59] sm:$0xff]
      %v2214 = vld [vmem:[#allocation2 + $0x61] sm:$0xff]
      %v2215 = vld [vmem:[#allocation2 + $0x69] sm:$0xff]
      %v2216 = vld [vmem:[#allocation2 + $0x71] sm:$0xff]
      %v2217 = vld [vmem:[#allocation2 + $0x79] sm:$0xff]
      %v2218 = vld [vmem:[#allocation2 + $0x81] sm:$0xff]
      %v2219 = vld [vmem:[#allocation2 + $0x89] sm:$0xff]
      %v2220 = vld [vmem:[#allocation2 + $0x91] sm:$0xff]
      %v2221 = vld [vmem:[#allocation2 + $0x99] sm:$0xff]
      %v2222 = vld [vmem:[#allocation2 + $0xa1] sm:$0xff]
      %v2223 = vld [vmem:[#allocation2 + $0xa9] sm:$0xff]
      %v2224 = vld [vmem:[#allocation2 + $0xb1] sm:$0xff]
      %v2225 = vld [vmem:[#allocation2 + $0xb9] sm:$0xff]
      %v2226 = vld [vmem:[#allocation2 + $0xc1] sm:$0xff]
      %v2227 = vld [vmem:[#allocation2 + $0xc9] sm:$0xff]
      %v2228 = vld [vmem:[#allocation2 + $0xd1] sm:$0xff]
      %v2229 = vld [vmem:[#allocation2 + $0xd9] sm:$0xff]
      %v2230 = vld [vmem:[#allocation2 + $0xe1] sm:$0xff]
      %v2231 = vld [vmem:[#allocation2 + $0xe9] sm:$0xff]
      %v2232 = vld [vmem:[#allocation2 + $0xf1] sm:$0xff]
      %v2233 = vld [vmem:[#allocation2 + $0xf9] sm:$0xff]
      %v2234 = vld [vmem:[#allocation2 + $0x101] sm:$0xff]
      %v2235 = vld [vmem:[#allocation2 + $0x109] sm:$0xff]
      %v2236 = vld [vmem:[#allocation2 + $0x111] sm:$0xff]
      %v2237 = vld [vmem:[#allocation2 + $0x119] sm:$0xff]
      %v2238 = vld [vmem:[#allocation2 + $0x121] sm:$0xff]
      %vm2239 = vmand %vm509, %vm573
      %vm2240 = vmand %vm510, %vm574
      %vm2241 = vmand %vm511, %vm575
      %vm2242 = vmand %vm512, %vm576
      %vm2243 = vmand %vm513, %vm577
      %vm2244 = vmand %vm514, %vm578
      %vm2245 = vmand %vm515, %vm579
      %vm2246 = vmand %vm516, %vm580
      %vm2247 = vmand %vm517, %vm581
      %vm2248 = vmand %vm518, %vm582
      %vm2249 = vmand %vm519, %vm583
      %vm2250 = vmand %vm520, %vm584
      %vm2251 = vmand %vm521, %vm585
      %vm2252 = vmand %vm522, %vm586
      %vm2253 = vmand %vm523, %vm587
      %vm2254 = vmand %vm524, %vm588
      %vm2255 = vmand %vm525, %vm589
      %vm2256 = vmand %vm526, %vm590
      %vm2257 = vmand %vm527, %vm591
      %vm2258 = vmand %vm528, %vm592
      %vm2259 = vmand %vm529, %vm593
      %vm2260 = vmand %vm530, %vm594
      %vm2261 = vmand %vm531, %vm595
      %vm2262 = vmand %vm532, %vm596
      %vm2263 = vmand %vm533, %vm597
      %vm2264 = vmand %vm534, %vm598
      %vm2265 = vmand %vm535, %vm599
      %vm2266 = vmand %vm536, %vm600
      %vm2267 = vmand %vm537, %vm601
      %vm2268 = vmand %vm538, %vm602
      %vm2269 = vmand %vm539, %vm603
      %vm2270 = vmand %vm540, %vm604
      %v2271 = vsel %vm2239, %v2207, 0.0
      %v2272 = vsel %vm2240, %v2208, 0.0
      %v2273 = vsel %vm2241, %v2209, 0.0
      %v2274 = vsel %vm2242, %v2210, 0.0
      %v2275 = vsel %vm2243, %v2211, 0.0
      %v2276 = vsel %vm2244, %v2212, 0.0
      %v2277 = vsel %vm2245, %v2213, 0.0
      %v2278 = vsel %vm2246, %v2214, 0.0
      %v2279 = vsel %vm2247, %v2215, 0.0
      %v2280 = vsel %vm2248, %v2216, 0.0
      %v2281 = vsel %vm2249, %v2217, 0.0
      %v2282 = vsel %vm2250, %v2218, 0.0
      %v2283 = vsel %vm2251, %v2219, 0.0
      %v2284 = vsel %vm2252, %v2220, 0.0
      %v2285 = vsel %vm2253, %v2221, 0.0
      %v2286 = vsel %vm2254, %v2222, 0.0
      %v2287 = vsel %vm2255, %v2223, 0.0
      %v2288 = vsel %vm2256, %v2224, 0.0
      %v2289 = vsel %vm2257, %v2225, 0.0
      %v2290 = vsel %vm2258, %v2226, 0.0
      %v2291 = vsel %vm2259, %v2227, 0.0
      %v2292 = vsel %vm2260, %v2228, 0.0
      %v2293 = vsel %vm2261, %v2229, 0.0
      %v2294 = vsel %vm2262, %v2230, 0.0
      %v2295 = vsel %vm2263, %v2231, 0.0
      %v2296 = vsel %vm2264, %v2232, 0.0
      %v2297 = vsel %vm2265, %v2233, 0.0
      %v2298 = vsel %vm2266, %v2234, 0.0
      %v2299 = vsel %vm2267, %v2235, 0.0
      %v2300 = vsel %vm2268, %v2236, 0.0
      %v2301 = vsel %vm2269, %v2237, 0.0
      %v2302 = vsel %vm2270, %v2238, 0.0
      %v2303 = vpack.c.bf16 %v2271, %v2271
      %v2304 = vpack.c.bf16 %v2272, %v2272
      %v2305 = vpack.c.bf16 %v2273, %v2273
      %v2306 = vpack.c.bf16 %v2274, %v2274
      %v2307 = vpack.c.bf16 %v2275, %v2275
      %v2308 = vpack.c.bf16 %v2276, %v2276
      %v2309 = vpack.c.bf16 %v2277, %v2277
      %v2310 = vpack.c.bf16 %v2278, %v2278
      %v2311 = vpack.c.bf16 %v2279, %v2279
      %v2312 = vpack.c.bf16 %v2280, %v2280
      %v2313 = vpack.c.bf16 %v2281, %v2281
      %v2314 = vpack.c.bf16 %v2282, %v2282
      %v2315 = vpack.c.bf16 %v2283, %v2283
      %v2316 = vpack.c.bf16 %v2284, %v2284
      %v2317 = vpack.c.bf16 %v2285, %v2285
      %v2318 = vpack.c.bf16 %v2286, %v2286
      %v2319 = vpack.c.bf16 %v2287, %v2287
      %v2320 = vpack.c.bf16 %v2288, %v2288
      %v2321 = vpack.c.bf16 %v2289, %v2289
      %v2322 = vpack.c.bf16 %v2290, %v2290
      %v2323 = vpack.c.bf16 %v2291, %v2291
      %v2324 = vpack.c.bf16 %v2292, %v2292
      %v2325 = vpack.c.bf16 %v2293, %v2293
      %v2326 = vpack.c.bf16 %v2294, %v2294
      %v2327 = vpack.c.bf16 %v2295, %v2295
      %v2328 = vpack.c.bf16 %v2296, %v2296
      %v2329 = vpack.c.bf16 %v2297, %v2297
      %v2330 = vpack.c.bf16 %v2298, %v2298
      %v2331 = vpack.c.bf16 %v2299, %v2299
      %v2332 = vpack.c.bf16 %v2300, %v2300
      %v2333 = vpack.c.bf16 %v2301, %v2301
      %v2334 = vpack.c.bf16 %v2302, %v2302
      %2335 = vst.msk [vmem:[#allocation3 + $0x10] sm:$0xf] %vm733, %v2303
      %2336 = vst.msk [vmem:[#allocation3 + $0x24] sm:$0xf] %vm733, %v2304
      %2337 = vst.msk [vmem:[#allocation3 + $0x38] sm:$0xf] %vm733, %v2305
      %2338 = vst.msk [vmem:[#allocation3 + $0x4c] sm:$0xf] %vm733, %v2306
      %2339 = vst.msk [vmem:[#allocation3 + $0x60] sm:$0xf] %vm733, %v2307
      %2340 = vst.msk [vmem:[#allocation3 + $0x74] sm:$0xf] %vm733, %v2308
      %2341 = vst.msk [vmem:[#allocation3 + $0x88] sm:$0xf] %vm733, %v2309
      %2342 = vst.msk [vmem:[#allocation3 + $0x9c] sm:$0xf] %vm733, %v2310
      %2343 = vst.msk [vmem:[#allocation3 + $0xb0] sm:$0xf] %vm733, %v2311
      %2344 = vst.msk [vmem:[#allocation3 + $0xc4] sm:$0xf] %vm733, %v2312
      %2345 = vst.msk [vmem:[#allocation3 + $0xd8] sm:$0xf] %vm733, %v2313
      %2346 = vst.msk [vmem:[#allocation3 + $0xec] sm:$0xf] %vm733, %v2314
      %2347 = vst.msk [vmem:[#allocation3 + $0x100] sm:$0xf] %vm733, %v2315
      %2348 = vst.msk [vmem:[#allocation3 + $0x114] sm:$0xf] %vm733, %v2316
      %2349 = vst.msk [vmem:[#allocation3 + $0x128] sm:$0xf] %vm733, %v2317
      %2350 = vst.msk [vmem:[#allocation3 + $0x13c] sm:$0xf] %vm733, %v2318
      %2351 = vst.msk [vmem:[#allocation3 + $0x150] sm:$0xf] %vm733, %v2319
      %2352 = vst.msk [vmem:[#allocation3 + $0x164] sm:$0xf] %vm733, %v2320
      %2353 = vst.msk [vmem:[#allocation3 + $0x178] sm:$0xf] %vm733, %v2321
      %2354 = vst.msk [vmem:[#allocation3 + $0x18c] sm:$0xf] %vm733, %v2322
      %2355 = vst.msk [vmem:[#allocation3 + $0x1a0] sm:$0xf] %vm733, %v2323
      %2356 = vst.msk [vmem:[#allocation3 + $0x1b4] sm:$0xf] %vm733, %v2324
      %2357 = vst.msk [vmem:[#allocation3 + $0x1c8] sm:$0xf] %vm733, %v2325
      %2358 = vst.msk [vmem:[#allocation3 + $0x1dc] sm:$0xf] %vm733, %v2326
      %2359 = vst.msk [vmem:[#allocation3 + $0x1f0] sm:$0xf] %vm733, %v2327
      %2360 = vst.msk [vmem:[#allocation3 + $0x204] sm:$0xf] %vm733, %v2328
      %2361 = vst.msk [vmem:[#allocation3 + $0x218] sm:$0xf] %vm733, %v2329
      %2362 = vst.msk [vmem:[#allocation3 + $0x22c] sm:$0xf] %vm733, %v2330
      %2363 = vst.msk [vmem:[#allocation3 + $0x240] sm:$0xf] %vm733, %v2331
      %2364 = vst.msk [vmem:[#allocation3 + $0x254] sm:$0xf] %vm733, %v2332
      %2365 = vst.msk [vmem:[#allocation3 + $0x268] sm:$0xf] %vm733, %v2333
      %2366 = vst.msk [vmem:[#allocation3 + $0x27c] sm:$0xf] %vm733, %v2334
      %v2367 = vld [vmem:[#allocation3] sm:$0xff]
      %v2368 = vld [vmem:[#allocation3 + $0x8] sm:$0xff]
      %v2369 = vld [vmem:[#allocation3 + $0x10] sm:$0xf]
      %v2370 = vld [vmem:[#allocation3 + $0x14] sm:$0xff]
      %v2371 = vld [vmem:[#allocation3 + $0x1c] sm:$0xff]
      %v2372 = vld [vmem:[#allocation3 + $0x24] sm:$0xf]
      %v2373 = vld [vmem:[#allocation3 + $0x28] sm:$0xff]
      %v2374 = vld [vmem:[#allocation3 + $0x30] sm:$0xff]
      %v2375 = vld [vmem:[#allocation3 + $0x38] sm:$0xf]
      %v2376 = vld [vmem:[#allocation3 + $0x3c] sm:$0xff]
      %v2377 = vld [vmem:[#allocation3 + $0x44] sm:$0xff]
      %v2378 = vld [vmem:[#allocation3 + $0x4c] sm:$0xf]
      %v2379 = vld [vmem:[#allocation3 + $0x50] sm:$0xff]
      %v2380 = vld [vmem:[#allocation3 + $0x58] sm:$0xff]
      %v2381 = vld [vmem:[#allocation3 + $0x60] sm:$0xf]
      %v2382 = vld [vmem:[#allocation3 + $0x64] sm:$0xff]
      %v2383 = vld [vmem:[#allocation3 + $0x6c] sm:$0xff]
      %v2384 = vld [vmem:[#allocation3 + $0x74] sm:$0xf]
      %v2385 = vld [vmem:[#allocation3 + $0x78] sm:$0xff]
      %v2386 = vld [vmem:[#allocation3 + $0x80] sm:$0xff]
      %v2387 = vld [vmem:[#allocation3 + $0x88] sm:$0xf]
      %v2388 = vld [vmem:[#allocation3 + $0x8c] sm:$0xff]
      %v2389 = vld [vmem:[#allocation3 + $0x94] sm:$0xff]
      %v2390 = vld [vmem:[#allocation3 + $0x9c] sm:$0xf]
      %v2391 = vld [vmem:[#allocation3 + $0xa0] sm:$0xff]
      %v2392 = vld [vmem:[#allocation3 + $0xa8] sm:$0xff]
      %v2393 = vld [vmem:[#allocation3 + $0xb0] sm:$0xf]
      %v2394 = vld [vmem:[#allocation3 + $0xb4] sm:$0xff]
      %v2395 = vld [vmem:[#allocation3 + $0xbc] sm:$0xff]
      %v2396 = vld [vmem:[#allocation3 + $0xc4] sm:$0xf]
      %v2397 = vld [vmem:[#allocation3 + $0xc8] sm:$0xff]
      %v2398 = vld [vmem:[#allocation3 + $0xd0] sm:$0xff]
      %v2399 = vld [vmem:[#allocation3 + $0xd8] sm:$0xf]
      %v2400 = vld [vmem:[#allocation3 + $0xdc] sm:$0xff]
      %v2401 = vld [vmem:[#allocation3 + $0xe4] sm:$0xff]
      %v2402 = vld [vmem:[#allocation3 + $0xec] sm:$0xf]
      %v2403 = vld [vmem:[#allocation3 + $0xf0] sm:$0xff]
      %v2404 = vld [vmem:[#allocation3 + $0xf8] sm:$0xff]
      %v2405 = vld [vmem:[#allocation3 + $0x100] sm:$0xf]
      %v2406 = vld [vmem:[#allocation3 + $0x104] sm:$0xff]
      %v2407 = vld [vmem:[#allocation3 + $0x10c] sm:$0xff]
      %v2408 = vld [vmem:[#allocation3 + $0x114] sm:$0xf]
      %v2409 = vld [vmem:[#allocation3 + $0x118] sm:$0xff]
      %v2410 = vld [vmem:[#allocation3 + $0x120] sm:$0xff]
      %v2411 = vld [vmem:[#allocation3 + $0x128] sm:$0xf]
      %v2412 = vld [vmem:[#allocation3 + $0x12c] sm:$0xff]
      %v2413 = vld [vmem:[#allocation3 + $0x134] sm:$0xff]
      %v2414 = vld [vmem:[#allocation3 + $0x13c] sm:$0xf]
      %v2415 = vld [vmem:[#allocation3 + $0x140] sm:$0xff]
      %v2416 = vld [vmem:[#allocation3 + $0x148] sm:$0xff]
      %v2417 = vld [vmem:[#allocation3 + $0x150] sm:$0xf]
      %v2418 = vld [vmem:[#allocation3 + $0x154] sm:$0xff]
      %v2419 = vld [vmem:[#allocation3 + $0x15c] sm:$0xff]
      %v2420 = vld [vmem:[#allocation3 + $0x164] sm:$0xf]
      %v2421 = vld [vmem:[#allocation3 + $0x168] sm:$0xff]
      %v2422 = vld [vmem:[#allocation3 + $0x170] sm:$0xff]
      %v2423 = vld [vmem:[#allocation3 + $0x178] sm:$0xf]
      %v2424 = vld [vmem:[#allocation3 + $0x17c] sm:$0xff]
      %v2425 = vld [vmem:[#allocation3 + $0x184] sm:$0xff]
      %v2426 = vld [vmem:[#allocation3 + $0x18c] sm:$0xf]
      %v2427 = vld [vmem:[#allocation3 + $0x190] sm:$0xff]
      %v2428 = vld [vmem:[#allocation3 + $0x198] sm:$0xff]
      %v2429 = vld [vmem:[#allocation3 + $0x1a0] sm:$0xf]
      %v2430 = vld [vmem:[#allocation3 + $0x1a4] sm:$0xff]
      %v2431 = vld [vmem:[#allocation3 + $0x1ac] sm:$0xff]
      %v2432 = vld [vmem:[#allocation3 + $0x1b4] sm:$0xf]
      %v2433 = vld [vmem:[#allocation3 + $0x1b8] sm:$0xff]
      %v2434 = vld [vmem:[#allocation3 + $0x1c0] sm:$0xff]
      %v2435 = vld [vmem:[#allocation3 + $0x1c8] sm:$0xf]
      %v2436 = vld [vmem:[#allocation3 + $0x1cc] sm:$0xff]
      %v2437 = vld [vmem:[#allocation3 + $0x1d4] sm:$0xff]
      %v2438 = vld [vmem:[#allocation3 + $0x1dc] sm:$0xf]
      %v2439 = vld [vmem:[#allocation3 + $0x1e0] sm:$0xff]
      %v2440 = vld [vmem:[#allocation3 + $0x1e8] sm:$0xff]
      %v2441 = vld [vmem:[#allocation3 + $0x1f0] sm:$0xf]
      %v2442 = vld [vmem:[#allocation3 + $0x1f4] sm:$0xff]
      %v2443 = vld [vmem:[#allocation3 + $0x1fc] sm:$0xff]
      %v2444 = vld [vmem:[#allocation3 + $0x204] sm:$0xf]
      %v2445 = vld [vmem:[#allocation3 + $0x208] sm:$0xff]
      %v2446 = vld [vmem:[#allocation3 + $0x210] sm:$0xff]
      %v2447 = vld [vmem:[#allocation3 + $0x218] sm:$0xf]
      %v2448 = vld [vmem:[#allocation3 + $0x21c] sm:$0xff]
      %v2449 = vld [vmem:[#allocation3 + $0x224] sm:$0xff]
      %v2450 = vld [vmem:[#allocation3 + $0x22c] sm:$0xf]
      %v2451 = vld [vmem:[#allocation3 + $0x230] sm:$0xff]
      %v2452 = vld [vmem:[#allocation3 + $0x238] sm:$0xff]
      %v2453 = vld [vmem:[#allocation3 + $0x240] sm:$0xf]
      %v2454 = vld [vmem:[#allocation3 + $0x244] sm:$0xff]
      %v2455 = vld [vmem:[#allocation3 + $0x24c] sm:$0xff]
      %v2456 = vld [vmem:[#allocation3 + $0x254] sm:$0xf]
      %v2457 = vld [vmem:[#allocation3 + $0x258] sm:$0xff]
      %v2458 = vld [vmem:[#allocation3 + $0x260] sm:$0xff]
      %v2459 = vld [vmem:[#allocation3 + $0x268] sm:$0xf]
      %v2460 = vld [vmem:[#allocation3 + $0x26c] sm:$0xff]
      %v2461 = vld [vmem:[#allocation3 + $0x274] sm:$0xff]
      %v2462 = vld [vmem:[#allocation3 + $0x27c] sm:$0xf]
      %v2463 = vld [vmem:[%s1] sm:$0xf]
      %v2464 = vld [vmem:[%s1 + $0x4] sm:$0xf]
      %v2465 = vld [vmem:[%s1 + $0x8] sm:$0xf]
      %v2466 = vld [vmem:[%s1 + $0xc] sm:$0xf]
      %v2467 = vld [vmem:[%s1 + $0x10] sm:$0xf]
      %v2468 = vld [vmem:[%s1 + $0x14] sm:$0xf]
      %v2469 = vld [vmem:[%s1 + $0x18] sm:$0xf]
      %v2470 = vld [vmem:[%s1 + $0x1c] sm:$0xf]
      %v2471 = vld [vmem:[%s1 + $0x20] sm:$0xf]
      %v2472 = vld [vmem:[%s1 + $0x24] sm:$0xf]
      %v2473 = vld [vmem:[%s1 + $0x28] sm:$0xf]
      %v2474 = vld [vmem:[%s1 + $0x2c] sm:$0xf]
      %v2475 = vld [vmem:[%s1 + $0x30] sm:$0xf]
      %v2476 = vld [vmem:[%s1 + $0x34] sm:$0xf]
      %v2477 = vld [vmem:[%s1 + $0x38] sm:$0xf]
      %v2478 = vld [vmem:[%s1 + $0x3c] sm:$0xf]
      %v2479 = vld [vmem:[%s1 + $0x40] sm:$0xf]
      %v2480 = vld [vmem:[%s1 + $0x44] sm:$0xf]
      %v2481 = vld [vmem:[%s1 + $0x48] sm:$0xf]
      %v2482 = vld [vmem:[%s1 + $0x4c] sm:$0xf]
      %v2483 = vld [vmem:[%s1 + $0x50] sm:$0xf]
      %v2484 = vld [vmem:[%s1 + $0x54] sm:$0xf]
      %v2485 = vld [vmem:[%s1 + $0x58] sm:$0xf]
      %v2486 = vld [vmem:[%s1 + $0x5c] sm:$0xf]
      %v2487 = vld [vmem:[%s1 + $0x60] sm:$0xf]
      %v2488 = vld [vmem:[%s1 + $0x64] sm:$0xf]
      %v2489 = vld [vmem:[%s1 + $0x68] sm:$0xf]
      %v2490 = vld [vmem:[%s1 + $0x6c] sm:$0xf]
      %v2491 = vld [vmem:[%s1 + $0x70] sm:$0xf]
      %v2492 = vld [vmem:[%s1 + $0x74] sm:$0xf]
      %v2493 = vld [vmem:[%s1 + $0x78] sm:$0xf]
      %v2494 = vld [vmem:[%s1 + $0x7c] sm:$0xf]
      %v2495 = vld [vmem:[%s1 + $0x80] sm:$0xf]
      %v2496 = vld [vmem:[%s1 + $0x84] sm:$0xf]
      %v2497 = vld [vmem:[%s1 + $0x88] sm:$0xf]
      %v2498 = vld [vmem:[%s1 + $0x8c] sm:$0xf]
      %v2499 = vld [vmem:[%s1 + $0x90] sm:$0xf]
      %v2500 = vld [vmem:[%s1 + $0x94] sm:$0xf]
      %v2501 = vld [vmem:[%s1 + $0x98] sm:$0xf]
      %v2502 = vld [vmem:[%s1 + $0x9c] sm:$0xf]
      %v2503 = vld [vmem:[%s1 + $0xa0] sm:$0xf]
      %v2504 = vld [vmem:[%s1 + $0xa4] sm:$0xf]
      %v2505 = vld [vmem:[%s1 + $0xa8] sm:$0xf]
      %v2506 = vld [vmem:[%s1 + $0xac] sm:$0xf]
      %v2507 = vld [vmem:[%s1 + $0xb0] sm:$0xf]
      %v2508 = vld [vmem:[%s1 + $0xb4] sm:$0xf]
      %v2509 = vld [vmem:[%s1 + $0xb8] sm:$0xf]
      %v2510 = vld [vmem:[%s1 + $0xbc] sm:$0xf]
      %v2511 = vld [vmem:[%s1 + $0xc0] sm:$0xf]
      %v2512 = vld [vmem:[%s1 + $0xc4] sm:$0xf]
      %v2513 = vld [vmem:[%s1 + $0xc8] sm:$0xf]
      %v2514 = vld [vmem:[%s1 + $0xcc] sm:$0xf]
      %v2515 = vld [vmem:[%s1 + $0xd0] sm:$0xf]
      %v2516 = vld [vmem:[%s1 + $0xd4] sm:$0xf]
      %v2517 = vld [vmem:[%s1 + $0xd8] sm:$0xf]
      %v2518 = vld [vmem:[%s1 + $0xdc] sm:$0xf]
      %v2519 = vld [vmem:[%s1 + $0xe0] sm:$0xf]
      %v2520 = vld [vmem:[%s1 + $0xe4] sm:$0xf]
      %v2521 = vld [vmem:[%s1 + $0xe8] sm:$0xf]
      %v2522 = vld [vmem:[%s1 + $0xec] sm:$0xf]
      %v2523 = vld [vmem:[%s1 + $0xf0] sm:$0xf]
      %v2524 = vld [vmem:[%s1 + $0xf4] sm:$0xf]
      %v2525 = vld [vmem:[%s1 + $0xf8] sm:$0xf]
      %v2526 = vld [vmem:[%s1 + $0xfc] sm:$0xf]
      %v2527 = vld [vmem:[%s1 + $0x100] sm:$0xf]
      %v2528 = vld [vmem:[%s1 + $0x104] sm:$0xf]
      %v2529 = vld [vmem:[%s1 + $0x108] sm:$0xf]
      %v2530 = vld [vmem:[%s1 + $0x10c] sm:$0xf]
      %v2531 = vld [vmem:[%s1 + $0x110] sm:$0xf]
      %v2532 = vld [vmem:[%s1 + $0x114] sm:$0xf]
      %v2533 = vld [vmem:[%s1 + $0x118] sm:$0xf]
      %v2534 = vld [vmem:[%s1 + $0x11c] sm:$0xf]
      %v2631 = vunpack.c.l.b16 %v2367
      %v2632 = vunpack.c.h.b16 %v2367
      %v2633 = vunpack.c.l.b16 %v2368
      %v2634 = vunpack.c.h.b16 %v2368
      %v2635 = vunpack.c.l.b16 %v2369
      %v2636 = vunpack.c.l.b16 %v2370
      %v2637 = vunpack.c.h.b16 %v2370
      %v2638 = vunpack.c.l.b16 %v2371
      %v2639 = vunpack.c.h.b16 %v2371
      %v2640 = vunpack.c.l.b16 %v2372
      %v2641 = vunpack.c.l.b16 %v2373
      %v2642 = vunpack.c.h.b16 %v2373
      %v2643 = vunpack.c.l.b16 %v2374
      %v2644 = vunpack.c.h.b16 %v2374
      %v2645 = vunpack.c.l.b16 %v2375
      %v2646 = vunpack.c.l.b16 %v2376
      %v2647 = vunpack.c.h.b16 %v2376
      %v2648 = vunpack.c.l.b16 %v2377
      %v2649 = vunpack.c.h.b16 %v2377
      %v2650 = vunpack.c.l.b16 %v2378
      %v2651 = vunpack.c.l.b16 %v2379
      %v2652 = vunpack.c.h.b16 %v2379
      %v2653 = vunpack.c.l.b16 %v2380
      %v2654 = vunpack.c.h.b16 %v2380
      %v2655 = vunpack.c.l.b16 %v2381
      %v2656 = vunpack.c.l.b16 %v2382
      %v2657 = vunpack.c.h.b16 %v2382
      %v2658 = vunpack.c.l.b16 %v2383
      %v2659 = vunpack.c.h.b16 %v2383
      %v2660 = vunpack.c.l.b16 %v2384
      %v2661 = vunpack.c.l.b16 %v2385
      %v2662 = vunpack.c.h.b16 %v2385
      %v2663 = vunpack.c.l.b16 %v2386
      %v2664 = vunpack.c.h.b16 %v2386
      %v2665 = vunpack.c.l.b16 %v2387
      %v2666 = vunpack.c.l.b16 %v2388
      %v2667 = vunpack.c.h.b16 %v2388
      %v2668 = vunpack.c.l.b16 %v2389
      %v2669 = vunpack.c.h.b16 %v2389
      %v2670 = vunpack.c.l.b16 %v2390
      %v2671 = vunpack.c.l.b16 %v2391
      %v2672 = vunpack.c.h.b16 %v2391
      %v2673 = vunpack.c.l.b16 %v2392
      %v2674 = vunpack.c.h.b16 %v2392
      %v2675 = vunpack.c.l.b16 %v2393
      %v2676 = vunpack.c.l.b16 %v2394
      %v2677 = vunpack.c.h.b16 %v2394
      %v2678 = vunpack.c.l.b16 %v2395
      %v2679 = vunpack.c.h.b16 %v2395
      %v2680 = vunpack.c.l.b16 %v2396
      %v2681 = vunpack.c.l.b16 %v2397
      %v2682 = vunpack.c.h.b16 %v2397
      %v2683 = vunpack.c.l.b16 %v2398
      %v2684 = vunpack.c.h.b16 %v2398
      %v2685 = vunpack.c.l.b16 %v2399
      %v2686 = vunpack.c.l.b16 %v2400
      %v2687 = vunpack.c.h.b16 %v2400
      %v2688 = vunpack.c.l.b16 %v2401
      %v2689 = vunpack.c.h.b16 %v2401
      %v2690 = vunpack.c.l.b16 %v2402
      %v2691 = vunpack.c.l.b16 %v2403
      %v2692 = vunpack.c.h.b16 %v2403
      %v2693 = vunpack.c.l.b16 %v2404
      %v2694 = vunpack.c.h.b16 %v2404
      %v2695 = vunpack.c.l.b16 %v2405
      %v2696 = vunpack.c.l.b16 %v2406
      %v2697 = vunpack.c.h.b16 %v2406
      %v2698 = vunpack.c.l.b16 %v2407
      %v2699 = vunpack.c.h.b16 %v2407
      %v2700 = vunpack.c.l.b16 %v2408
      %v2701 = vunpack.c.l.b16 %v2409
      %v2702 = vunpack.c.h.b16 %v2409
      %v2703 = vunpack.c.l.b16 %v2410
      %v2704 = vunpack.c.h.b16 %v2410
      %v2705 = vunpack.c.l.b16 %v2411
      %v2706 = vunpack.c.l.b16 %v2412
      %v2707 = vunpack.c.h.b16 %v2412
      %v2708 = vunpack.c.l.b16 %v2413
      %v2709 = vunpack.c.h.b16 %v2413
      %v2710 = vunpack.c.l.b16 %v2414
      %v2711 = vunpack.c.l.b16 %v2415
      %v2712 = vunpack.c.h.b16 %v2415
      %v2713 = vunpack.c.l.b16 %v2416
      %v2714 = vunpack.c.h.b16 %v2416
      %v2715 = vunpack.c.l.b16 %v2417
      %v2716 = vunpack.c.l.b16 %v2418
      %v2717 = vunpack.c.h.b16 %v2418
      %v2718 = vunpack.c.l.b16 %v2419
      %v2719 = vunpack.c.h.b16 %v2419
      %v2720 = vunpack.c.l.b16 %v2420
      %v2721 = vunpack.c.l.b16 %v2421
      %v2722 = vunpack.c.h.b16 %v2421
      %v2723 = vunpack.c.l.b16 %v2422
      %v2724 = vunpack.c.h.b16 %v2422
      %v2725 = vunpack.c.l.b16 %v2423
      %v2726 = vunpack.c.l.b16 %v2424
      %v2727 = vunpack.c.h.b16 %v2424
      %v2728 = vunpack.c.l.b16 %v2425
      %v2729 = vunpack.c.h.b16 %v2425
      %v2730 = vunpack.c.l.b16 %v2426
      %v2731 = vunpack.c.l.b16 %v2427
      %v2732 = vunpack.c.h.b16 %v2427
      %v2733 = vunpack.c.l.b16 %v2428
      %v2734 = vunpack.c.h.b16 %v2428
      %v2735 = vunpack.c.l.b16 %v2429
      %v2736 = vunpack.c.l.b16 %v2430
      %v2737 = vunpack.c.h.b16 %v2430
      %v2738 = vunpack.c.l.b16 %v2431
      %v2739 = vunpack.c.h.b16 %v2431
      %v2740 = vunpack.c.l.b16 %v2432
      %v2741 = vunpack.c.l.b16 %v2433
      %v2742 = vunpack.c.h.b16 %v2433
      %v2743 = vunpack.c.l.b16 %v2434
      %v2744 = vunpack.c.h.b16 %v2434
      %v2745 = vunpack.c.l.b16 %v2435
      %v2746 = vunpack.c.l.b16 %v2436
      %v2747 = vunpack.c.h.b16 %v2436
      %v2748 = vunpack.c.l.b16 %v2437
      %v2749 = vunpack.c.h.b16 %v2437
      %v2750 = vunpack.c.l.b16 %v2438
      %v2751 = vunpack.c.l.b16 %v2439
      %v2752 = vunpack.c.h.b16 %v2439
      %v2753 = vunpack.c.l.b16 %v2440
      %v2754 = vunpack.c.h.b16 %v2440
      %v2755 = vunpack.c.l.b16 %v2441
      %v2756 = vunpack.c.l.b16 %v2442
      %v2757 = vunpack.c.h.b16 %v2442
      %v2758 = vunpack.c.l.b16 %v2443
      %v2759 = vunpack.c.h.b16 %v2443
      %v2760 = vunpack.c.l.b16 %v2444
      %v2761 = vunpack.c.l.b16 %v2445
      %v2762 = vunpack.c.h.b16 %v2445
      %v2763 = vunpack.c.l.b16 %v2446
      %v2764 = vunpack.c.h.b16 %v2446
      %v2765 = vunpack.c.l.b16 %v2447
      %v2766 = vunpack.c.l.b16 %v2448
      %v2767 = vunpack.c.h.b16 %v2448
      %v2768 = vunpack.c.l.b16 %v2449
      %v2769 = vunpack.c.h.b16 %v2449
      %v2770 = vunpack.c.l.b16 %v2450
      %v2771 = vunpack.c.l.b16 %v2451
      %v2772 = vunpack.c.h.b16 %v2451
      %v2773 = vunpack.c.l.b16 %v2452
      %v2774 = vunpack.c.h.b16 %v2452
      %v2775 = vunpack.c.l.b16 %v2453
      %v2776 = vunpack.c.l.b16 %v2454
      %v2777 = vunpack.c.h.b16 %v2454
      %v2778 = vunpack.c.l.b16 %v2455
      %v2779 = vunpack.c.h.b16 %v2455
      %v2780 = vunpack.c.l.b16 %v2456
      %v2781 = vunpack.c.l.b16 %v2457
      %v2782 = vunpack.c.h.b16 %v2457
      %v2783 = vunpack.c.l.b16 %v2458
      %v2784 = vunpack.c.h.b16 %v2458
      %v2785 = vunpack.c.l.b16 %v2459
      %v2786 = vunpack.c.l.b16 %v2460
      %v2787 = vunpack.c.h.b16 %v2460
      %v2788 = vunpack.c.l.b16 %v2461
      %v2789 = vunpack.c.h.b16 %v2461
      %v2790 = vunpack.c.l.b16 %v2462
      %v2791 = vpack.c.b16 %v2636, %v2631
      %v2792 = vpack.c.b16 %v2637, %v2632
      %v2793 = vpack.c.b16 %v2638, %v2633
      %v2794 = vpack.c.b16 %v2639, %v2634
      %v2795 = vpack.c.b16 %v2640, %v2635
      %v2796 = vpack.c.b16 %v2646, %v2641
      %v2797 = vpack.c.b16 %v2647, %v2642
      %v2798 = vpack.c.b16 %v2648, %v2643
      %v2799 = vpack.c.b16 %v2649, %v2644
      %v2800 = vpack.c.b16 %v2650, %v2645
      %v2801 = vpack.c.b16 %v2656, %v2651
      %v2802 = vpack.c.b16 %v2657, %v2652
      %v2803 = vpack.c.b16 %v2658, %v2653
      %v2804 = vpack.c.b16 %v2659, %v2654
      %v2805 = vpack.c.b16 %v2660, %v2655
      %v2806 = vpack.c.b16 %v2666, %v2661
      %v2807 = vpack.c.b16 %v2667, %v2662
      %v2808 = vpack.c.b16 %v2668, %v2663
      %v2809 = vpack.c.b16 %v2669, %v2664
      %v2810 = vpack.c.b16 %v2670, %v2665
      %v2811 = vpack.c.b16 %v2676, %v2671
      %v2812 = vpack.c.b16 %v2677, %v2672
      %v2813 = vpack.c.b16 %v2678, %v2673
      %v2814 = vpack.c.b16 %v2679, %v2674
      %v2815 = vpack.c.b16 %v2680, %v2675
      %v2816 = vpack.c.b16 %v2686, %v2681
      %v2817 = vpack.c.b16 %v2687, %v2682
      %v2818 = vpack.c.b16 %v2688, %v2683
      %v2819 = vpack.c.b16 %v2689, %v2684
      %v2820 = vpack.c.b16 %v2690, %v2685
      %v2821 = vpack.c.b16 %v2696, %v2691
      %v2822 = vpack.c.b16 %v2697, %v2692
      %v2823 = vpack.c.b16 %v2698, %v2693
      %v2824 = vpack.c.b16 %v2699, %v2694
      %v2825 = vpack.c.b16 %v2700, %v2695
      %v2826 = vpack.c.b16 %v2706, %v2701
      %v2827 = vpack.c.b16 %v2707, %v2702
      %v2828 = vpack.c.b16 %v2708, %v2703
      %v2829 = vpack.c.b16 %v2709, %v2704
      %v2830 = vpack.c.b16 %v2710, %v2705
      %v2831 = vpack.c.b16 %v2716, %v2711
      %v2832 = vpack.c.b16 %v2717, %v2712
      %v2833 = vpack.c.b16 %v2718, %v2713
      %v2834 = vpack.c.b16 %v2719, %v2714
      %v2835 = vpack.c.b16 %v2720, %v2715
      %v2836 = vpack.c.b16 %v2726, %v2721
      %v2837 = vpack.c.b16 %v2727, %v2722
      %v2838 = vpack.c.b16 %v2728, %v2723
      %v2839 = vpack.c.b16 %v2729, %v2724
      %v2840 = vpack.c.b16 %v2730, %v2725
      %v2841 = vpack.c.b16 %v2736, %v2731
      %v2842 = vpack.c.b16 %v2737, %v2732
      %v2843 = vpack.c.b16 %v2738, %v2733
      %v2844 = vpack.c.b16 %v2739, %v2734
      %v2845 = vpack.c.b16 %v2740, %v2735
      %v2846 = vpack.c.b16 %v2746, %v2741
      %v2847 = vpack.c.b16 %v2747, %v2742
      %v2848 = vpack.c.b16 %v2748, %v2743
      %v2849 = vpack.c.b16 %v2749, %v2744
      %v2850 = vpack.c.b16 %v2750, %v2745
      %v2851 = vpack.c.b16 %v2756, %v2751
      %v2852 = vpack.c.b16 %v2757, %v2752
      %v2853 = vpack.c.b16 %v2758, %v2753
      %v2854 = vpack.c.b16 %v2759, %v2754
      %v2855 = vpack.c.b16 %v2760, %v2755
      %v2856 = vpack.c.b16 %v2766, %v2761
      %v2857 = vpack.c.b16 %v2767, %v2762
      %v2858 = vpack.c.b16 %v2768, %v2763
      %v2859 = vpack.c.b16 %v2769, %v2764
      %v2860 = vpack.c.b16 %v2770, %v2765
      %v2861 = vpack.c.b16 %v2776, %v2771
      %v2862 = vpack.c.b16 %v2777, %v2772
      %v2863 = vpack.c.b16 %v2778, %v2773
      %v2864 = vpack.c.b16 %v2779, %v2774
      %v2865 = vpack.c.b16 %v2780, %v2775
      %v2866 = vpack.c.b16 %v2786, %v2781
      %v2867 = vpack.c.b16 %v2787, %v2782
      %v2868 = vpack.c.b16 %v2788, %v2783
      %v2869 = vpack.c.b16 %v2789, %v2784
      %v2870 = vpack.c.b16 %v2790, %v2785
      %v3007 = vunpack.c.l.b16 %v2463
      %v3008 = vunpack.c.l.b16 %v2464
      %v3009 = vunpack.c.l.b16 %v2465
      %v3010 = vunpack.c.l.b16 %v2466
      %v3011 = vunpack.c.l.b16 %v2467
      %v3012 = vunpack.c.l.b16 %v2468
      %v3013 = vunpack.c.l.b16 %v2469
      %v3014 = vunpack.c.l.b16 %v2470
      %v3015 = vunpack.c.l.b16 %v2471
      %v3016 = vunpack.c.l.b16 %v2472
      %v3017 = vunpack.c.l.b16 %v2473
      %v3018 = vunpack.c.l.b16 %v2474
      %v3019 = vunpack.c.l.b16 %v2475
      %v3020 = vunpack.c.l.b16 %v2476
      %v3021 = vunpack.c.l.b16 %v2477
      %v3022 = vunpack.c.l.b16 %v2478
      %v3023 = vunpack.c.l.b16 %v2479
      %v3024 = vunpack.c.l.b16 %v2480
      %v3025 = vunpack.c.l.b16 %v2481
      %v3026 = vunpack.c.l.b16 %v2482
      %v3027 = vunpack.c.l.b16 %v2483
      %v3028 = vunpack.c.l.b16 %v2484
      %v3029 = vunpack.c.l.b16 %v2485
      %v3030 = vunpack.c.l.b16 %v2486
      %v3031 = vunpack.c.l.b16 %v2487
      %v3032 = vunpack.c.l.b16 %v2488
      %v3033 = vunpack.c.l.b16 %v2489
      %v3034 = vunpack.c.l.b16 %v2490
      %v3035 = vunpack.c.l.b16 %v2491
      %v3036 = vunpack.c.l.b16 %v2492
      %v3037 = vunpack.c.l.b16 %v2493
      %v3038 = vunpack.c.l.b16 %v2494
      %v3039 = vunpack.c.l.b16 %v2495
      %v3040 = vunpack.c.l.b16 %v2496
      %v3041 = vunpack.c.l.b16 %v2497
      %v3042 = vunpack.c.l.b16 %v2498
      %v3043 = vunpack.c.l.b16 %v2499
      %v3044 = vunpack.c.l.b16 %v2500
      %v3045 = vunpack.c.l.b16 %v2501
      %v3046 = vunpack.c.l.b16 %v2502
      %v3047 = vunpack.c.l.b16 %v2503
      %v3048 = vunpack.c.l.b16 %v2504
      %v3049 = vunpack.c.l.b16 %v2505
      %v3050 = vunpack.c.l.b16 %v2506
      %v3051 = vunpack.c.l.b16 %v2507
      %v3052 = vunpack.c.l.b16 %v2508
      %v3053 = vunpack.c.l.b16 %v2509
      %v3054 = vunpack.c.l.b16 %v2510
      %v3055 = vunpack.c.l.b16 %v2511
      %v3056 = vunpack.c.l.b16 %v2512
      %v3057 = vunpack.c.l.b16 %v2513
      %v3058 = vunpack.c.l.b16 %v2514
      %v3059 = vunpack.c.l.b16 %v2515
      %v3060 = vunpack.c.l.b16 %v2516
      %v3061 = vunpack.c.l.b16 %v2517
      %v3062 = vunpack.c.l.b16 %v2518
      %v3063 = vunpack.c.l.b16 %v2519
      %v3064 = vunpack.c.l.b16 %v2520
      %v3065 = vunpack.c.l.b16 %v2521
      %v3066 = vunpack.c.l.b16 %v2522
      %v3067 = vunpack.c.l.b16 %v2523
      %v3068 = vunpack.c.l.b16 %v2524
      %v3069 = vunpack.c.l.b16 %v2525
      %v3070 = vunpack.c.l.b16 %v2526
      %v3071 = vunpack.c.l.b16 %v2527
      %v3072 = vunpack.c.l.b16 %v2528
      %v3073 = vunpack.c.l.b16 %v2529
      %v3074 = vunpack.c.l.b16 %v2530
      %v3075 = vunpack.c.l.b16 %v2531
      %v3076 = vunpack.c.l.b16 %v2532
      %v3077 = vunpack.c.l.b16 %v2533
      %v3078 = vunpack.c.l.b16 %v2534
      %v3079 = vpack.c.b16 %v3008, %v3007
      %v3080 = vpack.c.b16 %v3010, %v3009
      %v3081 = vpack.c.b16 %v3012, %v3011
      %v3082 = vpack.c.b16 %v3014, %v3013
      %v3083 = vpack.c.b16 %v3016, %v3015
      %v3084 = vpack.c.b16 %v3018, %v3017
      %v3085 = vpack.c.b16 %v3020, %v3019
      %v3086 = vpack.c.b16 %v3022, %v3021
      %v3087 = vpack.c.b16 %v3024, %v3023
      %v3088 = vpack.c.b16 %v3026, %v3025
      %v3089 = vpack.c.b16 %v3028, %v3027
      %v3090 = vpack.c.b16 %v3030, %v3029
      %v3091 = vpack.c.b16 %v3032, %v3031
      %v3092 = vpack.c.b16 %v3034, %v3033
      %v3093 = vpack.c.b16 %v3036, %v3035
      %v3094 = vpack.c.b16 %v3038, %v3037
      %v3095 = vpack.c.b16 %v3040, %v3039
      %v3096 = vpack.c.b16 %v3042, %v3041
      %v3097 = vpack.c.b16 %v3044, %v3043
      %v3098 = vpack.c.b16 %v3046, %v3045
      %v3099 = vpack.c.b16 %v3048, %v3047
      %v3100 = vpack.c.b16 %v3050, %v3049
      %v3101 = vpack.c.b16 %v3052, %v3051
      %v3102 = vpack.c.b16 %v3054, %v3053
      %v3103 = vpack.c.b16 %v3056, %v3055
      %v3104 = vpack.c.b16 %v3058, %v3057
      %v3105 = vpack.c.b16 %v3060, %v3059
      %v3106 = vpack.c.b16 %v3062, %v3061
      %v3107 = vpack.c.b16 %v3064, %v3063
      %v3108 = vpack.c.b16 %v3066, %v3065
      %v3109 = vpack.c.b16 %v3068, %v3067
      %v3110 = vpack.c.b16 %v3070, %v3069
      %v3111 = vpack.c.b16 %v3072, %v3071
      %v3112 = vpack.c.b16 %v3074, %v3073
      %v3113 = vpack.c.b16 %v3076, %v3075
      %v3114 = vpack.c.b16 %v3078, %v3077
      %v3152 = vsel %vm347, %v2795, 0
      %v3155 = vsel %vm347, %v2800, 0
      %v3158 = vsel %vm347, %v2805, 0
      %v3161 = vsel %vm347, %v2810, 0
      %v3164 = vsel %vm347, %v2815, 0
      %v3167 = vsel %vm347, %v2820, 0
      %v3170 = vsel %vm347, %v2825, 0
      %v3173 = vsel %vm347, %v2830, 0
      %v3176 = vsel %vm347, %v2835, 0
      %v3179 = vsel %vm347, %v2840, 0
      %v3182 = vsel %vm347, %v2845, 0
      %v3185 = vsel %vm347, %v2850, 0
      %v3188 = vsel %vm347, %v2855, 0
      %v3191 = vsel %vm347, %v2860, 0
      %v3194 = vsel %vm347, %v2865, 0
      %v3197 = vsel %vm347, %v2870, 0
      %3199 = vmatpush.bf16.msra.mxu0 %v3086
      %3200 = vmatpush.bf16.msra.mxu0 %v3085
      %3201 = vmatpush.bf16.msra.mxu0 %v3084
      %3202 = vmatpush.bf16.msra.mxu0 %v3083
      %3203 = vmatpush.bf16.msra.mxu0 %v3082
      %3204 = vmatpush.bf16.msra.mxu0 %v3081
      %3205 = vmatpush.bf16.msra.mxu0 %v3080
      %3206 = vmatpush.bf16.msra.mxu0 %v3079
      %3207 = vmatmul.bf16.gmra.mxu0 %v2791
      %v3208 = vpop.f32.mrf.mxu0
      %v3209 = vadd.f32 0.0, %v3208
      %v3210 = vpop.f32.mrf.mxu0
      %v3211 = vadd.f32 0.0, %v3210
      %3212 = vmatmul.bf16.gmra.mxu0 %v2796
      %v3213 = vpop.f32.mrf.mxu0
      %v3214 = vadd.f32 0.0, %v3213
      %v3215 = vpop.f32.mrf.mxu0
      %v3216 = vadd.f32 0.0, %v3215
      %3217 = vmatmul.bf16.gmra.mxu0 %v2801
      %v3218 = vpop.f32.mrf.mxu0
      %v3219 = vadd.f32 0.0, %v3218
      %v3220 = vpop.f32.mrf.mxu0
      %v3221 = vadd.f32 0.0, %v3220
      %3222 = vmatmul.bf16.gmra.mxu0 %v2806
      %v3223 = vpop.f32.mrf.mxu0
      %v3224 = vadd.f32 0.0, %v3223
      %v3225 = vpop.f32.mrf.mxu0
      %v3226 = vadd.f32 0.0, %v3225
      %3227 = vmatmul.bf16.gmra.mxu0 %v2811
      %v3228 = vpop.f32.mrf.mxu0
      %v3229 = vadd.f32 0.0, %v3228
      %v3230 = vpop.f32.mrf.mxu0
      %v3231 = vadd.f32 0.0, %v3230
      %3232 = vmatmul.bf16.gmra.mxu0 %v2816
      %v3233 = vpop.f32.mrf.mxu0
      %v3234 = vadd.f32 0.0, %v3233
      %v3235 = vpop.f32.mrf.mxu0
      %v3236 = vadd.f32 0.0, %v3235
      %3237 = vmatmul.bf16.gmra.mxu0 %v2821
      %v3238 = vpop.f32.mrf.mxu0
      %v3239 = vadd.f32 0.0, %v3238
      %v3240 = vpop.f32.mrf.mxu0
      %v3241 = vadd.f32 0.0, %v3240
      %3242 = vmatmul.bf16.gmra.mxu0 %v2826
      %v3243 = vpop.f32.mrf.mxu0
      %v3244 = vadd.f32 0.0, %v3243
      %v3245 = vpop.f32.mrf.mxu0
      %v3246 = vadd.f32 0.0, %v3245
      %3247 = vmatmul.bf16.gmra.mxu0 %v2831
      %v3248 = vpop.f32.mrf.mxu0
      %v3249 = vadd.f32 0.0, %v3248
      %v3250 = vpop.f32.mrf.mxu0
      %v3251 = vadd.f32 0.0, %v3250
      %3252 = vmatmul.bf16.gmra.mxu0 %v2836
      %v3253 = vpop.f32.mrf.mxu0
      %v3254 = vadd.f32 0.0, %v3253
      %v3255 = vpop.f32.mrf.mxu0
      %v3256 = vadd.f32 0.0, %v3255
      %3257 = vmatmul.bf16.gmra.mxu0 %v2841
      %v3258 = vpop.f32.mrf.mxu0
      %v3259 = vadd.f32 0.0, %v3258
      %v3260 = vpop.f32.mrf.mxu0
      %v3261 = vadd.f32 0.0, %v3260
      %3262 = vmatmul.bf16.gmra.mxu0 %v2846
      %v3263 = vpop.f32.mrf.mxu0
      %v3264 = vadd.f32 0.0, %v3263
      %v3265 = vpop.f32.mrf.mxu0
      %v3266 = vadd.f32 0.0, %v3265
      %3267 = vmatmul.bf16.gmra.mxu0 %v2851
      %v3268 = vpop.f32.mrf.mxu0
      %v3269 = vadd.f32 0.0, %v3268
      %v3270 = vpop.f32.mrf.mxu0
      %v3271 = vadd.f32 0.0, %v3270
      %3272 = vmatmul.bf16.gmra.mxu0 %v2856
      %v3273 = vpop.f32.mrf.mxu0
      %v3274 = vadd.f32 0.0, %v3273
      %v3275 = vpop.f32.mrf.mxu0
      %v3276 = vadd.f32 0.0, %v3275
      %3277 = vmatmul.bf16.gmra.mxu0 %v2861
      %v3278 = vpop.f32.mrf.mxu0
      %v3279 = vadd.f32 0.0, %v3278
      %v3280 = vpop.f32.mrf.mxu0
      %v3281 = vadd.f32 0.0, %v3280
      %3282 = vmatmul.bf16.gmra.mxu0 %v2866
      %v3283 = vpop.f32.mrf.mxu0
      %v3284 = vadd.f32 0.0, %v3283
      %v3285 = vpop.f32.mrf.mxu0
      %v3286 = vadd.f32 0.0, %v3285
      %3287 = vdwg.mxu0
      %3288 = vmatpush.bf16.msra.mxu0 %v3094
      %3289 = vmatpush.bf16.msra.mxu0 %v3093
      %3290 = vmatpush.bf16.msra.mxu0 %v3092
      %3291 = vmatpush.bf16.msra.mxu0 %v3091
      %3292 = vmatpush.bf16.msra.mxu0 %v3090
      %3293 = vmatpush.bf16.msra.mxu0 %v3089
      %3294 = vmatpush.bf16.msra.mxu0 %v3088
      %3295 = vmatpush.bf16.msra.mxu0 %v3087
      %3296 = vmatmul.bf16.gmra.mxu0 %v2792
      %v3297 = vpop.f32.mrf.mxu0
      %v3298 = vadd.f32 %v3209, %v3297
      %v3299 = vpop.f32.mrf.mxu0
      %v3300 = vadd.f32 %v3211, %v3299
      %3301 = vmatmul.bf16.gmra.mxu0 %v2797
      %v3302 = vpop.f32.mrf.mxu0
      %v3303 = vadd.f32 %v3214, %v3302
      %v3304 = vpop.f32.mrf.mxu0
      %v3305 = vadd.f32 %v3216, %v3304
      %3306 = vmatmul.bf16.gmra.mxu0 %v2802
      %v3307 = vpop.f32.mrf.mxu0
      %v3308 = vadd.f32 %v3219, %v3307
      %v3309 = vpop.f32.mrf.mxu0
      %v3310 = vadd.f32 %v3221, %v3309
      %3311 = vmatmul.bf16.gmra.mxu0 %v2807
      %v3312 = vpop.f32.mrf.mxu0
      %v3313 = vadd.f32 %v3224, %v3312
      %v3314 = vpop.f32.mrf.mxu0
      %v3315 = vadd.f32 %v3226, %v3314
      %3316 = vmatmul.bf16.gmra.mxu0 %v2812
      %v3317 = vpop.f32.mrf.mxu0
      %v3318 = vadd.f32 %v3229, %v3317
      %v3319 = vpop.f32.mrf.mxu0
      %v3320 = vadd.f32 %v3231, %v3319
      %3321 = vmatmul.bf16.gmra.mxu0 %v2817
      %v3322 = vpop.f32.mrf.mxu0
      %v3323 = vadd.f32 %v3234, %v3322
      %v3324 = vpop.f32.mrf.mxu0
      %v3325 = vadd.f32 %v3236, %v3324
      %3326 = vmatmul.bf16.gmra.mxu0 %v2822
      %v3327 = vpop.f32.mrf.mxu0
      %v3328 = vadd.f32 %v3239, %v3327
      %v3329 = vpop.f32.mrf.mxu0
      %v3330 = vadd.f32 %v3241, %v3329
      %3331 = vmatmul.bf16.gmra.mxu0 %v2827
      %v3332 = vpop.f32.mrf.mxu0
      %v3333 = vadd.f32 %v3244, %v3332
      %v3334 = vpop.f32.mrf.mxu0
      %v3335 = vadd.f32 %v3246, %v3334
      %3336 = vmatmul.bf16.gmra.mxu0 %v2832
      %v3337 = vpop.f32.mrf.mxu0
      %v3338 = vadd.f32 %v3249, %v3337
      %v3339 = vpop.f32.mrf.mxu0
      %v3340 = vadd.f32 %v3251, %v3339
      %3341 = vmatmul.bf16.gmra.mxu0 %v2837
      %v3342 = vpop.f32.mrf.mxu0
      %v3343 = vadd.f32 %v3254, %v3342
      %v3344 = vpop.f32.mrf.mxu0
      %v3345 = vadd.f32 %v3256, %v3344
      %3346 = vmatmul.bf16.gmra.mxu0 %v2842
      %v3347 = vpop.f32.mrf.mxu0
      %v3348 = vadd.f32 %v3259, %v3347
      %v3349 = vpop.f32.mrf.mxu0
      %v3350 = vadd.f32 %v3261, %v3349
      %3351 = vmatmul.bf16.gmra.mxu0 %v2847
      %v3352 = vpop.f32.mrf.mxu0
      %v3353 = vadd.f32 %v3264, %v3352
      %v3354 = vpop.f32.mrf.mxu0
      %v3355 = vadd.f32 %v3266, %v3354
      %3356 = vmatmul.bf16.gmra.mxu0 %v2852
      %v3357 = vpop.f32.mrf.mxu0
      %v3358 = vadd.f32 %v3269, %v3357
      %v3359 = vpop.f32.mrf.mxu0
      %v3360 = vadd.f32 %v3271, %v3359
      %3361 = vmatmul.bf16.gmra.mxu0 %v2857
      %v3362 = vpop.f32.mrf.mxu0
      %v3363 = vadd.f32 %v3274, %v3362
      %v3364 = vpop.f32.mrf.mxu0
      %v3365 = vadd.f32 %v3276, %v3364
      %3366 = vmatmul.bf16.gmra.mxu0 %v2862
      %v3367 = vpop.f32.mrf.mxu0
      %v3368 = vadd.f32 %v3279, %v3367
      %v3369 = vpop.f32.mrf.mxu0
      %v3370 = vadd.f32 %v3281, %v3369
      %3371 = vmatmul.bf16.gmra.mxu0 %v2867
      %v3372 = vpop.f32.mrf.mxu0
      %v3373 = vadd.f32 %v3284, %v3372
      %v3374 = vpop.f32.mrf.mxu0
      %v3375 = vadd.f32 %v3286, %v3374
      %3376 = vdwg.mxu0
      %3377 = vmatpush.bf16.msra.mxu0 %v3102
      %3378 = vmatpush.bf16.msra.mxu0 %v3101
      %3379 = vmatpush.bf16.msra.mxu0 %v3100
      %3380 = vmatpush.bf16.msra.mxu0 %v3099
      %3381 = vmatpush.bf16.msra.mxu0 %v3098
      %3382 = vmatpush.bf16.msra.mxu0 %v3097
      %3383 = vmatpush.bf16.msra.mxu0 %v3096
      %3384 = vmatpush.bf16.msra.mxu0 %v3095
      %3385 = vmatmul.bf16.gmra.mxu0 %v2793
      %v3386 = vpop.f32.mrf.mxu0
      %v3387 = vadd.f32 %v3298, %v3386
      %v3388 = vpop.f32.mrf.mxu0
      %v3389 = vadd.f32 %v3300, %v3388
      %3390 = vmatmul.bf16.gmra.mxu0 %v2798
      %v3391 = vpop.f32.mrf.mxu0
      %v3392 = vadd.f32 %v3303, %v3391
      %v3393 = vpop.f32.mrf.mxu0
      %v3394 = vadd.f32 %v3305, %v3393
      %3395 = vmatmul.bf16.gmra.mxu0 %v2803
      %v3396 = vpop.f32.mrf.mxu0
      %v3397 = vadd.f32 %v3308, %v3396
      %v3398 = vpop.f32.mrf.mxu0
      %v3399 = vadd.f32 %v3310, %v3398
      %3400 = vmatmul.bf16.gmra.mxu0 %v2808
      %v3401 = vpop.f32.mrf.mxu0
      %v3402 = vadd.f32 %v3313, %v3401
      %v3403 = vpop.f32.mrf.mxu0
      %v3404 = vadd.f32 %v3315, %v3403
      %3405 = vmatmul.bf16.gmra.mxu0 %v2813
      %v3406 = vpop.f32.mrf.mxu0
      %v3407 = vadd.f32 %v3318, %v3406
      %v3408 = vpop.f32.mrf.mxu0
      %v3409 = vadd.f32 %v3320, %v3408
      %3410 = vmatmul.bf16.gmra.mxu0 %v2818
      %v3411 = vpop.f32.mrf.mxu0
      %v3412 = vadd.f32 %v3323, %v3411
      %v3413 = vpop.f32.mrf.mxu0
      %v3414 = vadd.f32 %v3325, %v3413
      %3415 = vmatmul.bf16.gmra.mxu0 %v2823
      %v3416 = vpop.f32.mrf.mxu0
      %v3417 = vadd.f32 %v3328, %v3416
      %v3418 = vpop.f32.mrf.mxu0
      %v3419 = vadd.f32 %v3330, %v3418
      %3420 = vmatmul.bf16.gmra.mxu0 %v2828
      %v3421 = vpop.f32.mrf.mxu0
      %v3422 = vadd.f32 %v3333, %v3421
      %v3423 = vpop.f32.mrf.mxu0
      %v3424 = vadd.f32 %v3335, %v3423
      %3425 = vmatmul.bf16.gmra.mxu0 %v2833
      %v3426 = vpop.f32.mrf.mxu0
      %v3427 = vadd.f32 %v3338, %v3426
      %v3428 = vpop.f32.mrf.mxu0
      %v3429 = vadd.f32 %v3340, %v3428
      %3430 = vmatmul.bf16.gmra.mxu0 %v2838
      %v3431 = vpop.f32.mrf.mxu0
      %v3432 = vadd.f32 %v3343, %v3431
      %v3433 = vpop.f32.mrf.mxu0
      %v3434 = vadd.f32 %v3345, %v3433
      %3435 = vmatmul.bf16.gmra.mxu0 %v2843
      %v3436 = vpop.f32.mrf.mxu0
      %v3437 = vadd.f32 %v3348, %v3436
      %v3438 = vpop.f32.mrf.mxu0
      %v3439 = vadd.f32 %v3350, %v3438
      %3440 = vmatmul.bf16.gmra.mxu0 %v2848
      %v3441 = vpop.f32.mrf.mxu0
      %v3442 = vadd.f32 %v3353, %v3441
      %v3443 = vpop.f32.mrf.mxu0
      %v3444 = vadd.f32 %v3355, %v3443
      %3445 = vmatmul.bf16.gmra.mxu0 %v2853
      %v3446 = vpop.f32.mrf.mxu0
      %v3447 = vadd.f32 %v3358, %v3446
      %v3448 = vpop.f32.mrf.mxu0
      %v3449 = vadd.f32 %v3360, %v3448
      %3450 = vmatmul.bf16.gmra.mxu0 %v2858
      %v3451 = vpop.f32.mrf.mxu0
      %v3452 = vadd.f32 %v3363, %v3451
      %v3453 = vpop.f32.mrf.mxu0
      %v3454 = vadd.f32 %v3365, %v3453
      %3455 = vmatmul.bf16.gmra.mxu0 %v2863
      %v3456 = vpop.f32.mrf.mxu0
      %v3457 = vadd.f32 %v3368, %v3456
      %v3458 = vpop.f32.mrf.mxu0
      %v3459 = vadd.f32 %v3370, %v3458
      %3460 = vmatmul.bf16.gmra.mxu0 %v2868
      %v3461 = vpop.f32.mrf.mxu0
      %v3462 = vadd.f32 %v3373, %v3461
      %v3463 = vpop.f32.mrf.mxu0
      %v3464 = vadd.f32 %v3375, %v3463
      %3465 = vdwg.mxu0
      %3466 = vmatpush.bf16.msra.mxu0 %v3110
      %3467 = vmatpush.bf16.msra.mxu0 %v3109
      %3468 = vmatpush.bf16.msra.mxu0 %v3108
      %3469 = vmatpush.bf16.msra.mxu0 %v3107
      %3470 = vmatpush.bf16.msra.mxu0 %v3106
      %3471 = vmatpush.bf16.msra.mxu0 %v3105
      %3472 = vmatpush.bf16.msra.mxu0 %v3104
      %3473 = vmatpush.bf16.msra.mxu0 %v3103
      %3474 = vmatmul.bf16.gmra.mxu0 %v2794
      %v3475 = vpop.f32.mrf.mxu0
      %v3476 = vadd.f32 %v3387, %v3475
      %v3477 = vpop.f32.mrf.mxu0
      %v3478 = vadd.f32 %v3389, %v3477
      %3479 = vmatmul.bf16.gmra.mxu0 %v2799
      %v3480 = vpop.f32.mrf.mxu0
      %v3481 = vadd.f32 %v3392, %v3480
      %v3482 = vpop.f32.mrf.mxu0
      %v3483 = vadd.f32 %v3394, %v3482
      %3484 = vmatmul.bf16.gmra.mxu0 %v2804
      %v3485 = vpop.f32.mrf.mxu0
      %v3486 = vadd.f32 %v3397, %v3485
      %v3487 = vpop.f32.mrf.mxu0
      %v3488 = vadd.f32 %v3399, %v3487
      %3489 = vmatmul.bf16.gmra.mxu0 %v2809
      %v3490 = vpop.f32.mrf.mxu0
      %v3491 = vadd.f32 %v3402, %v3490
      %v3492 = vpop.f32.mrf.mxu0
      %v3493 = vadd.f32 %v3404, %v3492
      %3494 = vmatmul.bf16.gmra.mxu0 %v2814
      %v3495 = vpop.f32.mrf.mxu0
      %v3496 = vadd.f32 %v3407, %v3495
      %v3497 = vpop.f32.mrf.mxu0
      %v3498 = vadd.f32 %v3409, %v3497
      %3499 = vmatmul.bf16.gmra.mxu0 %v2819
      %v3500 = vpop.f32.mrf.mxu0
      %v3501 = vadd.f32 %v3412, %v3500
      %v3502 = vpop.f32.mrf.mxu0
      %v3503 = vadd.f32 %v3414, %v3502
      %3504 = vmatmul.bf16.gmra.mxu0 %v2824
      %v3505 = vpop.f32.mrf.mxu0
      %v3506 = vadd.f32 %v3417, %v3505
      %v3507 = vpop.f32.mrf.mxu0
      %v3508 = vadd.f32 %v3419, %v3507
      %3509 = vmatmul.bf16.gmra.mxu0 %v2829
      %v3510 = vpop.f32.mrf.mxu0
      %v3511 = vadd.f32 %v3422, %v3510
      %v3512 = vpop.f32.mrf.mxu0
      %v3513 = vadd.f32 %v3424, %v3512
      %3514 = vmatmul.bf16.gmra.mxu0 %v2834
      %v3515 = vpop.f32.mrf.mxu0
      %v3516 = vadd.f32 %v3427, %v3515
      %v3517 = vpop.f32.mrf.mxu0
      %v3518 = vadd.f32 %v3429, %v3517
      %3519 = vmatmul.bf16.gmra.mxu0 %v2839
      %v3520 = vpop.f32.mrf.mxu0
      %v3521 = vadd.f32 %v3432, %v3520
      %v3522 = vpop.f32.mrf.mxu0
      %v3523 = vadd.f32 %v3434, %v3522
      %3524 = vmatmul.bf16.gmra.mxu0 %v2844
      %v3525 = vpop.f32.mrf.mxu0
      %v3526 = vadd.f32 %v3437, %v3525
      %v3527 = vpop.f32.mrf.mxu0
      %v3528 = vadd.f32 %v3439, %v3527
      %3529 = vmatmul.bf16.gmra.mxu0 %v2849
      %v3530 = vpop.f32.mrf.mxu0
      %v3531 = vadd.f32 %v3442, %v3530
      %v3532 = vpop.f32.mrf.mxu0
      %v3533 = vadd.f32 %v3444, %v3532
      %3534 = vmatmul.bf16.gmra.mxu0 %v2854
      %v3535 = vpop.f32.mrf.mxu0
      %v3536 = vadd.f32 %v3447, %v3535
      %v3537 = vpop.f32.mrf.mxu0
      %v3538 = vadd.f32 %v3449, %v3537
      %3539 = vmatmul.bf16.gmra.mxu0 %v2859
      %v3540 = vpop.f32.mrf.mxu0
      %v3541 = vadd.f32 %v3452, %v3540
      %v3542 = vpop.f32.mrf.mxu0
      %v3543 = vadd.f32 %v3454, %v3542
      %3544 = vmatmul.bf16.gmra.mxu0 %v2864
      %v3545 = vpop.f32.mrf.mxu0
      %v3546 = vadd.f32 %v3457, %v3545
      %v3547 = vpop.f32.mrf.mxu0
      %v3548 = vadd.f32 %v3459, %v3547
      %3549 = vmatmul.bf16.gmra.mxu0 %v2869
      %v3550 = vpop.f32.mrf.mxu0
      %v3551 = vadd.f32 %v3462, %v3550
      %v3552 = vpop.f32.mrf.mxu0
      %v3553 = vadd.f32 %v3464, %v3552
      %3554 = vdwg.mxu0
      %3555 = vmatpush.bf16.msra.mxu0 0
      %3556 = vmatpush.bf16.msra.mxu0 0
      %3557 = vmatpush.bf16.msra.mxu0 0
      %3558 = vmatpush.bf16.msra.mxu0 0
      %3559 = vmatpush.bf16.msra.mxu0 %v3114
      %3560 = vmatpush.bf16.msra.mxu0 %v3113
      %3561 = vmatpush.bf16.msra.mxu0 %v3112
      %3562 = vmatpush.bf16.msra.mxu0 %v3111
      %3563 = vmatmul.bf16.gmra.mxu0 %v3152
      %v3564 = vpop.f32.mrf.mxu0
      %v3565 = vadd.f32 %v3476, %v3564
      %v3566 = vpop.f32.mrf.mxu0
      %v3567 = vadd.f32 %v3478, %v3566
      %3568 = vmatmul.bf16.gmra.mxu0 %v3155
      %v3569 = vpop.f32.mrf.mxu0
      %v3570 = vadd.f32 %v3481, %v3569
      %v3571 = vpop.f32.mrf.mxu0
      %v3572 = vadd.f32 %v3483, %v3571
      %3573 = vmatmul.bf16.gmra.mxu0 %v3158
      %v3574 = vpop.f32.mrf.mxu0
      %v3575 = vadd.f32 %v3486, %v3574
      %v3576 = vpop.f32.mrf.mxu0
      %v3577 = vadd.f32 %v3488, %v3576
      %3578 = vmatmul.bf16.gmra.mxu0 %v3161
      %v3579 = vpop.f32.mrf.mxu0
      %v3580 = vadd.f32 %v3491, %v3579
      %v3581 = vpop.f32.mrf.mxu0
      %v3582 = vadd.f32 %v3493, %v3581
      %3583 = vmatmul.bf16.gmra.mxu0 %v3164
      %v3584 = vpop.f32.mrf.mxu0
      %v3585 = vadd.f32 %v3496, %v3584
      %v3586 = vpop.f32.mrf.mxu0
      %v3587 = vadd.f32 %v3498, %v3586
      %3588 = vmatmul.bf16.gmra.mxu0 %v3167
      %v3589 = vpop.f32.mrf.mxu0
      %v3590 = vadd.f32 %v3501, %v3589
      %v3591 = vpop.f32.mrf.mxu0
      %v3592 = vadd.f32 %v3503, %v3591
      %3593 = vmatmul.bf16.gmra.mxu0 %v3170
      %v3594 = vpop.f32.mrf.mxu0
      %v3595 = vadd.f32 %v3506, %v3594
      %v3596 = vpop.f32.mrf.mxu0
      %v3597 = vadd.f32 %v3508, %v3596
      %3598 = vmatmul.bf16.gmra.mxu0 %v3173
      %v3599 = vpop.f32.mrf.mxu0
      %v3600 = vadd.f32 %v3511, %v3599
      %v3601 = vpop.f32.mrf.mxu0
      %v3602 = vadd.f32 %v3513, %v3601
      %3603 = vmatmul.bf16.gmra.mxu0 %v3176
      %v3604 = vpop.f32.mrf.mxu0
      %v3605 = vadd.f32 %v3516, %v3604
      %v3606 = vpop.f32.mrf.mxu0
      %v3607 = vadd.f32 %v3518, %v3606
      %3608 = vmatmul.bf16.gmra.mxu0 %v3179
      %v3609 = vpop.f32.mrf.mxu0
      %v3610 = vadd.f32 %v3521, %v3609
      %v3611 = vpop.f32.mrf.mxu0
      %v3612 = vadd.f32 %v3523, %v3611
      %3613 = vmatmul.bf16.gmra.mxu0 %v3182
      %v3614 = vpop.f32.mrf.mxu0
      %v3615 = vadd.f32 %v3526, %v3614
      %v3616 = vpop.f32.mrf.mxu0
      %v3617 = vadd.f32 %v3528, %v3616
      %3618 = vmatmul.bf16.gmra.mxu0 %v3185
      %v3619 = vpop.f32.mrf.mxu0
      %v3620 = vadd.f32 %v3531, %v3619
      %v3621 = vpop.f32.mrf.mxu0
      %v3622 = vadd.f32 %v3533, %v3621
      %3623 = vmatmul.bf16.gmra.mxu0 %v3188
      %v3624 = vpop.f32.mrf.mxu0
      %v3625 = vadd.f32 %v3536, %v3624
      %v3626 = vpop.f32.mrf.mxu0
      %v3627 = vadd.f32 %v3538, %v3626
      %3628 = vmatmul.bf16.gmra.mxu0 %v3191
      %v3629 = vpop.f32.mrf.mxu0
      %v3630 = vadd.f32 %v3541, %v3629
      %v3631 = vpop.f32.mrf.mxu0
      %v3632 = vadd.f32 %v3543, %v3631
      %3633 = vmatmul.bf16.gmra.mxu0 %v3194
      %v3634 = vpop.f32.mrf.mxu0
      %v3635 = vadd.f32 %v3546, %v3634
      %v3636 = vpop.f32.mrf.mxu0
      %v3637 = vadd.f32 %v3548, %v3636
      %3638 = vmatmul.bf16.gmra.mxu0 %v3197
      %v3639 = vpop.f32.mrf.mxu0
      %v3640 = vadd.f32 %v3551, %v3639
      %v3641 = vpop.f32.mrf.mxu0
      %v3642 = vadd.f32 %v3553, %v3641
      %3643 = vdwg.mxu0
      %v3644 = vld [vmem:[%s2] sm:$0x1]
      %v3646 = vperm.slane %v3644, 0
      %v3648 = vmul.f32 %v3565, %v3646
      %v3649 = vmul.f32 %v3567, %v3646
      %v3650 = vmul.f32 %v3570, %v3646
      %v3651 = vmul.f32 %v3572, %v3646
      %v3652 = vmul.f32 %v3575, %v3646
      %v3653 = vmul.f32 %v3577, %v3646
      %v3654 = vmul.f32 %v3580, %v3646
      %v3655 = vmul.f32 %v3582, %v3646
      %v3656 = vmul.f32 %v3585, %v3646
      %v3657 = vmul.f32 %v3587, %v3646
      %v3658 = vmul.f32 %v3590, %v3646
      %v3659 = vmul.f32 %v3592, %v3646
      %v3660 = vmul.f32 %v3595, %v3646
      %v3661 = vmul.f32 %v3597, %v3646
      %v3662 = vmul.f32 %v3600, %v3646
      %v3663 = vmul.f32 %v3602, %v3646
      %v3664 = vmul.f32 %v3605, %v3646
      %v3665 = vmul.f32 %v3607, %v3646
      %v3666 = vmul.f32 %v3610, %v3646
      %v3667 = vmul.f32 %v3612, %v3646
      %v3668 = vmul.f32 %v3615, %v3646
      %v3669 = vmul.f32 %v3617, %v3646
      %v3670 = vmul.f32 %v3620, %v3646
      %v3671 = vmul.f32 %v3622, %v3646
      %v3672 = vmul.f32 %v3625, %v3646
      %v3673 = vmul.f32 %v3627, %v3646
      %v3674 = vmul.f32 %v3630, %v3646
      %v3675 = vmul.f32 %v3632, %v3646
      %v3676 = vmul.f32 %v3635, %v3646
      %v3677 = vmul.f32 %v3637, %v3646
      %v3678 = vmul.f32 %v3640, %v3646
      %v3679 = vmul.f32 %v3642, %v3646
      %v3680 = vld [vmem:[%s3] sm:$0x1]
      %v3682 = vperm.slane %v3680, 0
      %v3684 = vadd.f32 %v3648, %v3682
      %v3685 = vadd.f32 %v3649, %v3682
      %v3686 = vadd.f32 %v3650, %v3682
      %v3687 = vadd.f32 %v3651, %v3682
      %v3688 = vadd.f32 %v3652, %v3682
      %v3689 = vadd.f32 %v3653, %v3682
      %v3690 = vadd.f32 %v3654, %v3682
      %v3691 = vadd.f32 %v3655, %v3682
      %v3692 = vadd.f32 %v3656, %v3682
      %v3693 = vadd.f32 %v3657, %v3682
      %v3694 = vadd.f32 %v3658, %v3682
      %v3695 = vadd.f32 %v3659, %v3682
      %v3696 = vadd.f32 %v3660, %v3682
      %v3697 = vadd.f32 %v3661, %v3682
      %v3698 = vadd.f32 %v3662, %v3682
      %v3699 = vadd.f32 %v3663, %v3682
      %v3700 = vadd.f32 %v3664, %v3682
      %v3701 = vadd.f32 %v3665, %v3682
      %v3702 = vadd.f32 %v3666, %v3682
      %v3703 = vadd.f32 %v3667, %v3682
      %v3704 = vadd.f32 %v3668, %v3682
      %v3705 = vadd.f32 %v3669, %v3682
      %v3706 = vadd.f32 %v3670, %v3682
      %v3707 = vadd.f32 %v3671, %v3682
      %v3708 = vadd.f32 %v3672, %v3682
      %v3709 = vadd.f32 %v3673, %v3682
      %v3710 = vadd.f32 %v3674, %v3682
      %v3711 = vadd.f32 %v3675, %v3682
      %v3712 = vadd.f32 %v3676, %v3682
      %v3713 = vadd.f32 %v3677, %v3682
      %v3714 = vadd.f32 %v3678, %v3682
      %v3715 = vadd.f32 %v3679, %v3682
      %v3716 = vmax.f32 %v3684, 0.0
      %v3717 = vmax.f32 %v3685, 0.0
      %v3718 = vmax.f32 %v3686, 0.0
      %v3719 = vmax.f32 %v3687, 0.0
      %v3720 = vmax.f32 %v3688, 0.0
      %v3721 = vmax.f32 %v3689, 0.0
      %v3722 = vmax.f32 %v3690, 0.0
      %v3723 = vmax.f32 %v3691, 0.0
      %v3724 = vmax.f32 %v3692, 0.0
      %v3725 = vmax.f32 %v3693, 0.0
      %v3726 = vmax.f32 %v3694, 0.0
      %v3727 = vmax.f32 %v3695, 0.0
      %v3728 = vmax.f32 %v3696, 0.0
      %v3729 = vmax.f32 %v3697, 0.0
      %v3730 = vmax.f32 %v3698, 0.0
      %v3731 = vmax.f32 %v3699, 0.0
      %v3732 = vmax.f32 %v3700, 0.0
      %v3733 = vmax.f32 %v3701, 0.0
      %v3734 = vmax.f32 %v3702, 0.0
      %v3735 = vmax.f32 %v3703, 0.0
      %v3736 = vmax.f32 %v3704, 0.0
      %v3737 = vmax.f32 %v3705, 0.0
      %v3738 = vmax.f32 %v3706, 0.0
      %v3739 = vmax.f32 %v3707, 0.0
      %v3740 = vmax.f32 %v3708, 0.0
      %v3741 = vmax.f32 %v3709, 0.0
      %v3742 = vmax.f32 %v3710, 0.0
      %v3743 = vmax.f32 %v3711, 0.0
      %v3744 = vmax.f32 %v3712, 0.0
      %v3745 = vmax.f32 %v3713, 0.0
      %v3746 = vmax.f32 %v3714, 0.0
      %v3747 = vmax.f32 %v3715, 0.0
      %3748 = vst.msk [vmem:[#allocation4 + $0x18] sm:$0xff] %vm347, %v3716
      %3749 = vst.msk [vmem:[#allocation4 + $0x20] sm:$0xff] %vm347, %v3717
      %3750 = vst.msk [vmem:[#allocation4 + $0x28] sm:$0xff] %vm347, %v3718
      %3751 = vst.msk [vmem:[#allocation4 + $0x30] sm:$0xff] %vm347, %v3719
      %3752 = vst.msk [vmem:[#allocation4 + $0x38] sm:$0xff] %vm347, %v3720
      %3753 = vst.msk [vmem:[#allocation4 + $0x40] sm:$0xff] %vm347, %v3721
      %3754 = vst.msk [vmem:[#allocation4 + $0x48] sm:$0xff] %vm347, %v3722
      %3755 = vst.msk [vmem:[#allocation4 + $0x50] sm:$0xff] %vm347, %v3723
      %3756 = vst.msk [vmem:[#allocation4 + $0x58] sm:$0xff] %vm347, %v3724
      %3757 = vst.msk [vmem:[#allocation4 + $0x60] sm:$0xff] %vm347, %v3725
      %3758 = vst.msk [vmem:[#allocation4 + $0x68] sm:$0xff] %vm347, %v3726
      %3759 = vst.msk [vmem:[#allocation4 + $0x70] sm:$0xff] %vm347, %v3727
      %3760 = vst.msk [vmem:[#allocation4 + $0x78] sm:$0xff] %vm347, %v3728
      %3761 = vst.msk [vmem:[#allocation4 + $0x80] sm:$0xff] %vm347, %v3729
      %3762 = vst.msk [vmem:[#allocation4 + $0x88] sm:$0xff] %vm347, %v3730
      %3763 = vst.msk [vmem:[#allocation4 + $0x90] sm:$0xff] %vm347, %v3731
      %3764 = vst.msk [vmem:[#allocation4 + $0x98] sm:$0xff] %vm347, %v3732
      %3765 = vst.msk [vmem:[#allocation4 + $0xa0] sm:$0xff] %vm347, %v3733
      %3766 = vst.msk [vmem:[#allocation4 + $0xa8] sm:$0xff] %vm347, %v3734
      %3767 = vst.msk [vmem:[#allocation4 + $0xb0] sm:$0xff] %vm347, %v3735
      %3768 = vst.msk [vmem:[#allocation4 + $0xb8] sm:$0xff] %vm347, %v3736
      %3769 = vst.msk [vmem:[#allocation4 + $0xc0] sm:$0xff] %vm347, %v3737
      %3770 = vst.msk [vmem:[#allocation4 + $0xc8] sm:$0xff] %vm347, %v3738
      %3771 = vst.msk [vmem:[#allocation4 + $0xd0] sm:$0xff] %vm347, %v3739
      %3772 = vst.msk [vmem:[#allocation4 + $0xd8] sm:$0xff] %vm347, %v3740
      %3773 = vst.msk [vmem:[#allocation4 + $0xe0] sm:$0xff] %vm347, %v3741
      %3774 = vst.msk [vmem:[#allocation4 + $0xe8] sm:$0xff] %vm347, %v3742
      %3775 = vst.msk [vmem:[#allocation4 + $0xf0] sm:$0xff] %vm347, %v3743
      %3776 = vst.msk [vmem:[#allocation4 + $0xf8] sm:$0xff] %vm347, %v3744
      %3777 = vst.msk [vmem:[#allocation4 + $0x100] sm:$0xff] %vm347, %v3745
      %3778 = vst.msk [vmem:[#allocation4 + $0x108] sm:$0xff] %vm347, %v3746
      %3779 = vst.msk [vmem:[#allocation4 + $0x110] sm:$0xff] %vm347, %v3747
      %v3780 = vld [vmem:[#allocation4 + $0x7] sm:$0xff]
      %v3781 = vld [vmem:[#allocation4 + $0xf] sm:$0xff]
      %v3782 = vld [vmem:[#allocation4 + $0x17] sm:$0xff]
      %v3783 = vld [vmem:[#allocation4 + $0x1f] sm:$0xff]
      %v3784 = vld [vmem:[#allocation4 + $0x27] sm:$0xff]
      %v3785 = vld [vmem:[#allocation4 + $0x2f] sm:$0xff]
      %v3786 = vld [vmem:[#allocation4 + $0x37] sm:$0xff]
      %v3787 = vld [vmem:[#allocation4 + $0x3f] sm:$0xff]
      %v3788 = vld [vmem:[#allocation4 + $0x47] sm:$0xff]
      %v3789 = vld [vmem:[#allocation4 + $0x4f] sm:$0xff]
      %v3790 = vld [vmem:[#allocation4 + $0x57] sm:$0xff]
      %v3791 = vld [vmem:[#allocation4 + $0x5f] sm:$0xff]
      %v3792 = vld [vmem:[#allocation4 + $0x67] sm:$0xff]
      %v3793 = vld [vmem:[#allocation4 + $0x6f] sm:$0xff]
      %v3794 = vld [vmem:[#allocation4 + $0x77] sm:$0xff]
      %v3795 = vld [vmem:[#allocation4 + $0x7f] sm:$0xff]
      %v3796 = vld [vmem:[#allocation4 + $0x87] sm:$0xff]
      %v3797 = vld [vmem:[#allocation4 + $0x8f] sm:$0xff]
      %v3798 = vld [vmem:[#allocation4 + $0x97] sm:$0xff]
      %v3799 = vld [vmem:[#allocation4 + $0x9f] sm:$0xff]
      %v3800 = vld [vmem:[#allocation4 + $0xa7] sm:$0xff]
      %v3801 = vld [vmem:[#allocation4 + $0xaf] sm:$0xff]
      %v3802 = vld [vmem:[#allocation4 + $0xb7] sm:$0xff]
      %v3803 = vld [vmem:[#allocation4 + $0xbf] sm:$0xff]
      %v3804 = vld [vmem:[#allocation4 + $0xc7] sm:$0xff]
      %v3805 = vld [vmem:[#allocation4 + $0xcf] sm:$0xff]
      %v3806 = vld [vmem:[#allocation4 + $0xd7] sm:$0xff]
      %v3807 = vld [vmem:[#allocation4 + $0xdf] sm:$0xff]
      %v3808 = vld [vmem:[#allocation4 + $0xe7] sm:$0xff]
      %v3809 = vld [vmem:[#allocation4 + $0xef] sm:$0xff]
      %v3810 = vld [vmem:[#allocation4 + $0xf7] sm:$0xff]
      %v3811 = vld [vmem:[#allocation4 + $0xff] sm:$0xff]
      %v3812 = vsel %vm637, %v3780, 0.0
      %v3813 = vsel %vm638, %v3781, 0.0
      %v3814 = vsel %vm639, %v3782, 0.0
      %v3815 = vsel %vm640, %v3783, 0.0
      %v3816 = vsel %vm641, %v3784, 0.0
      %v3817 = vsel %vm642, %v3785, 0.0
      %v3818 = vsel %vm643, %v3786, 0.0
      %v3819 = vsel %vm644, %v3787, 0.0
      %v3820 = vsel %vm645, %v3788, 0.0
      %v3821 = vsel %vm646, %v3789, 0.0
      %v3822 = vsel %vm647, %v3790, 0.0
      %v3823 = vsel %vm648, %v3791, 0.0
      %v3824 = vsel %vm649, %v3792, 0.0
      %v3825 = vsel %vm650, %v3793, 0.0
      %v3826 = vsel %vm651, %v3794, 0.0
      %v3827 = vsel %vm652, %v3795, 0.0
      %v3828 = vsel %vm653, %v3796, 0.0
      %v3829 = vsel %vm654, %v3797, 0.0
      %v3830 = vsel %vm655, %v3798, 0.0
      %v3831 = vsel %vm656, %v3799, 0.0
      %v3832 = vsel %vm657, %v3800, 0.0
      %v3833 = vsel %vm658, %v3801, 0.0
      %v3834 = vsel %vm659, %v3802, 0.0
      %v3835 = vsel %vm660, %v3803, 0.0
      %v3836 = vsel %vm661, %v3804, 0.0
      %v3837 = vsel %vm662, %v3805, 0.0
      %v3838 = vsel %vm663, %v3806, 0.0
      %v3839 = vsel %vm664, %v3807, 0.0
      %v3840 = vsel %vm665, %v3808, 0.0
      %v3841 = vsel %vm666, %v3809, 0.0
      %v3842 = vsel %vm667, %v3810, 0.0
      %v3843 = vsel %vm668, %v3811, 0.0
      %v3844 = vpack.c.bf16 %v3812, %v3812
      %v3845 = vpack.c.bf16 %v3813, %v3813
      %v3846 = vpack.c.bf16 %v3814, %v3814
      %v3847 = vpack.c.bf16 %v3815, %v3815
      %v3848 = vpack.c.bf16 %v3816, %v3816
      %v3849 = vpack.c.bf16 %v3817, %v3817
      %v3850 = vpack.c.bf16 %v3818, %v3818
      %v3851 = vpack.c.bf16 %v3819, %v3819
      %v3852 = vpack.c.bf16 %v3820, %v3820
      %v3853 = vpack.c.bf16 %v3821, %v3821
      %v3854 = vpack.c.bf16 %v3822, %v3822
      %v3855 = vpack.c.bf16 %v3823, %v3823
      %v3856 = vpack.c.bf16 %v3824, %v3824
      %v3857 = vpack.c.bf16 %v3825, %v3825
      %v3858 = vpack.c.bf16 %v3826, %v3826
      %v3859 = vpack.c.bf16 %v3827, %v3827
      %v3860 = vpack.c.bf16 %v3828, %v3828
      %v3861 = vpack.c.bf16 %v3829, %v3829
      %v3862 = vpack.c.bf16 %v3830, %v3830
      %v3863 = vpack.c.bf16 %v3831, %v3831
      %v3864 = vpack.c.bf16 %v3832, %v3832
      %v3865 = vpack.c.bf16 %v3833, %v3833
      %v3866 = vpack.c.bf16 %v3834, %v3834
      %v3867 = vpack.c.bf16 %v3835, %v3835
      %v3868 = vpack.c.bf16 %v3836, %v3836
      %v3869 = vpack.c.bf16 %v3837, %v3837
      %v3870 = vpack.c.bf16 %v3838, %v3838
      %v3871 = vpack.c.bf16 %v3839, %v3839
      %v3872 = vpack.c.bf16 %v3840, %v3840
      %v3873 = vpack.c.bf16 %v3841, %v3841
      %v3874 = vpack.c.bf16 %v3842, %v3842
      %v3875 = vpack.c.bf16 %v3843, %v3843
      %3876 = vst.msk [vmem:[#allocation5] sm:$0xf] %vm733, %v3844
      %3877 = vst.msk [vmem:[#allocation5 + $0x14] sm:$0xf] %vm733, %v3845
      %3878 = vst.msk [vmem:[#allocation5 + $0x28] sm:$0xf] %vm733, %v3846
      %3879 = vst.msk [vmem:[#allocation5 + $0x3c] sm:$0xf] %vm733, %v3847
      %3880 = vst.msk [vmem:[#allocation5 + $0x50] sm:$0xf] %vm733, %v3848
      %3881 = vst.msk [vmem:[#allocation5 + $0x64] sm:$0xf] %vm733, %v3849
      %3882 = vst.msk [vmem:[#allocation5 + $0x78] sm:$0xf] %vm733, %v3850
      %3883 = vst.msk [vmem:[#allocation5 + $0x8c] sm:$0xf] %vm733, %v3851
      %3884 = vst.msk [vmem:[#allocation5 + $0xa0] sm:$0xf] %vm733, %v3852
      %3885 = vst.msk [vmem:[#allocation5 + $0xb4] sm:$0xf] %vm733, %v3853
      %3886 = vst.msk [vmem:[#allocation5 + $0xc8] sm:$0xf] %vm733, %v3854
      %3887 = vst.msk [vmem:[#allocation5 + $0xdc] sm:$0xf] %vm733, %v3855
      %3888 = vst.msk [vmem:[#allocation5 + $0xf0] sm:$0xf] %vm733, %v3856
      %3889 = vst.msk [vmem:[#allocation5 + $0x104] sm:$0xf] %vm733, %v3857
      %3890 = vst.msk [vmem:[#allocation5 + $0x118] sm:$0xf] %vm733, %v3858
      %3891 = vst.msk [vmem:[#allocation5 + $0x12c] sm:$0xf] %vm733, %v3859
      %3892 = vst.msk [vmem:[#allocation5 + $0x140] sm:$0xf] %vm733, %v3860
      %3893 = vst.msk [vmem:[#allocation5 + $0x154] sm:$0xf] %vm733, %v3861
      %3894 = vst.msk [vmem:[#allocation5 + $0x168] sm:$0xf] %vm733, %v3862
      %3895 = vst.msk [vmem:[#allocation5 + $0x17c] sm:$0xf] %vm733, %v3863
      %3896 = vst.msk [vmem:[#allocation5 + $0x190] sm:$0xf] %vm733, %v3864
      %3897 = vst.msk [vmem:[#allocation5 + $0x1a4] sm:$0xf] %vm733, %v3865
      %3898 = vst.msk [vmem:[#allocation5 + $0x1b8] sm:$0xf] %vm733, %v3866
      %3899 = vst.msk [vmem:[#allocation5 + $0x1cc] sm:$0xf] %vm733, %v3867
      %3900 = vst.msk [vmem:[#allocation5 + $0x1e0] sm:$0xf] %vm733, %v3868
      %3901 = vst.msk [vmem:[#allocation5 + $0x1f4] sm:$0xf] %vm733, %v3869
      %3902 = vst.msk [vmem:[#allocation5 + $0x208] sm:$0xf] %vm733, %v3870
      %3903 = vst.msk [vmem:[#allocation5 + $0x21c] sm:$0xf] %vm733, %v3871
      %3904 = vst.msk [vmem:[#allocation5 + $0x230] sm:$0xf] %vm733, %v3872
      %3905 = vst.msk [vmem:[#allocation5 + $0x244] sm:$0xf] %vm733, %v3873
      %3906 = vst.msk [vmem:[#allocation5 + $0x258] sm:$0xf] %vm733, %v3874
      %3907 = vst.msk [vmem:[#allocation5 + $0x26c] sm:$0xf] %vm733, %v3875
      %v3908 = vld [vmem:[#allocation4 + $0x8] sm:$0xff]
      %v3909 = vld [vmem:[#allocation4 + $0x10] sm:$0xff]
      %v3910 = vld [vmem:[#allocation4 + $0x18] sm:$0xff]
      %v3911 = vld [vmem:[#allocation4 + $0x20] sm:$0xff]
      %v3912 = vld [vmem:[#allocation4 + $0x28] sm:$0xff]
      %v3913 = vld [vmem:[#allocation4 + $0x30] sm:$0xff]
      %v3914 = vld [vmem:[#allocation4 + $0x38] sm:$0xff]
      %v3915 = vld [vmem:[#allocation4 + $0x40] sm:$0xff]
      %v3916 = vld [vmem:[#allocation4 + $0x48] sm:$0xff]
      %v3917 = vld [vmem:[#allocation4 + $0x50] sm:$0xff]
      %v3918 = vld [vmem:[#allocation4 + $0x58] sm:$0xff]
      %v3919 = vld [vmem:[#allocation4 + $0x60] sm:$0xff]
      %v3920 = vld [vmem:[#allocation4 + $0x68] sm:$0xff]
      %v3921 = vld [vmem:[#allocation4 + $0x70] sm:$0xff]
      %v3922 = vld [vmem:[#allocation4 + $0x78] sm:$0xff]
      %v3923 = vld [vmem:[#allocation4 + $0x80] sm:$0xff]
      %v3924 = vld [vmem:[#allocation4 + $0x88] sm:$0xff]
      %v3925 = vld [vmem:[#allocation4 + $0x90] sm:$0xff]
      %v3926 = vld [vmem:[#allocation4 + $0x98] sm:$0xff]
      %v3927 = vld [vmem:[#allocation4 + $0xa0] sm:$0xff]
      %v3928 = vld [vmem:[#allocation4 + $0xa8] sm:$0xff]
      %v3929 = vld [vmem:[#allocation4 + $0xb0] sm:$0xff]
      %v3930 = vld [vmem:[#allocation4 + $0xb8] sm:$0xff]
      %v3931 = vld [vmem:[#allocation4 + $0xc0] sm:$0xff]
      %v3932 = vld [vmem:[#allocation4 + $0xc8] sm:$0xff]
      %v3933 = vld [vmem:[#allocation4 + $0xd0] sm:$0xff]
      %v3934 = vld [vmem:[#allocation4 + $0xd8] sm:$0xff]
      %v3935 = vld [vmem:[#allocation4 + $0xe0] sm:$0xff]
      %v3936 = vld [vmem:[#allocation4 + $0xe8] sm:$0xff]
      %v3937 = vld [vmem:[#allocation4 + $0xf0] sm:$0xff]
      %v3938 = vld [vmem:[#allocation4 + $0xf8] sm:$0xff]
      %v3939 = vld [vmem:[#allocation4 + $0x100] sm:$0xff]
      %v3940 = vsel %vm477, %v3908, 0.0
      %v3941 = vsel %vm478, %v3909, 0.0
      %v3942 = vsel %vm479, %v3910, 0.0
      %v3943 = vsel %vm480, %v3911, 0.0
      %v3944 = vsel %vm481, %v3912, 0.0
      %v3945 = vsel %vm482, %v3913, 0.0
      %v3946 = vsel %vm483, %v3914, 0.0
      %v3947 = vsel %vm484, %v3915, 0.0
      %v3948 = vsel %vm485, %v3916, 0.0
      %v3949 = vsel %vm486, %v3917, 0.0
      %v3950 = vsel %vm487, %v3918, 0.0
      %v3951 = vsel %vm488, %v3919, 0.0
      %v3952 = vsel %vm489, %v3920, 0.0
      %v3953 = vsel %vm490, %v3921, 0.0
      %v3954 = vsel %vm491, %v3922, 0.0
      %v3955 = vsel %vm492, %v3923, 0.0
      %v3956 = vsel %vm493, %v3924, 0.0
      %v3957 = vsel %vm494, %v3925, 0.0
      %v3958 = vsel %vm495, %v3926, 0.0
      %v3959 = vsel %vm496, %v3927, 0.0
      %v3960 = vsel %vm497, %v3928, 0.0
      %v3961 = vsel %vm498, %v3929, 0.0
      %v3962 = vsel %vm499, %v3930, 0.0
      %v3963 = vsel %vm500, %v3931, 0.0
      %v3964 = vsel %vm501, %v3932, 0.0
      %v3965 = vsel %vm502, %v3933, 0.0
      %v3966 = vsel %vm503, %v3934, 0.0
      %v3967 = vsel %vm504, %v3935, 0.0
      %v3968 = vsel %vm505, %v3936, 0.0
      %v3969 = vsel %vm506, %v3937, 0.0
      %v3970 = vsel %vm507, %v3938, 0.0
      %v3971 = vsel %vm508, %v3939, 0.0
      %v3972 = vpack.c.bf16 %v3940, %v3940
      %v3973 = vpack.c.bf16 %v3941, %v3941
      %v3974 = vpack.c.bf16 %v3942, %v3942
      %v3975 = vpack.c.bf16 %v3943, %v3943
      %v3976 = vpack.c.bf16 %v3944, %v3944
      %v3977 = vpack.c.bf16 %v3945, %v3945
      %v3978 = vpack.c.bf16 %v3946, %v3946
      %v3979 = vpack.c.bf16 %v3947, %v3947
      %v3980 = vpack.c.bf16 %v3948, %v3948
      %v3981 = vpack.c.bf16 %v3949, %v3949
      %v3982 = vpack.c.bf16 %v3950, %v3950
      %v3983 = vpack.c.bf16 %v3951, %v3951
      %v3984 = vpack.c.bf16 %v3952, %v3952
      %v3985 = vpack.c.bf16 %v3953, %v3953
      %v3986 = vpack.c.bf16 %v3954, %v3954
      %v3987 = vpack.c.bf16 %v3955, %v3955
      %v3988 = vpack.c.bf16 %v3956, %v3956
      %v3989 = vpack.c.bf16 %v3957, %v3957
      %v3990 = vpack.c.bf16 %v3958, %v3958
      %v3991 = vpack.c.bf16 %v3959, %v3959
      %v3992 = vpack.c.bf16 %v3960, %v3960
      %v3993 = vpack.c.bf16 %v3961, %v3961
      %v3994 = vpack.c.bf16 %v3962, %v3962
      %v3995 = vpack.c.bf16 %v3963, %v3963
      %v3996 = vpack.c.bf16 %v3964, %v3964
      %v3997 = vpack.c.bf16 %v3965, %v3965
      %v3998 = vpack.c.bf16 %v3966, %v3966
      %v3999 = vpack.c.bf16 %v3967, %v3967
      %v4000 = vpack.c.bf16 %v3968, %v3968
      %v4001 = vpack.c.bf16 %v3969, %v3969
      %v4002 = vpack.c.bf16 %v3970, %v3970
      %v4003 = vpack.c.bf16 %v3971, %v3971
      %4036 = vrot.lane.b32.xlu0 %v3972, 64
      %v4037 = vpop.permute.xlu0 %4036
      %4038 = vrot.lane.b32.xlu0 %v3973, 64
      %v4039 = vpop.permute.xlu0 %4038
      %4040 = vrot.lane.b32.xlu0 %v3974, 64
      %v4041 = vpop.permute.xlu0 %4040
      %4042 = vrot.lane.b32.xlu0 %v3975, 64
      %v4043 = vpop.permute.xlu0 %4042
      %4044 = vrot.lane.b32.xlu0 %v3976, 64
      %v4045 = vpop.permute.xlu0 %4044
      %4046 = vrot.lane.b32.xlu0 %v3977, 64
      %v4047 = vpop.permute.xlu0 %4046
      %4048 = vrot.lane.b32.xlu0 %v3978, 64
      %v4049 = vpop.permute.xlu0 %4048
      %4050 = vrot.lane.b32.xlu0 %v3979, 64
      %v4051 = vpop.permute.xlu0 %4050
      %4052 = vrot.lane.b32.xlu0 %v3980, 64
      %v4053 = vpop.permute.xlu0 %4052
      %4054 = vrot.lane.b32.xlu0 %v3981, 64
      %v4055 = vpop.permute.xlu0 %4054
      %4056 = vrot.lane.b32.xlu0 %v3982, 64
      %v4057 = vpop.permute.xlu0 %4056
      %4058 = vrot.lane.b32.xlu0 %v3983, 64
      %v4059 = vpop.permute.xlu0 %4058
      %4060 = vrot.lane.b32.xlu0 %v3984, 64
      %v4061 = vpop.permute.xlu0 %4060
      %4062 = vrot.lane.b32.xlu0 %v3985, 64
      %v4063 = vpop.permute.xlu0 %4062
      %4064 = vrot.lane.b32.xlu0 %v3986, 64
      %v4065 = vpop.permute.xlu0 %4064
      %4066 = vrot.lane.b32.xlu0 %v3987, 64
      %v4067 = vpop.permute.xlu0 %4066
      %4068 = vrot.lane.b32.xlu0 %v3988, 64
      %v4069 = vpop.permute.xlu0 %4068
      %4070 = vrot.lane.b32.xlu0 %v3989, 64
      %v4071 = vpop.permute.xlu0 %4070
      %4072 = vrot.lane.b32.xlu0 %v3990, 64
      %v4073 = vpop.permute.xlu0 %4072
      %4074 = vrot.lane.b32.xlu0 %v3991, 64
      %v4075 = vpop.permute.xlu0 %4074
      %4076 = vrot.lane.b32.xlu0 %v3992, 64
      %v4077 = vpop.permute.xlu0 %4076
      %4078 = vrot.lane.b32.xlu0 %v3993, 64
      %v4079 = vpop.permute.xlu0 %4078
      %4080 = vrot.lane.b32.xlu0 %v3994, 64
      %v4081 = vpop.permute.xlu0 %4080
      %4082 = vrot.lane.b32.xlu0 %v3995, 64
      %v4083 = vpop.permute.xlu0 %4082
      %4084 = vrot.lane.b32.xlu0 %v3996, 64
      %v4085 = vpop.permute.xlu0 %4084
      %4086 = vrot.lane.b32.xlu0 %v3997, 64
      %v4087 = vpop.permute.xlu0 %4086
      %4088 = vrot.lane.b32.xlu0 %v3998, 64
      %v4089 = vpop.permute.xlu0 %4088
      %4090 = vrot.lane.b32.xlu0 %v3999, 64
      %v4091 = vpop.permute.xlu0 %4090
      %4092 = vrot.lane.b32.xlu0 %v4000, 64
      %v4093 = vpop.permute.xlu0 %4092
      %4094 = vrot.lane.b32.xlu0 %v4001, 64
      %v4095 = vpop.permute.xlu0 %4094
      %4096 = vrot.lane.b32.xlu0 %v4002, 64
      %v4097 = vpop.permute.xlu0 %4096
      %4098 = vrot.lane.b32.xlu0 %v4003, 64
      %v4099 = vpop.permute.xlu0 %4098
      %4132 = vst.msk [vmem:[#allocation5] sm:$0xf] %vm990, %v4037
      %4133 = vst.msk [vmem:[#allocation5 + $0x14] sm:$0xf] %vm990, %v4039
      %4134 = vst.msk [vmem:[#allocation5 + $0x28] sm:$0xf] %vm990, %v4041
      %4135 = vst.msk [vmem:[#allocation5 + $0x3c] sm:$0xf] %vm990, %v4043
      %4136 = vst.msk [vmem:[#allocation5 + $0x50] sm:$0xf] %vm990, %v4045
      %4137 = vst.msk [vmem:[#allocation5 + $0x64] sm:$0xf] %vm990, %v4047
      %4138 = vst.msk [vmem:[#allocation5 + $0x78] sm:$0xf] %vm990, %v4049
      %4139 = vst.msk [vmem:[#allocation5 + $0x8c] sm:$0xf] %vm990, %v4051
      %4140 = vst.msk [vmem:[#allocation5 + $0xa0] sm:$0xf] %vm990, %v4053
      %4141 = vst.msk [vmem:[#allocation5 + $0xb4] sm:$0xf] %vm990, %v4055
      %4142 = vst.msk [vmem:[#allocation5 + $0xc8] sm:$0xf] %vm990, %v4057
      %4143 = vst.msk [vmem:[#allocation5 + $0xdc] sm:$0xf] %vm990, %v4059
      %4144 = vst.msk [vmem:[#allocation5 + $0xf0] sm:$0xf] %vm990, %v4061
      %4145 = vst.msk [vmem:[#allocation5 + $0x104] sm:$0xf] %vm990, %v4063
      %4146 = vst.msk [vmem:[#allocation5 + $0x118] sm:$0xf] %vm990, %v4065
      %4147 = vst.msk [vmem:[#allocation5 + $0x12c] sm:$0xf] %vm990, %v4067
      %4148 = vst.msk [vmem:[#allocation5 + $0x140] sm:$0xf] %vm990, %v4069
      %4149 = vst.msk [vmem:[#allocation5 + $0x154] sm:$0xf] %vm990, %v4071
      %4150 = vst.msk [vmem:[#allocation5 + $0x168] sm:$0xf] %vm990, %v4073
      %4151 = vst.msk [vmem:[#allocation5 + $0x17c] sm:$0xf] %vm990, %v4075
      %4152 = vst.msk [vmem:[#allocation5 + $0x190] sm:$0xf] %vm990, %v4077
      %4153 = vst.msk [vmem:[#allocation5 + $0x1a4] sm:$0xf] %vm990, %v4079
      %4154 = vst.msk [vmem:[#allocation5 + $0x1b8] sm:$0xf] %vm990, %v4081
      %4155 = vst.msk [vmem:[#allocation5 + $0x1cc] sm:$0xf] %vm990, %v4083
      %4156 = vst.msk [vmem:[#allocation5 + $0x1e0] sm:$0xf] %vm990, %v4085
      %4157 = vst.msk [vmem:[#allocation5 + $0x1f4] sm:$0xf] %vm990, %v4087
      %4158 = vst.msk [vmem:[#allocation5 + $0x208] sm:$0xf] %vm990, %v4089
      %4159 = vst.msk [vmem:[#allocation5 + $0x21c] sm:$0xf] %vm990, %v4091
      %4160 = vst.msk [vmem:[#allocation5 + $0x230] sm:$0xf] %vm990, %v4093
      %4161 = vst.msk [vmem:[#allocation5 + $0x244] sm:$0xf] %vm990, %v4095
      %4162 = vst.msk [vmem:[#allocation5 + $0x258] sm:$0xf] %vm990, %v4097
      %4163 = vst.msk [vmem:[#allocation5 + $0x26c] sm:$0xf] %vm990, %v4099
      %v4164 = vld [vmem:[#allocation4 + $0x9] sm:$0xff]
      %v4165 = vld [vmem:[#allocation4 + $0x11] sm:$0xff]
      %v4166 = vld [vmem:[#allocation4 + $0x19] sm:$0xff]
      %v4167 = vld [vmem:[#allocation4 + $0x21] sm:$0xff]
      %v4168 = vld [vmem:[#allocation4 + $0x29] sm:$0xff]
      %v4169 = vld [vmem:[#allocation4 + $0x31] sm:$0xff]
      %v4170 = vld [vmem:[#allocation4 + $0x39] sm:$0xff]
      %v4171 = vld [vmem:[#allocation4 + $0x41] sm:$0xff]
      %v4172 = vld [vmem:[#allocation4 + $0x49] sm:$0xff]
      %v4173 = vld [vmem:[#allocation4 + $0x51] sm:$0xff]
      %v4174 = vld [vmem:[#allocation4 + $0x59] sm:$0xff]
      %v4175 = vld [vmem:[#allocation4 + $0x61] sm:$0xff]
      %v4176 = vld [vmem:[#allocation4 + $0x69] sm:$0xff]
      %v4177 = vld [vmem:[#allocation4 + $0x71] sm:$0xff]
      %v4178 = vld [vmem:[#allocation4 + $0x79] sm:$0xff]
      %v4179 = vld [vmem:[#allocation4 + $0x81] sm:$0xff]
      %v4180 = vld [vmem:[#allocation4 + $0x89] sm:$0xff]
      %v4181 = vld [vmem:[#allocation4 + $0x91] sm:$0xff]
      %v4182 = vld [vmem:[#allocation4 + $0x99] sm:$0xff]
      %v4183 = vld [vmem:[#allocation4 + $0xa1] sm:$0xff]
      %v4184 = vld [vmem:[#allocation4 + $0xa9] sm:$0xff]
      %v4185 = vld [vmem:[#allocation4 + $0xb1] sm:$0xff]
      %v4186 = vld [vmem:[#allocation4 + $0xb9] sm:$0xff]
      %v4187 = vld [vmem:[#allocation4 + $0xc1] sm:$0xff]
      %v4188 = vld [vmem:[#allocation4 + $0xc9] sm:$0xff]
      %v4189 = vld [vmem:[#allocation4 + $0xd1] sm:$0xff]
      %v4190 = vld [vmem:[#allocation4 + $0xd9] sm:$0xff]
      %v4191 = vld [vmem:[#allocation4 + $0xe1] sm:$0xff]
      %v4192 = vld [vmem:[#allocation4 + $0xe9] sm:$0xff]
      %v4193 = vld [vmem:[#allocation4 + $0xf1] sm:$0xff]
      %v4194 = vld [vmem:[#allocation4 + $0xf9] sm:$0xff]
      %v4195 = vld [vmem:[#allocation4 + $0x101] sm:$0xff]
      %v4196 = vsel %vm1055, %v4164, 0.0
      %v4197 = vsel %vm1056, %v4165, 0.0
      %v4198 = vsel %vm1057, %v4166, 0.0
      %v4199 = vsel %vm1058, %v4167, 0.0
      %v4200 = vsel %vm1059, %v4168, 0.0
      %v4201 = vsel %vm1060, %v4169, 0.0
      %v4202 = vsel %vm1061, %v4170, 0.0
      %v4203 = vsel %vm1062, %v4171, 0.0
      %v4204 = vsel %vm1063, %v4172, 0.0
      %v4205 = vsel %vm1064, %v4173, 0.0
      %v4206 = vsel %vm1065, %v4174, 0.0
      %v4207 = vsel %vm1066, %v4175, 0.0
      %v4208 = vsel %vm1067, %v4176, 0.0
      %v4209 = vsel %vm1068, %v4177, 0.0
      %v4210 = vsel %vm1069, %v4178, 0.0
      %v4211 = vsel %vm1070, %v4179, 0.0
      %v4212 = vsel %vm1071, %v4180, 0.0
      %v4213 = vsel %vm1072, %v4181, 0.0
      %v4214 = vsel %vm1073, %v4182, 0.0
      %v4215 = vsel %vm1074, %v4183, 0.0
      %v4216 = vsel %vm1075, %v4184, 0.0
      %v4217 = vsel %vm1076, %v4185, 0.0
      %v4218 = vsel %vm1077, %v4186, 0.0
      %v4219 = vsel %vm1078, %v4187, 0.0
      %v4220 = vsel %vm1079, %v4188, 0.0
      %v4221 = vsel %vm1080, %v4189, 0.0
      %v4222 = vsel %vm1081, %v4190, 0.0
      %v4223 = vsel %vm1082, %v4191, 0.0
      %v4224 = vsel %vm1083, %v4192, 0.0
      %v4225 = vsel %vm1084, %v4193, 0.0
      %v4226 = vsel %vm1085, %v4194, 0.0
      %v4227 = vsel %vm1086, %v4195, 0.0
      %v4228 = vpack.c.bf16 %v4196, %v4196
      %v4229 = vpack.c.bf16 %v4197, %v4197
      %v4230 = vpack.c.bf16 %v4198, %v4198
      %v4231 = vpack.c.bf16 %v4199, %v4199
      %v4232 = vpack.c.bf16 %v4200, %v4200
      %v4233 = vpack.c.bf16 %v4201, %v4201
      %v4234 = vpack.c.bf16 %v4202, %v4202
      %v4235 = vpack.c.bf16 %v4203, %v4203
      %v4236 = vpack.c.bf16 %v4204, %v4204
      %v4237 = vpack.c.bf16 %v4205, %v4205
      %v4238 = vpack.c.bf16 %v4206, %v4206
      %v4239 = vpack.c.bf16 %v4207, %v4207
      %v4240 = vpack.c.bf16 %v4208, %v4208
      %v4241 = vpack.c.bf16 %v4209, %v4209
      %v4242 = vpack.c.bf16 %v4210, %v4210
      %v4243 = vpack.c.bf16 %v4211, %v4211
      %v4244 = vpack.c.bf16 %v4212, %v4212
      %v4245 = vpack.c.bf16 %v4213, %v4213
      %v4246 = vpack.c.bf16 %v4214, %v4214
      %v4247 = vpack.c.bf16 %v4215, %v4215
      %v4248 = vpack.c.bf16 %v4216, %v4216
      %v4249 = vpack.c.bf16 %v4217, %v4217
      %v4250 = vpack.c.bf16 %v4218, %v4218
      %v4251 = vpack.c.bf16 %v4219, %v4219
      %v4252 = vpack.c.bf16 %v4220, %v4220
      %v4253 = vpack.c.bf16 %v4221, %v4221
      %v4254 = vpack.c.bf16 %v4222, %v4222
      %v4255 = vpack.c.bf16 %v4223, %v4223
      %v4256 = vpack.c.bf16 %v4224, %v4224
      %v4257 = vpack.c.bf16 %v4225, %v4225
      %v4258 = vpack.c.bf16 %v4226, %v4226
      %v4259 = vpack.c.bf16 %v4227, %v4227
      %4260 = vst.msk [vmem:[#allocation5 + $0x4] sm:$0xf] %vm733, %v4228
      %4261 = vst.msk [vmem:[#allocation5 + $0x18] sm:$0xf] %vm733, %v4229
      %4262 = vst.msk [vmem:[#allocation5 + $0x2c] sm:$0xf] %vm733, %v4230
      %4263 = vst.msk [vmem:[#allocation5 + $0x40] sm:$0xf] %vm733, %v4231
      %4264 = vst.msk [vmem:[#allocation5 + $0x54] sm:$0xf] %vm733, %v4232
      %4265 = vst.msk [vmem:[#allocation5 + $0x68] sm:$0xf] %vm733, %v4233
      %4266 = vst.msk [vmem:[#allocation5 + $0x7c] sm:$0xf] %vm733, %v4234
      %4267 = vst.msk [vmem:[#allocation5 + $0x90] sm:$0xf] %vm733, %v4235
      %4268 = vst.msk [vmem:[#allocation5 + $0xa4] sm:$0xf] %vm733, %v4236
      %4269 = vst.msk [vmem:[#allocation5 + $0xb8] sm:$0xf] %vm733, %v4237
      %4270 = vst.msk [vmem:[#allocation5 + $0xcc] sm:$0xf] %vm733, %v4238
      %4271 = vst.msk [vmem:[#allocation5 + $0xe0] sm:$0xf] %vm733, %v4239
      %4272 = vst.msk [vmem:[#allocation5 + $0xf4] sm:$0xf] %vm733, %v4240
      %4273 = vst.msk [vmem:[#allocation5 + $0x108] sm:$0xf] %vm733, %v4241
      %4274 = vst.msk [vmem:[#allocation5 + $0x11c] sm:$0xf] %vm733, %v4242
      %4275 = vst.msk [vmem:[#allocation5 + $0x130] sm:$0xf] %vm733, %v4243
      %4276 = vst.msk [vmem:[#allocation5 + $0x144] sm:$0xf] %vm733, %v4244
      %4277 = vst.msk [vmem:[#allocation5 + $0x158] sm:$0xf] %vm733, %v4245
      %4278 = vst.msk [vmem:[#allocation5 + $0x16c] sm:$0xf] %vm733, %v4246
      %4279 = vst.msk [vmem:[#allocation5 + $0x180] sm:$0xf] %vm733, %v4247
      %4280 = vst.msk [vmem:[#allocation5 + $0x194] sm:$0xf] %vm733, %v4248
      %4281 = vst.msk [vmem:[#allocation5 + $0x1a8] sm:$0xf] %vm733, %v4249
      %4282 = vst.msk [vmem:[#allocation5 + $0x1bc] sm:$0xf] %vm733, %v4250
      %4283 = vst.msk [vmem:[#allocation5 + $0x1d0] sm:$0xf] %vm733, %v4251
      %4284 = vst.msk [vmem:[#allocation5 + $0x1e4] sm:$0xf] %vm733, %v4252
      %4285 = vst.msk [vmem:[#allocation5 + $0x1f8] sm:$0xf] %vm733, %v4253
      %4286 = vst.msk [vmem:[#allocation5 + $0x20c] sm:$0xf] %vm733, %v4254
      %4287 = vst.msk [vmem:[#allocation5 + $0x220] sm:$0xf] %vm733, %v4255
      %4288 = vst.msk [vmem:[#allocation5 + $0x234] sm:$0xf] %vm733, %v4256
      %4289 = vst.msk [vmem:[#allocation5 + $0x248] sm:$0xf] %vm733, %v4257
      %4290 = vst.msk [vmem:[#allocation5 + $0x25c] sm:$0xf] %vm733, %v4258
      %4291 = vst.msk [vmem:[#allocation5 + $0x270] sm:$0xf] %vm733, %v4259
      %v4292 = vld [vmem:[#allocation4 + $0x17] sm:$0xff]
      %v4293 = vld [vmem:[#allocation4 + $0x1f] sm:$0xff]
      %v4294 = vld [vmem:[#allocation4 + $0x27] sm:$0xff]
      %v4295 = vld [vmem:[#allocation4 + $0x2f] sm:$0xff]
      %v4296 = vld [vmem:[#allocation4 + $0x37] sm:$0xff]
      %v4297 = vld [vmem:[#allocation4 + $0x3f] sm:$0xff]
      %v4298 = vld [vmem:[#allocation4 + $0x47] sm:$0xff]
      %v4299 = vld [vmem:[#allocation4 + $0x4f] sm:$0xff]
      %v4300 = vld [vmem:[#allocation4 + $0x57] sm:$0xff]
      %v4301 = vld [vmem:[#allocation4 + $0x5f] sm:$0xff]
      %v4302 = vld [vmem:[#allocation4 + $0x67] sm:$0xff]
      %v4303 = vld [vmem:[#allocation4 + $0x6f] sm:$0xff]
      %v4304 = vld [vmem:[#allocation4 + $0x77] sm:$0xff]
      %v4305 = vld [vmem:[#allocation4 + $0x7f] sm:$0xff]
      %v4306 = vld [vmem:[#allocation4 + $0x87] sm:$0xff]
      %v4307 = vld [vmem:[#allocation4 + $0x8f] sm:$0xff]
      %v4308 = vld [vmem:[#allocation4 + $0x97] sm:$0xff]
      %v4309 = vld [vmem:[#allocation4 + $0x9f] sm:$0xff]
      %v4310 = vld [vmem:[#allocation4 + $0xa7] sm:$0xff]
      %v4311 = vld [vmem:[#allocation4 + $0xaf] sm:$0xff]
      %v4312 = vld [vmem:[#allocation4 + $0xb7] sm:$0xff]
      %v4313 = vld [vmem:[#allocation4 + $0xbf] sm:$0xff]
      %v4314 = vld [vmem:[#allocation4 + $0xc7] sm:$0xff]
      %v4315 = vld [vmem:[#allocation4 + $0xcf] sm:$0xff]
      %v4316 = vld [vmem:[#allocation4 + $0xd7] sm:$0xff]
      %v4317 = vld [vmem:[#allocation4 + $0xdf] sm:$0xff]
      %v4318 = vld [vmem:[#allocation4 + $0xe7] sm:$0xff]
      %v4319 = vld [vmem:[#allocation4 + $0xef] sm:$0xff]
      %v4320 = vld [vmem:[#allocation4 + $0xf7] sm:$0xff]
      %v4321 = vld [vmem:[#allocation4 + $0xff] sm:$0xff]
      %v4322 = vld [vmem:[#allocation4 + $0x107] sm:$0xff]
      %v4323 = vld [vmem:[#allocation4 + $0x10f] sm:$0xff]
      %v4324 = vsel %vm541, %v4292, 0.0
      %v4325 = vsel %vm542, %v4293, 0.0
      %v4326 = vsel %vm543, %v4294, 0.0
      %v4327 = vsel %vm544, %v4295, 0.0
      %v4328 = vsel %vm545, %v4296, 0.0
      %v4329 = vsel %vm546, %v4297, 0.0
      %v4330 = vsel %vm547, %v4298, 0.0
      %v4331 = vsel %vm548, %v4299, 0.0
      %v4332 = vsel %vm549, %v4300, 0.0
      %v4333 = vsel %vm550, %v4301, 0.0
      %v4334 = vsel %vm551, %v4302, 0.0
      %v4335 = vsel %vm552, %v4303, 0.0
      %v4336 = vsel %vm553, %v4304, 0.0
      %v4337 = vsel %vm554, %v4305, 0.0
      %v4338 = vsel %vm555, %v4306, 0.0
      %v4339 = vsel %vm556, %v4307, 0.0
      %v4340 = vsel %vm557, %v4308, 0.0
      %v4341 = vsel %vm558, %v4309, 0.0
      %v4342 = vsel %vm559, %v4310, 0.0
      %v4343 = vsel %vm560, %v4311, 0.0
      %v4344 = vsel %vm561, %v4312, 0.0
      %v4345 = vsel %vm562, %v4313, 0.0
      %v4346 = vsel %vm563, %v4314, 0.0
      %v4347 = vsel %vm564, %v4315, 0.0
      %v4348 = vsel %vm565, %v4316, 0.0
      %v4349 = vsel %vm566, %v4317, 0.0
      %v4350 = vsel %vm567, %v4318, 0.0
      %v4351 = vsel %vm568, %v4319, 0.0
      %v4352 = vsel %vm569, %v4320, 0.0
      %v4353 = vsel %vm570, %v4321, 0.0
      %v4354 = vsel %vm571, %v4322, 0.0
      %v4355 = vsel %vm572, %v4323, 0.0
      %v4356 = vpack.c.bf16 %v4324, %v4324
      %v4357 = vpack.c.bf16 %v4325, %v4325
      %v4358 = vpack.c.bf16 %v4326, %v4326
      %v4359 = vpack.c.bf16 %v4327, %v4327
      %v4360 = vpack.c.bf16 %v4328, %v4328
      %v4361 = vpack.c.bf16 %v4329, %v4329
      %v4362 = vpack.c.bf16 %v4330, %v4330
      %v4363 = vpack.c.bf16 %v4331, %v4331
      %v4364 = vpack.c.bf16 %v4332, %v4332
      %v4365 = vpack.c.bf16 %v4333, %v4333
      %v4366 = vpack.c.bf16 %v4334, %v4334
      %v4367 = vpack.c.bf16 %v4335, %v4335
      %v4368 = vpack.c.bf16 %v4336, %v4336
      %v4369 = vpack.c.bf16 %v4337, %v4337
      %v4370 = vpack.c.bf16 %v4338, %v4338
      %v4371 = vpack.c.bf16 %v4339, %v4339
      %v4372 = vpack.c.bf16 %v4340, %v4340
      %v4373 = vpack.c.bf16 %v4341, %v4341
      %v4374 = vpack.c.bf16 %v4342, %v4342
      %v4375 = vpack.c.bf16 %v4343, %v4343
      %v4376 = vpack.c.bf16 %v4344, %v4344
      %v4377 = vpack.c.bf16 %v4345, %v4345
      %v4378 = vpack.c.bf16 %v4346, %v4346
      %v4379 = vpack.c.bf16 %v4347, %v4347
      %v4380 = vpack.c.bf16 %v4348, %v4348
      %v4381 = vpack.c.bf16 %v4349, %v4349
      %v4382 = vpack.c.bf16 %v4350, %v4350
      %v4383 = vpack.c.bf16 %v4351, %v4351
      %v4384 = vpack.c.bf16 %v4352, %v4352
      %v4385 = vpack.c.bf16 %v4353, %v4353
      %v4386 = vpack.c.bf16 %v4354, %v4354
      %v4387 = vpack.c.bf16 %v4355, %v4355
      %4420 = vrot.lane.b32.xlu0 %v4356, 64
      %v4421 = vpop.permute.xlu0 %4420
      %4422 = vrot.lane.b32.xlu0 %v4357, 64
      %v4423 = vpop.permute.xlu0 %4422
      %4424 = vrot.lane.b32.xlu0 %v4358, 64
      %v4425 = vpop.permute.xlu0 %4424
      %4426 = vrot.lane.b32.xlu0 %v4359, 64
      %v4427 = vpop.permute.xlu0 %4426
      %4428 = vrot.lane.b32.xlu0 %v4360, 64
      %v4429 = vpop.permute.xlu0 %4428
      %4430 = vrot.lane.b32.xlu0 %v4361, 64
      %v4431 = vpop.permute.xlu0 %4430
      %4432 = vrot.lane.b32.xlu0 %v4362, 64
      %v4433 = vpop.permute.xlu0 %4432
      %4434 = vrot.lane.b32.xlu0 %v4363, 64
      %v4435 = vpop.permute.xlu0 %4434
      %4436 = vrot.lane.b32.xlu0 %v4364, 64
      %v4437 = vpop.permute.xlu0 %4436
      %4438 = vrot.lane.b32.xlu0 %v4365, 64
      %v4439 = vpop.permute.xlu0 %4438
      %4440 = vrot.lane.b32.xlu0 %v4366, 64
      %v4441 = vpop.permute.xlu0 %4440
      %4442 = vrot.lane.b32.xlu0 %v4367, 64
      %v4443 = vpop.permute.xlu0 %4442
      %4444 = vrot.lane.b32.xlu0 %v4368, 64
      %v4445 = vpop.permute.xlu0 %4444
      %4446 = vrot.lane.b32.xlu0 %v4369, 64
      %v4447 = vpop.permute.xlu0 %4446
      %4448 = vrot.lane.b32.xlu0 %v4370, 64
      %v4449 = vpop.permute.xlu0 %4448
      %4450 = vrot.lane.b32.xlu0 %v4371, 64
      %v4451 = vpop.permute.xlu0 %4450
      %4452 = vrot.lane.b32.xlu0 %v4372, 64
      %v4453 = vpop.permute.xlu0 %4452
      %4454 = vrot.lane.b32.xlu0 %v4373, 64
      %v4455 = vpop.permute.xlu0 %4454
      %4456 = vrot.lane.b32.xlu0 %v4374, 64
      %v4457 = vpop.permute.xlu0 %4456
      %4458 = vrot.lane.b32.xlu0 %v4375, 64
      %v4459 = vpop.permute.xlu0 %4458
      %4460 = vrot.lane.b32.xlu0 %v4376, 64
      %v4461 = vpop.permute.xlu0 %4460
      %4462 = vrot.lane.b32.xlu0 %v4377, 64
      %v4463 = vpop.permute.xlu0 %4462
      %4464 = vrot.lane.b32.xlu0 %v4378, 64
      %v4465 = vpop.permute.xlu0 %4464
      %4466 = vrot.lane.b32.xlu0 %v4379, 64
      %v4467 = vpop.permute.xlu0 %4466
      %4468 = vrot.lane.b32.xlu0 %v4380, 64
      %v4469 = vpop.permute.xlu0 %4468
      %4470 = vrot.lane.b32.xlu0 %v4381, 64
      %v4471 = vpop.permute.xlu0 %4470
      %4472 = vrot.lane.b32.xlu0 %v4382, 64
      %v4473 = vpop.permute.xlu0 %4472
      %4474 = vrot.lane.b32.xlu0 %v4383, 64
      %v4475 = vpop.permute.xlu0 %4474
      %4476 = vrot.lane.b32.xlu0 %v4384, 64
      %v4477 = vpop.permute.xlu0 %4476
      %4478 = vrot.lane.b32.xlu0 %v4385, 64
      %v4479 = vpop.permute.xlu0 %4478
      %4480 = vrot.lane.b32.xlu0 %v4386, 64
      %v4481 = vpop.permute.xlu0 %4480
      %4482 = vrot.lane.b32.xlu0 %v4387, 64
      %v4483 = vpop.permute.xlu0 %4482
      %4516 = vst.msk [vmem:[#allocation5 + $0x4] sm:$0xf] %vm990, %v4421
      %4517 = vst.msk [vmem:[#allocation5 + $0x18] sm:$0xf] %vm990, %v4423
      %4518 = vst.msk [vmem:[#allocation5 + $0x2c] sm:$0xf] %vm990, %v4425
      %4519 = vst.msk [vmem:[#allocation5 + $0x40] sm:$0xf] %vm990, %v4427
      %4520 = vst.msk [vmem:[#allocation5 + $0x54] sm:$0xf] %vm990, %v4429
      %4521 = vst.msk [vmem:[#allocation5 + $0x68] sm:$0xf] %vm990, %v4431
      %4522 = vst.msk [vmem:[#allocation5 + $0x7c] sm:$0xf] %vm990, %v4433
      %4523 = vst.msk [vmem:[#allocation5 + $0x90] sm:$0xf] %vm990, %v4435
      %4524 = vst.msk [vmem:[#allocation5 + $0xa4] sm:$0xf] %vm990, %v4437
      %4525 = vst.msk [vmem:[#allocation5 + $0xb8] sm:$0xf] %vm990, %v4439
      %4526 = vst.msk [vmem:[#allocation5 + $0xcc] sm:$0xf] %vm990, %v4441
      %4527 = vst.msk [vmem:[#allocation5 + $0xe0] sm:$0xf] %vm990, %v4443
      %4528 = vst.msk [vmem:[#allocation5 + $0xf4] sm:$0xf] %vm990, %v4445
      %4529 = vst.msk [vmem:[#allocation5 + $0x108] sm:$0xf] %vm990, %v4447
      %4530 = vst.msk [vmem:[#allocation5 + $0x11c] sm:$0xf] %vm990, %v4449
      %4531 = vst.msk [vmem:[#allocation5 + $0x130] sm:$0xf] %vm990, %v4451
      %4532 = vst.msk [vmem:[#allocation5 + $0x144] sm:$0xf] %vm990, %v4453
      %4533 = vst.msk [vmem:[#allocation5 + $0x158] sm:$0xf] %vm990, %v4455
      %4534 = vst.msk [vmem:[#allocation5 + $0x16c] sm:$0xf] %vm990, %v4457
      %4535 = vst.msk [vmem:[#allocation5 + $0x180] sm:$0xf] %vm990, %v4459
      %4536 = vst.msk [vmem:[#allocation5 + $0x194] sm:$0xf] %vm990, %v4461
      %4537 = vst.msk [vmem:[#allocation5 + $0x1a8] sm:$0xf] %vm990, %v4463
      %4538 = vst.msk [vmem:[#allocation5 + $0x1bc] sm:$0xf] %vm990, %v4465
      %4539 = vst.msk [vmem:[#allocation5 + $0x1d0] sm:$0xf] %vm990, %v4467
      %4540 = vst.msk [vmem:[#allocation5 + $0x1e4] sm:$0xf] %vm990, %v4469
      %4541 = vst.msk [vmem:[#allocation5 + $0x1f8] sm:$0xf] %vm990, %v4471
      %4542 = vst.msk [vmem:[#allocation5 + $0x20c] sm:$0xf] %vm990, %v4473
      %4543 = vst.msk [vmem:[#allocation5 + $0x220] sm:$0xf] %vm990, %v4475
      %4544 = vst.msk [vmem:[#allocation5 + $0x234] sm:$0xf] %vm990, %v4477
      %4545 = vst.msk [vmem:[#allocation5 + $0x248] sm:$0xf] %vm990, %v4479
      %4546 = vst.msk [vmem:[#allocation5 + $0x25c] sm:$0xf] %vm990, %v4481
      %4547 = vst.msk [vmem:[#allocation5 + $0x270] sm:$0xf] %vm990, %v4483
      %v4548 = vld [vmem:[#allocation4 + $0x18] sm:$0xff]
      %v4549 = vld [vmem:[#allocation4 + $0x20] sm:$0xff]
      %v4550 = vld [vmem:[#allocation4 + $0x28] sm:$0xff]
      %v4551 = vld [vmem:[#allocation4 + $0x30] sm:$0xff]
      %v4552 = vld [vmem:[#allocation4 + $0x38] sm:$0xff]
      %v4553 = vld [vmem:[#allocation4 + $0x40] sm:$0xff]
      %v4554 = vld [vmem:[#allocation4 + $0x48] sm:$0xff]
      %v4555 = vld [vmem:[#allocation4 + $0x50] sm:$0xff]
      %v4556 = vld [vmem:[#allocation4 + $0x58] sm:$0xff]
      %v4557 = vld [vmem:[#allocation4 + $0x60] sm:$0xff]
      %v4558 = vld [vmem:[#allocation4 + $0x68] sm:$0xff]
      %v4559 = vld [vmem:[#allocation4 + $0x70] sm:$0xff]
      %v4560 = vld [vmem:[#allocation4 + $0x78] sm:$0xff]
      %v4561 = vld [vmem:[#allocation4 + $0x80] sm:$0xff]
      %v4562 = vld [vmem:[#allocation4 + $0x88] sm:$0xff]
      %v4563 = vld [vmem:[#allocation4 + $0x90] sm:$0xff]
      %v4564 = vld [vmem:[#allocation4 + $0x98] sm:$0xff]
      %v4565 = vld [vmem:[#allocation4 + $0xa0] sm:$0xff]
      %v4566 = vld [vmem:[#allocation4 + $0xa8] sm:$0xff]
      %v4567 = vld [vmem:[#allocation4 + $0xb0] sm:$0xff]
      %v4568 = vld [vmem:[#allocation4 + $0xb8] sm:$0xff]
      %v4569 = vld [vmem:[#allocation4 + $0xc0] sm:$0xff]
      %v4570 = vld [vmem:[#allocation4 + $0xc8] sm:$0xff]
      %v4571 = vld [vmem:[#allocation4 + $0xd0] sm:$0xff]
      %v4572 = vld [vmem:[#allocation4 + $0xd8] sm:$0xff]
      %v4573 = vld [vmem:[#allocation4 + $0xe0] sm:$0xff]
      %v4574 = vld [vmem:[#allocation4 + $0xe8] sm:$0xff]
      %v4575 = vld [vmem:[#allocation4 + $0xf0] sm:$0xff]
      %v4576 = vld [vmem:[#allocation4 + $0xf8] sm:$0xff]
      %v4577 = vld [vmem:[#allocation4 + $0x100] sm:$0xff]
      %v4578 = vld [vmem:[#allocation4 + $0x108] sm:$0xff]
      %v4579 = vld [vmem:[#allocation4 + $0x110] sm:$0xff]
      %v4580 = vpack.c.bf16 %v4548, %v4548
      %v4581 = vpack.c.bf16 %v4549, %v4549
      %v4582 = vpack.c.bf16 %v4550, %v4550
      %v4583 = vpack.c.bf16 %v4551, %v4551
      %v4584 = vpack.c.bf16 %v4552, %v4552
      %v4585 = vpack.c.bf16 %v4553, %v4553
      %v4586 = vpack.c.bf16 %v4554, %v4554
      %v4587 = vpack.c.bf16 %v4555, %v4555
      %v4588 = vpack.c.bf16 %v4556, %v4556
      %v4589 = vpack.c.bf16 %v4557, %v4557
      %v4590 = vpack.c.bf16 %v4558, %v4558
      %v4591 = vpack.c.bf16 %v4559, %v4559
      %v4592 = vpack.c.bf16 %v4560, %v4560
      %v4593 = vpack.c.bf16 %v4561, %v4561
      %v4594 = vpack.c.bf16 %v4562, %v4562
      %v4595 = vpack.c.bf16 %v4563, %v4563
      %v4596 = vpack.c.bf16 %v4564, %v4564
      %v4597 = vpack.c.bf16 %v4565, %v4565
      %v4598 = vpack.c.bf16 %v4566, %v4566
      %v4599 = vpack.c.bf16 %v4567, %v4567
      %v4600 = vpack.c.bf16 %v4568, %v4568
      %v4601 = vpack.c.bf16 %v4569, %v4569
      %v4602 = vpack.c.bf16 %v4570, %v4570
      %v4603 = vpack.c.bf16 %v4571, %v4571
      %v4604 = vpack.c.bf16 %v4572, %v4572
      %v4605 = vpack.c.bf16 %v4573, %v4573
      %v4606 = vpack.c.bf16 %v4574, %v4574
      %v4607 = vpack.c.bf16 %v4575, %v4575
      %v4608 = vpack.c.bf16 %v4576, %v4576
      %v4609 = vpack.c.bf16 %v4577, %v4577
      %v4610 = vpack.c.bf16 %v4578, %v4578
      %v4611 = vpack.c.bf16 %v4579, %v4579
      %4612 = vst.msk [vmem:[#allocation5 + $0x8] sm:$0xf] %vm733, %v4580
      %4613 = vst.msk [vmem:[#allocation5 + $0x1c] sm:$0xf] %vm733, %v4581
      %4614 = vst.msk [vmem:[#allocation5 + $0x30] sm:$0xf] %vm733, %v4582
      %4615 = vst.msk [vmem:[#allocation5 + $0x44] sm:$0xf] %vm733, %v4583
      %4616 = vst.msk [vmem:[#allocation5 + $0x58] sm:$0xf] %vm733, %v4584
      %4617 = vst.msk [vmem:[#allocation5 + $0x6c] sm:$0xf] %vm733, %v4585
      %4618 = vst.msk [vmem:[#allocation5 + $0x80] sm:$0xf] %vm733, %v4586
      %4619 = vst.msk [vmem:[#allocation5 + $0x94] sm:$0xf] %vm733, %v4587
      %4620 = vst.msk [vmem:[#allocation5 + $0xa8] sm:$0xf] %vm733, %v4588
      %4621 = vst.msk [vmem:[#allocation5 + $0xbc] sm:$0xf] %vm733, %v4589
      %4622 = vst.msk [vmem:[#allocation5 + $0xd0] sm:$0xf] %vm733, %v4590
      %4623 = vst.msk [vmem:[#allocation5 + $0xe4] sm:$0xf] %vm733, %v4591
      %4624 = vst.msk [vmem:[#allocation5 + $0xf8] sm:$0xf] %vm733, %v4592
      %4625 = vst.msk [vmem:[#allocation5 + $0x10c] sm:$0xf] %vm733, %v4593
      %4626 = vst.msk [vmem:[#allocation5 + $0x120] sm:$0xf] %vm733, %v4594
      %4627 = vst.msk [vmem:[#allocation5 + $0x134] sm:$0xf] %vm733, %v4595
      %4628 = vst.msk [vmem:[#allocation5 + $0x148] sm:$0xf] %vm733, %v4596
      %4629 = vst.msk [vmem:[#allocation5 + $0x15c] sm:$0xf] %vm733, %v4597
      %4630 = vst.msk [vmem:[#allocation5 + $0x170] sm:$0xf] %vm733, %v4598
      %4631 = vst.msk [vmem:[#allocation5 + $0x184] sm:$0xf] %vm733, %v4599
      %4632 = vst.msk [vmem:[#allocation5 + $0x198] sm:$0xf] %vm733, %v4600
      %4633 = vst.msk [vmem:[#allocation5 + $0x1ac] sm:$0xf] %vm733, %v4601
      %4634 = vst.msk [vmem:[#allocation5 + $0x1c0] sm:$0xf] %vm733, %v4602
      %4635 = vst.msk [vmem:[#allocation5 + $0x1d4] sm:$0xf] %vm733, %v4603
      %4636 = vst.msk [vmem:[#allocation5 + $0x1e8] sm:$0xf] %vm733, %v4604
      %4637 = vst.msk [vmem:[#allocation5 + $0x1fc] sm:$0xf] %vm733, %v4605
      %4638 = vst.msk [vmem:[#allocation5 + $0x210] sm:$0xf] %vm733, %v4606
      %4639 = vst.msk [vmem:[#allocation5 + $0x224] sm:$0xf] %vm733, %v4607
      %4640 = vst.msk [vmem:[#allocation5 + $0x238] sm:$0xf] %vm733, %v4608
      %4641 = vst.msk [vmem:[#allocation5 + $0x24c] sm:$0xf] %vm733, %v4609
      %4642 = vst.msk [vmem:[#allocation5 + $0x260] sm:$0xf] %vm733, %v4610
      %4643 = vst.msk [vmem:[#allocation5 + $0x274] sm:$0xf] %vm733, %v4611
      %v4644 = vld [vmem:[#allocation4 + $0x19] sm:$0xff]
      %v4645 = vld [vmem:[#allocation4 + $0x21] sm:$0xff]
      %v4646 = vld [vmem:[#allocation4 + $0x29] sm:$0xff]
      %v4647 = vld [vmem:[#allocation4 + $0x31] sm:$0xff]
      %v4648 = vld [vmem:[#allocation4 + $0x39] sm:$0xff]
      %v4649 = vld [vmem:[#allocation4 + $0x41] sm:$0xff]
      %v4650 = vld [vmem:[#allocation4 + $0x49] sm:$0xff]
      %v4651 = vld [vmem:[#allocation4 + $0x51] sm:$0xff]
      %v4652 = vld [vmem:[#allocation4 + $0x59] sm:$0xff]
      %v4653 = vld [vmem:[#allocation4 + $0x61] sm:$0xff]
      %v4654 = vld [vmem:[#allocation4 + $0x69] sm:$0xff]
      %v4655 = vld [vmem:[#allocation4 + $0x71] sm:$0xff]
      %v4656 = vld [vmem:[#allocation4 + $0x79] sm:$0xff]
      %v4657 = vld [vmem:[#allocation4 + $0x81] sm:$0xff]
      %v4658 = vld [vmem:[#allocation4 + $0x89] sm:$0xff]
      %v4659 = vld [vmem:[#allocation4 + $0x91] sm:$0xff]
      %v4660 = vld [vmem:[#allocation4 + $0x99] sm:$0xff]
      %v4661 = vld [vmem:[#allocation4 + $0xa1] sm:$0xff]
      %v4662 = vld [vmem:[#allocation4 + $0xa9] sm:$0xff]
      %v4663 = vld [vmem:[#allocation4 + $0xb1] sm:$0xff]
      %v4664 = vld [vmem:[#allocation4 + $0xb9] sm:$0xff]
      %v4665 = vld [vmem:[#allocation4 + $0xc1] sm:$0xff]
      %v4666 = vld [vmem:[#allocation4 + $0xc9] sm:$0xff]
      %v4667 = vld [vmem:[#allocation4 + $0xd1] sm:$0xff]
      %v4668 = vld [vmem:[#allocation4 + $0xd9] sm:$0xff]
      %v4669 = vld [vmem:[#allocation4 + $0xe1] sm:$0xff]
      %v4670 = vld [vmem:[#allocation4 + $0xe9] sm:$0xff]
      %v4671 = vld [vmem:[#allocation4 + $0xf1] sm:$0xff]
      %v4672 = vld [vmem:[#allocation4 + $0xf9] sm:$0xff]
      %v4673 = vld [vmem:[#allocation4 + $0x101] sm:$0xff]
      %v4674 = vld [vmem:[#allocation4 + $0x109] sm:$0xff]
      %v4675 = vld [vmem:[#allocation4 + $0x111] sm:$0xff]
      %v4676 = vsel %vm573, %v4644, 0.0
      %v4677 = vsel %vm574, %v4645, 0.0
      %v4678 = vsel %vm575, %v4646, 0.0
      %v4679 = vsel %vm576, %v4647, 0.0
      %v4680 = vsel %vm577, %v4648, 0.0
      %v4681 = vsel %vm578, %v4649, 0.0
      %v4682 = vsel %vm579, %v4650, 0.0
      %v4683 = vsel %vm580, %v4651, 0.0
      %v4684 = vsel %vm581, %v4652, 0.0
      %v4685 = vsel %vm582, %v4653, 0.0
      %v4686 = vsel %vm583, %v4654, 0.0
      %v4687 = vsel %vm584, %v4655, 0.0
      %v4688 = vsel %vm585, %v4656, 0.0
      %v4689 = vsel %vm586, %v4657, 0.0
      %v4690 = vsel %vm587, %v4658, 0.0
      %v4691 = vsel %vm588, %v4659, 0.0
      %v4692 = vsel %vm589, %v4660, 0.0
      %v4693 = vsel %vm590, %v4661, 0.0
      %v4694 = vsel %vm591, %v4662, 0.0
      %v4695 = vsel %vm592, %v4663, 0.0
      %v4696 = vsel %vm593, %v4664, 0.0
      %v4697 = vsel %vm594, %v4665, 0.0
      %v4698 = vsel %vm595, %v4666, 0.0
      %v4699 = vsel %vm596, %v4667, 0.0
      %v4700 = vsel %vm597, %v4668, 0.0
      %v4701 = vsel %vm598, %v4669, 0.0
      %v4702 = vsel %vm599, %v4670, 0.0
      %v4703 = vsel %vm600, %v4671, 0.0
      %v4704 = vsel %vm601, %v4672, 0.0
      %v4705 = vsel %vm602, %v4673, 0.0
      %v4706 = vsel %vm603, %v4674, 0.0
      %v4707 = vsel %vm604, %v4675, 0.0
      %v4708 = vpack.c.bf16 %v4676, %v4676
      %v4709 = vpack.c.bf16 %v4677, %v4677
      %v4710 = vpack.c.bf16 %v4678, %v4678
      %v4711 = vpack.c.bf16 %v4679, %v4679
      %v4712 = vpack.c.bf16 %v4680, %v4680
      %v4713 = vpack.c.bf16 %v4681, %v4681
      %v4714 = vpack.c.bf16 %v4682, %v4682
      %v4715 = vpack.c.bf16 %v4683, %v4683
      %v4716 = vpack.c.bf16 %v4684, %v4684
      %v4717 = vpack.c.bf16 %v4685, %v4685
      %v4718 = vpack.c.bf16 %v4686, %v4686
      %v4719 = vpack.c.bf16 %v4687, %v4687
      %v4720 = vpack.c.bf16 %v4688, %v4688
      %v4721 = vpack.c.bf16 %v4689, %v4689
      %v4722 = vpack.c.bf16 %v4690, %v4690
      %v4723 = vpack.c.bf16 %v4691, %v4691
      %v4724 = vpack.c.bf16 %v4692, %v4692
      %v4725 = vpack.c.bf16 %v4693, %v4693
      %v4726 = vpack.c.bf16 %v4694, %v4694
      %v4727 = vpack.c.bf16 %v4695, %v4695
      %v4728 = vpack.c.bf16 %v4696, %v4696
      %v4729 = vpack.c.bf16 %v4697, %v4697
      %v4730 = vpack.c.bf16 %v4698, %v4698
      %v4731 = vpack.c.bf16 %v4699, %v4699
      %v4732 = vpack.c.bf16 %v4700, %v4700
      %v4733 = vpack.c.bf16 %v4701, %v4701
      %v4734 = vpack.c.bf16 %v4702, %v4702
      %v4735 = vpack.c.bf16 %v4703, %v4703
      %v4736 = vpack.c.bf16 %v4704, %v4704
      %v4737 = vpack.c.bf16 %v4705, %v4705
      %v4738 = vpack.c.bf16 %v4706, %v4706
      %v4739 = vpack.c.bf16 %v4707, %v4707
      %4772 = vrot.lane.b32.xlu0 %v4708, 64
      %v4773 = vpop.permute.xlu0 %4772
      %4774 = vrot.lane.b32.xlu0 %v4709, 64
      %v4775 = vpop.permute.xlu0 %4774
      %4776 = vrot.lane.b32.xlu0 %v4710, 64
      %v4777 = vpop.permute.xlu0 %4776
      %4778 = vrot.lane.b32.xlu0 %v4711, 64
      %v4779 = vpop.permute.xlu0 %4778
      %4780 = vrot.lane.b32.xlu0 %v4712, 64
      %v4781 = vpop.permute.xlu0 %4780
      %4782 = vrot.lane.b32.xlu0 %v4713, 64
      %v4783 = vpop.permute.xlu0 %4782
      %4784 = vrot.lane.b32.xlu0 %v4714, 64
      %v4785 = vpop.permute.xlu0 %4784
      %4786 = vrot.lane.b32.xlu0 %v4715, 64
      %v4787 = vpop.permute.xlu0 %4786
      %4788 = vrot.lane.b32.xlu0 %v4716, 64
      %v4789 = vpop.permute.xlu0 %4788
      %4790 = vrot.lane.b32.xlu0 %v4717, 64
      %v4791 = vpop.permute.xlu0 %4790
      %4792 = vrot.lane.b32.xlu0 %v4718, 64
      %v4793 = vpop.permute.xlu0 %4792
      %4794 = vrot.lane.b32.xlu0 %v4719, 64
      %v4795 = vpop.permute.xlu0 %4794
      %4796 = vrot.lane.b32.xlu0 %v4720, 64
      %v4797 = vpop.permute.xlu0 %4796
      %4798 = vrot.lane.b32.xlu0 %v4721, 64
      %v4799 = vpop.permute.xlu0 %4798
      %4800 = vrot.lane.b32.xlu0 %v4722, 64
      %v4801 = vpop.permute.xlu0 %4800
      %4802 = vrot.lane.b32.xlu0 %v4723, 64
      %v4803 = vpop.permute.xlu0 %4802
      %4804 = vrot.lane.b32.xlu0 %v4724, 64
      %v4805 = vpop.permute.xlu0 %4804
      %4806 = vrot.lane.b32.xlu0 %v4725, 64
      %v4807 = vpop.permute.xlu0 %4806
      %4808 = vrot.lane.b32.xlu0 %v4726, 64
      %v4809 = vpop.permute.xlu0 %4808
      %4810 = vrot.lane.b32.xlu0 %v4727, 64
      %v4811 = vpop.permute.xlu0 %4810
      %4812 = vrot.lane.b32.xlu0 %v4728, 64
      %v4813 = vpop.permute.xlu0 %4812
      %4814 = vrot.lane.b32.xlu0 %v4729, 64
      %v4815 = vpop.permute.xlu0 %4814
      %4816 = vrot.lane.b32.xlu0 %v4730, 64
      %v4817 = vpop.permute.xlu0 %4816
      %4818 = vrot.lane.b32.xlu0 %v4731, 64
      %v4819 = vpop.permute.xlu0 %4818
      %4820 = vrot.lane.b32.xlu0 %v4732, 64
      %v4821 = vpop.permute.xlu0 %4820
      %4822 = vrot.lane.b32.xlu0 %v4733, 64
      %v4823 = vpop.permute.xlu0 %4822
      %4824 = vrot.lane.b32.xlu0 %v4734, 64
      %v4825 = vpop.permute.xlu0 %4824
      %4826 = vrot.lane.b32.xlu0 %v4735, 64
      %v4827 = vpop.permute.xlu0 %4826
      %4828 = vrot.lane.b32.xlu0 %v4736, 64
      %v4829 = vpop.permute.xlu0 %4828
      %4830 = vrot.lane.b32.xlu0 %v4737, 64
      %v4831 = vpop.permute.xlu0 %4830
      %4832 = vrot.lane.b32.xlu0 %v4738, 64
      %v4833 = vpop.permute.xlu0 %4832
      %4834 = vrot.lane.b32.xlu0 %v4739, 64
      %v4835 = vpop.permute.xlu0 %4834
      %4868 = vst.msk [vmem:[#allocation5 + $0x8] sm:$0xf] %vm990, %v4773
      %4869 = vst.msk [vmem:[#allocation5 + $0x1c] sm:$0xf] %vm990, %v4775
      %4870 = vst.msk [vmem:[#allocation5 + $0x30] sm:$0xf] %vm990, %v4777
      %4871 = vst.msk [vmem:[#allocation5 + $0x44] sm:$0xf] %vm990, %v4779
      %4872 = vst.msk [vmem:[#allocation5 + $0x58] sm:$0xf] %vm990, %v4781
      %4873 = vst.msk [vmem:[#allocation5 + $0x6c] sm:$0xf] %vm990, %v4783
      %4874 = vst.msk [vmem:[#allocation5 + $0x80] sm:$0xf] %vm990, %v4785
      %4875 = vst.msk [vmem:[#allocation5 + $0x94] sm:$0xf] %vm990, %v4787
      %4876 = vst.msk [vmem:[#allocation5 + $0xa8] sm:$0xf] %vm990, %v4789
      %4877 = vst.msk [vmem:[#allocation5 + $0xbc] sm:$0xf] %vm990, %v4791
      %4878 = vst.msk [vmem:[#allocation5 + $0xd0] sm:$0xf] %vm990, %v4793
      %4879 = vst.msk [vmem:[#allocation5 + $0xe4] sm:$0xf] %vm990, %v4795
      %4880 = vst.msk [vmem:[#allocation5 + $0xf8] sm:$0xf] %vm990, %v4797
      %4881 = vst.msk [vmem:[#allocation5 + $0x10c] sm:$0xf] %vm990, %v4799
      %4882 = vst.msk [vmem:[#allocation5 + $0x120] sm:$0xf] %vm990, %v4801
      %4883 = vst.msk [vmem:[#allocation5 + $0x134] sm:$0xf] %vm990, %v4803
      %4884 = vst.msk [vmem:[#allocation5 + $0x148] sm:$0xf] %vm990, %v4805
      %4885 = vst.msk [vmem:[#allocation5 + $0x15c] sm:$0xf] %vm990, %v4807
      %4886 = vst.msk [vmem:[#allocation5 + $0x170] sm:$0xf] %vm990, %v4809
      %4887 = vst.msk [vmem:[#allocation5 + $0x184] sm:$0xf] %vm990, %v4811
      %4888 = vst.msk [vmem:[#allocation5 + $0x198] sm:$0xf] %vm990, %v4813
      %4889 = vst.msk [vmem:[#allocation5 + $0x1ac] sm:$0xf] %vm990, %v4815
      %4890 = vst.msk [vmem:[#allocation5 + $0x1c0] sm:$0xf] %vm990, %v4817
      %4891 = vst.msk [vmem:[#allocation5 + $0x1d4] sm:$0xf] %vm990, %v4819
      %4892 = vst.msk [vmem:[#allocation5 + $0x1e8] sm:$0xf] %vm990, %v4821
      %4893 = vst.msk [vmem:[#allocation5 + $0x1fc] sm:$0xf] %vm990, %v4823
      %4894 = vst.msk [vmem:[#allocation5 + $0x210] sm:$0xf] %vm990, %v4825
      %4895 = vst.msk [vmem:[#allocation5 + $0x224] sm:$0xf] %vm990, %v4827
      %4896 = vst.msk [vmem:[#allocation5 + $0x238] sm:$0xf] %vm990, %v4829
      %4897 = vst.msk [vmem:[#allocation5 + $0x24c] sm:$0xf] %vm990, %v4831
      %4898 = vst.msk [vmem:[#allocation5 + $0x260] sm:$0xf] %vm990, %v4833
      %4899 = vst.msk [vmem:[#allocation5 + $0x274] sm:$0xf] %vm990, %v4835
      %v4900 = vld [vmem:[#allocation4 + $0x27] sm:$0xff]
      %v4901 = vld [vmem:[#allocation4 + $0x2f] sm:$0xff]
      %v4902 = vld [vmem:[#allocation4 + $0x37] sm:$0xff]
      %v4903 = vld [vmem:[#allocation4 + $0x3f] sm:$0xff]
      %v4904 = vld [vmem:[#allocation4 + $0x47] sm:$0xff]
      %v4905 = vld [vmem:[#allocation4 + $0x4f] sm:$0xff]
      %v4906 = vld [vmem:[#allocation4 + $0x57] sm:$0xff]
      %v4907 = vld [vmem:[#allocation4 + $0x5f] sm:$0xff]
      %v4908 = vld [vmem:[#allocation4 + $0x67] sm:$0xff]
      %v4909 = vld [vmem:[#allocation4 + $0x6f] sm:$0xff]
      %v4910 = vld [vmem:[#allocation4 + $0x77] sm:$0xff]
      %v4911 = vld [vmem:[#allocation4 + $0x7f] sm:$0xff]
      %v4912 = vld [vmem:[#allocation4 + $0x87] sm:$0xff]
      %v4913 = vld [vmem:[#allocation4 + $0x8f] sm:$0xff]
      %v4914 = vld [vmem:[#allocation4 + $0x97] sm:$0xff]
      %v4915 = vld [vmem:[#allocation4 + $0x9f] sm:$0xff]
      %v4916 = vld [vmem:[#allocation4 + $0xa7] sm:$0xff]
      %v4917 = vld [vmem:[#allocation4 + $0xaf] sm:$0xff]
      %v4918 = vld [vmem:[#allocation4 + $0xb7] sm:$0xff]
      %v4919 = vld [vmem:[#allocation4 + $0xbf] sm:$0xff]
      %v4920 = vld [vmem:[#allocation4 + $0xc7] sm:$0xff]
      %v4921 = vld [vmem:[#allocation4 + $0xcf] sm:$0xff]
      %v4922 = vld [vmem:[#allocation4 + $0xd7] sm:$0xff]
      %v4923 = vld [vmem:[#allocation4 + $0xdf] sm:$0xff]
      %v4924 = vld [vmem:[#allocation4 + $0xe7] sm:$0xff]
      %v4925 = vld [vmem:[#allocation4 + $0xef] sm:$0xff]
      %v4926 = vld [vmem:[#allocation4 + $0xf7] sm:$0xff]
      %v4927 = vld [vmem:[#allocation4 + $0xff] sm:$0xff]
      %v4928 = vld [vmem:[#allocation4 + $0x107] sm:$0xff]
      %v4929 = vld [vmem:[#allocation4 + $0x10f] sm:$0xff]
      %v4930 = vld [vmem:[#allocation4 + $0x117] sm:$0xff]
      %v4931 = vld [vmem:[#allocation4 + $0x11f] sm:$0xff]
      %v4932 = vsel %vm1823, %v4900, 0.0
      %v4933 = vsel %vm1824, %v4901, 0.0
      %v4934 = vsel %vm1825, %v4902, 0.0
      %v4935 = vsel %vm1826, %v4903, 0.0
      %v4936 = vsel %vm1827, %v4904, 0.0
      %v4937 = vsel %vm1828, %v4905, 0.0
      %v4938 = vsel %vm1829, %v4906, 0.0
      %v4939 = vsel %vm1830, %v4907, 0.0
      %v4940 = vsel %vm1831, %v4908, 0.0
      %v4941 = vsel %vm1832, %v4909, 0.0
      %v4942 = vsel %vm1833, %v4910, 0.0
      %v4943 = vsel %vm1834, %v4911, 0.0
      %v4944 = vsel %vm1835, %v4912, 0.0
      %v4945 = vsel %vm1836, %v4913, 0.0
      %v4946 = vsel %vm1837, %v4914, 0.0
      %v4947 = vsel %vm1838, %v4915, 0.0
      %v4948 = vsel %vm1839, %v4916, 0.0
      %v4949 = vsel %vm1840, %v4917, 0.0
      %v4950 = vsel %vm1841, %v4918, 0.0
      %v4951 = vsel %vm1842, %v4919, 0.0
      %v4952 = vsel %vm1843, %v4920, 0.0
      %v4953 = vsel %vm1844, %v4921, 0.0
      %v4954 = vsel %vm1845, %v4922, 0.0
      %v4955 = vsel %vm1846, %v4923, 0.0
      %v4956 = vsel %vm1847, %v4924, 0.0
      %v4957 = vsel %vm1848, %v4925, 0.0
      %v4958 = vsel %vm1849, %v4926, 0.0
      %v4959 = vsel %vm1850, %v4927, 0.0
      %v4960 = vsel %vm1851, %v4928, 0.0
      %v4961 = vsel %vm1852, %v4929, 0.0
      %v4962 = vsel %vm1853, %v4930, 0.0
      %v4963 = vsel %vm1854, %v4931, 0.0
      %v4964 = vpack.c.bf16 %v4932, %v4932
      %v4965 = vpack.c.bf16 %v4933, %v4933
      %v4966 = vpack.c.bf16 %v4934, %v4934
      %v4967 = vpack.c.bf16 %v4935, %v4935
      %v4968 = vpack.c.bf16 %v4936, %v4936
      %v4969 = vpack.c.bf16 %v4937, %v4937
      %v4970 = vpack.c.bf16 %v4938, %v4938
      %v4971 = vpack.c.bf16 %v4939, %v4939
      %v4972 = vpack.c.bf16 %v4940, %v4940
      %v4973 = vpack.c.bf16 %v4941, %v4941
      %v4974 = vpack.c.bf16 %v4942, %v4942
      %v4975 = vpack.c.bf16 %v4943, %v4943
      %v4976 = vpack.c.bf16 %v4944, %v4944
      %v4977 = vpack.c.bf16 %v4945, %v4945
      %v4978 = vpack.c.bf16 %v4946, %v4946
      %v4979 = vpack.c.bf16 %v4947, %v4947
      %v4980 = vpack.c.bf16 %v4948, %v4948
      %v4981 = vpack.c.bf16 %v4949, %v4949
      %v4982 = vpack.c.bf16 %v4950, %v4950
      %v4983 = vpack.c.bf16 %v4951, %v4951
      %v4984 = vpack.c.bf16 %v4952, %v4952
      %v4985 = vpack.c.bf16 %v4953, %v4953
      %v4986 = vpack.c.bf16 %v4954, %v4954
      %v4987 = vpack.c.bf16 %v4955, %v4955
      %v4988 = vpack.c.bf16 %v4956, %v4956
      %v4989 = vpack.c.bf16 %v4957, %v4957
      %v4990 = vpack.c.bf16 %v4958, %v4958
      %v4991 = vpack.c.bf16 %v4959, %v4959
      %v4992 = vpack.c.bf16 %v4960, %v4960
      %v4993 = vpack.c.bf16 %v4961, %v4961
      %v4994 = vpack.c.bf16 %v4962, %v4962
      %v4995 = vpack.c.bf16 %v4963, %v4963
      %4996 = vst.msk [vmem:[#allocation5 + $0xc] sm:$0xf] %vm733, %v4964
      %4997 = vst.msk [vmem:[#allocation5 + $0x20] sm:$0xf] %vm733, %v4965
      %4998 = vst.msk [vmem:[#allocation5 + $0x34] sm:$0xf] %vm733, %v4966
      %4999 = vst.msk [vmem:[#allocation5 + $0x48] sm:$0xf] %vm733, %v4967
      %5000 = vst.msk [vmem:[#allocation5 + $0x5c] sm:$0xf] %vm733, %v4968
      %5001 = vst.msk [vmem:[#allocation5 + $0x70] sm:$0xf] %vm733, %v4969
      %5002 = vst.msk [vmem:[#allocation5 + $0x84] sm:$0xf] %vm733, %v4970
      %5003 = vst.msk [vmem:[#allocation5 + $0x98] sm:$0xf] %vm733, %v4971
      %5004 = vst.msk [vmem:[#allocation5 + $0xac] sm:$0xf] %vm733, %v4972
      %5005 = vst.msk [vmem:[#allocation5 + $0xc0] sm:$0xf] %vm733, %v4973
      %5006 = vst.msk [vmem:[#allocation5 + $0xd4] sm:$0xf] %vm733, %v4974
      %5007 = vst.msk [vmem:[#allocation5 + $0xe8] sm:$0xf] %vm733, %v4975
      %5008 = vst.msk [vmem:[#allocation5 + $0xfc] sm:$0xf] %vm733, %v4976
      %5009 = vst.msk [vmem:[#allocation5 + $0x110] sm:$0xf] %vm733, %v4977
      %5010 = vst.msk [vmem:[#allocation5 + $0x124] sm:$0xf] %vm733, %v4978
      %5011 = vst.msk [vmem:[#allocation5 + $0x138] sm:$0xf] %vm733, %v4979
      %5012 = vst.msk [vmem:[#allocation5 + $0x14c] sm:$0xf] %vm733, %v4980
      %5013 = vst.msk [vmem:[#allocation5 + $0x160] sm:$0xf] %vm733, %v4981
      %5014 = vst.msk [vmem:[#allocation5 + $0x174] sm:$0xf] %vm733, %v4982
      %5015 = vst.msk [vmem:[#allocation5 + $0x188] sm:$0xf] %vm733, %v4983
      %5016 = vst.msk [vmem:[#allocation5 + $0x19c] sm:$0xf] %vm733, %v4984
      %5017 = vst.msk [vmem:[#allocation5 + $0x1b0] sm:$0xf] %vm733, %v4985
      %5018 = vst.msk [vmem:[#allocation5 + $0x1c4] sm:$0xf] %vm733, %v4986
      %5019 = vst.msk [vmem:[#allocation5 + $0x1d8] sm:$0xf] %vm733, %v4987
      %5020 = vst.msk [vmem:[#allocation5 + $0x1ec] sm:$0xf] %vm733, %v4988
      %5021 = vst.msk [vmem:[#allocation5 + $0x200] sm:$0xf] %vm733, %v4989
      %5022 = vst.msk [vmem:[#allocation5 + $0x214] sm:$0xf] %vm733, %v4990
      %5023 = vst.msk [vmem:[#allocation5 + $0x228] sm:$0xf] %vm733, %v4991
      %5024 = vst.msk [vmem:[#allocation5 + $0x23c] sm:$0xf] %vm733, %v4992
      %5025 = vst.msk [vmem:[#allocation5 + $0x250] sm:$0xf] %vm733, %v4993
      %5026 = vst.msk [vmem:[#allocation5 + $0x264] sm:$0xf] %vm733, %v4994
      %5027 = vst.msk [vmem:[#allocation5 + $0x278] sm:$0xf] %vm733, %v4995
      %v5028 = vld [vmem:[#allocation4 + $0x28] sm:$0xff]
      %v5029 = vld [vmem:[#allocation4 + $0x30] sm:$0xff]
      %v5030 = vld [vmem:[#allocation4 + $0x38] sm:$0xff]
      %v5031 = vld [vmem:[#allocation4 + $0x40] sm:$0xff]
      %v5032 = vld [vmem:[#allocation4 + $0x48] sm:$0xff]
      %v5033 = vld [vmem:[#allocation4 + $0x50] sm:$0xff]
      %v5034 = vld [vmem:[#allocation4 + $0x58] sm:$0xff]
      %v5035 = vld [vmem:[#allocation4 + $0x60] sm:$0xff]
      %v5036 = vld [vmem:[#allocation4 + $0x68] sm:$0xff]
      %v5037 = vld [vmem:[#allocation4 + $0x70] sm:$0xff]
      %v5038 = vld [vmem:[#allocation4 + $0x78] sm:$0xff]
      %v5039 = vld [vmem:[#allocation4 + $0x80] sm:$0xff]
      %v5040 = vld [vmem:[#allocation4 + $0x88] sm:$0xff]
      %v5041 = vld [vmem:[#allocation4 + $0x90] sm:$0xff]
      %v5042 = vld [vmem:[#allocation4 + $0x98] sm:$0xff]
      %v5043 = vld [vmem:[#allocation4 + $0xa0] sm:$0xff]
      %v5044 = vld [vmem:[#allocation4 + $0xa8] sm:$0xff]
      %v5045 = vld [vmem:[#allocation4 + $0xb0] sm:$0xff]
      %v5046 = vld [vmem:[#allocation4 + $0xb8] sm:$0xff]
      %v5047 = vld [vmem:[#allocation4 + $0xc0] sm:$0xff]
      %v5048 = vld [vmem:[#allocation4 + $0xc8] sm:$0xff]
      %v5049 = vld [vmem:[#allocation4 + $0xd0] sm:$0xff]
      %v5050 = vld [vmem:[#allocation4 + $0xd8] sm:$0xff]
      %v5051 = vld [vmem:[#allocation4 + $0xe0] sm:$0xff]
      %v5052 = vld [vmem:[#allocation4 + $0xe8] sm:$0xff]
      %v5053 = vld [vmem:[#allocation4 + $0xf0] sm:$0xff]
      %v5054 = vld [vmem:[#allocation4 + $0xf8] sm:$0xff]
      %v5055 = vld [vmem:[#allocation4 + $0x100] sm:$0xff]
      %v5056 = vld [vmem:[#allocation4 + $0x108] sm:$0xff]
      %v5057 = vld [vmem:[#allocation4 + $0x110] sm:$0xff]
      %v5058 = vld [vmem:[#allocation4 + $0x118] sm:$0xff]
      %v5059 = vld [vmem:[#allocation4 + $0x120] sm:$0xff]
      %v5060 = vsel %vm509, %v5028, 0.0
      %v5061 = vsel %vm510, %v5029, 0.0
      %v5062 = vsel %vm511, %v5030, 0.0
      %v5063 = vsel %vm512, %v5031, 0.0
      %v5064 = vsel %vm513, %v5032, 0.0
      %v5065 = vsel %vm514, %v5033, 0.0
      %v5066 = vsel %vm515, %v5034, 0.0
      %v5067 = vsel %vm516, %v5035, 0.0
      %v5068 = vsel %vm517, %v5036, 0.0
      %v5069 = vsel %vm518, %v5037, 0.0
      %v5070 = vsel %vm519, %v5038, 0.0
      %v5071 = vsel %vm520, %v5039, 0.0
      %v5072 = vsel %vm521, %v5040, 0.0
      %v5073 = vsel %vm522, %v5041, 0.0
      %v5074 = vsel %vm523, %v5042, 0.0
      %v5075 = vsel %vm524, %v5043, 0.0
      %v5076 = vsel %vm525, %v5044, 0.0
      %v5077 = vsel %vm526, %v5045, 0.0
      %v5078 = vsel %vm527, %v5046, 0.0
      %v5079 = vsel %vm528, %v5047, 0.0
      %v5080 = vsel %vm529, %v5048, 0.0
      %v5081 = vsel %vm530, %v5049, 0.0
      %v5082 = vsel %vm531, %v5050, 0.0
      %v5083 = vsel %vm532, %v5051, 0.0
      %v5084 = vsel %vm533, %v5052, 0.0
      %v5085 = vsel %vm534, %v5053, 0.0
      %v5086 = vsel %vm535, %v5054, 0.0
      %v5087 = vsel %vm536, %v5055, 0.0
      %v5088 = vsel %vm537, %v5056, 0.0
      %v5089 = vsel %vm538, %v5057, 0.0
      %v5090 = vsel %vm539, %v5058, 0.0
      %v5091 = vsel %vm540, %v5059, 0.0
      %v5092 = vpack.c.bf16 %v5060, %v5060
      %v5093 = vpack.c.bf16 %v5061, %v5061
      %v5094 = vpack.c.bf16 %v5062, %v5062
      %v5095 = vpack.c.bf16 %v5063, %v5063
      %v5096 = vpack.c.bf16 %v5064, %v5064
      %v5097 = vpack.c.bf16 %v5065, %v5065
      %v5098 = vpack.c.bf16 %v5066, %v5066
      %v5099 = vpack.c.bf16 %v5067, %v5067
      %v5100 = vpack.c.bf16 %v5068, %v5068
      %v5101 = vpack.c.bf16 %v5069, %v5069
      %v5102 = vpack.c.bf16 %v5070, %v5070
      %v5103 = vpack.c.bf16 %v5071, %v5071
      %v5104 = vpack.c.bf16 %v5072, %v5072
      %v5105 = vpack.c.bf16 %v5073, %v5073
      %v5106 = vpack.c.bf16 %v5074, %v5074
      %v5107 = vpack.c.bf16 %v5075, %v5075
      %v5108 = vpack.c.bf16 %v5076, %v5076
      %v5109 = vpack.c.bf16 %v5077, %v5077
      %v5110 = vpack.c.bf16 %v5078, %v5078
      %v5111 = vpack.c.bf16 %v5079, %v5079
      %v5112 = vpack.c.bf16 %v5080, %v5080
      %v5113 = vpack.c.bf16 %v5081, %v5081
      %v5114 = vpack.c.bf16 %v5082, %v5082
      %v5115 = vpack.c.bf16 %v5083, %v5083
      %v5116 = vpack.c.bf16 %v5084, %v5084
      %v5117 = vpack.c.bf16 %v5085, %v5085
      %v5118 = vpack.c.bf16 %v5086, %v5086
      %v5119 = vpack.c.bf16 %v5087, %v5087
      %v5120 = vpack.c.bf16 %v5088, %v5088
      %v5121 = vpack.c.bf16 %v5089, %v5089
      %v5122 = vpack.c.bf16 %v5090, %v5090
      %v5123 = vpack.c.bf16 %v5091, %v5091
      %5156 = vrot.lane.b32.xlu0 %v5092, 64
      %v5157 = vpop.permute.xlu0 %5156
      %5158 = vrot.lane.b32.xlu0 %v5093, 64
      %v5159 = vpop.permute.xlu0 %5158
      %5160 = vrot.lane.b32.xlu0 %v5094, 64
      %v5161 = vpop.permute.xlu0 %5160
      %5162 = vrot.lane.b32.xlu0 %v5095, 64
      %v5163 = vpop.permute.xlu0 %5162
      %5164 = vrot.lane.b32.xlu0 %v5096, 64
      %v5165 = vpop.permute.xlu0 %5164
      %5166 = vrot.lane.b32.xlu0 %v5097, 64
      %v5167 = vpop.permute.xlu0 %5166
      %5168 = vrot.lane.b32.xlu0 %v5098, 64
      %v5169 = vpop.permute.xlu0 %5168
      %5170 = vrot.lane.b32.xlu0 %v5099, 64
      %v5171 = vpop.permute.xlu0 %5170
      %5172 = vrot.lane.b32.xlu0 %v5100, 64
      %v5173 = vpop.permute.xlu0 %5172
      %5174 = vrot.lane.b32.xlu0 %v5101, 64
      %v5175 = vpop.permute.xlu0 %5174
      %5176 = vrot.lane.b32.xlu0 %v5102, 64
      %v5177 = vpop.permute.xlu0 %5176
      %5178 = vrot.lane.b32.xlu0 %v5103, 64
      %v5179 = vpop.permute.xlu0 %5178
      %5180 = vrot.lane.b32.xlu0 %v5104, 64
      %v5181 = vpop.permute.xlu0 %5180
      %5182 = vrot.lane.b32.xlu0 %v5105, 64
      %v5183 = vpop.permute.xlu0 %5182
      %5184 = vrot.lane.b32.xlu0 %v5106, 64
      %v5185 = vpop.permute.xlu0 %5184
      %5186 = vrot.lane.b32.xlu0 %v5107, 64
      %v5187 = vpop.permute.xlu0 %5186
      %5188 = vrot.lane.b32.xlu0 %v5108, 64
      %v5189 = vpop.permute.xlu0 %5188
      %5190 = vrot.lane.b32.xlu0 %v5109, 64
      %v5191 = vpop.permute.xlu0 %5190
      %5192 = vrot.lane.b32.xlu0 %v5110, 64
      %v5193 = vpop.permute.xlu0 %5192
      %5194 = vrot.lane.b32.xlu0 %v5111, 64
      %v5195 = vpop.permute.xlu0 %5194
      %5196 = vrot.lane.b32.xlu0 %v5112, 64
      %v5197 = vpop.permute.xlu0 %5196
      %5198 = vrot.lane.b32.xlu0 %v5113, 64
      %v5199 = vpop.permute.xlu0 %5198
      %5200 = vrot.lane.b32.xlu0 %v5114, 64
      %v5201 = vpop.permute.xlu0 %5200
      %5202 = vrot.lane.b32.xlu0 %v5115, 64
      %v5203 = vpop.permute.xlu0 %5202
      %5204 = vrot.lane.b32.xlu0 %v5116, 64
      %v5205 = vpop.permute.xlu0 %5204
      %5206 = vrot.lane.b32.xlu0 %v5117, 64
      %v5207 = vpop.permute.xlu0 %5206
      %5208 = vrot.lane.b32.xlu0 %v5118, 64
      %v5209 = vpop.permute.xlu0 %5208
      %5210 = vrot.lane.b32.xlu0 %v5119, 64
      %v5211 = vpop.permute.xlu0 %5210
      %5212 = vrot.lane.b32.xlu0 %v5120, 64
      %v5213 = vpop.permute.xlu0 %5212
      %5214 = vrot.lane.b32.xlu0 %v5121, 64
      %v5215 = vpop.permute.xlu0 %5214
      %5216 = vrot.lane.b32.xlu0 %v5122, 64
      %v5217 = vpop.permute.xlu0 %5216
      %5218 = vrot.lane.b32.xlu0 %v5123, 64
      %v5219 = vpop.permute.xlu0 %5218
      %5252 = vst.msk [vmem:[#allocation5 + $0xc] sm:$0xf] %vm990, %v5157
      %5253 = vst.msk [vmem:[#allocation5 + $0x20] sm:$0xf] %vm990, %v5159
      %5254 = vst.msk [vmem:[#allocation5 + $0x34] sm:$0xf] %vm990, %v5161
      %5255 = vst.msk [vmem:[#allocation5 + $0x48] sm:$0xf] %vm990, %v5163
      %5256 = vst.msk [vmem:[#allocation5 + $0x5c] sm:$0xf] %vm990, %v5165
      %5257 = vst.msk [vmem:[#allocation5 + $0x70] sm:$0xf] %vm990, %v5167
      %5258 = vst.msk [vmem:[#allocation5 + $0x84] sm:$0xf] %vm990, %v5169
      %5259 = vst.msk [vmem:[#allocation5 + $0x98] sm:$0xf] %vm990, %v5171
      %5260 = vst.msk [vmem:[#allocation5 + $0xac] sm:$0xf] %vm990, %v5173
      %5261 = vst.msk [vmem:[#allocation5 + $0xc0] sm:$0xf] %vm990, %v5175
      %5262 = vst.msk [vmem:[#allocation5 + $0xd4] sm:$0xf] %vm990, %v5177
      %5263 = vst.msk [vmem:[#allocation5 + $0xe8] sm:$0xf] %vm990, %v5179
      %5264 = vst.msk [vmem:[#allocation5 + $0xfc] sm:$0xf] %vm990, %v5181
      %5265 = vst.msk [vmem:[#allocation5 + $0x110] sm:$0xf] %vm990, %v5183
      %5266 = vst.msk [vmem:[#allocation5 + $0x124] sm:$0xf] %vm990, %v5185
      %5267 = vst.msk [vmem:[#allocation5 + $0x138] sm:$0xf] %vm990, %v5187
      %5268 = vst.msk [vmem:[#allocation5 + $0x14c] sm:$0xf] %vm990, %v5189
      %5269 = vst.msk [vmem:[#allocation5 + $0x160] sm:$0xf] %vm990, %v5191
      %5270 = vst.msk [vmem:[#allocation5 + $0x174] sm:$0xf] %vm990, %v5193
      %5271 = vst.msk [vmem:[#allocation5 + $0x188] sm:$0xf] %vm990, %v5195
      %5272 = vst.msk [vmem:[#allocation5 + $0x19c] sm:$0xf] %vm990, %v5197
      %5273 = vst.msk [vmem:[#allocation5 + $0x1b0] sm:$0xf] %vm990, %v5199
      %5274 = vst.msk [vmem:[#allocation5 + $0x1c4] sm:$0xf] %vm990, %v5201
      %5275 = vst.msk [vmem:[#allocation5 + $0x1d8] sm:$0xf] %vm990, %v5203
      %5276 = vst.msk [vmem:[#allocation5 + $0x1ec] sm:$0xf] %vm990, %v5205
      %5277 = vst.msk [vmem:[#allocation5 + $0x200] sm:$0xf] %vm990, %v5207
      %5278 = vst.msk [vmem:[#allocation5 + $0x214] sm:$0xf] %vm990, %v5209
      %5279 = vst.msk [vmem:[#allocation5 + $0x228] sm:$0xf] %vm990, %v5211
      %5280 = vst.msk [vmem:[#allocation5 + $0x23c] sm:$0xf] %vm990, %v5213
      %5281 = vst.msk [vmem:[#allocation5 + $0x250] sm:$0xf] %vm990, %v5215
      %5282 = vst.msk [vmem:[#allocation5 + $0x264] sm:$0xf] %vm990, %v5217
      %5283 = vst.msk [vmem:[#allocation5 + $0x278] sm:$0xf] %vm990, %v5219
      %v5284 = vld [vmem:[#allocation4 + $0x29] sm:$0xff]
      %v5285 = vld [vmem:[#allocation4 + $0x31] sm:$0xff]
      %v5286 = vld [vmem:[#allocation4 + $0x39] sm:$0xff]
      %v5287 = vld [vmem:[#allocation4 + $0x41] sm:$0xff]
      %v5288 = vld [vmem:[#allocation4 + $0x49] sm:$0xff]
      %v5289 = vld [vmem:[#allocation4 + $0x51] sm:$0xff]
      %v5290 = vld [vmem:[#allocation4 + $0x59] sm:$0xff]
      %v5291 = vld [vmem:[#allocation4 + $0x61] sm:$0xff]
      %v5292 = vld [vmem:[#allocation4 + $0x69] sm:$0xff]
      %v5293 = vld [vmem:[#allocation4 + $0x71] sm:$0xff]
      %v5294 = vld [vmem:[#allocation4 + $0x79] sm:$0xff]
      %v5295 = vld [vmem:[#allocation4 + $0x81] sm:$0xff]
      %v5296 = vld [vmem:[#allocation4 + $0x89] sm:$0xff]
      %v5297 = vld [vmem:[#allocation4 + $0x91] sm:$0xff]
      %v5298 = vld [vmem:[#allocation4 + $0x99] sm:$0xff]
      %v5299 = vld [vmem:[#allocation4 + $0xa1] sm:$0xff]
      %v5300 = vld [vmem:[#allocation4 + $0xa9] sm:$0xff]
      %v5301 = vld [vmem:[#allocation4 + $0xb1] sm:$0xff]
      %v5302 = vld [vmem:[#allocation4 + $0xb9] sm:$0xff]
      %v5303 = vld [vmem:[#allocation4 + $0xc1] sm:$0xff]
      %v5304 = vld [vmem:[#allocation4 + $0xc9] sm:$0xff]
      %v5305 = vld [vmem:[#allocation4 + $0xd1] sm:$0xff]
      %v5306 = vld [vmem:[#allocation4 + $0xd9] sm:$0xff]
      %v5307 = vld [vmem:[#allocation4 + $0xe1] sm:$0xff]
      %v5308 = vld [vmem:[#allocation4 + $0xe9] sm:$0xff]
      %v5309 = vld [vmem:[#allocation4 + $0xf1] sm:$0xff]
      %v5310 = vld [vmem:[#allocation4 + $0xf9] sm:$0xff]
      %v5311 = vld [vmem:[#allocation4 + $0x101] sm:$0xff]
      %v5312 = vld [vmem:[#allocation4 + $0x109] sm:$0xff]
      %v5313 = vld [vmem:[#allocation4 + $0x111] sm:$0xff]
      %v5314 = vld [vmem:[#allocation4 + $0x119] sm:$0xff]
      %v5315 = vld [vmem:[#allocation4 + $0x121] sm:$0xff]
      %v5316 = vsel %vm2239, %v5284, 0.0
      %v5317 = vsel %vm2240, %v5285, 0.0
      %v5318 = vsel %vm2241, %v5286, 0.0
      %v5319 = vsel %vm2242, %v5287, 0.0
      %v5320 = vsel %vm2243, %v5288, 0.0
      %v5321 = vsel %vm2244, %v5289, 0.0
      %v5322 = vsel %vm2245, %v5290, 0.0
      %v5323 = vsel %vm2246, %v5291, 0.0
      %v5324 = vsel %vm2247, %v5292, 0.0
      %v5325 = vsel %vm2248, %v5293, 0.0
      %v5326 = vsel %vm2249, %v5294, 0.0
      %v5327 = vsel %vm2250, %v5295, 0.0
      %v5328 = vsel %vm2251, %v5296, 0.0
      %v5329 = vsel %vm2252, %v5297, 0.0
      %v5330 = vsel %vm2253, %v5298, 0.0
      %v5331 = vsel %vm2254, %v5299, 0.0
      %v5332 = vsel %vm2255, %v5300, 0.0
      %v5333 = vsel %vm2256, %v5301, 0.0
      %v5334 = vsel %vm2257, %v5302, 0.0
      %v5335 = vsel %vm2258, %v5303, 0.0
      %v5336 = vsel %vm2259, %v5304, 0.0
      %v5337 = vsel %vm2260, %v5305, 0.0
      %v5338 = vsel %vm2261, %v5306, 0.0
      %v5339 = vsel %vm2262, %v5307, 0.0
      %v5340 = vsel %vm2263, %v5308, 0.0
      %v5341 = vsel %vm2264, %v5309, 0.0
      %v5342 = vsel %vm2265, %v5310, 0.0
      %v5343 = vsel %vm2266, %v5311, 0.0
      %v5344 = vsel %vm2267, %v5312, 0.0
      %v5345 = vsel %vm2268, %v5313, 0.0
      %v5346 = vsel %vm2269, %v5314, 0.0
      %v5347 = vsel %vm2270, %v5315, 0.0
      %v5348 = vpack.c.bf16 %v5316, %v5316
      %v5349 = vpack.c.bf16 %v5317, %v5317
      %v5350 = vpack.c.bf16 %v5318, %v5318
      %v5351 = vpack.c.bf16 %v5319, %v5319
      %v5352 = vpack.c.bf16 %v5320, %v5320
      %v5353 = vpack.c.bf16 %v5321, %v5321
      %v5354 = vpack.c.bf16 %v5322, %v5322
      %v5355 = vpack.c.bf16 %v5323, %v5323
      %v5356 = vpack.c.bf16 %v5324, %v5324
      %v5357 = vpack.c.bf16 %v5325, %v5325
      %v5358 = vpack.c.bf16 %v5326, %v5326
      %v5359 = vpack.c.bf16 %v5327, %v5327
      %v5360 = vpack.c.bf16 %v5328, %v5328
      %v5361 = vpack.c.bf16 %v5329, %v5329
      %v5362 = vpack.c.bf16 %v5330, %v5330
      %v5363 = vpack.c.bf16 %v5331, %v5331
      %v5364 = vpack.c.bf16 %v5332, %v5332
      %v5365 = vpack.c.bf16 %v5333, %v5333
      %v5366 = vpack.c.bf16 %v5334, %v5334
      %v5367 = vpack.c.bf16 %v5335, %v5335
      %v5368 = vpack.c.bf16 %v5336, %v5336
      %v5369 = vpack.c.bf16 %v5337, %v5337
      %v5370 = vpack.c.bf16 %v5338, %v5338
      %v5371 = vpack.c.bf16 %v5339, %v5339
      %v5372 = vpack.c.bf16 %v5340, %v5340
      %v5373 = vpack.c.bf16 %v5341, %v5341
      %v5374 = vpack.c.bf16 %v5342, %v5342
      %v5375 = vpack.c.bf16 %v5343, %v5343
      %v5376 = vpack.c.bf16 %v5344, %v5344
      %v5377 = vpack.c.bf16 %v5345, %v5345
      %v5378 = vpack.c.bf16 %v5346, %v5346
      %v5379 = vpack.c.bf16 %v5347, %v5347
      %5380 = vst.msk [vmem:[#allocation5 + $0x10] sm:$0xf] %vm733, %v5348
      %5381 = vst.msk [vmem:[#allocation5 + $0x24] sm:$0xf] %vm733, %v5349
      %5382 = vst.msk [vmem:[#allocation5 + $0x38] sm:$0xf] %vm733, %v5350
      %5383 = vst.msk [vmem:[#allocation5 + $0x4c] sm:$0xf] %vm733, %v5351
      %5384 = vst.msk [vmem:[#allocation5 + $0x60] sm:$0xf] %vm733, %v5352
      %5385 = vst.msk [vmem:[#allocation5 + $0x74] sm:$0xf] %vm733, %v5353
      %5386 = vst.msk [vmem:[#allocation5 + $0x88] sm:$0xf] %vm733, %v5354
      %5387 = vst.msk [vmem:[#allocation5 + $0x9c] sm:$0xf] %vm733, %v5355
      %5388 = vst.msk [vmem:[#allocation5 + $0xb0] sm:$0xf] %vm733, %v5356
      %5389 = vst.msk [vmem:[#allocation5 + $0xc4] sm:$0xf] %vm733, %v5357
      %5390 = vst.msk [vmem:[#allocation5 + $0xd8] sm:$0xf] %vm733, %v5358
      %5391 = vst.msk [vmem:[#allocation5 + $0xec] sm:$0xf] %vm733, %v5359
      %5392 = vst.msk [vmem:[#allocation5 + $0x100] sm:$0xf] %vm733, %v5360
      %5393 = vst.msk [vmem:[#allocation5 + $0x114] sm:$0xf] %vm733, %v5361
      %5394 = vst.msk [vmem:[#allocation5 + $0x128] sm:$0xf] %vm733, %v5362
      %5395 = vst.msk [vmem:[#allocation5 + $0x13c] sm:$0xf] %vm733, %v5363
      %5396 = vst.msk [vmem:[#allocation5 + $0x150] sm:$0xf] %vm733, %v5364
      %5397 = vst.msk [vmem:[#allocation5 + $0x164] sm:$0xf] %vm733, %v5365
      %5398 = vst.msk [vmem:[#allocation5 + $0x178] sm:$0xf] %vm733, %v5366
      %5399 = vst.msk [vmem:[#allocation5 + $0x18c] sm:$0xf] %vm733, %v5367
      %5400 = vst.msk [vmem:[#allocation5 + $0x1a0] sm:$0xf] %vm733, %v5368
      %5401 = vst.msk [vmem:[#allocation5 + $0x1b4] sm:$0xf] %vm733, %v5369
      %5402 = vst.msk [vmem:[#allocation5 + $0x1c8] sm:$0xf] %vm733, %v5370
      %5403 = vst.msk [vmem:[#allocation5 + $0x1dc] sm:$0xf] %vm733, %v5371
      %5404 = vst.msk [vmem:[#allocation5 + $0x1f0] sm:$0xf] %vm733, %v5372
      %5405 = vst.msk [vmem:[#allocation5 + $0x204] sm:$0xf] %vm733, %v5373
      %5406 = vst.msk [vmem:[#allocation5 + $0x218] sm:$0xf] %vm733, %v5374
      %5407 = vst.msk [vmem:[#allocation5 + $0x22c] sm:$0xf] %vm733, %v5375
      %5408 = vst.msk [vmem:[#allocation5 + $0x240] sm:$0xf] %vm733, %v5376
      %5409 = vst.msk [vmem:[#allocation5 + $0x254] sm:$0xf] %vm733, %v5377
      %5410 = vst.msk [vmem:[#allocation5 + $0x268] sm:$0xf] %vm733, %v5378
      %5411 = vst.msk [vmem:[#allocation5 + $0x27c] sm:$0xf] %vm733, %v5379
      %v5412 = vld [vmem:[#allocation5] sm:$0xff]
      %v5413 = vld [vmem:[#allocation5 + $0x8] sm:$0xff]
      %v5414 = vld [vmem:[#allocation5 + $0x10] sm:$0xf]
      %v5415 = vld [vmem:[#allocation5 + $0x14] sm:$0xff]
      %v5416 = vld [vmem:[#allocation5 + $0x1c] sm:$0xff]
      %v5417 = vld [vmem:[#allocation5 + $0x24] sm:$0xf]
      %v5418 = vld [vmem:[#allocation5 + $0x28] sm:$0xff]
      %v5419 = vld [vmem:[#allocation5 + $0x30] sm:$0xff]
      %v5420 = vld [vmem:[#allocation5 + $0x38] sm:$0xf]
      %v5421 = vld [vmem:[#allocation5 + $0x3c] sm:$0xff]
      %v5422 = vld [vmem:[#allocation5 + $0x44] sm:$0xff]
      %v5423 = vld [vmem:[#allocation5 + $0x4c] sm:$0xf]
      %v5424 = vld [vmem:[#allocation5 + $0x50] sm:$0xff]
      %v5425 = vld [vmem:[#allocation5 + $0x58] sm:$0xff]
      %v5426 = vld [vmem:[#allocation5 + $0x60] sm:$0xf]
      %v5427 = vld [vmem:[#allocation5 + $0x64] sm:$0xff]
      %v5428 = vld [vmem:[#allocation5 + $0x6c] sm:$0xff]
      %v5429 = vld [vmem:[#allocation5 + $0x74] sm:$0xf]
      %v5430 = vld [vmem:[#allocation5 + $0x78] sm:$0xff]
      %v5431 = vld [vmem:[#allocation5 + $0x80] sm:$0xff]
      %v5432 = vld [vmem:[#allocation5 + $0x88] sm:$0xf]
      %v5433 = vld [vmem:[#allocation5 + $0x8c] sm:$0xff]
      %v5434 = vld [vmem:[#allocation5 + $0x94] sm:$0xff]
      %v5435 = vld [vmem:[#allocation5 + $0x9c] sm:$0xf]
      %v5436 = vld [vmem:[#allocation5 + $0xa0] sm:$0xff]
      %v5437 = vld [vmem:[#allocation5 + $0xa8] sm:$0xff]
      %v5438 = vld [vmem:[#allocation5 + $0xb0] sm:$0xf]
      %v5439 = vld [vmem:[#allocation5 + $0xb4] sm:$0xff]
      %v5440 = vld [vmem:[#allocation5 + $0xbc] sm:$0xff]
      %v5441 = vld [vmem:[#allocation5 + $0xc4] sm:$0xf]
      %v5442 = vld [vmem:[#allocation5 + $0xc8] sm:$0xff]
      %v5443 = vld [vmem:[#allocation5 + $0xd0] sm:$0xff]
      %v5444 = vld [vmem:[#allocation5 + $0xd8] sm:$0xf]
      %v5445 = vld [vmem:[#allocation5 + $0xdc] sm:$0xff]
      %v5446 = vld [vmem:[#allocation5 + $0xe4] sm:$0xff]
      %v5447 = vld [vmem:[#allocation5 + $0xec] sm:$0xf]
      %v5448 = vld [vmem:[#allocation5 + $0xf0] sm:$0xff]
      %v5449 = vld [vmem:[#allocation5 + $0xf8] sm:$0xff]
      %v5450 = vld [vmem:[#allocation5 + $0x100] sm:$0xf]
      %v5451 = vld [vmem:[#allocation5 + $0x104] sm:$0xff]
      %v5452 = vld [vmem:[#allocation5 + $0x10c] sm:$0xff]
      %v5453 = vld [vmem:[#allocation5 + $0x114] sm:$0xf]
      %v5454 = vld [vmem:[#allocation5 + $0x118] sm:$0xff]
      %v5455 = vld [vmem:[#allocation5 + $0x120] sm:$0xff]
      %v5456 = vld [vmem:[#allocation5 + $0x128] sm:$0xf]
      %v5457 = vld [vmem:[#allocation5 + $0x12c] sm:$0xff]
      %v5458 = vld [vmem:[#allocation5 + $0x134] sm:$0xff]
      %v5459 = vld [vmem:[#allocation5 + $0x13c] sm:$0xf]
      %v5460 = vld [vmem:[#allocation5 + $0x140] sm:$0xff]
      %v5461 = vld [vmem:[#allocation5 + $0x148] sm:$0xff]
      %v5462 = vld [vmem:[#allocation5 + $0x150] sm:$0xf]
      %v5463 = vld [vmem:[#allocation5 + $0x154] sm:$0xff]
      %v5464 = vld [vmem:[#allocation5 + $0x15c] sm:$0xff]
      %v5465 = vld [vmem:[#allocation5 + $0x164] sm:$0xf]
      %v5466 = vld [vmem:[#allocation5 + $0x168] sm:$0xff]
      %v5467 = vld [vmem:[#allocation5 + $0x170] sm:$0xff]
      %v5468 = vld [vmem:[#allocation5 + $0x178] sm:$0xf]
      %v5469 = vld [vmem:[#allocation5 + $0x17c] sm:$0xff]
      %v5470 = vld [vmem:[#allocation5 + $0x184] sm:$0xff]
      %v5471 = vld [vmem:[#allocation5 + $0x18c] sm:$0xf]
      %v5472 = vld [vmem:[#allocation5 + $0x190] sm:$0xff]
      %v5473 = vld [vmem:[#allocation5 + $0x198] sm:$0xff]
      %v5474 = vld [vmem:[#allocation5 + $0x1a0] sm:$0xf]
      %v5475 = vld [vmem:[#allocation5 + $0x1a4] sm:$0xff]
      %v5476 = vld [vmem:[#allocation5 + $0x1ac] sm:$0xff]
      %v5477 = vld [vmem:[#allocation5 + $0x1b4] sm:$0xf]
      %v5478 = vld [vmem:[#allocation5 + $0x1b8] sm:$0xff]
      %v5479 = vld [vmem:[#allocation5 + $0x1c0] sm:$0xff]
      %v5480 = vld [vmem:[#allocation5 + $0x1c8] sm:$0xf]
      %v5481 = vld [vmem:[#allocation5 + $0x1cc] sm:$0xff]
      %v5482 = vld [vmem:[#allocation5 + $0x1d4] sm:$0xff]
      %v5483 = vld [vmem:[#allocation5 + $0x1dc] sm:$0xf]
      %v5484 = vld [vmem:[#allocation5 + $0x1e0] sm:$0xff]
      %v5485 = vld [vmem:[#allocation5 + $0x1e8] sm:$0xff]
      %v5486 = vld [vmem:[#allocation5 + $0x1f0] sm:$0xf]
      %v5487 = vld [vmem:[#allocation5 + $0x1f4] sm:$0xff]
      %v5488 = vld [vmem:[#allocation5 + $0x1fc] sm:$0xff]
      %v5489 = vld [vmem:[#allocation5 + $0x204] sm:$0xf]
      %v5490 = vld [vmem:[#allocation5 + $0x208] sm:$0xff]
      %v5491 = vld [vmem:[#allocation5 + $0x210] sm:$0xff]
      %v5492 = vld [vmem:[#allocation5 + $0x218] sm:$0xf]
      %v5493 = vld [vmem:[#allocation5 + $0x21c] sm:$0xff]
      %v5494 = vld [vmem:[#allocation5 + $0x224] sm:$0xff]
      %v5495 = vld [vmem:[#allocation5 + $0x22c] sm:$0xf]
      %v5496 = vld [vmem:[#allocation5 + $0x230] sm:$0xff]
      %v5497 = vld [vmem:[#allocation5 + $0x238] sm:$0xff]
      %v5498 = vld [vmem:[#allocation5 + $0x240] sm:$0xf]
      %v5499 = vld [vmem:[#allocation5 + $0x244] sm:$0xff]
      %v5500 = vld [vmem:[#allocation5 + $0x24c] sm:$0xff]
      %v5501 = vld [vmem:[#allocation5 + $0x254] sm:$0xf]
      %v5502 = vld [vmem:[#allocation5 + $0x258] sm:$0xff]
      %v5503 = vld [vmem:[#allocation5 + $0x260] sm:$0xff]
      %v5504 = vld [vmem:[#allocation5 + $0x268] sm:$0xf]
      %v5505 = vld [vmem:[#allocation5 + $0x26c] sm:$0xff]
      %v5506 = vld [vmem:[#allocation5 + $0x274] sm:$0xff]
      %v5507 = vld [vmem:[#allocation5 + $0x27c] sm:$0xf]
      %v5508 = vld [vmem:[%s4] sm:$0xf]
      %v5509 = vld [vmem:[%s4 + $0x4] sm:$0xf]
      %v5510 = vld [vmem:[%s4 + $0x8] sm:$0xf]
      %v5511 = vld [vmem:[%s4 + $0xc] sm:$0xf]
      %v5512 = vld [vmem:[%s4 + $0x10] sm:$0xf]
      %v5513 = vld [vmem:[%s4 + $0x14] sm:$0xf]
      %v5514 = vld [vmem:[%s4 + $0x18] sm:$0xf]
      %v5515 = vld [vmem:[%s4 + $0x1c] sm:$0xf]
      %v5516 = vld [vmem:[%s4 + $0x20] sm:$0xf]
      %v5517 = vld [vmem:[%s4 + $0x24] sm:$0xf]
      %v5518 = vld [vmem:[%s4 + $0x28] sm:$0xf]
      %v5519 = vld [vmem:[%s4 + $0x2c] sm:$0xf]
      %v5520 = vld [vmem:[%s4 + $0x30] sm:$0xf]
      %v5521 = vld [vmem:[%s4 + $0x34] sm:$0xf]
      %v5522 = vld [vmem:[%s4 + $0x38] sm:$0xf]
      %v5523 = vld [vmem:[%s4 + $0x3c] sm:$0xf]
      %v5524 = vld [vmem:[%s4 + $0x40] sm:$0xf]
      %v5525 = vld [vmem:[%s4 + $0x44] sm:$0xf]
      %v5526 = vld [vmem:[%s4 + $0x48] sm:$0xf]
      %v5527 = vld [vmem:[%s4 + $0x4c] sm:$0xf]
      %v5528 = vld [vmem:[%s4 + $0x50] sm:$0xf]
      %v5529 = vld [vmem:[%s4 + $0x54] sm:$0xf]
      %v5530 = vld [vmem:[%s4 + $0x58] sm:$0xf]
      %v5531 = vld [vmem:[%s4 + $0x5c] sm:$0xf]
      %v5532 = vld [vmem:[%s4 + $0x60] sm:$0xf]
      %v5533 = vld [vmem:[%s4 + $0x64] sm:$0xf]
      %v5534 = vld [vmem:[%s4 + $0x68] sm:$0xf]
      %v5535 = vld [vmem:[%s4 + $0x6c] sm:$0xf]
      %v5536 = vld [vmem:[%s4 + $0x70] sm:$0xf]
      %v5537 = vld [vmem:[%s4 + $0x74] sm:$0xf]
      %v5538 = vld [vmem:[%s4 + $0x78] sm:$0xf]
      %v5539 = vld [vmem:[%s4 + $0x7c] sm:$0xf]
      %v5540 = vld [vmem:[%s4 + $0x80] sm:$0xf]
      %v5541 = vld [vmem:[%s4 + $0x84] sm:$0xf]
      %v5542 = vld [vmem:[%s4 + $0x88] sm:$0xf]
      %v5543 = vld [vmem:[%s4 + $0x8c] sm:$0xf]
      %v5544 = vld [vmem:[%s4 + $0x90] sm:$0xf]
      %v5545 = vld [vmem:[%s4 + $0x94] sm:$0xf]
      %v5546 = vld [vmem:[%s4 + $0x98] sm:$0xf]
      %v5547 = vld [vmem:[%s4 + $0x9c] sm:$0xf]
      %v5548 = vld [vmem:[%s4 + $0xa0] sm:$0xf]
      %v5549 = vld [vmem:[%s4 + $0xa4] sm:$0xf]
      %v5550 = vld [vmem:[%s4 + $0xa8] sm:$0xf]
      %v5551 = vld [vmem:[%s4 + $0xac] sm:$0xf]
      %v5552 = vld [vmem:[%s4 + $0xb0] sm:$0xf]
      %v5553 = vld [vmem:[%s4 + $0xb4] sm:$0xf]
      %v5554 = vld [vmem:[%s4 + $0xb8] sm:$0xf]
      %v5555 = vld [vmem:[%s4 + $0xbc] sm:$0xf]
      %v5556 = vld [vmem:[%s4 + $0xc0] sm:$0xf]
      %v5557 = vld [vmem:[%s4 + $0xc4] sm:$0xf]
      %v5558 = vld [vmem:[%s4 + $0xc8] sm:$0xf]
      %v5559 = vld [vmem:[%s4 + $0xcc] sm:$0xf]
      %v5560 = vld [vmem:[%s4 + $0xd0] sm:$0xf]
      %v5561 = vld [vmem:[%s4 + $0xd4] sm:$0xf]
      %v5562 = vld [vmem:[%s4 + $0xd8] sm:$0xf]
      %v5563 = vld [vmem:[%s4 + $0xdc] sm:$0xf]
      %v5564 = vld [vmem:[%s4 + $0xe0] sm:$0xf]
      %v5565 = vld [vmem:[%s4 + $0xe4] sm:$0xf]
      %v5566 = vld [vmem:[%s4 + $0xe8] sm:$0xf]
      %v5567 = vld [vmem:[%s4 + $0xec] sm:$0xf]
      %v5568 = vld [vmem:[%s4 + $0xf0] sm:$0xf]
      %v5569 = vld [vmem:[%s4 + $0xf4] sm:$0xf]
      %v5570 = vld [vmem:[%s4 + $0xf8] sm:$0xf]
      %v5571 = vld [vmem:[%s4 + $0xfc] sm:$0xf]
      %v5572 = vld [vmem:[%s4 + $0x100] sm:$0xf]
      %v5573 = vld [vmem:[%s4 + $0x104] sm:$0xf]
      %v5574 = vld [vmem:[%s4 + $0x108] sm:$0xf]
      %v5575 = vld [vmem:[%s4 + $0x10c] sm:$0xf]
      %v5576 = vld [vmem:[%s4 + $0x110] sm:$0xf]
      %v5577 = vld [vmem:[%s4 + $0x114] sm:$0xf]
      %v5578 = vld [vmem:[%s4 + $0x118] sm:$0xf]
      %v5579 = vld [vmem:[%s4 + $0x11c] sm:$0xf]
      %v5676 = vunpack.c.l.b16 %v5412
      %v5677 = vunpack.c.h.b16 %v5412
      %v5678 = vunpack.c.l.b16 %v5413
      %v5679 = vunpack.c.h.b16 %v5413
      %v5680 = vunpack.c.l.b16 %v5414
      %v5681 = vunpack.c.l.b16 %v5415
      %v5682 = vunpack.c.h.b16 %v5415
      %v5683 = vunpack.c.l.b16 %v5416
      %v5684 = vunpack.c.h.b16 %v5416
      %v5685 = vunpack.c.l.b16 %v5417
      %v5686 = vunpack.c.l.b16 %v5418
      %v5687 = vunpack.c.h.b16 %v5418
      %v5688 = vunpack.c.l.b16 %v5419
      %v5689 = vunpack.c.h.b16 %v5419
      %v5690 = vunpack.c.l.b16 %v5420
      %v5691 = vunpack.c.l.b16 %v5421
      %v5692 = vunpack.c.h.b16 %v5421
      %v5693 = vunpack.c.l.b16 %v5422
      %v5694 = vunpack.c.h.b16 %v5422
      %v5695 = vunpack.c.l.b16 %v5423
      %v5696 = vunpack.c.l.b16 %v5424
      %v5697 = vunpack.c.h.b16 %v5424
      %v5698 = vunpack.c.l.b16 %v5425
      %v5699 = vunpack.c.h.b16 %v5425
      %v5700 = vunpack.c.l.b16 %v5426
      %v5701 = vunpack.c.l.b16 %v5427
      %v5702 = vunpack.c.h.b16 %v5427
      %v5703 = vunpack.c.l.b16 %v5428
      %v5704 = vunpack.c.h.b16 %v5428
      %v5705 = vunpack.c.l.b16 %v5429
      %v5706 = vunpack.c.l.b16 %v5430
      %v5707 = vunpack.c.h.b16 %v5430
      %v5708 = vunpack.c.l.b16 %v5431
      %v5709 = vunpack.c.h.b16 %v5431
      %v5710 = vunpack.c.l.b16 %v5432
      %v5711 = vunpack.c.l.b16 %v5433
      %v5712 = vunpack.c.h.b16 %v5433
      %v5713 = vunpack.c.l.b16 %v5434
      %v5714 = vunpack.c.h.b16 %v5434
      %v5715 = vunpack.c.l.b16 %v5435
      %v5716 = vunpack.c.l.b16 %v5436
      %v5717 = vunpack.c.h.b16 %v5436
      %v5718 = vunpack.c.l.b16 %v5437
      %v5719 = vunpack.c.h.b16 %v5437
      %v5720 = vunpack.c.l.b16 %v5438
      %v5721 = vunpack.c.l.b16 %v5439
      %v5722 = vunpack.c.h.b16 %v5439
      %v5723 = vunpack.c.l.b16 %v5440
      %v5724 = vunpack.c.h.b16 %v5440
      %v5725 = vunpack.c.l.b16 %v5441
      %v5726 = vunpack.c.l.b16 %v5442
      %v5727 = vunpack.c.h.b16 %v5442
      %v5728 = vunpack.c.l.b16 %v5443
      %v5729 = vunpack.c.h.b16 %v5443
      %v5730 = vunpack.c.l.b16 %v5444
      %v5731 = vunpack.c.l.b16 %v5445
      %v5732 = vunpack.c.h.b16 %v5445
      %v5733 = vunpack.c.l.b16 %v5446
      %v5734 = vunpack.c.h.b16 %v5446
      %v5735 = vunpack.c.l.b16 %v5447
      %v5736 = vunpack.c.l.b16 %v5448
      %v5737 = vunpack.c.h.b16 %v5448
      %v5738 = vunpack.c.l.b16 %v5449
      %v5739 = vunpack.c.h.b16 %v5449
      %v5740 = vunpack.c.l.b16 %v5450
      %v5741 = vunpack.c.l.b16 %v5451
      %v5742 = vunpack.c.h.b16 %v5451
      %v5743 = vunpack.c.l.b16 %v5452
      %v5744 = vunpack.c.h.b16 %v5452
      %v5745 = vunpack.c.l.b16 %v5453
      %v5746 = vunpack.c.l.b16 %v5454
      %v5747 = vunpack.c.h.b16 %v5454
      %v5748 = vunpack.c.l.b16 %v5455
      %v5749 = vunpack.c.h.b16 %v5455
      %v5750 = vunpack.c.l.b16 %v5456
      %v5751 = vunpack.c.l.b16 %v5457
      %v5752 = vunpack.c.h.b16 %v5457
      %v5753 = vunpack.c.l.b16 %v5458
      %v5754 = vunpack.c.h.b16 %v5458
      %v5755 = vunpack.c.l.b16 %v5459
      %v5756 = vunpack.c.l.b16 %v5460
      %v5757 = vunpack.c.h.b16 %v5460
      %v5758 = vunpack.c.l.b16 %v5461
      %v5759 = vunpack.c.h.b16 %v5461
      %v5760 = vunpack.c.l.b16 %v5462
      %v5761 = vunpack.c.l.b16 %v5463
      %v5762 = vunpack.c.h.b16 %v5463
      %v5763 = vunpack.c.l.b16 %v5464
      %v5764 = vunpack.c.h.b16 %v5464
      %v5765 = vunpack.c.l.b16 %v5465
      %v5766 = vunpack.c.l.b16 %v5466
      %v5767 = vunpack.c.h.b16 %v5466
      %v5768 = vunpack.c.l.b16 %v5467
      %v5769 = vunpack.c.h.b16 %v5467
      %v5770 = vunpack.c.l.b16 %v5468
      %v5771 = vunpack.c.l.b16 %v5469
      %v5772 = vunpack.c.h.b16 %v5469
      %v5773 = vunpack.c.l.b16 %v5470
      %v5774 = vunpack.c.h.b16 %v5470
      %v5775 = vunpack.c.l.b16 %v5471
      %v5776 = vunpack.c.l.b16 %v5472
      %v5777 = vunpack.c.h.b16 %v5472
      %v5778 = vunpack.c.l.b16 %v5473
      %v5779 = vunpack.c.h.b16 %v5473
      %v5780 = vunpack.c.l.b16 %v5474
      %v5781 = vunpack.c.l.b16 %v5475
      %v5782 = vunpack.c.h.b16 %v5475
      %v5783 = vunpack.c.l.b16 %v5476
      %v5784 = vunpack.c.h.b16 %v5476
      %v5785 = vunpack.c.l.b16 %v5477
      %v5786 = vunpack.c.l.b16 %v5478
      %v5787 = vunpack.c.h.b16 %v5478
      %v5788 = vunpack.c.l.b16 %v5479
      %v5789 = vunpack.c.h.b16 %v5479
      %v5790 = vunpack.c.l.b16 %v5480
      %v5791 = vunpack.c.l.b16 %v5481
      %v5792 = vunpack.c.h.b16 %v5481
      %v5793 = vunpack.c.l.b16 %v5482
      %v5794 = vunpack.c.h.b16 %v5482
      %v5795 = vunpack.c.l.b16 %v5483
      %v5796 = vunpack.c.l.b16 %v5484
      %v5797 = vunpack.c.h.b16 %v5484
      %v5798 = vunpack.c.l.b16 %v5485
      %v5799 = vunpack.c.h.b16 %v5485
      %v5800 = vunpack.c.l.b16 %v5486
      %v5801 = vunpack.c.l.b16 %v5487
      %v5802 = vunpack.c.h.b16 %v5487
      %v5803 = vunpack.c.l.b16 %v5488
      %v5804 = vunpack.c.h.b16 %v5488
      %v5805 = vunpack.c.l.b16 %v5489
      %v5806 = vunpack.c.l.b16 %v5490
      %v5807 = vunpack.c.h.b16 %v5490
      %v5808 = vunpack.c.l.b16 %v5491
      %v5809 = vunpack.c.h.b16 %v5491
      %v5810 = vunpack.c.l.b16 %v5492
      %v5811 = vunpack.c.l.b16 %v5493
      %v5812 = vunpack.c.h.b16 %v5493
      %v5813 = vunpack.c.l.b16 %v5494
      %v5814 = vunpack.c.h.b16 %v5494
      %v5815 = vunpack.c.l.b16 %v5495
      %v5816 = vunpack.c.l.b16 %v5496
      %v5817 = vunpack.c.h.b16 %v5496
      %v5818 = vunpack.c.l.b16 %v5497
      %v5819 = vunpack.c.h.b16 %v5497
      %v5820 = vunpack.c.l.b16 %v5498
      %v5821 = vunpack.c.l.b16 %v5499
      %v5822 = vunpack.c.h.b16 %v5499
      %v5823 = vunpack.c.l.b16 %v5500
      %v5824 = vunpack.c.h.b16 %v5500
      %v5825 = vunpack.c.l.b16 %v5501
      %v5826 = vunpack.c.l.b16 %v5502
      %v5827 = vunpack.c.h.b16 %v5502
      %v5828 = vunpack.c.l.b16 %v5503
      %v5829 = vunpack.c.h.b16 %v5503
      %v5830 = vunpack.c.l.b16 %v5504
      %v5831 = vunpack.c.l.b16 %v5505
      %v5832 = vunpack.c.h.b16 %v5505
      %v5833 = vunpack.c.l.b16 %v5506
      %v5834 = vunpack.c.h.b16 %v5506
      %v5835 = vunpack.c.l.b16 %v5507
      %v5836 = vpack.c.b16 %v5681, %v5676
      %v5837 = vpack.c.b16 %v5682, %v5677
      %v5838 = vpack.c.b16 %v5683, %v5678
      %v5839 = vpack.c.b16 %v5684, %v5679
      %v5840 = vpack.c.b16 %v5685, %v5680
      %v5841 = vpack.c.b16 %v5691, %v5686
      %v5842 = vpack.c.b16 %v5692, %v5687
      %v5843 = vpack.c.b16 %v5693, %v5688
      %v5844 = vpack.c.b16 %v5694, %v5689
      %v5845 = vpack.c.b16 %v5695, %v5690
      %v5846 = vpack.c.b16 %v5701, %v5696
      %v5847 = vpack.c.b16 %v5702, %v5697
      %v5848 = vpack.c.b16 %v5703, %v5698
      %v5849 = vpack.c.b16 %v5704, %v5699
      %v5850 = vpack.c.b16 %v5705, %v5700
      %v5851 = vpack.c.b16 %v5711, %v5706
      %v5852 = vpack.c.b16 %v5712, %v5707
      %v5853 = vpack.c.b16 %v5713, %v5708
      %v5854 = vpack.c.b16 %v5714, %v5709
      %v5855 = vpack.c.b16 %v5715, %v5710
      %v5856 = vpack.c.b16 %v5721, %v5716
      %v5857 = vpack.c.b16 %v5722, %v5717
      %v5858 = vpack.c.b16 %v5723, %v5718
      %v5859 = vpack.c.b16 %v5724, %v5719
      %v5860 = vpack.c.b16 %v5725, %v5720
      %v5861 = vpack.c.b16 %v5731, %v5726
      %v5862 = vpack.c.b16 %v5732, %v5727
      %v5863 = vpack.c.b16 %v5733, %v5728
      %v5864 = vpack.c.b16 %v5734, %v5729
      %v5865 = vpack.c.b16 %v5735, %v5730
      %v5866 = vpack.c.b16 %v5741, %v5736
      %v5867 = vpack.c.b16 %v5742, %v5737
      %v5868 = vpack.c.b16 %v5743, %v5738
      %v5869 = vpack.c.b16 %v5744, %v5739
      %v5870 = vpack.c.b16 %v5745, %v5740
      %v5871 = vpack.c.b16 %v5751, %v5746
      %v5872 = vpack.c.b16 %v5752, %v5747
      %v5873 = vpack.c.b16 %v5753, %v5748
      %v5874 = vpack.c.b16 %v5754, %v5749
      %v5875 = vpack.c.b16 %v5755, %v5750
      %v5876 = vpack.c.b16 %v5761, %v5756
      %v5877 = vpack.c.b16 %v5762, %v5757
      %v5878 = vpack.c.b16 %v5763, %v5758
      %v5879 = vpack.c.b16 %v5764, %v5759
      %v5880 = vpack.c.b16 %v5765, %v5760
      %v5881 = vpack.c.b16 %v5771, %v5766
      %v5882 = vpack.c.b16 %v5772, %v5767
      %v5883 = vpack.c.b16 %v5773, %v5768
      %v5884 = vpack.c.b16 %v5774, %v5769
      %v5885 = vpack.c.b16 %v5775, %v5770
      %v5886 = vpack.c.b16 %v5781, %v5776
      %v5887 = vpack.c.b16 %v5782, %v5777
      %v5888 = vpack.c.b16 %v5783, %v5778
      %v5889 = vpack.c.b16 %v5784, %v5779
      %v5890 = vpack.c.b16 %v5785, %v5780
      %v5891 = vpack.c.b16 %v5791, %v5786
      %v5892 = vpack.c.b16 %v5792, %v5787
      %v5893 = vpack.c.b16 %v5793, %v5788
      %v5894 = vpack.c.b16 %v5794, %v5789
      %v5895 = vpack.c.b16 %v5795, %v5790
      %v5896 = vpack.c.b16 %v5801, %v5796
      %v5897 = vpack.c.b16 %v5802, %v5797
      %v5898 = vpack.c.b16 %v5803, %v5798
      %v5899 = vpack.c.b16 %v5804, %v5799
      %v5900 = vpack.c.b16 %v5805, %v5800
      %v5901 = vpack.c.b16 %v5811, %v5806
      %v5902 = vpack.c.b16 %v5812, %v5807
      %v5903 = vpack.c.b16 %v5813, %v5808
      %v5904 = vpack.c.b16 %v5814, %v5809
      %v5905 = vpack.c.b16 %v5815, %v5810
      %v5906 = vpack.c.b16 %v5821, %v5816
      %v5907 = vpack.c.b16 %v5822, %v5817
      %v5908 = vpack.c.b16 %v5823, %v5818
      %v5909 = vpack.c.b16 %v5824, %v5819
      %v5910 = vpack.c.b16 %v5825, %v5820
      %v5911 = vpack.c.b16 %v5831, %v5826
      %v5912 = vpack.c.b16 %v5832, %v5827
      %v5913 = vpack.c.b16 %v5833, %v5828
      %v5914 = vpack.c.b16 %v5834, %v5829
      %v5915 = vpack.c.b16 %v5835, %v5830
      %v6052 = vunpack.c.l.b16 %v5508
      %v6053 = vunpack.c.l.b16 %v5509
      %v6054 = vunpack.c.l.b16 %v5510
      %v6055 = vunpack.c.l.b16 %v5511
      %v6056 = vunpack.c.l.b16 %v5512
      %v6057 = vunpack.c.l.b16 %v5513
      %v6058 = vunpack.c.l.b16 %v5514
      %v6059 = vunpack.c.l.b16 %v5515
      %v6060 = vunpack.c.l.b16 %v5516
      %v6061 = vunpack.c.l.b16 %v5517
      %v6062 = vunpack.c.l.b16 %v5518
      %v6063 = vunpack.c.l.b16 %v5519
      %v6064 = vunpack.c.l.b16 %v5520
      %v6065 = vunpack.c.l.b16 %v5521
      %v6066 = vunpack.c.l.b16 %v5522
      %v6067 = vunpack.c.l.b16 %v5523
      %v6068 = vunpack.c.l.b16 %v5524
      %v6069 = vunpack.c.l.b16 %v5525
      %v6070 = vunpack.c.l.b16 %v5526
      %v6071 = vunpack.c.l.b16 %v5527
      %v6072 = vunpack.c.l.b16 %v5528
      %v6073 = vunpack.c.l.b16 %v5529
      %v6074 = vunpack.c.l.b16 %v5530
      %v6075 = vunpack.c.l.b16 %v5531
      %v6076 = vunpack.c.l.b16 %v5532
      %v6077 = vunpack.c.l.b16 %v5533
      %v6078 = vunpack.c.l.b16 %v5534
      %v6079 = vunpack.c.l.b16 %v5535
      %v6080 = vunpack.c.l.b16 %v5536
      %v6081 = vunpack.c.l.b16 %v5537
      %v6082 = vunpack.c.l.b16 %v5538
      %v6083 = vunpack.c.l.b16 %v5539
      %v6084 = vunpack.c.l.b16 %v5540
      %v6085 = vunpack.c.l.b16 %v5541
      %v6086 = vunpack.c.l.b16 %v5542
      %v6087 = vunpack.c.l.b16 %v5543
      %v6088 = vunpack.c.l.b16 %v5544
      %v6089 = vunpack.c.l.b16 %v5545
      %v6090 = vunpack.c.l.b16 %v5546
      %v6091 = vunpack.c.l.b16 %v5547
      %v6092 = vunpack.c.l.b16 %v5548
      %v6093 = vunpack.c.l.b16 %v5549
      %v6094 = vunpack.c.l.b16 %v5550
      %v6095 = vunpack.c.l.b16 %v5551
      %v6096 = vunpack.c.l.b16 %v5552
      %v6097 = vunpack.c.l.b16 %v5553
      %v6098 = vunpack.c.l.b16 %v5554
      %v6099 = vunpack.c.l.b16 %v5555
      %v6100 = vunpack.c.l.b16 %v5556
      %v6101 = vunpack.c.l.b16 %v5557
      %v6102 = vunpack.c.l.b16 %v5558
      %v6103 = vunpack.c.l.b16 %v5559
      %v6104 = vunpack.c.l.b16 %v5560
      %v6105 = vunpack.c.l.b16 %v5561
      %v6106 = vunpack.c.l.b16 %v5562
      %v6107 = vunpack.c.l.b16 %v5563
      %v6108 = vunpack.c.l.b16 %v5564
      %v6109 = vunpack.c.l.b16 %v5565
      %v6110 = vunpack.c.l.b16 %v5566
      %v6111 = vunpack.c.l.b16 %v5567
      %v6112 = vunpack.c.l.b16 %v5568
      %v6113 = vunpack.c.l.b16 %v5569
      %v6114 = vunpack.c.l.b16 %v5570
      %v6115 = vunpack.c.l.b16 %v5571
      %v6116 = vunpack.c.l.b16 %v5572
      %v6117 = vunpack.c.l.b16 %v5573
      %v6118 = vunpack.c.l.b16 %v5574
      %v6119 = vunpack.c.l.b16 %v5575
      %v6120 = vunpack.c.l.b16 %v5576
      %v6121 = vunpack.c.l.b16 %v5577
      %v6122 = vunpack.c.l.b16 %v5578
      %v6123 = vunpack.c.l.b16 %v5579
      %v6124 = vpack.c.b16 %v6053, %v6052
      %v6125 = vpack.c.b16 %v6055, %v6054
      %v6126 = vpack.c.b16 %v6057, %v6056
      %v6127 = vpack.c.b16 %v6059, %v6058
      %v6128 = vpack.c.b16 %v6061, %v6060
      %v6129 = vpack.c.b16 %v6063, %v6062
      %v6130 = vpack.c.b16 %v6065, %v6064
      %v6131 = vpack.c.b16 %v6067, %v6066
      %v6132 = vpack.c.b16 %v6069, %v6068
      %v6133 = vpack.c.b16 %v6071, %v6070
      %v6134 = vpack.c.b16 %v6073, %v6072
      %v6135 = vpack.c.b16 %v6075, %v6074
      %v6136 = vpack.c.b16 %v6077, %v6076
      %v6137 = vpack.c.b16 %v6079, %v6078
      %v6138 = vpack.c.b16 %v6081, %v6080
      %v6139 = vpack.c.b16 %v6083, %v6082
      %v6140 = vpack.c.b16 %v6085, %v6084
      %v6141 = vpack.c.b16 %v6087, %v6086
      %v6142 = vpack.c.b16 %v6089, %v6088
      %v6143 = vpack.c.b16 %v6091, %v6090
      %v6144 = vpack.c.b16 %v6093, %v6092
      %v6145 = vpack.c.b16 %v6095, %v6094
      %v6146 = vpack.c.b16 %v6097, %v6096
      %v6147 = vpack.c.b16 %v6099, %v6098
      %v6148 = vpack.c.b16 %v6101, %v6100
      %v6149 = vpack.c.b16 %v6103, %v6102
      %v6150 = vpack.c.b16 %v6105, %v6104
      %v6151 = vpack.c.b16 %v6107, %v6106
      %v6152 = vpack.c.b16 %v6109, %v6108
      %v6153 = vpack.c.b16 %v6111, %v6110
      %v6154 = vpack.c.b16 %v6113, %v6112
      %v6155 = vpack.c.b16 %v6115, %v6114
      %v6156 = vpack.c.b16 %v6117, %v6116
      %v6157 = vpack.c.b16 %v6119, %v6118
      %v6158 = vpack.c.b16 %v6121, %v6120
      %v6159 = vpack.c.b16 %v6123, %v6122
      %v6197 = vsel %vm347, %v5840, 0
      %v6200 = vsel %vm347, %v5845, 0
      %v6203 = vsel %vm347, %v5850, 0
      %v6206 = vsel %vm347, %v5855, 0
      %v6209 = vsel %vm347, %v5860, 0
      %v6212 = vsel %vm347, %v5865, 0
      %v6215 = vsel %vm347, %v5870, 0
      %v6218 = vsel %vm347, %v5875, 0
      %v6221 = vsel %vm347, %v5880, 0
      %v6224 = vsel %vm347, %v5885, 0
      %v6227 = vsel %vm347, %v5890, 0
      %v6230 = vsel %vm347, %v5895, 0
      %v6233 = vsel %vm347, %v5900, 0
      %v6236 = vsel %vm347, %v5905, 0
      %v6239 = vsel %vm347, %v5910, 0
      %v6242 = vsel %vm347, %v5915, 0
      %6244 = vmatpush.bf16.msra.mxu0 %v6131
      %6245 = vmatpush.bf16.msra.mxu0 %v6130
      %6246 = vmatpush.bf16.msra.mxu0 %v6129
      %6247 = vmatpush.bf16.msra.mxu0 %v6128
      %6248 = vmatpush.bf16.msra.mxu0 %v6127
      %6249 = vmatpush.bf16.msra.mxu0 %v6126
      %6250 = vmatpush.bf16.msra.mxu0 %v6125
      %6251 = vmatpush.bf16.msra.mxu0 %v6124
      %6252 = vmatmul.bf16.gmra.mxu0 %v5836
      %v6253 = vpop.f32.mrf.mxu0
      %v6254 = vadd.f32 0.0, %v6253
      %v6255 = vpop.f32.mrf.mxu0
      %v6256 = vadd.f32 0.0, %v6255
      %6257 = vmatmul.bf16.gmra.mxu0 %v5841
      %v6258 = vpop.f32.mrf.mxu0
      %v6259 = vadd.f32 0.0, %v6258
      %v6260 = vpop.f32.mrf.mxu0
      %v6261 = vadd.f32 0.0, %v6260
      %6262 = vmatmul.bf16.gmra.mxu0 %v5846
      %v6263 = vpop.f32.mrf.mxu0
      %v6264 = vadd.f32 0.0, %v6263
      %v6265 = vpop.f32.mrf.mxu0
      %v6266 = vadd.f32 0.0, %v6265
      %6267 = vmatmul.bf16.gmra.mxu0 %v5851
      %v6268 = vpop.f32.mrf.mxu0
      %v6269 = vadd.f32 0.0, %v6268
      %v6270 = vpop.f32.mrf.mxu0
      %v6271 = vadd.f32 0.0, %v6270
      %6272 = vmatmul.bf16.gmra.mxu0 %v5856
      %v6273 = vpop.f32.mrf.mxu0
      %v6274 = vadd.f32 0.0, %v6273
      %v6275 = vpop.f32.mrf.mxu0
      %v6276 = vadd.f32 0.0, %v6275
      %6277 = vmatmul.bf16.gmra.mxu0 %v5861
      %v6278 = vpop.f32.mrf.mxu0
      %v6279 = vadd.f32 0.0, %v6278
      %v6280 = vpop.f32.mrf.mxu0
      %v6281 = vadd.f32 0.0, %v6280
      %6282 = vmatmul.bf16.gmra.mxu0 %v5866
      %v6283 = vpop.f32.mrf.mxu0
      %v6284 = vadd.f32 0.0, %v6283
      %v6285 = vpop.f32.mrf.mxu0
      %v6286 = vadd.f32 0.0, %v6285
      %6287 = vmatmul.bf16.gmra.mxu0 %v5871
      %v6288 = vpop.f32.mrf.mxu0
      %v6289 = vadd.f32 0.0, %v6288
      %v6290 = vpop.f32.mrf.mxu0
      %v6291 = vadd.f32 0.0, %v6290
      %6292 = vmatmul.bf16.gmra.mxu0 %v5876
      %v6293 = vpop.f32.mrf.mxu0
      %v6294 = vadd.f32 0.0, %v6293
      %v6295 = vpop.f32.mrf.mxu0
      %v6296 = vadd.f32 0.0, %v6295
      %6297 = vmatmul.bf16.gmra.mxu0 %v5881
      %v6298 = vpop.f32.mrf.mxu0
      %v6299 = vadd.f32 0.0, %v6298
      %v6300 = vpop.f32.mrf.mxu0
      %v6301 = vadd.f32 0.0, %v6300
      %6302 = vmatmul.bf16.gmra.mxu0 %v5886
      %v6303 = vpop.f32.mrf.mxu0
      %v6304 = vadd.f32 0.0, %v6303
      %v6305 = vpop.f32.mrf.mxu0
      %v6306 = vadd.f32 0.0, %v6305
      %6307 = vmatmul.bf16.gmra.mxu0 %v5891
      %v6308 = vpop.f32.mrf.mxu0
      %v6309 = vadd.f32 0.0, %v6308
      %v6310 = vpop.f32.mrf.mxu0
      %v6311 = vadd.f32 0.0, %v6310
      %6312 = vmatmul.bf16.gmra.mxu0 %v5896
      %v6313 = vpop.f32.mrf.mxu0
      %v6314 = vadd.f32 0.0, %v6313
      %v6315 = vpop.f32.mrf.mxu0
      %v6316 = vadd.f32 0.0, %v6315
      %6317 = vmatmul.bf16.gmra.mxu0 %v5901
      %v6318 = vpop.f32.mrf.mxu0
      %v6319 = vadd.f32 0.0, %v6318
      %v6320 = vpop.f32.mrf.mxu0
      %v6321 = vadd.f32 0.0, %v6320
      %6322 = vmatmul.bf16.gmra.mxu0 %v5906
      %v6323 = vpop.f32.mrf.mxu0
      %v6324 = vadd.f32 0.0, %v6323
      %v6325 = vpop.f32.mrf.mxu0
      %v6326 = vadd.f32 0.0, %v6325
      %6327 = vmatmul.bf16.gmra.mxu0 %v5911
      %v6328 = vpop.f32.mrf.mxu0
      %v6329 = vadd.f32 0.0, %v6328
      %v6330 = vpop.f32.mrf.mxu0
      %v6331 = vadd.f32 0.0, %v6330
      %6332 = vdwg.mxu0
      %6333 = vmatpush.bf16.msra.mxu0 %v6139
      %6334 = vmatpush.bf16.msra.mxu0 %v6138
      %6335 = vmatpush.bf16.msra.mxu0 %v6137
      %6336 = vmatpush.bf16.msra.mxu0 %v6136
      %6337 = vmatpush.bf16.msra.mxu0 %v6135
      %6338 = vmatpush.bf16.msra.mxu0 %v6134
      %6339 = vmatpush.bf16.msra.mxu0 %v6133
      %6340 = vmatpush.bf16.msra.mxu0 %v6132
      %6341 = vmatmul.bf16.gmra.mxu0 %v5837
      %v6342 = vpop.f32.mrf.mxu0
      %v6343 = vadd.f32 %v6254, %v6342
      %v6344 = vpop.f32.mrf.mxu0
      %v6345 = vadd.f32 %v6256, %v6344
      %6346 = vmatmul.bf16.gmra.mxu0 %v5842
      %v6347 = vpop.f32.mrf.mxu0
      %v6348 = vadd.f32 %v6259, %v6347
      %v6349 = vpop.f32.mrf.mxu0
      %v6350 = vadd.f32 %v6261, %v6349
      %6351 = vmatmul.bf16.gmra.mxu0 %v5847
      %v6352 = vpop.f32.mrf.mxu0
      %v6353 = vadd.f32 %v6264, %v6352
      %v6354 = vpop.f32.mrf.mxu0
      %v6355 = vadd.f32 %v6266, %v6354
      %6356 = vmatmul.bf16.gmra.mxu0 %v5852
      %v6357 = vpop.f32.mrf.mxu0
      %v6358 = vadd.f32 %v6269, %v6357
      %v6359 = vpop.f32.mrf.mxu0
      %v6360 = vadd.f32 %v6271, %v6359
      %6361 = vmatmul.bf16.gmra.mxu0 %v5857
      %v6362 = vpop.f32.mrf.mxu0
      %v6363 = vadd.f32 %v6274, %v6362
      %v6364 = vpop.f32.mrf.mxu0
      %v6365 = vadd.f32 %v6276, %v6364
      %6366 = vmatmul.bf16.gmra.mxu0 %v5862
      %v6367 = vpop.f32.mrf.mxu0
      %v6368 = vadd.f32 %v6279, %v6367
      %v6369 = vpop.f32.mrf.mxu0
      %v6370 = vadd.f32 %v6281, %v6369
      %6371 = vmatmul.bf16.gmra.mxu0 %v5867
      %v6372 = vpop.f32.mrf.mxu0
      %v6373 = vadd.f32 %v6284, %v6372
      %v6374 = vpop.f32.mrf.mxu0
      %v6375 = vadd.f32 %v6286, %v6374
      %6376 = vmatmul.bf16.gmra.mxu0 %v5872
      %v6377 = vpop.f32.mrf.mxu0
      %v6378 = vadd.f32 %v6289, %v6377
      %v6379 = vpop.f32.mrf.mxu0
      %v6380 = vadd.f32 %v6291, %v6379
      %6381 = vmatmul.bf16.gmra.mxu0 %v5877
      %v6382 = vpop.f32.mrf.mxu0
      %v6383 = vadd.f32 %v6294, %v6382
      %v6384 = vpop.f32.mrf.mxu0
      %v6385 = vadd.f32 %v6296, %v6384
      %6386 = vmatmul.bf16.gmra.mxu0 %v5882
      %v6387 = vpop.f32.mrf.mxu0
      %v6388 = vadd.f32 %v6299, %v6387
      %v6389 = vpop.f32.mrf.mxu0
      %v6390 = vadd.f32 %v6301, %v6389
      %6391 = vmatmul.bf16.gmra.mxu0 %v5887
      %v6392 = vpop.f32.mrf.mxu0
      %v6393 = vadd.f32 %v6304, %v6392
      %v6394 = vpop.f32.mrf.mxu0
      %v6395 = vadd.f32 %v6306, %v6394
      %6396 = vmatmul.bf16.gmra.mxu0 %v5892
      %v6397 = vpop.f32.mrf.mxu0
      %v6398 = vadd.f32 %v6309, %v6397
      %v6399 = vpop.f32.mrf.mxu0
      %v6400 = vadd.f32 %v6311, %v6399
      %6401 = vmatmul.bf16.gmra.mxu0 %v5897
      %v6402 = vpop.f32.mrf.mxu0
      %v6403 = vadd.f32 %v6314, %v6402
      %v6404 = vpop.f32.mrf.mxu0
      %v6405 = vadd.f32 %v6316, %v6404
      %6406 = vmatmul.bf16.gmra.mxu0 %v5902
      %v6407 = vpop.f32.mrf.mxu0
      %v6408 = vadd.f32 %v6319, %v6407
      %v6409 = vpop.f32.mrf.mxu0
      %v6410 = vadd.f32 %v6321, %v6409
      %6411 = vmatmul.bf16.gmra.mxu0 %v5907
      %v6412 = vpop.f32.mrf.mxu0
      %v6413 = vadd.f32 %v6324, %v6412
      %v6414 = vpop.f32.mrf.mxu0
      %v6415 = vadd.f32 %v6326, %v6414
      %6416 = vmatmul.bf16.gmra.mxu0 %v5912
      %v6417 = vpop.f32.mrf.mxu0
      %v6418 = vadd.f32 %v6329, %v6417
      %v6419 = vpop.f32.mrf.mxu0
      %v6420 = vadd.f32 %v6331, %v6419
      %6421 = vdwg.mxu0
      %6422 = vmatpush.bf16.msra.mxu0 %v6147
      %6423 = vmatpush.bf16.msra.mxu0 %v6146
      %6424 = vmatpush.bf16.msra.mxu0 %v6145
      %6425 = vmatpush.bf16.msra.mxu0 %v6144
      %6426 = vmatpush.bf16.msra.mxu0 %v6143
      %6427 = vmatpush.bf16.msra.mxu0 %v6142
      %6428 = vmatpush.bf16.msra.mxu0 %v6141
      %6429 = vmatpush.bf16.msra.mxu0 %v6140
      %6430 = vmatmul.bf16.gmra.mxu0 %v5838
      %v6431 = vpop.f32.mrf.mxu0
      %v6432 = vadd.f32 %v6343, %v6431
      %v6433 = vpop.f32.mrf.mxu0
      %v6434 = vadd.f32 %v6345, %v6433
      %6435 = vmatmul.bf16.gmra.mxu0 %v5843
      %v6436 = vpop.f32.mrf.mxu0
      %v6437 = vadd.f32 %v6348, %v6436
      %v6438 = vpop.f32.mrf.mxu0
      %v6439 = vadd.f32 %v6350, %v6438
      %6440 = vmatmul.bf16.gmra.mxu0 %v5848
      %v6441 = vpop.f32.mrf.mxu0
      %v6442 = vadd.f32 %v6353, %v6441
      %v6443 = vpop.f32.mrf.mxu0
      %v6444 = vadd.f32 %v6355, %v6443
      %6445 = vmatmul.bf16.gmra.mxu0 %v5853
      %v6446 = vpop.f32.mrf.mxu0
      %v6447 = vadd.f32 %v6358, %v6446
      %v6448 = vpop.f32.mrf.mxu0
      %v6449 = vadd.f32 %v6360, %v6448
      %6450 = vmatmul.bf16.gmra.mxu0 %v5858
      %v6451 = vpop.f32.mrf.mxu0
      %v6452 = vadd.f32 %v6363, %v6451
      %v6453 = vpop.f32.mrf.mxu0
      %v6454 = vadd.f32 %v6365, %v6453
      %6455 = vmatmul.bf16.gmra.mxu0 %v5863
      %v6456 = vpop.f32.mrf.mxu0
      %v6457 = vadd.f32 %v6368, %v6456
      %v6458 = vpop.f32.mrf.mxu0
      %v6459 = vadd.f32 %v6370, %v6458
      %6460 = vmatmul.bf16.gmra.mxu0 %v5868
      %v6461 = vpop.f32.mrf.mxu0
      %v6462 = vadd.f32 %v6373, %v6461
      %v6463 = vpop.f32.mrf.mxu0
      %v6464 = vadd.f32 %v6375, %v6463
      %6465 = vmatmul.bf16.gmra.mxu0 %v5873
      %v6466 = vpop.f32.mrf.mxu0
      %v6467 = vadd.f32 %v6378, %v6466
      %v6468 = vpop.f32.mrf.mxu0
      %v6469 = vadd.f32 %v6380, %v6468
      %6470 = vmatmul.bf16.gmra.mxu0 %v5878
      %v6471 = vpop.f32.mrf.mxu0
      %v6472 = vadd.f32 %v6383, %v6471
      %v6473 = vpop.f32.mrf.mxu0
      %v6474 = vadd.f32 %v6385, %v6473
      %6475 = vmatmul.bf16.gmra.mxu0 %v5883
      %v6476 = vpop.f32.mrf.mxu0
      %v6477 = vadd.f32 %v6388, %v6476
      %v6478 = vpop.f32.mrf.mxu0
      %v6479 = vadd.f32 %v6390, %v6478
      %6480 = vmatmul.bf16.gmra.mxu0 %v5888
      %v6481 = vpop.f32.mrf.mxu0
      %v6482 = vadd.f32 %v6393, %v6481
      %v6483 = vpop.f32.mrf.mxu0
      %v6484 = vadd.f32 %v6395, %v6483
      %6485 = vmatmul.bf16.gmra.mxu0 %v5893
      %v6486 = vpop.f32.mrf.mxu0
      %v6487 = vadd.f32 %v6398, %v6486
      %v6488 = vpop.f32.mrf.mxu0
      %v6489 = vadd.f32 %v6400, %v6488
      %6490 = vmatmul.bf16.gmra.mxu0 %v5898
      %v6491 = vpop.f32.mrf.mxu0
      %v6492 = vadd.f32 %v6403, %v6491
      %v6493 = vpop.f32.mrf.mxu0
      %v6494 = vadd.f32 %v6405, %v6493
      %6495 = vmatmul.bf16.gmra.mxu0 %v5903
      %v6496 = vpop.f32.mrf.mxu0
      %v6497 = vadd.f32 %v6408, %v6496
      %v6498 = vpop.f32.mrf.mxu0
      %v6499 = vadd.f32 %v6410, %v6498
      %6500 = vmatmul.bf16.gmra.mxu0 %v5908
      %v6501 = vpop.f32.mrf.mxu0
      %v6502 = vadd.f32 %v6413, %v6501
      %v6503 = vpop.f32.mrf.mxu0
      %v6504 = vadd.f32 %v6415, %v6503
      %6505 = vmatmul.bf16.gmra.mxu0 %v5913
      %v6506 = vpop.f32.mrf.mxu0
      %v6507 = vadd.f32 %v6418, %v6506
      %v6508 = vpop.f32.mrf.mxu0
      %v6509 = vadd.f32 %v6420, %v6508
      %6510 = vdwg.mxu0
      %6511 = vmatpush.bf16.msra.mxu0 %v6155
      %6512 = vmatpush.bf16.msra.mxu0 %v6154
      %6513 = vmatpush.bf16.msra.mxu0 %v6153
      %6514 = vmatpush.bf16.msra.mxu0 %v6152
      %6515 = vmatpush.bf16.msra.mxu0 %v6151
      %6516 = vmatpush.bf16.msra.mxu0 %v6150
      %6517 = vmatpush.bf16.msra.mxu0 %v6149
      %6518 = vmatpush.bf16.msra.mxu0 %v6148
      %6519 = vmatmul.bf16.gmra.mxu0 %v5839
      %v6520 = vpop.f32.mrf.mxu0
      %v6521 = vadd.f32 %v6432, %v6520
      %v6522 = vpop.f32.mrf.mxu0
      %v6523 = vadd.f32 %v6434, %v6522
      %6524 = vmatmul.bf16.gmra.mxu0 %v5844
      %v6525 = vpop.f32.mrf.mxu0
      %v6526 = vadd.f32 %v6437, %v6525
      %v6527 = vpop.f32.mrf.mxu0
      %v6528 = vadd.f32 %v6439, %v6527
      %6529 = vmatmul.bf16.gmra.mxu0 %v5849
      %v6530 = vpop.f32.mrf.mxu0
      %v6531 = vadd.f32 %v6442, %v6530
      %v6532 = vpop.f32.mrf.mxu0
      %v6533 = vadd.f32 %v6444, %v6532
      %6534 = vmatmul.bf16.gmra.mxu0 %v5854
      %v6535 = vpop.f32.mrf.mxu0
      %v6536 = vadd.f32 %v6447, %v6535
      %v6537 = vpop.f32.mrf.mxu0
      %v6538 = vadd.f32 %v6449, %v6537
      %6539 = vmatmul.bf16.gmra.mxu0 %v5859
      %v6540 = vpop.f32.mrf.mxu0
      %v6541 = vadd.f32 %v6452, %v6540
      %v6542 = vpop.f32.mrf.mxu0
      %v6543 = vadd.f32 %v6454, %v6542
      %6544 = vmatmul.bf16.gmra.mxu0 %v5864
      %v6545 = vpop.f32.mrf.mxu0
      %v6546 = vadd.f32 %v6457, %v6545
      %v6547 = vpop.f32.mrf.mxu0
      %v6548 = vadd.f32 %v6459, %v6547
      %6549 = vmatmul.bf16.gmra.mxu0 %v5869
      %v6550 = vpop.f32.mrf.mxu0
      %v6551 = vadd.f32 %v6462, %v6550
      %v6552 = vpop.f32.mrf.mxu0
      %v6553 = vadd.f32 %v6464, %v6552
      %6554 = vmatmul.bf16.gmra.mxu0 %v5874
      %v6555 = vpop.f32.mrf.mxu0
      %v6556 = vadd.f32 %v6467, %v6555
      %v6557 = vpop.f32.mrf.mxu0
      %v6558 = vadd.f32 %v6469, %v6557
      %6559 = vmatmul.bf16.gmra.mxu0 %v5879
      %v6560 = vpop.f32.mrf.mxu0
      %v6561 = vadd.f32 %v6472, %v6560
      %v6562 = vpop.f32.mrf.mxu0
      %v6563 = vadd.f32 %v6474, %v6562
      %6564 = vmatmul.bf16.gmra.mxu0 %v5884
      %v6565 = vpop.f32.mrf.mxu0
      %v6566 = vadd.f32 %v6477, %v6565
      %v6567 = vpop.f32.mrf.mxu0
      %v6568 = vadd.f32 %v6479, %v6567
      %6569 = vmatmul.bf16.gmra.mxu0 %v5889
      %v6570 = vpop.f32.mrf.mxu0
      %v6571 = vadd.f32 %v6482, %v6570
      %v6572 = vpop.f32.mrf.mxu0
      %v6573 = vadd.f32 %v6484, %v6572
      %6574 = vmatmul.bf16.gmra.mxu0 %v5894
      %v6575 = vpop.f32.mrf.mxu0
      %v6576 = vadd.f32 %v6487, %v6575
      %v6577 = vpop.f32.mrf.mxu0
      %v6578 = vadd.f32 %v6489, %v6577
      %6579 = vmatmul.bf16.gmra.mxu0 %v5899
      %v6580 = vpop.f32.mrf.mxu0
      %v6581 = vadd.f32 %v6492, %v6580
      %v6582 = vpop.f32.mrf.mxu0
      %v6583 = vadd.f32 %v6494, %v6582
      %6584 = vmatmul.bf16.gmra.mxu0 %v5904
      %v6585 = vpop.f32.mrf.mxu0
      %v6586 = vadd.f32 %v6497, %v6585
      %v6587 = vpop.f32.mrf.mxu0
      %v6588 = vadd.f32 %v6499, %v6587
      %6589 = vmatmul.bf16.gmra.mxu0 %v5909
      %v6590 = vpop.f32.mrf.mxu0
      %v6591 = vadd.f32 %v6502, %v6590
      %v6592 = vpop.f32.mrf.mxu0
      %v6593 = vadd.f32 %v6504, %v6592
      %6594 = vmatmul.bf16.gmra.mxu0 %v5914
      %v6595 = vpop.f32.mrf.mxu0
      %v6596 = vadd.f32 %v6507, %v6595
      %v6597 = vpop.f32.mrf.mxu0
      %v6598 = vadd.f32 %v6509, %v6597
      %6599 = vdwg.mxu0
      %6600 = vmatpush.bf16.msra.mxu0 0
      %6601 = vmatpush.bf16.msra.mxu0 0
      %6602 = vmatpush.bf16.msra.mxu0 0
      %6603 = vmatpush.bf16.msra.mxu0 0
      %6604 = vmatpush.bf16.msra.mxu0 %v6159
      %6605 = vmatpush.bf16.msra.mxu0 %v6158
      %6606 = vmatpush.bf16.msra.mxu0 %v6157
      %6607 = vmatpush.bf16.msra.mxu0 %v6156
      %6608 = vmatmul.bf16.gmra.mxu0 %v6197
      %v6609 = vpop.f32.mrf.mxu0
      %v6610 = vadd.f32 %v6521, %v6609
      %v6611 = vpop.f32.mrf.mxu0
      %v6612 = vadd.f32 %v6523, %v6611
      %6613 = vmatmul.bf16.gmra.mxu0 %v6200
      %v6614 = vpop.f32.mrf.mxu0
      %v6615 = vadd.f32 %v6526, %v6614
      %v6616 = vpop.f32.mrf.mxu0
      %v6617 = vadd.f32 %v6528, %v6616
      %6618 = vmatmul.bf16.gmra.mxu0 %v6203
      %v6619 = vpop.f32.mrf.mxu0
      %v6620 = vadd.f32 %v6531, %v6619
      %v6621 = vpop.f32.mrf.mxu0
      %v6622 = vadd.f32 %v6533, %v6621
      %6623 = vmatmul.bf16.gmra.mxu0 %v6206
      %v6624 = vpop.f32.mrf.mxu0
      %v6625 = vadd.f32 %v6536, %v6624
      %v6626 = vpop.f32.mrf.mxu0
      %v6627 = vadd.f32 %v6538, %v6626
      %6628 = vmatmul.bf16.gmra.mxu0 %v6209
      %v6629 = vpop.f32.mrf.mxu0
      %v6630 = vadd.f32 %v6541, %v6629
      %v6631 = vpop.f32.mrf.mxu0
      %v6632 = vadd.f32 %v6543, %v6631
      %6633 = vmatmul.bf16.gmra.mxu0 %v6212
      %v6634 = vpop.f32.mrf.mxu0
      %v6635 = vadd.f32 %v6546, %v6634
      %v6636 = vpop.f32.mrf.mxu0
      %v6637 = vadd.f32 %v6548, %v6636
      %6638 = vmatmul.bf16.gmra.mxu0 %v6215
      %v6639 = vpop.f32.mrf.mxu0
      %v6640 = vadd.f32 %v6551, %v6639
      %v6641 = vpop.f32.mrf.mxu0
      %v6642 = vadd.f32 %v6553, %v6641
      %6643 = vmatmul.bf16.gmra.mxu0 %v6218
      %v6644 = vpop.f32.mrf.mxu0
      %v6645 = vadd.f32 %v6556, %v6644
      %v6646 = vpop.f32.mrf.mxu0
      %v6647 = vadd.f32 %v6558, %v6646
      %6648 = vmatmul.bf16.gmra.mxu0 %v6221
      %v6649 = vpop.f32.mrf.mxu0
      %v6650 = vadd.f32 %v6561, %v6649
      %v6651 = vpop.f32.mrf.mxu0
      %v6652 = vadd.f32 %v6563, %v6651
      %6653 = vmatmul.bf16.gmra.mxu0 %v6224
      %v6654 = vpop.f32.mrf.mxu0
      %v6655 = vadd.f32 %v6566, %v6654
      %v6656 = vpop.f32.mrf.mxu0
      %v6657 = vadd.f32 %v6568, %v6656
      %6658 = vmatmul.bf16.gmra.mxu0 %v6227
      %v6659 = vpop.f32.mrf.mxu0
      %v6660 = vadd.f32 %v6571, %v6659
      %v6661 = vpop.f32.mrf.mxu0
      %v6662 = vadd.f32 %v6573, %v6661
      %6663 = vmatmul.bf16.gmra.mxu0 %v6230
      %v6664 = vpop.f32.mrf.mxu0
      %v6665 = vadd.f32 %v6576, %v6664
      %v6666 = vpop.f32.mrf.mxu0
      %v6667 = vadd.f32 %v6578, %v6666
      %6668 = vmatmul.bf16.gmra.mxu0 %v6233
      %v6669 = vpop.f32.mrf.mxu0
      %v6670 = vadd.f32 %v6581, %v6669
      %v6671 = vpop.f32.mrf.mxu0
      %v6672 = vadd.f32 %v6583, %v6671
      %6673 = vmatmul.bf16.gmra.mxu0 %v6236
      %v6674 = vpop.f32.mrf.mxu0
      %v6675 = vadd.f32 %v6586, %v6674
      %v6676 = vpop.f32.mrf.mxu0
      %v6677 = vadd.f32 %v6588, %v6676
      %6678 = vmatmul.bf16.gmra.mxu0 %v6239
      %v6679 = vpop.f32.mrf.mxu0
      %v6680 = vadd.f32 %v6591, %v6679
      %v6681 = vpop.f32.mrf.mxu0
      %v6682 = vadd.f32 %v6593, %v6681
      %6683 = vmatmul.bf16.gmra.mxu0 %v6242
      %v6684 = vpop.f32.mrf.mxu0
      %v6685 = vadd.f32 %v6596, %v6684
      %v6686 = vpop.f32.mrf.mxu0
      %v6687 = vadd.f32 %v6598, %v6686
      %6688 = vdwg.mxu0
      %v6689 = vld [vmem:[%s5] sm:$0x1]
      %v6691 = vperm.slane %v6689, 0
      %v6693 = vmul.f32 %v6610, %v6691
      %v6694 = vmul.f32 %v6612, %v6691
      %v6695 = vmul.f32 %v6615, %v6691
      %v6696 = vmul.f32 %v6617, %v6691
      %v6697 = vmul.f32 %v6620, %v6691
      %v6698 = vmul.f32 %v6622, %v6691
      %v6699 = vmul.f32 %v6625, %v6691
      %v6700 = vmul.f32 %v6627, %v6691
      %v6701 = vmul.f32 %v6630, %v6691
      %v6702 = vmul.f32 %v6632, %v6691
      %v6703 = vmul.f32 %v6635, %v6691
      %v6704 = vmul.f32 %v6637, %v6691
      %v6705 = vmul.f32 %v6640, %v6691
      %v6706 = vmul.f32 %v6642, %v6691
      %v6707 = vmul.f32 %v6645, %v6691
      %v6708 = vmul.f32 %v6647, %v6691
      %v6709 = vmul.f32 %v6650, %v6691
      %v6710 = vmul.f32 %v6652, %v6691
      %v6711 = vmul.f32 %v6655, %v6691
      %v6712 = vmul.f32 %v6657, %v6691
      %v6713 = vmul.f32 %v6660, %v6691
      %v6714 = vmul.f32 %v6662, %v6691
      %v6715 = vmul.f32 %v6665, %v6691
      %v6716 = vmul.f32 %v6667, %v6691
      %v6717 = vmul.f32 %v6670, %v6691
      %v6718 = vmul.f32 %v6672, %v6691
      %v6719 = vmul.f32 %v6675, %v6691
      %v6720 = vmul.f32 %v6677, %v6691
      %v6721 = vmul.f32 %v6680, %v6691
      %v6722 = vmul.f32 %v6682, %v6691
      %v6723 = vmul.f32 %v6685, %v6691
      %v6724 = vmul.f32 %v6687, %v6691
      %v6725 = vld [vmem:[%s6] sm:$0x1]
      %v6727 = vperm.slane %v6725, 0
      %v6729 = vadd.f32 %v6693, %v6727
      %v6730 = vadd.f32 %v6694, %v6727
      %v6731 = vadd.f32 %v6695, %v6727
      %v6732 = vadd.f32 %v6696, %v6727
      %v6733 = vadd.f32 %v6697, %v6727
      %v6734 = vadd.f32 %v6698, %v6727
      %v6735 = vadd.f32 %v6699, %v6727
      %v6736 = vadd.f32 %v6700, %v6727
      %v6737 = vadd.f32 %v6701, %v6727
      %v6738 = vadd.f32 %v6702, %v6727
      %v6739 = vadd.f32 %v6703, %v6727
      %v6740 = vadd.f32 %v6704, %v6727
      %v6741 = vadd.f32 %v6705, %v6727
      %v6742 = vadd.f32 %v6706, %v6727
      %v6743 = vadd.f32 %v6707, %v6727
      %v6744 = vadd.f32 %v6708, %v6727
      %v6745 = vadd.f32 %v6709, %v6727
      %v6746 = vadd.f32 %v6710, %v6727
      %v6747 = vadd.f32 %v6711, %v6727
      %v6748 = vadd.f32 %v6712, %v6727
      %v6749 = vadd.f32 %v6713, %v6727
      %v6750 = vadd.f32 %v6714, %v6727
      %v6751 = vadd.f32 %v6715, %v6727
      %v6752 = vadd.f32 %v6716, %v6727
      %v6753 = vadd.f32 %v6717, %v6727
      %v6754 = vadd.f32 %v6718, %v6727
      %v6755 = vadd.f32 %v6719, %v6727
      %v6756 = vadd.f32 %v6720, %v6727
      %v6757 = vadd.f32 %v6721, %v6727
      %v6758 = vadd.f32 %v6722, %v6727
      %v6759 = vadd.f32 %v6723, %v6727
      %v6760 = vadd.f32 %v6724, %v6727
      %v6761 = vld [vmem:[%s274] sm:$0xf]
      %v6762 = vld [vmem:[%s274 + $0x4] sm:$0xf]
      %v6763 = vld [vmem:[%s274 + $0x8] sm:$0xf]
      %v6764 = vld [vmem:[%s274 + $0xc] sm:$0xf]
      %v6765 = vld [vmem:[%s274 + $0x10] sm:$0xf]
      %v6766 = vld [vmem:[%s274 + $0x14] sm:$0xf]
      %v6767 = vld [vmem:[%s274 + $0x18] sm:$0xf]
      %v6768 = vld [vmem:[%s274 + $0x1c] sm:$0xf]
      %v6769 = vld [vmem:[%s274 + $0x20] sm:$0xf]
      %v6770 = vld [vmem:[%s274 + $0x24] sm:$0xf]
      %v6771 = vld [vmem:[%s274 + $0x28] sm:$0xf]
      %v6772 = vld [vmem:[%s274 + $0x2c] sm:$0xf]
      %v6773 = vld [vmem:[%s274 + $0x30] sm:$0xf]
      %v6774 = vld [vmem:[%s274 + $0x34] sm:$0xf]
      %v6775 = vld [vmem:[%s274 + $0x38] sm:$0xf]
      %v6776 = vld [vmem:[%s274 + $0x3c] sm:$0xf]
      %v6777 = vld [vmem:[%s274 + $0x40] sm:$0xf]
      %v6778 = vld [vmem:[%s274 + $0x44] sm:$0xf]
      %v6779 = vld [vmem:[%s274 + $0x48] sm:$0xf]
      %v6780 = vld [vmem:[%s274 + $0x4c] sm:$0xf]
      %v6781 = vld [vmem:[%s274 + $0x50] sm:$0xf]
      %v6782 = vld [vmem:[%s274 + $0x54] sm:$0xf]
      %v6783 = vld [vmem:[%s274 + $0x58] sm:$0xf]
      %v6784 = vld [vmem:[%s274 + $0x5c] sm:$0xf]
      %v6785 = vld [vmem:[%s274 + $0x60] sm:$0xf]
      %v6786 = vld [vmem:[%s274 + $0x64] sm:$0xf]
      %v6787 = vld [vmem:[%s274 + $0x68] sm:$0xf]
      %v6788 = vld [vmem:[%s274 + $0x6c] sm:$0xf]
      %v6789 = vld [vmem:[%s274 + $0x70] sm:$0xf]
      %v6790 = vld [vmem:[%s274 + $0x74] sm:$0xf]
      %v6791 = vld [vmem:[%s274 + $0x78] sm:$0xf]
      %v6792 = vld [vmem:[%s274 + $0x7c] sm:$0xf]
      %v6793 = vunpack.c.l.bf16 %v6761
      %v6794 = vunpack.c.l.bf16 %v6762
      %v6795 = vunpack.c.l.bf16 %v6763
      %v6796 = vunpack.c.l.bf16 %v6764
      %v6797 = vunpack.c.l.bf16 %v6765
      %v6798 = vunpack.c.l.bf16 %v6766
      %v6799 = vunpack.c.l.bf16 %v6767
      %v6800 = vunpack.c.l.bf16 %v6768
      %v6801 = vunpack.c.l.bf16 %v6769
      %v6802 = vunpack.c.l.bf16 %v6770
      %v6803 = vunpack.c.l.bf16 %v6771
      %v6804 = vunpack.c.l.bf16 %v6772
      %v6805 = vunpack.c.l.bf16 %v6773
      %v6806 = vunpack.c.l.bf16 %v6774
      %v6807 = vunpack.c.l.bf16 %v6775
      %v6808 = vunpack.c.l.bf16 %v6776
      %v6809 = vunpack.c.l.bf16 %v6777
      %v6810 = vunpack.c.l.bf16 %v6778
      %v6811 = vunpack.c.l.bf16 %v6779
      %v6812 = vunpack.c.l.bf16 %v6780
      %v6813 = vunpack.c.l.bf16 %v6781
      %v6814 = vunpack.c.l.bf16 %v6782
      %v6815 = vunpack.c.l.bf16 %v6783
      %v6816 = vunpack.c.l.bf16 %v6784
      %v6817 = vunpack.c.l.bf16 %v6785
      %v6818 = vunpack.c.l.bf16 %v6786
      %v6819 = vunpack.c.l.bf16 %v6787
      %v6820 = vunpack.c.l.bf16 %v6788
      %v6821 = vunpack.c.l.bf16 %v6789
      %v6822 = vunpack.c.l.bf16 %v6790
      %v6823 = vunpack.c.l.bf16 %v6791
      %v6824 = vunpack.c.l.bf16 %v6792
      %v6825 = vadd.f32 %v6729, %v6793
      %v6826 = vadd.f32 %v6730, %v6794
      %v6827 = vadd.f32 %v6731, %v6795
      %v6828 = vadd.f32 %v6732, %v6796
      %v6829 = vadd.f32 %v6733, %v6797
      %v6830 = vadd.f32 %v6734, %v6798
      %v6831 = vadd.f32 %v6735, %v6799
      %v6832 = vadd.f32 %v6736, %v6800
      %v6833 = vadd.f32 %v6737, %v6801
      %v6834 = vadd.f32 %v6738, %v6802
      %v6835 = vadd.f32 %v6739, %v6803
      %v6836 = vadd.f32 %v6740, %v6804
      %v6837 = vadd.f32 %v6741, %v6805
      %v6838 = vadd.f32 %v6742, %v6806
      %v6839 = vadd.f32 %v6743, %v6807
      %v6840 = vadd.f32 %v6744, %v6808
      %v6841 = vadd.f32 %v6745, %v6809
      %v6842 = vadd.f32 %v6746, %v6810
      %v6843 = vadd.f32 %v6747, %v6811
      %v6844 = vadd.f32 %v6748, %v6812
      %v6845 = vadd.f32 %v6749, %v6813
      %v6846 = vadd.f32 %v6750, %v6814
      %v6847 = vadd.f32 %v6751, %v6815
      %v6848 = vadd.f32 %v6752, %v6816
      %v6849 = vadd.f32 %v6753, %v6817
      %v6850 = vadd.f32 %v6754, %v6818
      %v6851 = vadd.f32 %v6755, %v6819
      %v6852 = vadd.f32 %v6756, %v6820
      %v6853 = vadd.f32 %v6757, %v6821
      %v6854 = vadd.f32 %v6758, %v6822
      %v6855 = vadd.f32 %v6759, %v6823
      %v6856 = vadd.f32 %v6760, %v6824
      %v6857 = vmax.f32 %v6825, 0.0
      %v6858 = vmax.f32 %v6826, 0.0
      %v6859 = vmax.f32 %v6827, 0.0
      %v6860 = vmax.f32 %v6828, 0.0
      %v6861 = vmax.f32 %v6829, 0.0
      %v6862 = vmax.f32 %v6830, 0.0
      %v6863 = vmax.f32 %v6831, 0.0
      %v6864 = vmax.f32 %v6832, 0.0
      %v6865 = vmax.f32 %v6833, 0.0
      %v6866 = vmax.f32 %v6834, 0.0
      %v6867 = vmax.f32 %v6835, 0.0
      %v6868 = vmax.f32 %v6836, 0.0
      %v6869 = vmax.f32 %v6837, 0.0
      %v6870 = vmax.f32 %v6838, 0.0
      %v6871 = vmax.f32 %v6839, 0.0
      %v6872 = vmax.f32 %v6840, 0.0
      %v6873 = vmax.f32 %v6841, 0.0
      %v6874 = vmax.f32 %v6842, 0.0
      %v6875 = vmax.f32 %v6843, 0.0
      %v6876 = vmax.f32 %v6844, 0.0
      %v6877 = vmax.f32 %v6845, 0.0
      %v6878 = vmax.f32 %v6846, 0.0
      %v6879 = vmax.f32 %v6847, 0.0
      %v6880 = vmax.f32 %v6848, 0.0
      %v6881 = vmax.f32 %v6849, 0.0
      %v6882 = vmax.f32 %v6850, 0.0
      %v6883 = vmax.f32 %v6851, 0.0
      %v6884 = vmax.f32 %v6852, 0.0
      %v6885 = vmax.f32 %v6853, 0.0
      %v6886 = vmax.f32 %v6854, 0.0
      %v6887 = vmax.f32 %v6855, 0.0
      %v6888 = vmax.f32 %v6856, 0.0
      %v6889 = vpack.c.bf16 %v6857, %v6857
      %v6890 = vpack.c.bf16 %v6858, %v6858
      %v6891 = vpack.c.bf16 %v6859, %v6859
      %v6892 = vpack.c.bf16 %v6860, %v6860
      %v6893 = vpack.c.bf16 %v6861, %v6861
      %v6894 = vpack.c.bf16 %v6862, %v6862
      %v6895 = vpack.c.bf16 %v6863, %v6863
      %v6896 = vpack.c.bf16 %v6864, %v6864
      %v6897 = vpack.c.bf16 %v6865, %v6865
      %v6898 = vpack.c.bf16 %v6866, %v6866
      %v6899 = vpack.c.bf16 %v6867, %v6867
      %v6900 = vpack.c.bf16 %v6868, %v6868
      %v6901 = vpack.c.bf16 %v6869, %v6869
      %v6902 = vpack.c.bf16 %v6870, %v6870
      %v6903 = vpack.c.bf16 %v6871, %v6871
      %v6904 = vpack.c.bf16 %v6872, %v6872
      %v6905 = vpack.c.bf16 %v6873, %v6873
      %v6906 = vpack.c.bf16 %v6874, %v6874
      %v6907 = vpack.c.bf16 %v6875, %v6875
      %v6908 = vpack.c.bf16 %v6876, %v6876
      %v6909 = vpack.c.bf16 %v6877, %v6877
      %v6910 = vpack.c.bf16 %v6878, %v6878
      %v6911 = vpack.c.bf16 %v6879, %v6879
      %v6912 = vpack.c.bf16 %v6880, %v6880
      %v6913 = vpack.c.bf16 %v6881, %v6881
      %v6914 = vpack.c.bf16 %v6882, %v6882
      %v6915 = vpack.c.bf16 %v6883, %v6883
      %v6916 = vpack.c.bf16 %v6884, %v6884
      %v6917 = vpack.c.bf16 %v6885, %v6885
      %v6918 = vpack.c.bf16 %v6886, %v6886
      %v6919 = vpack.c.bf16 %v6887, %v6887
      %v6920 = vpack.c.bf16 %v6888, %v6888
      %6921 = vst.msk [vmem:[%s280] sm:$0xf] %vm733, %v6889
      %6922 = vst.msk [vmem:[%s280 + $0x4] sm:$0xf] %vm733, %v6890
      %6923 = vst.msk [vmem:[%s280 + $0x8] sm:$0xf] %vm733, %v6891
      %6924 = vst.msk [vmem:[%s280 + $0xc] sm:$0xf] %vm733, %v6892
      %6925 = vst.msk [vmem:[%s280 + $0x10] sm:$0xf] %vm733, %v6893
      %6926 = vst.msk [vmem:[%s280 + $0x14] sm:$0xf] %vm733, %v6894
      %6927 = vst.msk [vmem:[%s280 + $0x18] sm:$0xf] %vm733, %v6895
      %6928 = vst.msk [vmem:[%s280 + $0x1c] sm:$0xf] %vm733, %v6896
      %6929 = vst.msk [vmem:[%s280 + $0x20] sm:$0xf] %vm733, %v6897
      %6930 = vst.msk [vmem:[%s280 + $0x24] sm:$0xf] %vm733, %v6898
      %6931 = vst.msk [vmem:[%s280 + $0x28] sm:$0xf] %vm733, %v6899
      %6932 = vst.msk [vmem:[%s280 + $0x2c] sm:$0xf] %vm733, %v6900
      %6933 = vst.msk [vmem:[%s280 + $0x30] sm:$0xf] %vm733, %v6901
      %6934 = vst.msk [vmem:[%s280 + $0x34] sm:$0xf] %vm733, %v6902
      %6935 = vst.msk [vmem:[%s280 + $0x38] sm:$0xf] %vm733, %v6903
      %6936 = vst.msk [vmem:[%s280 + $0x3c] sm:$0xf] %vm733, %v6904
      %6937 = vst.msk [vmem:[%s280 + $0x40] sm:$0xf] %vm733, %v6905
      %6938 = vst.msk [vmem:[%s280 + $0x44] sm:$0xf] %vm733, %v6906
      %6939 = vst.msk [vmem:[%s280 + $0x48] sm:$0xf] %vm733, %v6907
      %6940 = vst.msk [vmem:[%s280 + $0x4c] sm:$0xf] %vm733, %v6908
      %6941 = vst.msk [vmem:[%s280 + $0x50] sm:$0xf] %vm733, %v6909
      %6942 = vst.msk [vmem:[%s280 + $0x54] sm:$0xf] %vm733, %v6910
      %6943 = vst.msk [vmem:[%s280 + $0x58] sm:$0xf] %vm733, %v6911
      %6944 = vst.msk [vmem:[%s280 + $0x5c] sm:$0xf] %vm733, %v6912
      %6945 = vst.msk [vmem:[%s280 + $0x60] sm:$0xf] %vm733, %v6913
      %6946 = vst.msk [vmem:[%s280 + $0x64] sm:$0xf] %vm733, %v6914
      %6947 = vst.msk [vmem:[%s280 + $0x68] sm:$0xf] %vm733, %v6915
      %6948 = vst.msk [vmem:[%s280 + $0x6c] sm:$0xf] %vm733, %v6916
      %6949 = vst.msk [vmem:[%s280 + $0x70] sm:$0xf] %vm733, %v6917
      %6950 = vst.msk [vmem:[%s280 + $0x74] sm:$0xf] %vm733, %v6918
      %6951 = vst.msk [vmem:[%s280 + $0x78] sm:$0xf] %vm733, %v6919
      %6952 = vst.msk [vmem:[%s280 + $0x7c] sm:$0xf] %vm733, %v6920
      %s6953 = smul.u32 32, %s18
      %p6954 = scmp.lt.s32.totalorder %s6953, 63
      %s6955 = scalar_select %p6954, %s6953, 63
      %s6956 = smul.addr %s6955, 4
      %s6957 = scalar_lea.vmem %s7, %s6956
      // Predicated region
      $region49: #{basic_block_forward.1} parent=47 // pred_check
        %p6958 = pneg %p188
      $region50: #{basic_block_forward.1} parent=47 // pred_check_branch
        %6960 = sbr.rel (%p6958) target = $region52
      $region51: #{basic_block_forward.1} parent=47 // pred_region
        %s6961 = smul.u32 32, %s18
      $region52: #{basic_block_forward.1} parent=47 // pred_fallthru
        _
    $region48: #{basic_block_forward.1} parent=5 // pred_fallthru
      _
    %p6962 = scmp.le.s32.totalorder 2, %s13
    // Predicated region
    $region53: #{basic_block_forward.1} parent=5 // pred_check
      %p6963 = pneg %p6962
    $region54: #{basic_block_forward.1} parent=5 // pred_check_branch
      %6965 = sbr.rel (%p6963) target = $region56
    $region55: #{basic_block_forward.1} parent=5 // pred_region
      %s6966 = ssub.s32 %s13, 2
      // Predicated region
      $region57: #{basic_block_forward.1} parent=55 // pred_check
        %p6967 = pneg %p194
      $region58: #{basic_block_forward.1} parent=55 // pred_check_branch
        %6969 = sbr.rel (%p6967) target = $region60
      $region59: #{basic_block_forward.1} parent=55 // pred_region
        %s6970 = smul.u32 32, %s19
        %p6971 = scmp.lt.s32.totalorder %s6970, 63
        %s6972 = scalar_select %p6971, %s6970, 63
        %s6973 = smul.addr %s6972, 4
        %s6974 = scalar_lea.vmem %s7, %s6973
      $region60: #{basic_block_forward.1} parent=55 // pred_fallthru
        _
    $region56: #{basic_block_forward.1} parent=5 // pred_fallthru
      _
  $region6: #{basic_block_forward.1} parent=0 // loop_footer
    %s17 = sadd.s32 1, %s13
  $region7: #{basic_block_forward.1} parent=0 // loop_footer_branch
    %12 = sbr.rel target = $region3
  $region8: #{basic_block_forward.1} parent=0 // loop_exit
    _

</llo_original>
